<compile_context>
chip_gen: v6e
topology: v6e:2x2x1
jax: 0.10.0
libtpu: 0.0.40
codegen_flags: <defaults>
</compile_context>

<pallas_src>
import math

import jax
import jax.numpy as jnp
from jax.experimental import pallas as pl
from jax.experimental.pallas import tpu as pltpu

STACK_SIZE = 4

# Explicit scoped-VMEM budget: v5e's default is 16 MiB and the fused FC call
# double-buffers ~10 MiB of bf16 weights; 28 MiB gives headroom and is well
# under v7x's 64 MiB physical VMEM.
_VMEM_LIMIT_BYTES = 28 * 1024 * 1024


def _compiler_params():
    return pltpu.CompilerParams(
        dimension_semantics=("arbitrary",),
        vmem_limit_bytes=_VMEM_LIMIT_BYTES,
    )


# ----------------------------------------------------------------------------
# Pallas kernels
# ----------------------------------------------------------------------------
def _matmul_bias_relu_kernel(x_ref, w_ref, b_ref, o_ref):
    """out = relu(x @ w + b); x f32 (cast to bf16), w bf16, acc/bias f32."""
    x = x_ref[...].astype(jnp.bfloat16)
    acc = jnp.dot(x, w_ref[...], preferred_element_type=jnp.float32)
    acc = jnp.maximum(acc + b_ref[...], 0.0)
    o_ref[...] = acc.astype(o_ref.dtype)


def _fused_fc_kernel(x_ref, w1_ref, b1_ref, w2_ref, b2_ref, w3_ref, b3_ref,
                     o_ref):
    """q = relu(relu(x@w1+b1)@w2+b2)@w3 + b3 in a single kernel invocation.

    Chained MXU matmuls with intermediates resident in VMEM/vregs; matmul
    inputs are bf16, accumulation and bias/ReLU epilogues are f32.
    """
    h = x_ref[...].astype(jnp.bfloat16)
    h = jnp.dot(h, w1_ref[...], preferred_element_type=jnp.float32)
    h = jnp.maximum(h + b1_ref[...], 0.0)

    h = jnp.dot(h.astype(jnp.bfloat16), w2_ref[...],
                preferred_element_type=jnp.float32)
    h = jnp.maximum(h + b2_ref[...], 0.0)

    q = jnp.dot(h.astype(jnp.bfloat16), w3_ref[...],
                preferred_element_type=jnp.float32)
    o_ref[...] = (q + b3_ref[...]).astype(o_ref.dtype)


# ----------------------------------------------------------------------------
# pallas_call wrappers
# ----------------------------------------------------------------------------
def matmul_bias_relu(x, w, b):
    """x: (M, K) f32, w: (K, N) bf16, b: (1, N) f32 -> (M, N) f32."""
    M, K = x.shape
    K2, N = w.shape
    assert K == K2 and b.shape == (1, N)
    return pl.pallas_call(
        _matmul_bias_relu_kernel,
        out_shape=jax.ShapeDtypeStruct((M, N), jnp.float32),
        grid=(1,),
        in_specs=[
            pl.BlockSpec((M, K), lambda i: (0, 0)),
            pl.BlockSpec((K, N), lambda i: (0, 0)),
            pl.BlockSpec((1, N), lambda i: (0, 0)),
        ],
        out_specs=pl.BlockSpec((M, N), lambda i: (0, 0)),
        compiler_params=_compiler_params(),
    )(x, w, b)


def fused_fc(x, w1, b1, w2, b2, w3, b3):
    """Fused fc1+fc2+fc3: x (B, 4480) f32 -> q (B, n_action) f32."""
    B, K1 = x.shape
    N1 = w1.shape[1]
    N2 = w2.shape[1]
    N3 = w3.shape[1]
    return pl.pallas_call(
        _fused_fc_kernel,
        out_shape=jax.ShapeDtypeStruct((B, N3), jnp.float32),
        grid=(1,),
        in_specs=[
            pl.BlockSpec((B, K1), lambda i: (0, 0)),
            pl.BlockSpec((K1, N1), lambda i: (0, 0)),
            pl.BlockSpec((1, N1), lambda i: (0, 0)),
            pl.BlockSpec((N1, N2), lambda i: (0, 0)),
            pl.BlockSpec((1, N2), lambda i: (0, 0)),
            pl.BlockSpec((N2, N3), lambda i: (0, 0)),
            pl.BlockSpec((1, N3), lambda i: (0, 0)),
        ],
        out_specs=pl.BlockSpec((B, N3), lambda i: (0, 0)),
        compiler_params=_compiler_params(),
    )(x, w1, b1, w2, b2, w3, b3)


# ----------------------------------------------------------------------------
# im2col glue (single XLA op per conv: pure data movement, no MACs)
# ----------------------------------------------------------------------------
def extract_patches(x_nhwc, k, s):
    """Strided k x k patches of an NHWC tensor as (B*Ho*Wo, Ci*k*k).

    Output feature ordering is (Ci, kh, kw), matched by the pre-reshaped
    conv weights stored at init.
    """
    B = x_nhwc.shape[0]
    C = x_nhwc.shape[3]
    p = jax.lax.conv_general_dilated_patches(
        x_nhwc,
        filter_shape=(k, k),
        window_strides=(s, s),
        padding="VALID",
        dimension_numbers=("NHWC", "HWIO", "NHWC"),
    )
    Ho, Wo = p.shape[1], p.shape[2]
    return p.reshape(B * Ho * Wo, C * k * k), Ho, Wo


def conv2d_relu(x_nhwc, w_mat, b, *, k, s):
    """NHWC conv (no padding) as im2col + Pallas matmul+bias+ReLU."""
    B = x_nhwc.shape[0]
    Co = w_mat.shape[1]
    patches, Ho, Wo = extract_patches(x_nhwc, k, s)
    y = matmul_bias_relu(patches, w_mat, b)
    return y.reshape(B, Ho, Wo, Co)


# ----------------------------------------------------------------------------
# Parameter init (PyTorch-default-like uniform(-1/sqrt(fan_in)); all layout
# transforms done ONCE here so the forward pass has zero runtime transposes)
# ----------------------------------------------------------------------------
def _uniform(key, shape, fan_in):
    bound = 1.0 / math.sqrt(fan_in)
    return jax.random.uniform(key, shape, jnp.float32, -bound, bound)


def init_params(n_action, key):
    ks = jax.random.split(key, 12)
    p = {}

    # Conv weights generated in PyTorch (Co, Ci, kh, kw) layout, then reshaped
    # to (Ci*kh*kw, Co) -- matching the (Ci, kh, kw) patch ordering -- and
    # stored in bf16 for cheaper weight streaming (f32 accumulation in-kernel).
    w1 = _uniform(ks[0], (32, STACK_SIZE, 8, 8), STACK_SIZE * 8 * 8)
    w2 = _uniform(ks[2], (64, 32, 4, 4), 32 * 4 * 4)
    w3 = _uniform(ks[4], (64, 64, 3, 3), 64 * 3 * 3)
    p["w1"] = w1.reshape(32, -1).T.astype(jnp.bfloat16)
    p["w2"] = w2.reshape(64, -1).T.astype(jnp.bfloat16)
    p["w3"] = w3.reshape(64, -1).T.astype(jnp.bfloat16)
    p["b1"] = _uniform(ks[1], (1, 32), STACK_SIZE * 8 * 8)
    p["b2"] = _uniform(ks[3], (1, 64), 32 * 4 * 4)
    p["b3"] = _uniform(ks[5], (1, 64), 64 * 3 * 3)

    # fc1: generate rows in PyTorch's flatten order (C=64, H=7, W=10), then
    # permute them once to (H, W, C) order so the NHWC conv3 output can be
    # flattened directly (no runtime NCHW transpose), preserving semantics.
    wf1_chw = _uniform(ks[6], (4480, 512), 4480)          # rows in (C,H,W) order
    perm = jnp.arange(4480).reshape(64, 7, 10).transpose(1, 2, 0).reshape(-1)
    p["wf1"] = wf1_chw[perm].astype(jnp.bfloat16)         # rows in (H,W,C) order
    p["bf1"] = _uniform(ks[7], (1, 512), 4480)
    p["wf2"] = _uniform(ks[8], (512, 256), 512).astype(jnp.bfloat16)
    p["bf2"] = _uniform(ks[9], (1, 256), 512)
    p["wf3"] = _uniform(ks[10], (256, n_action), 256).astype(jnp.bfloat16)
    p["bf3"] = _uniform(ks[11], (1, n_action), 256)
    return p


# ----------------------------------------------------------------------------
# Forward pass (mirrors Model.forward)
# ----------------------------------------------------------------------------
def model_forward(params, state_nhwc):
    # state.dim() == 3 -> unsqueeze batch dim (same as the PyTorch branch)
    if state_nhwc.ndim == 3:
        state_nhwc = state_nhwc[None, ...]
    B = state_nhwc.shape[0]

    x = conv2d_relu(state_nhwc, params["w1"], params["b1"], k=8, s=4)  # (B,20,26,32)
    x = conv2d_relu(x, params["w2"], params["b2"], k=4, s=2)           # (B, 9,12,64)
    x = conv2d_relu(x, params["w3"], params["b3"], k=3, s=1)           # (B, 7,10,64)

    # Flatten directly in NHWC; PyTorch's (C,H,W) flatten order is absorbed
    # into the one-time fc1 row permutation at init.
    x = x.reshape(B, -1)                                               # (B, 4480)

    q = fused_fc(x, params["wf1"], params["bf1"],
                 params["wf2"], params["bf2"],
                 params["wf3"], params["bf3"])                         # (B, n_action)
    return q


if __name__ == "__main__":
    n_action = 6
    B, H, W, C = 2, 84, 108, STACK_SIZE   # 84x108 -> 7x10x64 = 4480 (matches fc1)

    key = jax.random.PRNGKey(0)
    k_param, k_input = jax.random.split(key)
    params = init_params(n_action, k_param)
    state = jax.random.uniform(k_input, (B, H, W, C), jnp.float32)

    fwd = jax.jit(model_forward)
    q = jax.block_until_ready(fwd(params, state))
    assert q.shape == (B, n_action) and q.dtype == jnp.float32
    print("KERNEL_OK")
</pallas_src>

<mosaic_0001>
module attributes {stable_mosaic.version = 11 : i64} {
  func.func @_matmul_bias_relu_kernel(%arg0: i32, %arg1: memref<1040x256xf32, #tpu.memory_space<vmem>>, %arg2: memref<256x32xbf16, #tpu.memory_space<vmem>>, %arg3: memref<1x32xf32, #tpu.memory_space<vmem>>, %arg4: memref<1040x32xf32, #tpu.memory_space<vmem>>) attributes {dimension_semantics = [#tpu.dimension_semantics<arbitrary>], iteration_bounds = array<i64: 1>, scalar_prefetch = 0 : i64, scratch_operands = 0 : i64, tpu.core_type = #tpu.core_type<tc>, window_params = [{pipeline_mode = #tpu.pipeline_mode<synchronous>, transform_indices = @transform_0, window_bounds = array<i64: 1040, 256>}, {pipeline_mode = #tpu.pipeline_mode<synchronous>, transform_indices = @transform_1, window_bounds = array<i64: 256, 32>}, {pipeline_mode = #tpu.pipeline_mode<synchronous>, transform_indices = @transform_2, window_bounds = array<i64: 1, 32>}, {pipeline_mode = #tpu.pipeline_mode<synchronous>, transform_indices = @transform_3, window_bounds = array<i64: 1040, 32>}]} {
    %c0 = arith.constant 0 : index
    %c0_0 = arith.constant 0 : index
    %0 = vector.load %arg1[%c0, %c0_0] : memref<1040x256xf32, #tpu.memory_space<vmem>>, vector<1040x256xf32>
    %1 = arith.truncf %0 : vector<1040x256xf32> to vector<1040x256xbf16>
    %c0_1 = arith.constant 0 : index
    %c0_2 = arith.constant 0 : index
    %2 = vector.load %arg2[%c0_1, %c0_2] : memref<256x32xbf16, #tpu.memory_space<vmem>>, vector<256x32xbf16>
    %cst = arith.constant dense<0.000000e+00> : vector<1040x32xf32>
    %3 = tpu.matmul %1, %2, %cst {dimension_numbers = #tpu.dot_dimension_numbers<[1], [0], [0], [1], [0, 0, 1, 1], [], []>} : vector<1040x256xbf16>, vector<256x32xbf16>, vector<1040x32xf32> -> vector<1040x32xf32>
    %c0_3 = arith.constant 0 : index
    %c0_4 = arith.constant 0 : index
    %4 = vector.load %arg3[%c0_3, %c0_4] : memref<1x32xf32, #tpu.memory_space<vmem>>, vector<1x32xf32>
    %5 = vector.broadcast %4 : vector<1x32xf32> to vector<1040x32xf32>
    %6 = arith.addf %3, %5 : vector<1040x32xf32>
    %cst_5 = arith.constant 0.000000e+00 : f32
    %7 = vector.broadcast %cst_5 : f32 to vector<1040x32xf32>
    %8 = arith.maximumf %6, %7 : vector<1040x32xf32>
    %c0_6 = arith.constant 0 : index
    %c0_7 = arith.constant 0 : index
    %9 = vector.load %arg4[%c0_6, %c0_7] : memref<1040x32xf32, #tpu.memory_space<vmem>>, vector<1040x32xf32>
    tpu.vector_store %arg4[%c0_6, %c0_7], %8 {strides = array<i32>} : memref<1040x32xf32, #tpu.memory_space<vmem>>, vector<1040x32xf32>,
    return
  }
  func.func @transform_0(%arg0: i32) -> (i32, i32) {
    %c0_i32 = arith.constant 0 : i32
    %c0_i32_0 = arith.constant 0 : i32
    %c0_i32_1 = arith.constant 0 : i32
    return %c0_i32, %c0_i32_0 : i32, i32
  }
  func.func @transform_1(%arg0: i32) -> (i32, i32) {
    %c0_i32 = arith.constant 0 : i32
    %c0_i32_0 = arith.constant 0 : i32
    %c0_i32_1 = arith.constant 0 : i32
    return %c0_i32, %c0_i32_0 : i32, i32
  }
  func.func @transform_2(%arg0: i32) -> (i32, i32) {
    %c0_i32 = arith.constant 0 : i32
    %c0_i32_0 = arith.constant 0 : i32
    %c0_i32_1 = arith.constant 0 : i32
    return %c0_i32, %c0_i32_0 : i32, i32
  }
  func.func @transform_3(%arg0: i32) -> (i32, i32) {
    %c0_i32 = arith.constant 0 : i32
    %c0_i32_0 = arith.constant 0 : i32
    %c0_i32_1 = arith.constant 0 : i32
    return %c0_i32, %c0_i32_0 : i32, i32
  }
}

module attributes {stable_mosaic.version = 11 : i64} {
  func.func @_matmul_bias_relu_kernel(%arg0: i32, %arg1: memref<216x512xf32, #tpu.memory_space<vmem>>, %arg2: memref<512x64xbf16, #tpu.memory_space<vmem>>, %arg3: memref<1x64xf32, #tpu.memory_space<vmem>>, %arg4: memref<216x64xf32, #tpu.memory_space<vmem>>) attributes {dimension_semantics = [#tpu.dimension_semantics<arbitrary>], iteration_bounds = array<i64: 1>, scalar_prefetch = 0 : i64, scratch_operands = 0 : i64, tpu.core_type = #tpu.core_type<tc>, window_params = [{pipeline_mode = #tpu.pipeline_mode<synchronous>, transform_indices = @transform_0, window_bounds = array<i64: 216, 512>}, {pipeline_mode = #tpu.pipeline_mode<synchronous>, transform_indices = @transform_1, window_bounds = array<i64: 512, 64>}, {pipeline_mode = #tpu.pipeline_mode<synchronous>, transform_indices = @transform_2, window_bounds = array<i64: 1, 64>}, {pipeline_mode = #tpu.pipeline_mode<synchronous>, transform_indices = @transform_3, window_bounds = array<i64: 216, 64>}]} {
    %c0 = arith.constant 0 : index
    %c0_0 = arith.constant 0 : index
    %0 = vector.load %arg1[%c0, %c0_0] : memref<216x512xf32, #tpu.memory_space<vmem>>, vector<216x512xf32>
    %1 = arith.truncf %0 : vector<216x512xf32> to vector<216x512xbf16>
    %c0_1 = arith.constant 0 : index
    %c0_2 = arith.constant 0 : index
    %2 = vector.load %arg2[%c0_1, %c0_2] : memref<512x64xbf16, #tpu.memory_space<vmem>>, vector<512x64xbf16>
    %cst = arith.constant dense<0.000000e+00> : vector<216x64xf32>
    %3 = tpu.matmul %1, %2, %cst {dimension_numbers = #tpu.dot_dimension_numbers<[1], [0], [0], [1], [0, 0, 1, 1], [], []>} : vector<216x512xbf16>, vector<512x64xbf16>, vector<216x64xf32> -> vector<216x64xf32>
    %c0_3 = arith.constant 0 : index
    %c0_4 = arith.constant 0 : index
    %4 = vector.load %arg3[%c0_3, %c0_4] : memref<1x64xf32, #tpu.memory_space<vmem>>, vector<1x64xf32>
    %5 = vector.broadcast %4 : vector<1x64xf32> to vector<216x64xf32>
    %6 = arith.addf %3, %5 : vector<216x64xf32>
    %cst_5 = arith.constant 0.000000e+00 : f32
    %7 = vector.broadcast %cst_5 : f32 to vector<216x64xf32>
    %8 = arith.maximumf %6, %7 : vector<216x64xf32>
    %c0_6 = arith.constant 0 : index
    %c0_7 = arith.constant 0 : index
    %9 = vector.load %arg4[%c0_6, %c0_7] : memref<216x64xf32, #tpu.memory_space<vmem>>, vector<216x64xf32>
    tpu.vector_store %arg4[%c0_6, %c0_7], %8 {strides = array<i32>} : memref<216x64xf32, #tpu.memory_space<vmem>>, vector<216x64xf32>,
    return
  }
  func.func @transform_0(%arg0: i32) -> (i32, i32) {
    %c0_i32 = arith.constant 0 : i32
    %c0_i32_0 = arith.constant 0 : i32
    %c0_i32_1 = arith.constant 0 : i32
    return %c0_i32, %c0_i32_0 : i32, i32
  }
  func.func @transform_1(%arg0: i32) -> (i32, i32) {
    %c0_i32 = arith.constant 0 : i32
    %c0_i32_0 = arith.constant 0 : i32
    %c0_i32_1 = arith.constant 0 : i32
    return %c0_i32, %c0_i32_0 : i32, i32
  }
  func.func @transform_2(%arg0: i32) -> (i32, i32) {
    %c0_i32 = arith.constant 0 : i32
    %c0_i32_0 = arith.constant 0 : i32
    %c0_i32_1 = arith.constant 0 : i32
    return %c0_i32, %c0_i32_0 : i32, i32
  }
  func.func @transform_3(%arg0: i32) -> (i32, i32) {
    %c0_i32 = arith.constant 0 : i32
    %c0_i32_0 = arith.constant 0 : i32
    %c0_i32_1 = arith.constant 0 : i32
    return %c0_i32, %c0_i32_0 : i32, i32
  }
}

module attributes {stable_mosaic.version = 11 : i64} {
  func.func @_matmul_bias_relu_kernel(%arg0: i32, %arg1: memref<140x576xf32, #tpu.memory_space<vmem>>, %arg2: memref<576x64xbf16, #tpu.memory_space<vmem>>, %arg3: memref<1x64xf32, #tpu.memory_space<vmem>>, %arg4: memref<140x64xf32, #tpu.memory_space<vmem>>) attributes {dimension_semantics = [#tpu.dimension_semantics<arbitrary>], iteration_bounds = array<i64: 1>, scalar_prefetch = 0 : i64, scratch_operands = 0 : i64, tpu.core_type = #tpu.core_type<tc>, window_params = [{pipeline_mode = #tpu.pipeline_mode<synchronous>, transform_indices = @transform_0, window_bounds = array<i64: 140, 576>}, {pipeline_mode = #tpu.pipeline_mode<synchronous>, transform_indices = @transform_1, window_bounds = array<i64: 576, 64>}, {pipeline_mode = #tpu.pipeline_mode<synchronous>, transform_indices = @transform_2, window_bounds = array<i64: 1, 64>}, {pipeline_mode = #tpu.pipeline_mode<synchronous>, transform_indices = @transform_3, window_bounds = array<i64: 140, 64>}]} {
    %c0 = arith.constant 0 : index
    %c0_0 = arith.constant 0 : index
    %0 = vector.load %arg1[%c0, %c0_0] : memref<140x576xf32, #tpu.memory_space<vmem>>, vector<140x576xf32>
    %1 = arith.truncf %0 : vector<140x576xf32> to vector<140x576xbf16>
    %c0_1 = arith.constant 0 : index
    %c0_2 = arith.constant 0 : index
    %2 = vector.load %arg2[%c0_1, %c0_2] : memref<576x64xbf16, #tpu.memory_space<vmem>>, vector<576x64xbf16>
    %cst = arith.constant dense<0.000000e+00> : vector<140x64xf32>
    %3 = tpu.matmul %1, %2, %cst {dimension_numbers = #tpu.dot_dimension_numbers<[1], [0], [0], [1], [0, 0, 1, 1], [], []>} : vector<140x576xbf16>, vector<576x64xbf16>, vector<140x64xf32> -> vector<140x64xf32>
    %c0_3 = arith.constant 0 : index
    %c0_4 = arith.constant 0 : index
    %4 = vector.load %arg3[%c0_3, %c0_4] : memref<1x64xf32, #tpu.memory_space<vmem>>, vector<1x64xf32>
    %5 = vector.broadcast %4 : vector<1x64xf32> to vector<140x64xf32>
    %6 = arith.addf %3, %5 : vector<140x64xf32>
    %cst_5 = arith.constant 0.000000e+00 : f32
    %7 = vector.broadcast %cst_5 : f32 to vector<140x64xf32>
    %8 = arith.maximumf %6, %7 : vector<140x64xf32>
    %c0_6 = arith.constant 0 : index
    %c0_7 = arith.constant 0 : index
    %9 = vector.load %arg4[%c0_6, %c0_7] : memref<140x64xf32, #tpu.memory_space<vmem>>, vector<140x64xf32>
    tpu.vector_store %arg4[%c0_6, %c0_7], %8 {strides = array<i32>} : memref<140x64xf32, #tpu.memory_space<vmem>>, vector<140x64xf32>,
    return
  }
  func.func @transform_0(%arg0: i32) -> (i32, i32) {
    %c0_i32 = arith.constant 0 : i32
    %c0_i32_0 = arith.constant 0 : i32
    %c0_i32_1 = arith.constant 0 : i32
    return %c0_i32, %c0_i32_0 : i32, i32
  }
  func.func @transform_1(%arg0: i32) -> (i32, i32) {
    %c0_i32 = arith.constant 0 : i32
    %c0_i32_0 = arith.constant 0 : i32
    %c0_i32_1 = arith.constant 0 : i32
    return %c0_i32, %c0_i32_0 : i32, i32
  }
  func.func @transform_2(%arg0: i32) -> (i32, i32) {
    %c0_i32 = arith.constant 0 : i32
    %c0_i32_0 = arith.constant 0 : i32
    %c0_i32_1 = arith.constant 0 : i32
    return %c0_i32, %c0_i32_0 : i32, i32
  }
  func.func @transform_3(%arg0: i32) -> (i32, i32) {
    %c0_i32 = arith.constant 0 : i32
    %c0_i32_0 = arith.constant 0 : i32
    %c0_i32_1 = arith.constant 0 : i32
    return %c0_i32, %c0_i32_0 : i32, i32
  }
}

module attributes {stable_mosaic.version = 11 : i64} {
  func.func @_fused_fc_kernel(%arg0: i32, %arg1: memref<2x4480xf32, #tpu.memory_space<vmem>>, %arg2: memref<4480x512xbf16, #tpu.memory_space<vmem>>, %arg3: memref<1x512xf32, #tpu.memory_space<vmem>>, %arg4: memref<512x256xbf16, #tpu.memory_space<vmem>>, %arg5: memref<1x256xf32, #tpu.memory_space<vmem>>, %arg6: memref<256x6xbf16, #tpu.memory_space<vmem>>, %arg7: memref<1x6xf32, #tpu.memory_space<vmem>>, %arg8: memref<2x6xf32, #tpu.memory_space<vmem>>) attributes {dimension_semantics = [#tpu.dimension_semantics<arbitrary>], iteration_bounds = array<i64: 1>, scalar_prefetch = 0 : i64, scratch_operands = 0 : i64, tpu.core_type = #tpu.core_type<tc>, window_params = [{pipeline_mode = #tpu.pipeline_mode<synchronous>, transform_indices = @transform_0, window_bounds = array<i64: 2, 4480>}, {pipeline_mode = #tpu.pipeline_mode<synchronous>, transform_indices = @transform_1, window_bounds = array<i64: 4480, 512>}, {pipeline_mode = #tpu.pipeline_mode<synchronous>, transform_indices = @transform_2, window_bounds = array<i64: 1, 512>}, {pipeline_mode = #tpu.pipeline_mode<synchronous>, transform_indices = @transform_3, window_bounds = array<i64: 512, 256>}, {pipeline_mode = #tpu.pipeline_mode<synchronous>, transform_indices = @transform_4, window_bounds = array<i64: 1, 256>}, {pipeline_mode = #tpu.pipeline_mode<synchronous>, transform_indices = @transform_5, window_bounds = array<i64: 256, 6>}, {pipeline_mode = #tpu.pipeline_mode<synchronous>, transform_indices = @transform_6, window_bounds = array<i64: 1, 6>}, {pipeline_mode = #tpu.pipeline_mode<synchronous>, transform_indices = @transform_7, window_bounds = array<i64: 2, 6>}]} {
    %c0 = arith.constant 0 : index
    %c0_0 = arith.constant 0 : index
    %0 = vector.load %arg1[%c0, %c0_0] : memref<2x4480xf32, #tpu.memory_space<vmem>>, vector<2x4480xf32>
    %1 = arith.truncf %0 : vector<2x4480xf32> to vector<2x4480xbf16>
    %c0_1 = arith.constant 0 : index
    %c0_2 = arith.constant 0 : index
    %2 = vector.load %arg2[%c0_1, %c0_2] : memref<4480x512xbf16, #tpu.memory_space<vmem>>, vector<4480x512xbf16>
    %cst = arith.constant dense<0.000000e+00> : vector<2x512xf32>
    %3 = tpu.matmul %1, %2, %cst {dimension_numbers = #tpu.dot_dimension_numbers<[1], [0], [0], [1], [0, 0, 1, 1], [], []>} : vector<2x4480xbf16>, vector<4480x512xbf16>, vector<2x512xf32> -> vector<2x512xf32>
    %c0_3 = arith.constant 0 : index
    %c0_4 = arith.constant 0 : index
    %4 = vector.load %arg3[%c0_3, %c0_4] : memref<1x512xf32, #tpu.memory_space<vmem>>, vector<1x512xf32>
    %5 = vector.broadcast %4 : vector<1x512xf32> to vector<2x512xf32>
    %6 = arith.addf %3, %5 : vector<2x512xf32>
    %cst_5 = arith.constant 0.000000e+00 : f32
    %7 = vector.broadcast %cst_5 : f32 to vector<2x512xf32>
    %8 = arith.maximumf %6, %7 : vector<2x512xf32>
    %9 = arith.truncf %8 : vector<2x512xf32> to vector<2x512xbf16>
    %c0_6 = arith.constant 0 : index
    %c0_7 = arith.constant 0 : index
    %10 = vector.load %arg4[%c0_6, %c0_7] : memref<512x256xbf16, #tpu.memory_space<vmem>>, vector<512x256xbf16>
    %cst_8 = arith.constant dense<0.000000e+00> : vector<2x256xf32>
    %11 = tpu.matmul %9, %10, %cst_8 {dimension_numbers = #tpu.dot_dimension_numbers<[1], [0], [0], [1], [0, 0, 1, 1], [], []>} : vector<2x512xbf16>, vector<512x256xbf16>, vector<2x256xf32> -> vector<2x256xf32>
    %c0_9 = arith.constant 0 : index
    %c0_10 = arith.constant 0 : index
    %12 = vector.load %arg5[%c0_9, %c0_10] : memref<1x256xf32, #tpu.memory_space<vmem>>, vector<1x256xf32>
    %13 = vector.broadcast %12 : vector<1x256xf32> to vector<2x256xf32>
    %14 = arith.addf %11, %13 : vector<2x256xf32>
    %cst_11 = arith.constant 0.000000e+00 : f32
    %15 = vector.broadcast %cst_11 : f32 to vector<2x256xf32>
    %16 = arith.maximumf %14, %15 : vector<2x256xf32>
    %17 = arith.truncf %16 : vector<2x256xf32> to vector<2x256xbf16>
    %c0_12 = arith.constant 0 : index
    %c0_13 = arith.constant 0 : index
    %18 = vector.load %arg6[%c0_12, %c0_13] : memref<256x6xbf16, #tpu.memory_space<vmem>>, vector<256x6xbf16>
    %cst_14 = arith.constant dense<0.000000e+00> : vector<2x6xf32>
    %19 = tpu.matmul %17, %18, %cst_14 {dimension_numbers = #tpu.dot_dimension_numbers<[1], [0], [0], [1], [0, 0, 1, 1], [], []>} : vector<2x256xbf16>, vector<256x6xbf16>, vector<2x6xf32> -> vector<2x6xf32>
    %c0_15 = arith.constant 0 : index
    %c0_16 = arith.constant 0 : index
    %20 = vector.load %arg7[%c0_15, %c0_16] : memref<1x6xf32, #tpu.memory_space<vmem>>, vector<1x6xf32>
    %21 = vector.broadcast %20 : vector<1x6xf32> to vector<2x6xf32>
    %22 = arith.addf %19, %21 : vector<2x6xf32>
    %c0_17 = arith.constant 0 : index
    %c0_18 = arith.constant 0 : index
    %23 = vector.load %arg8[%c0_17, %c0_18] : memref<2x6xf32, #tpu.memory_space<vmem>>, vector<2x6xf32>
    tpu.vector_store %arg8[%c0_17, %c0_18], %22 {strides = array<i32>} : memref<2x6xf32, #tpu.memory_space<vmem>>, vector<2x6xf32>,
    return
  }
  func.func @transform_0(%arg0: i32) -> (i32, i32) {
    %c0_i32 = arith.constant 0 : i32
    %c0_i32_0 = arith.constant 0 : i32
    %c0_i32_1 = arith.constant 0 : i32
    return %c0_i32, %c0_i32_0 : i32, i32
  }
  func.func @transform_1(%arg0: i32) -> (i32, i32) {
    %c0_i32 = arith.constant 0 : i32
    %c0_i32_0 = arith.constant 0 : i32
    %c0_i32_1 = arith.constant 0 : i32
    return %c0_i32, %c0_i32_0 : i32, i32
  }
  func.func @transform_2(%arg0: i32) -> (i32, i32) {
    %c0_i32 = arith.constant 0 : i32
    %c0_i32_0 = arith.constant 0 : i32
    %c0_i32_1 = arith.constant 0 : i32
    return %c0_i32, %c0_i32_0 : i32, i32
  }
  func.func @transform_3(%arg0: i32) -> (i32, i32) {
    %c0_i32 = arith.constant 0 : i32
    %c0_i32_0 = arith.constant 0 : i32
    %c0_i32_1 = arith.constant 0 : i32
    return %c0_i32, %c0_i32_0 : i32, i32
  }
  func.func @transform_4(%arg0: i32) -> (i32, i32) {
    %c0_i32 = arith.constant 0 : i32
    %c0_i32_0 = arith.constant 0 : i32
    %c0_i32_1 = arith.constant 0 : i32
    return %c0_i32, %c0_i32_0 : i32, i32
  }
  func.func @transform_5(%arg0: i32) -> (i32, i32) {
    %c0_i32 = arith.constant 0 : i32
    %c0_i32_0 = arith.constant 0 : i32
    %c0_i32_1 = arith.constant 0 : i32
    return %c0_i32, %c0_i32_0 : i32, i32
  }
  func.func @transform_6(%arg0: i32) -> (i32, i32) {
    %c0_i32 = arith.constant 0 : i32
    %c0_i32_0 = arith.constant 0 : i32
    %c0_i32_1 = arith.constant 0 : i32
    return %c0_i32, %c0_i32_0 : i32, i32
  }
  func.func @transform_7(%arg0: i32) -> (i32, i32) {
    %c0_i32 = arith.constant 0 : i32
    %c0_i32_0 = arith.constant 0 : i32
    %c0_i32_1 = arith.constant 0 : i32
    return %c0_i32, %c0_i32_0 : i32, i32
  }
}

</mosaic_0001>

<llo_original>
// kernel: model_forward.4
$region0: #{model_forward.4}
  #allocation0 [shape = 'u32[]', space=smem, size = 0x4, offset = 0x4, fixed_abs, tag = 'smem constant byte address 0x4 - core index']
  #allocation1 [shape = 'u32[144,128]{1,0:T(1,128)}', space=vmem, size = 0x12000, scoped, tag = 'internal scratch']
  %s0 = inlined_call_operand.vmem [shape: f32[1040,256], index: 0, kind: input, shape index: {}]
  %s1 = inlined_call_operand.vmem [shape: bf16[256,32], index: 1, kind: input, shape index: {}]
  %s2 = inlined_call_operand.vmem [shape: f32[1,32], index: 2, kind: input, shape index: {}]
  %s3 = inlined_call_operand.vmem [shape: f32[1040,32], index: 3, kind: output, shape index: {}]
  %s4 = sld [smem:[#allocation0]]
  $region22: #{model_forward.4} parent=0
    _
  %s6 = ssub.s32 1, %s4
  %s7 = scalar_select 0, %s6, %s4
  // Predicated region
  $region2: #{model_forward.4} parent=0 // pred_check
    _
  $region3: #{model_forward.4} parent=0 // pred_check_branch
    %9 = sbr.rel (0) target = $region5
  $region4: #{model_forward.4} parent=0 // pred_region
    _
  $region5: #{model_forward.4} parent=0 // pred_fallthru
    _
  // Predicated region
  $region6: #{model_forward.4} parent=0 // pred_check
    _
  $region7: #{model_forward.4} parent=0 // pred_check_branch
    %11 = sbr.rel (0) target = $region9
  $region8: #{model_forward.4} parent=0 // pred_region
    _
  $region9: #{model_forward.4} parent=0 // pred_fallthru
    _
  // Predicated region
  $region10: #{model_forward.4} parent=0 // pred_check
    _
  $region11: #{model_forward.4} parent=0 // pred_check_branch
    %13 = sbr.rel (0) target = $region13
  $region12: #{model_forward.4} parent=0 // pred_region
    _
  $region13: #{model_forward.4} parent=0 // pred_fallthru
    _
  %v15 = vld [vmem:[%s0] sm:$0xff]
  %v16 = vld [vmem:[%s0 + $0x8] sm:$0xff]
  %v17 = vld [vmem:[%s0 + $0x10] sm:$0xff]
  %v18 = vld [vmem:[%s0 + $0x18] sm:$0xff]
  %v19 = vld [vmem:[%s0 + $0x20] sm:$0xff]
  %v20 = vld [vmem:[%s0 + $0x28] sm:$0xff]
  %v21 = vld [vmem:[%s0 + $0x30] sm:$0xff]
  %v22 = vld [vmem:[%s0 + $0x38] sm:$0xff]
  %v23 = vld [vmem:[%s0 + $0x40] sm:$0xff]
  %v24 = vld [vmem:[%s0 + $0x48] sm:$0xff]
  %v25 = vld [vmem:[%s0 + $0x50] sm:$0xff]
  %v26 = vld [vmem:[%s0 + $0x58] sm:$0xff]
  %v27 = vld [vmem:[%s0 + $0x60] sm:$0xff]
  %v28 = vld [vmem:[%s0 + $0x68] sm:$0xff]
  %v29 = vld [vmem:[%s0 + $0x70] sm:$0xff]
  %v30 = vld [vmem:[%s0 + $0x78] sm:$0xff]
  %v31 = vld [vmem:[%s0 + $0x80] sm:$0xff]
  %v32 = vld [vmem:[%s0 + $0x88] sm:$0xff]
  %v33 = vld [vmem:[%s0 + $0x90] sm:$0xff]
  %v34 = vld [vmem:[%s0 + $0x98] sm:$0xff]
  %v35 = vld [vmem:[%s0 + $0xa0] sm:$0xff]
  %v36 = vld [vmem:[%s0 + $0xa8] sm:$0xff]
  %v37 = vld [vmem:[%s0 + $0xb0] sm:$0xff]
  %v38 = vld [vmem:[%s0 + $0xb8] sm:$0xff]
  %v39 = vld [vmem:[%s0 + $0xc0] sm:$0xff]
  %v40 = vld [vmem:[%s0 + $0xc8] sm:$0xff]
  %v41 = vld [vmem:[%s0 + $0xd0] sm:$0xff]
  %v42 = vld [vmem:[%s0 + $0xd8] sm:$0xff]
  %v43 = vld [vmem:[%s0 + $0xe0] sm:$0xff]
  %v44 = vld [vmem:[%s0 + $0xe8] sm:$0xff]
  %v45 = vld [vmem:[%s0 + $0xf0] sm:$0xff]
  %v46 = vld [vmem:[%s0 + $0xf8] sm:$0xff]
  %v47 = vld [vmem:[%s0 + $0x100] sm:$0xff]
  %v48 = vld [vmem:[%s0 + $0x108] sm:$0xff]
  %v49 = vld [vmem:[%s0 + $0x110] sm:$0xff]
  %v50 = vld [vmem:[%s0 + $0x118] sm:$0xff]
  %v51 = vld [vmem:[%s0 + $0x120] sm:$0xff]
  %v52 = vld [vmem:[%s0 + $0x128] sm:$0xff]
  %v53 = vld [vmem:[%s0 + $0x130] sm:$0xff]
  %v54 = vld [vmem:[%s0 + $0x138] sm:$0xff]
  %v55 = vld [vmem:[%s0 + $0x140] sm:$0xff]
  %v56 = vld [vmem:[%s0 + $0x148] sm:$0xff]
  %v57 = vld [vmem:[%s0 + $0x150] sm:$0xff]
  %v58 = vld [vmem:[%s0 + $0x158] sm:$0xff]
  %v59 = vld [vmem:[%s0 + $0x160] sm:$0xff]
  %v60 = vld [vmem:[%s0 + $0x168] sm:$0xff]
  %v61 = vld [vmem:[%s0 + $0x170] sm:$0xff]
  %v62 = vld [vmem:[%s0 + $0x178] sm:$0xff]
  %v63 = vld [vmem:[%s0 + $0x180] sm:$0xff]
  %v64 = vld [vmem:[%s0 + $0x188] sm:$0xff]
  %v65 = vld [vmem:[%s0 + $0x190] sm:$0xff]
  %v66 = vld [vmem:[%s0 + $0x198] sm:$0xff]
  %v67 = vld [vmem:[%s0 + $0x1a0] sm:$0xff]
  %v68 = vld [vmem:[%s0 + $0x1a8] sm:$0xff]
  %v69 = vld [vmem:[%s0 + $0x1b0] sm:$0xff]
  %v70 = vld [vmem:[%s0 + $0x1b8] sm:$0xff]
  %v71 = vld [vmem:[%s0 + $0x1c0] sm:$0xff]
  %v72 = vld [vmem:[%s0 + $0x1c8] sm:$0xff]
  %v73 = vld [vmem:[%s0 + $0x1d0] sm:$0xff]
  %v74 = vld [vmem:[%s0 + $0x1d8] sm:$0xff]
  %v75 = vld [vmem:[%s0 + $0x1e0] sm:$0xff]
  %v76 = vld [vmem:[%s0 + $0x1e8] sm:$0xff]
  %v77 = vld [vmem:[%s0 + $0x1f0] sm:$0xff]
  %v78 = vld [vmem:[%s0 + $0x1f8] sm:$0xff]
  %v79 = vld [vmem:[%s0 + $0x200] sm:$0xff]
  %v80 = vld [vmem:[%s0 + $0x208] sm:$0xff]
  %v81 = vld [vmem:[%s0 + $0x210] sm:$0xff]
  %v82 = vld [vmem:[%s0 + $0x218] sm:$0xff]
  %v83 = vld [vmem:[%s0 + $0x220] sm:$0xff]
  %v84 = vld [vmem:[%s0 + $0x228] sm:$0xff]
  %v85 = vld [vmem:[%s0 + $0x230] sm:$0xff]
  %v86 = vld [vmem:[%s0 + $0x238] sm:$0xff]
  %v87 = vld [vmem:[%s0 + $0x240] sm:$0xff]
  %v88 = vld [vmem:[%s0 + $0x248] sm:$0xff]
  %v89 = vld [vmem:[%s0 + $0x250] sm:$0xff]
  %v90 = vld [vmem:[%s0 + $0x258] sm:$0xff]
  %v91 = vld [vmem:[%s0 + $0x260] sm:$0xff]
  %v92 = vld [vmem:[%s0 + $0x268] sm:$0xff]
  %v93 = vld [vmem:[%s0 + $0x270] sm:$0xff]
  %v94 = vld [vmem:[%s0 + $0x278] sm:$0xff]
  %v95 = vld [vmem:[%s0 + $0x280] sm:$0xff]
  %v96 = vld [vmem:[%s0 + $0x288] sm:$0xff]
  %v97 = vld [vmem:[%s0 + $0x290] sm:$0xff]
  %v98 = vld [vmem:[%s0 + $0x298] sm:$0xff]
  %v99 = vld [vmem:[%s0 + $0x2a0] sm:$0xff]
  %v100 = vld [vmem:[%s0 + $0x2a8] sm:$0xff]
  %v101 = vld [vmem:[%s0 + $0x2b0] sm:$0xff]
  %v102 = vld [vmem:[%s0 + $0x2b8] sm:$0xff]
  %v103 = vld [vmem:[%s0 + $0x2c0] sm:$0xff]
  %v104 = vld [vmem:[%s0 + $0x2c8] sm:$0xff]
  %v105 = vld [vmem:[%s0 + $0x2d0] sm:$0xff]
  %v106 = vld [vmem:[%s0 + $0x2d8] sm:$0xff]
  %v107 = vld [vmem:[%s0 + $0x2e0] sm:$0xff]
  %v108 = vld [vmem:[%s0 + $0x2e8] sm:$0xff]
  %v109 = vld [vmem:[%s0 + $0x2f0] sm:$0xff]
  %v110 = vld [vmem:[%s0 + $0x2f8] sm:$0xff]
  %v111 = vld [vmem:[%s0 + $0x300] sm:$0xff]
  %v112 = vld [vmem:[%s0 + $0x308] sm:$0xff]
  %v113 = vld [vmem:[%s0 + $0x310] sm:$0xff]
  %v114 = vld [vmem:[%s0 + $0x318] sm:$0xff]
  %v115 = vld [vmem:[%s0 + $0x320] sm:$0xff]
  %v116 = vld [vmem:[%s0 + $0x328] sm:$0xff]
  %v117 = vld [vmem:[%s0 + $0x330] sm:$0xff]
  %v118 = vld [vmem:[%s0 + $0x338] sm:$0xff]
  %v119 = vld [vmem:[%s0 + $0x340] sm:$0xff]
  %v120 = vld [vmem:[%s0 + $0x348] sm:$0xff]
  %v121 = vld [vmem:[%s0 + $0x350] sm:$0xff]
  %v122 = vld [vmem:[%s0 + $0x358] sm:$0xff]
  %v123 = vld [vmem:[%s0 + $0x360] sm:$0xff]
  %v124 = vld [vmem:[%s0 + $0x368] sm:$0xff]
  %v125 = vld [vmem:[%s0 + $0x370] sm:$0xff]
  %v126 = vld [vmem:[%s0 + $0x378] sm:$0xff]
  %v127 = vld [vmem:[%s0 + $0x380] sm:$0xff]
  %v128 = vld [vmem:[%s0 + $0x388] sm:$0xff]
  %v129 = vld [vmem:[%s0 + $0x390] sm:$0xff]
  %v130 = vld [vmem:[%s0 + $0x398] sm:$0xff]
  %v131 = vld [vmem:[%s0 + $0x3a0] sm:$0xff]
  %v132 = vld [vmem:[%s0 + $0x3a8] sm:$0xff]
  %v133 = vld [vmem:[%s0 + $0x3b0] sm:$0xff]
  %v134 = vld [vmem:[%s0 + $0x3b8] sm:$0xff]
  %v135 = vld [vmem:[%s0 + $0x3c0] sm:$0xff]
  %v136 = vld [vmem:[%s0 + $0x3c8] sm:$0xff]
  %v137 = vld [vmem:[%s0 + $0x3d0] sm:$0xff]
  %v138 = vld [vmem:[%s0 + $0x3d8] sm:$0xff]
  %v139 = vld [vmem:[%s0 + $0x3e0] sm:$0xff]
  %v140 = vld [vmem:[%s0 + $0x3e8] sm:$0xff]
  %v141 = vld [vmem:[%s0 + $0x3f0] sm:$0xff]
  %v142 = vld [vmem:[%s0 + $0x3f8] sm:$0xff]
  %v143 = vld [vmem:[%s0 + $0x400] sm:$0xff]
  %v144 = vld [vmem:[%s0 + $0x408] sm:$0xff]
  %v145 = vld [vmem:[%s0 + $0x410] sm:$0xff]
  %v146 = vld [vmem:[%s0 + $0x418] sm:$0xff]
  %v147 = vld [vmem:[%s0 + $0x420] sm:$0xff]
  %v148 = vld [vmem:[%s0 + $0x428] sm:$0xff]
  %v149 = vld [vmem:[%s0 + $0x430] sm:$0xff]
  %v150 = vld [vmem:[%s0 + $0x438] sm:$0xff]
  %v151 = vld [vmem:[%s0 + $0x440] sm:$0xff]
  %v152 = vld [vmem:[%s0 + $0x448] sm:$0xff]
  %v153 = vld [vmem:[%s0 + $0x450] sm:$0xff]
  %v154 = vld [vmem:[%s0 + $0x458] sm:$0xff]
  %v155 = vld [vmem:[%s0 + $0x460] sm:$0xff]
  %v156 = vld [vmem:[%s0 + $0x468] sm:$0xff]
  %v157 = vld [vmem:[%s0 + $0x470] sm:$0xff]
  %v158 = vld [vmem:[%s0 + $0x478] sm:$0xff]
  %v159 = vld [vmem:[%s0 + $0x480] sm:$0xff]
  %v160 = vld [vmem:[%s0 + $0x488] sm:$0xff]
  %v161 = vld [vmem:[%s0 + $0x490] sm:$0xff]
  %v162 = vld [vmem:[%s0 + $0x498] sm:$0xff]
  %v163 = vld [vmem:[%s0 + $0x4a0] sm:$0xff]
  %v164 = vld [vmem:[%s0 + $0x4a8] sm:$0xff]
  %v165 = vld [vmem:[%s0 + $0x4b0] sm:$0xff]
  %v166 = vld [vmem:[%s0 + $0x4b8] sm:$0xff]
  %v167 = vld [vmem:[%s0 + $0x4c0] sm:$0xff]
  %v168 = vld [vmem:[%s0 + $0x4c8] sm:$0xff]
  %v169 = vld [vmem:[%s0 + $0x4d0] sm:$0xff]
  %v170 = vld [vmem:[%s0 + $0x4d8] sm:$0xff]
  %v171 = vld [vmem:[%s0 + $0x4e0] sm:$0xff]
  %v172 = vld [vmem:[%s0 + $0x4e8] sm:$0xff]
  %v173 = vld [vmem:[%s0 + $0x4f0] sm:$0xff]
  %v174 = vld [vmem:[%s0 + $0x4f8] sm:$0xff]
  %v175 = vld [vmem:[%s0 + $0x500] sm:$0xff]
  %v176 = vld [vmem:[%s0 + $0x508] sm:$0xff]
  %v177 = vld [vmem:[%s0 + $0x510] sm:$0xff]
  %v178 = vld [vmem:[%s0 + $0x518] sm:$0xff]
  %v179 = vld [vmem:[%s0 + $0x520] sm:$0xff]
  %v180 = vld [vmem:[%s0 + $0x528] sm:$0xff]
  %v181 = vld [vmem:[%s0 + $0x530] sm:$0xff]
  %v182 = vld [vmem:[%s0 + $0x538] sm:$0xff]
  %v183 = vld [vmem:[%s0 + $0x540] sm:$0xff]
  %v184 = vld [vmem:[%s0 + $0x548] sm:$0xff]
  %v185 = vld [vmem:[%s0 + $0x550] sm:$0xff]
  %v186 = vld [vmem:[%s0 + $0x558] sm:$0xff]
  %v187 = vld [vmem:[%s0 + $0x560] sm:$0xff]
  %v188 = vld [vmem:[%s0 + $0x568] sm:$0xff]
  %v189 = vld [vmem:[%s0 + $0x570] sm:$0xff]
  %v190 = vld [vmem:[%s0 + $0x578] sm:$0xff]
  %v191 = vld [vmem:[%s0 + $0x580] sm:$0xff]
  %v192 = vld [vmem:[%s0 + $0x588] sm:$0xff]
  %v193 = vld [vmem:[%s0 + $0x590] sm:$0xff]
  %v194 = vld [vmem:[%s0 + $0x598] sm:$0xff]
  %v195 = vld [vmem:[%s0 + $0x5a0] sm:$0xff]
  %v196 = vld [vmem:[%s0 + $0x5a8] sm:$0xff]
  %v197 = vld [vmem:[%s0 + $0x5b0] sm:$0xff]
  %v198 = vld [vmem:[%s0 + $0x5b8] sm:$0xff]
  %v199 = vld [vmem:[%s0 + $0x5c0] sm:$0xff]
  %v200 = vld [vmem:[%s0 + $0x5c8] sm:$0xff]
  %v201 = vld [vmem:[%s0 + $0x5d0] sm:$0xff]
  %v202 = vld [vmem:[%s0 + $0x5d8] sm:$0xff]
  %v203 = vld [vmem:[%s0 + $0x5e0] sm:$0xff]
  %v204 = vld [vmem:[%s0 + $0x5e8] sm:$0xff]
  %v205 = vld [vmem:[%s0 + $0x5f0] sm:$0xff]
  %v206 = vld [vmem:[%s0 + $0x5f8] sm:$0xff]
  %v207 = vld [vmem:[%s0 + $0x600] sm:$0xff]
  %v208 = vld [vmem:[%s0 + $0x608] sm:$0xff]
  %v209 = vld [vmem:[%s0 + $0x610] sm:$0xff]
  %v210 = vld [vmem:[%s0 + $0x618] sm:$0xff]
  %v211 = vld [vmem:[%s0 + $0x620] sm:$0xff]
  %v212 = vld [vmem:[%s0 + $0x628] sm:$0xff]
  %v213 = vld [vmem:[%s0 + $0x630] sm:$0xff]
  %v214 = vld [vmem:[%s0 + $0x638] sm:$0xff]
  %v215 = vld [vmem:[%s0 + $0x640] sm:$0xff]
  %v216 = vld [vmem:[%s0 + $0x648] sm:$0xff]
  %v217 = vld [vmem:[%s0 + $0x650] sm:$0xff]
  %v218 = vld [vmem:[%s0 + $0x658] sm:$0xff]
  %v219 = vld [vmem:[%s0 + $0x660] sm:$0xff]
  %v220 = vld [vmem:[%s0 + $0x668] sm:$0xff]
  %v221 = vld [vmem:[%s0 + $0x670] sm:$0xff]
  %v222 = vld [vmem:[%s0 + $0x678] sm:$0xff]
  %v223 = vld [vmem:[%s0 + $0x680] sm:$0xff]
  %v224 = vld [vmem:[%s0 + $0x688] sm:$0xff]
  %v225 = vld [vmem:[%s0 + $0x690] sm:$0xff]
  %v226 = vld [vmem:[%s0 + $0x698] sm:$0xff]
  %v227 = vld [vmem:[%s0 + $0x6a0] sm:$0xff]
  %v228 = vld [vmem:[%s0 + $0x6a8] sm:$0xff]
  %v229 = vld [vmem:[%s0 + $0x6b0] sm:$0xff]
  %v230 = vld [vmem:[%s0 + $0x6b8] sm:$0xff]
  %v231 = vld [vmem:[%s0 + $0x6c0] sm:$0xff]
  %v232 = vld [vmem:[%s0 + $0x6c8] sm:$0xff]
  %v233 = vld [vmem:[%s0 + $0x6d0] sm:$0xff]
  %v234 = vld [vmem:[%s0 + $0x6d8] sm:$0xff]
  %v235 = vld [vmem:[%s0 + $0x6e0] sm:$0xff]
  %v236 = vld [vmem:[%s0 + $0x6e8] sm:$0xff]
  %v237 = vld [vmem:[%s0 + $0x6f0] sm:$0xff]
  %v238 = vld [vmem:[%s0 + $0x6f8] sm:$0xff]
  %v239 = vld [vmem:[%s0 + $0x700] sm:$0xff]
  %v240 = vld [vmem:[%s0 + $0x708] sm:$0xff]
  %v241 = vld [vmem:[%s0 + $0x710] sm:$0xff]
  %v242 = vld [vmem:[%s0 + $0x718] sm:$0xff]
  %v243 = vld [vmem:[%s0 + $0x720] sm:$0xff]
  %v244 = vld [vmem:[%s0 + $0x728] sm:$0xff]
  %v245 = vld [vmem:[%s0 + $0x730] sm:$0xff]
  %v246 = vld [vmem:[%s0 + $0x738] sm:$0xff]
  %v247 = vld [vmem:[%s0 + $0x740] sm:$0xff]
  %v248 = vld [vmem:[%s0 + $0x748] sm:$0xff]
  %v249 = vld [vmem:[%s0 + $0x750] sm:$0xff]
  %v250 = vld [vmem:[%s0 + $0x758] sm:$0xff]
  %v251 = vld [vmem:[%s0 + $0x760] sm:$0xff]
  %v252 = vld [vmem:[%s0 + $0x768] sm:$0xff]
  %v253 = vld [vmem:[%s0 + $0x770] sm:$0xff]
  %v254 = vld [vmem:[%s0 + $0x778] sm:$0xff]
  %v255 = vld [vmem:[%s0 + $0x780] sm:$0xff]
  %v256 = vld [vmem:[%s0 + $0x788] sm:$0xff]
  %v257 = vld [vmem:[%s0 + $0x790] sm:$0xff]
  %v258 = vld [vmem:[%s0 + $0x798] sm:$0xff]
  %v259 = vld [vmem:[%s0 + $0x7a0] sm:$0xff]
  %v260 = vld [vmem:[%s0 + $0x7a8] sm:$0xff]
  %v261 = vld [vmem:[%s0 + $0x7b0] sm:$0xff]
  %v262 = vld [vmem:[%s0 + $0x7b8] sm:$0xff]
  %v263 = vld [vmem:[%s0 + $0x7c0] sm:$0xff]
  %v264 = vld [vmem:[%s0 + $0x7c8] sm:$0xff]
  %v265 = vld [vmem:[%s0 + $0x7d0] sm:$0xff]
  %v266 = vld [vmem:[%s0 + $0x7d8] sm:$0xff]
  %v267 = vld [vmem:[%s0 + $0x7e0] sm:$0xff]
  %v268 = vld [vmem:[%s0 + $0x7e8] sm:$0xff]
  %v269 = vld [vmem:[%s0 + $0x7f0] sm:$0xff]
  %v270 = vld [vmem:[%s0 + $0x7f8] sm:$0xff]
  %v271 = vld [vmem:[%s0 + $0x800] sm:$0xff]
  %v272 = vld [vmem:[%s0 + $0x808] sm:$0xff]
  %v273 = vld [vmem:[%s0 + $0x810] sm:$0xff]
  %v274 = vld [vmem:[%s0 + $0x818] sm:$0xff]
  %v275 = vpack.c.bf16 %v17, %v15
  %v276 = vpack.c.bf16 %v18, %v16
  %v277 = vpack.c.bf16 %v21, %v19
  %v278 = vpack.c.bf16 %v22, %v20
  %v279 = vpack.c.bf16 %v25, %v23
  %v280 = vpack.c.bf16 %v26, %v24
  %v281 = vpack.c.bf16 %v29, %v27
  %v282 = vpack.c.bf16 %v30, %v28
  %v283 = vpack.c.bf16 %v33, %v31
  %v284 = vpack.c.bf16 %v34, %v32
  %v285 = vpack.c.bf16 %v37, %v35
  %v286 = vpack.c.bf16 %v38, %v36
  %v287 = vpack.c.bf16 %v41, %v39
  %v288 = vpack.c.bf16 %v42, %v40
  %v289 = vpack.c.bf16 %v45, %v43
  %v290 = vpack.c.bf16 %v46, %v44
  %v291 = vpack.c.bf16 %v49, %v47
  %v292 = vpack.c.bf16 %v50, %v48
  %v293 = vpack.c.bf16 %v53, %v51
  %v294 = vpack.c.bf16 %v54, %v52
  %v295 = vpack.c.bf16 %v57, %v55
  %v296 = vpack.c.bf16 %v58, %v56
  %v297 = vpack.c.bf16 %v61, %v59
  %v298 = vpack.c.bf16 %v62, %v60
  %v299 = vpack.c.bf16 %v65, %v63
  %v300 = vpack.c.bf16 %v66, %v64
  %v301 = vpack.c.bf16 %v69, %v67
  %v302 = vpack.c.bf16 %v70, %v68
  %v303 = vpack.c.bf16 %v73, %v71
  %v304 = vpack.c.bf16 %v74, %v72
  %v305 = vpack.c.bf16 %v77, %v75
  %v306 = vpack.c.bf16 %v78, %v76
  %v307 = vpack.c.bf16 %v81, %v79
  %v308 = vpack.c.bf16 %v82, %v80
  %v309 = vpack.c.bf16 %v85, %v83
  %v310 = vpack.c.bf16 %v86, %v84
  %v311 = vpack.c.bf16 %v89, %v87
  %v312 = vpack.c.bf16 %v90, %v88
  %v313 = vpack.c.bf16 %v93, %v91
  %v314 = vpack.c.bf16 %v94, %v92
  %v315 = vpack.c.bf16 %v97, %v95
  %v316 = vpack.c.bf16 %v98, %v96
  %v317 = vpack.c.bf16 %v101, %v99
  %v318 = vpack.c.bf16 %v102, %v100
  %v319 = vpack.c.bf16 %v105, %v103
  %v320 = vpack.c.bf16 %v106, %v104
  %v321 = vpack.c.bf16 %v109, %v107
  %v322 = vpack.c.bf16 %v110, %v108
  %v323 = vpack.c.bf16 %v113, %v111
  %v324 = vpack.c.bf16 %v114, %v112
  %v325 = vpack.c.bf16 %v117, %v115
  %v326 = vpack.c.bf16 %v118, %v116
  %v327 = vpack.c.bf16 %v121, %v119
  %v328 = vpack.c.bf16 %v122, %v120
  %v329 = vpack.c.bf16 %v125, %v123
  %v330 = vpack.c.bf16 %v126, %v124
  %v331 = vpack.c.bf16 %v129, %v127
  %v332 = vpack.c.bf16 %v130, %v128
  %v333 = vpack.c.bf16 %v133, %v131
  %v334 = vpack.c.bf16 %v134, %v132
  %v335 = vpack.c.bf16 %v137, %v135
  %v336 = vpack.c.bf16 %v138, %v136
  %v337 = vpack.c.bf16 %v141, %v139
  %v338 = vpack.c.bf16 %v142, %v140
  %v339 = vpack.c.bf16 %v145, %v143
  %v340 = vpack.c.bf16 %v146, %v144
  %v341 = vpack.c.bf16 %v149, %v147
  %v342 = vpack.c.bf16 %v150, %v148
  %v343 = vpack.c.bf16 %v153, %v151
  %v344 = vpack.c.bf16 %v154, %v152
  %v345 = vpack.c.bf16 %v157, %v155
  %v346 = vpack.c.bf16 %v158, %v156
  %v347 = vpack.c.bf16 %v161, %v159
  %v348 = vpack.c.bf16 %v162, %v160
  %v349 = vpack.c.bf16 %v165, %v163
  %v350 = vpack.c.bf16 %v166, %v164
  %v351 = vpack.c.bf16 %v169, %v167
  %v352 = vpack.c.bf16 %v170, %v168
  %v353 = vpack.c.bf16 %v173, %v171
  %v354 = vpack.c.bf16 %v174, %v172
  %v355 = vpack.c.bf16 %v177, %v175
  %v356 = vpack.c.bf16 %v178, %v176
  %v357 = vpack.c.bf16 %v181, %v179
  %v358 = vpack.c.bf16 %v182, %v180
  %v359 = vpack.c.bf16 %v185, %v183
  %v360 = vpack.c.bf16 %v186, %v184
  %v361 = vpack.c.bf16 %v189, %v187
  %v362 = vpack.c.bf16 %v190, %v188
  %v363 = vpack.c.bf16 %v193, %v191
  %v364 = vpack.c.bf16 %v194, %v192
  %v365 = vpack.c.bf16 %v197, %v195
  %v366 = vpack.c.bf16 %v198, %v196
  %v367 = vpack.c.bf16 %v201, %v199
  %v368 = vpack.c.bf16 %v202, %v200
  %v369 = vpack.c.bf16 %v205, %v203
  %v370 = vpack.c.bf16 %v206, %v204
  %v371 = vpack.c.bf16 %v209, %v207
  %v372 = vpack.c.bf16 %v210, %v208
  %v373 = vpack.c.bf16 %v213, %v211
  %v374 = vpack.c.bf16 %v214, %v212
  %v375 = vpack.c.bf16 %v217, %v215
  %v376 = vpack.c.bf16 %v218, %v216
  %v377 = vpack.c.bf16 %v221, %v219
  %v378 = vpack.c.bf16 %v222, %v220
  %v379 = vpack.c.bf16 %v225, %v223
  %v380 = vpack.c.bf16 %v226, %v224
  %v381 = vpack.c.bf16 %v229, %v227
  %v382 = vpack.c.bf16 %v230, %v228
  %v383 = vpack.c.bf16 %v233, %v231
  %v384 = vpack.c.bf16 %v234, %v232
  %v385 = vpack.c.bf16 %v237, %v235
  %v386 = vpack.c.bf16 %v238, %v236
  %v387 = vpack.c.bf16 %v241, %v239
  %v388 = vpack.c.bf16 %v242, %v240
  %v389 = vpack.c.bf16 %v245, %v243
  %v390 = vpack.c.bf16 %v246, %v244
  %v391 = vpack.c.bf16 %v249, %v247
  %v392 = vpack.c.bf16 %v250, %v248
  %v393 = vpack.c.bf16 %v253, %v251
  %v394 = vpack.c.bf16 %v254, %v252
  %v395 = vpack.c.bf16 %v257, %v255
  %v396 = vpack.c.bf16 %v258, %v256
  %v397 = vpack.c.bf16 %v261, %v259
  %v398 = vpack.c.bf16 %v262, %v260
  %v399 = vpack.c.bf16 %v265, %v263
  %v400 = vpack.c.bf16 %v266, %v264
  %v401 = vpack.c.bf16 %v269, %v267
  %v402 = vpack.c.bf16 %v270, %v268
  %v403 = vpack.c.bf16 %v273, %v271
  %v404 = vpack.c.bf16 %v274, %v272
  %v405 = vld [vmem:[%s1] sm:$0xf]
  %v406 = vld [vmem:[%s1 + $0x4] sm:$0xf]
  %v407 = vld [vmem:[%s1 + $0x8] sm:$0xf]
  %v408 = vld [vmem:[%s1 + $0xc] sm:$0xf]
  %v409 = vld [vmem:[%s1 + $0x10] sm:$0xf]
  %v410 = vld [vmem:[%s1 + $0x14] sm:$0xf]
  %v411 = vld [vmem:[%s1 + $0x18] sm:$0xf]
  %v412 = vld [vmem:[%s1 + $0x1c] sm:$0xf]
  %v413 = vld [vmem:[%s1 + $0x20] sm:$0xf]
  %v414 = vld [vmem:[%s1 + $0x24] sm:$0xf]
  %v415 = vld [vmem:[%s1 + $0x28] sm:$0xf]
  %v416 = vld [vmem:[%s1 + $0x2c] sm:$0xf]
  %v417 = vld [vmem:[%s1 + $0x30] sm:$0xf]
  %v418 = vld [vmem:[%s1 + $0x34] sm:$0xf]
  %v419 = vld [vmem:[%s1 + $0x38] sm:$0xf]
  %v420 = vld [vmem:[%s1 + $0x3c] sm:$0xf]
  %v421 = vld [vmem:[%s1 + $0x40] sm:$0xf]
  %v422 = vld [vmem:[%s1 + $0x44] sm:$0xf]
  %v423 = vld [vmem:[%s1 + $0x48] sm:$0xf]
  %v424 = vld [vmem:[%s1 + $0x4c] sm:$0xf]
  %v425 = vld [vmem:[%s1 + $0x50] sm:$0xf]
  %v426 = vld [vmem:[%s1 + $0x54] sm:$0xf]
  %v427 = vld [vmem:[%s1 + $0x58] sm:$0xf]
  %v428 = vld [vmem:[%s1 + $0x5c] sm:$0xf]
  %v429 = vld [vmem:[%s1 + $0x60] sm:$0xf]
  %v430 = vld [vmem:[%s1 + $0x64] sm:$0xf]
  %v431 = vld [vmem:[%s1 + $0x68] sm:$0xf]
  %v432 = vld [vmem:[%s1 + $0x6c] sm:$0xf]
  %v433 = vld [vmem:[%s1 + $0x70] sm:$0xf]
  %v434 = vld [vmem:[%s1 + $0x74] sm:$0xf]
  %v435 = vld [vmem:[%s1 + $0x78] sm:$0xf]
  %v436 = vld [vmem:[%s1 + $0x7c] sm:$0xf]
  %v437 = vld [vmem:[%s2] sm:$0x1]
  %v439 = vlaneseq
  %v440 = vshrl.u32 %v439, 7
  %v441 = vsub.s32 0, %v440
  %v442 = vrot.slane %v437, %v441
  %v476 = vunpack.c.l.b16 %v405
  %v477 = vunpack.c.l.b16 %v406
  %v478 = vunpack.c.l.b16 %v407
  %v479 = vunpack.c.l.b16 %v408
  %v480 = vunpack.c.l.b16 %v409
  %v481 = vunpack.c.l.b16 %v410
  %v482 = vunpack.c.l.b16 %v411
  %v483 = vunpack.c.l.b16 %v412
  %v484 = vunpack.c.l.b16 %v413
  %v485 = vunpack.c.l.b16 %v414
  %v486 = vunpack.c.l.b16 %v415
  %v487 = vunpack.c.l.b16 %v416
  %v488 = vunpack.c.l.b16 %v417
  %v489 = vunpack.c.l.b16 %v418
  %v490 = vunpack.c.l.b16 %v419
  %v491 = vunpack.c.l.b16 %v420
  %v492 = vunpack.c.l.b16 %v421
  %v493 = vunpack.c.l.b16 %v422
  %v494 = vunpack.c.l.b16 %v423
  %v495 = vunpack.c.l.b16 %v424
  %v496 = vunpack.c.l.b16 %v425
  %v497 = vunpack.c.l.b16 %v426
  %v498 = vunpack.c.l.b16 %v427
  %v499 = vunpack.c.l.b16 %v428
  %v500 = vunpack.c.l.b16 %v429
  %v501 = vunpack.c.l.b16 %v430
  %v502 = vunpack.c.l.b16 %v431
  %v503 = vunpack.c.l.b16 %v432
  %v504 = vunpack.c.l.b16 %v433
  %v505 = vunpack.c.l.b16 %v434
  %v506 = vunpack.c.l.b16 %v435
  %v507 = vunpack.c.l.b16 %v436
  %v508 = vpack.c.b16 %v477, %v476
  %v509 = vpack.c.b16 %v479, %v478
  %v510 = vpack.c.b16 %v481, %v480
  %v511 = vpack.c.b16 %v483, %v482
  %v512 = vpack.c.b16 %v485, %v484
  %v513 = vpack.c.b16 %v487, %v486
  %v514 = vpack.c.b16 %v489, %v488
  %v515 = vpack.c.b16 %v491, %v490
  %v516 = vpack.c.b16 %v493, %v492
  %v517 = vpack.c.b16 %v495, %v494
  %v518 = vpack.c.b16 %v497, %v496
  %v519 = vpack.c.b16 %v499, %v498
  %v520 = vpack.c.b16 %v501, %v500
  %v521 = vpack.c.b16 %v503, %v502
  %v522 = vpack.c.b16 %v505, %v504
  %v523 = vpack.c.b16 %v507, %v506
  %540 = vmatprep.subr.bf16.mxu0 0
  %541 = vmatpush1.bf16.msra.mxu0 %v515
  %542 = vmatprep.subr.bf16.mxu0 0
  %543 = vmatpush1.bf16.msra.mxu0 %v514
  %544 = vmatprep.subr.bf16.mxu0 0
  %545 = vmatpush1.bf16.msra.mxu0 %v513
  %546 = vmatprep.subr.bf16.mxu0 0
  %547 = vmatpush1.bf16.msra.mxu0 %v512
  %548 = vmatprep.subr.bf16.mxu0 0
  %549 = vmatpush1.bf16.msra.mxu0 %v511
  %550 = vmatprep.subr.bf16.mxu0 0
  %551 = vmatpush1.bf16.msra.mxu0 %v510
  %552 = vmatprep.subr.bf16.mxu0 0
  %553 = vmatpush1.bf16.msra.mxu0 %v509
  %554 = vmatprep.subr.bf16.mxu0 0
  %555 = vmatpush1.bf16.msra.mxu0 %v508
  %556 = vmatprep.subr.bf16.mxu0 0
  %557 = vmatpush2.bf16.msra.mxu0 %v523
  %558 = vmatprep.subr.bf16.mxu0 0
  %559 = vmatpush2.bf16.msra.mxu0 %v522
  %560 = vmatprep.subr.bf16.mxu0 0
  %561 = vmatpush2.bf16.msra.mxu0 %v521
  %562 = vmatprep.subr.bf16.mxu0 0
  %563 = vmatpush2.bf16.msra.mxu0 %v520
  %564 = vmatprep.subr.bf16.mxu0 0
  %565 = vmatpush2.bf16.msra.mxu0 %v519
  %566 = vmatprep.subr.bf16.mxu0 0
  %567 = vmatpush2.bf16.msra.mxu0 %v518
  %568 = vmatprep.subr.bf16.mxu0 0
  %569 = vmatpush2.bf16.msra.mxu0 %v517
  %570 = vmatprep.subr.bf16.mxu0 0
  %571 = vmatpush2.bf16.msra.mxu0 %v516
  %572 = vmatprep.mubr.bf16.mxu0 %v276
  %573 = vmatmul.mubr.bf16.gmra.mxu0 %v275
  %v574 = vpop.f32.mrf.mxu0
  %v575 = vadd.f32 %v442, %v574
  %v576 = vpop.f32.mrf.mxu0
  %v577 = vpop.f32.mrf.mxu0
  %v578 = vadd.f32 %v442, %v577
  %v579 = vpop.f32.mrf.mxu0
  %580 = vmatprep.mubr.bf16.mxu0 %v278
  %581 = vmatmul.mubr.bf16.gmra.mxu0 %v277
  %v582 = vpop.f32.mrf.mxu0
  %v583 = vadd.f32 %v442, %v582
  %v584 = vpop.f32.mrf.mxu0
  %v585 = vpop.f32.mrf.mxu0
  %v586 = vadd.f32 %v442, %v585
  %v587 = vpop.f32.mrf.mxu0
  %588 = vmatprep.mubr.bf16.mxu0 %v280
  %589 = vmatmul.mubr.bf16.gmra.mxu0 %v279
  %v590 = vpop.f32.mrf.mxu0
  %v591 = vadd.f32 %v442, %v590
  %v592 = vpop.f32.mrf.mxu0
  %v593 = vpop.f32.mrf.mxu0
  %v594 = vadd.f32 %v442, %v593
  %v595 = vpop.f32.mrf.mxu0
  %596 = vmatprep.mubr.bf16.mxu0 %v282
  %597 = vmatmul.mubr.bf16.gmra.mxu0 %v281
  %v598 = vpop.f32.mrf.mxu0
  %v599 = vadd.f32 %v442, %v598
  %v600 = vpop.f32.mrf.mxu0
  %v601 = vpop.f32.mrf.mxu0
  %v602 = vadd.f32 %v442, %v601
  %v603 = vpop.f32.mrf.mxu0
  %604 = vmatprep.mubr.bf16.mxu0 %v284
  %605 = vmatmul.mubr.bf16.gmra.mxu0 %v283
  %v606 = vpop.f32.mrf.mxu0
  %v607 = vadd.f32 %v442, %v606
  %v608 = vpop.f32.mrf.mxu0
  %v609 = vpop.f32.mrf.mxu0
  %v610 = vadd.f32 %v442, %v609
  %v611 = vpop.f32.mrf.mxu0
  %612 = vmatprep.mubr.bf16.mxu0 %v286
  %613 = vmatmul.mubr.bf16.gmra.mxu0 %v285
  %v614 = vpop.f32.mrf.mxu0
  %v615 = vadd.f32 %v442, %v614
  %v616 = vpop.f32.mrf.mxu0
  %v617 = vpop.f32.mrf.mxu0
  %v618 = vadd.f32 %v442, %v617
  %v619 = vpop.f32.mrf.mxu0
  %620 = vmatprep.mubr.bf16.mxu0 %v288
  %621 = vmatmul.mubr.bf16.gmra.mxu0 %v287
  %v622 = vpop.f32.mrf.mxu0
  %v623 = vadd.f32 %v442, %v622
  %v624 = vpop.f32.mrf.mxu0
  %v625 = vpop.f32.mrf.mxu0
  %v626 = vadd.f32 %v442, %v625
  %v627 = vpop.f32.mrf.mxu0
  %628 = vmatprep.mubr.bf16.mxu0 %v290
  %629 = vmatmul.mubr.bf16.gmra.mxu0 %v289
  %v630 = vpop.f32.mrf.mxu0
  %v631 = vadd.f32 %v442, %v630
  %v632 = vpop.f32.mrf.mxu0
  %v633 = vpop.f32.mrf.mxu0
  %v634 = vadd.f32 %v442, %v633
  %v635 = vpop.f32.mrf.mxu0
  %636 = vmatprep.mubr.bf16.mxu0 %v292
  %637 = vmatmul.mubr.bf16.gmra.mxu0 %v291
  %v638 = vpop.f32.mrf.mxu0
  %v639 = vadd.f32 %v442, %v638
  %v640 = vpop.f32.mrf.mxu0
  %v641 = vpop.f32.mrf.mxu0
  %v642 = vadd.f32 %v442, %v641
  %v643 = vpop.f32.mrf.mxu0
  %644 = vmatprep.mubr.bf16.mxu0 %v294
  %645 = vmatmul.mubr.bf16.gmra.mxu0 %v293
  %v646 = vpop.f32.mrf.mxu0
  %v647 = vadd.f32 %v442, %v646
  %v648 = vpop.f32.mrf.mxu0
  %v649 = vpop.f32.mrf.mxu0
  %v650 = vadd.f32 %v442, %v649
  %v651 = vpop.f32.mrf.mxu0
  %652 = vmatprep.mubr.bf16.mxu0 %v296
  %653 = vmatmul.mubr.bf16.gmra.mxu0 %v295
  %v654 = vpop.f32.mrf.mxu0
  %v655 = vadd.f32 %v442, %v654
  %v656 = vpop.f32.mrf.mxu0
  %v657 = vpop.f32.mrf.mxu0
  %v658 = vadd.f32 %v442, %v657
  %v659 = vpop.f32.mrf.mxu0
  %660 = vmatprep.mubr.bf16.mxu0 %v298
  %661 = vmatmul.mubr.bf16.gmra.mxu0 %v297
  %v662 = vpop.f32.mrf.mxu0
  %v663 = vadd.f32 %v442, %v662
  %v664 = vpop.f32.mrf.mxu0
  %v665 = vpop.f32.mrf.mxu0
  %v666 = vadd.f32 %v442, %v665
  %v667 = vpop.f32.mrf.mxu0
  %668 = vmatprep.mubr.bf16.mxu0 %v300
  %669 = vmatmul.mubr.bf16.gmra.mxu0 %v299
  %v670 = vpop.f32.mrf.mxu0
  %v671 = vadd.f32 %v442, %v670
  %v672 = vpop.f32.mrf.mxu0
  %v673 = vpop.f32.mrf.mxu0
  %v674 = vadd.f32 %v442, %v673
  %v675 = vpop.f32.mrf.mxu0
  %676 = vmatprep.mubr.bf16.mxu0 %v302
  %677 = vmatmul.mubr.bf16.gmra.mxu0 %v301
  %v678 = vpop.f32.mrf.mxu0
  %v679 = vadd.f32 %v442, %v678
  %v680 = vpop.f32.mrf.mxu0
  %v681 = vpop.f32.mrf.mxu0
  %v682 = vadd.f32 %v442, %v681
  %v683 = vpop.f32.mrf.mxu0
  %684 = vmatprep.mubr.bf16.mxu0 %v304
  %685 = vmatmul.mubr.bf16.gmra.mxu0 %v303
  %v686 = vpop.f32.mrf.mxu0
  %v687 = vadd.f32 %v442, %v686
  %v688 = vpop.f32.mrf.mxu0
  %v689 = vpop.f32.mrf.mxu0
  %v690 = vadd.f32 %v442, %v689
  %v691 = vpop.f32.mrf.mxu0
  %692 = vmatprep.mubr.bf16.mxu0 %v306
  %693 = vmatmul.mubr.bf16.gmra.mxu0 %v305
  %v694 = vpop.f32.mrf.mxu0
  %v695 = vadd.f32 %v442, %v694
  %v696 = vpop.f32.mrf.mxu0
  %v697 = vpop.f32.mrf.mxu0
  %v698 = vadd.f32 %v442, %v697
  %v699 = vpop.f32.mrf.mxu0
  %700 = vmatprep.mubr.bf16.mxu0 %v308
  %701 = vmatmul.mubr.bf16.gmra.mxu0 %v307
  %v702 = vpop.f32.mrf.mxu0
  %v703 = vadd.f32 %v442, %v702
  %v704 = vpop.f32.mrf.mxu0
  %v705 = vpop.f32.mrf.mxu0
  %v706 = vadd.f32 %v442, %v705
  %v707 = vpop.f32.mrf.mxu0
  %708 = vmatprep.mubr.bf16.mxu0 %v310
  %709 = vmatmul.mubr.bf16.gmra.mxu0 %v309
  %v710 = vpop.f32.mrf.mxu0
  %v711 = vadd.f32 %v442, %v710
  %v712 = vpop.f32.mrf.mxu0
  %v713 = vpop.f32.mrf.mxu0
  %v714 = vadd.f32 %v442, %v713
  %v715 = vpop.f32.mrf.mxu0
  %716 = vmatprep.mubr.bf16.mxu0 %v312
  %717 = vmatmul.mubr.bf16.gmra.mxu0 %v311
  %v718 = vpop.f32.mrf.mxu0
  %v719 = vadd.f32 %v442, %v718
  %v720 = vpop.f32.mrf.mxu0
  %v721 = vpop.f32.mrf.mxu0
  %v722 = vadd.f32 %v442, %v721
  %v723 = vpop.f32.mrf.mxu0
  %724 = vmatprep.mubr.bf16.mxu0 %v314
  %725 = vmatmul.mubr.bf16.gmra.mxu0 %v313
  %v726 = vpop.f32.mrf.mxu0
  %v727 = vadd.f32 %v442, %v726
  %v728 = vpop.f32.mrf.mxu0
  %v729 = vpop.f32.mrf.mxu0
  %v730 = vadd.f32 %v442, %v729
  %v731 = vpop.f32.mrf.mxu0
  %732 = vmatprep.mubr.bf16.mxu0 %v316
  %733 = vmatmul.mubr.bf16.gmra.mxu0 %v315
  %v734 = vpop.f32.mrf.mxu0
  %v735 = vadd.f32 %v442, %v734
  %v736 = vpop.f32.mrf.mxu0
  %v737 = vpop.f32.mrf.mxu0
  %v738 = vadd.f32 %v442, %v737
  %v739 = vpop.f32.mrf.mxu0
  %740 = vmatprep.mubr.bf16.mxu0 %v318
  %741 = vmatmul.mubr.bf16.gmra.mxu0 %v317
  %v742 = vpop.f32.mrf.mxu0
  %v743 = vadd.f32 %v442, %v742
  %v744 = vpop.f32.mrf.mxu0
  %v745 = vpop.f32.mrf.mxu0
  %v746 = vadd.f32 %v442, %v745
  %v747 = vpop.f32.mrf.mxu0
  %748 = vmatprep.mubr.bf16.mxu0 %v320
  %749 = vmatmul.mubr.bf16.gmra.mxu0 %v319
  %v750 = vpop.f32.mrf.mxu0
  %v751 = vadd.f32 %v442, %v750
  %v752 = vpop.f32.mrf.mxu0
  %v753 = vpop.f32.mrf.mxu0
  %v754 = vadd.f32 %v442, %v753
  %v755 = vpop.f32.mrf.mxu0
  %756 = vmatprep.mubr.bf16.mxu0 %v322
  %757 = vmatmul.mubr.bf16.gmra.mxu0 %v321
  %v758 = vpop.f32.mrf.mxu0
  %v759 = vadd.f32 %v442, %v758
  %v760 = vpop.f32.mrf.mxu0
  %v761 = vpop.f32.mrf.mxu0
  %v762 = vadd.f32 %v442, %v761
  %v763 = vpop.f32.mrf.mxu0
  %764 = vmatprep.mubr.bf16.mxu0 %v324
  %765 = vmatmul.mubr.bf16.gmra.mxu0 %v323
  %v766 = vpop.f32.mrf.mxu0
  %v767 = vadd.f32 %v442, %v766
  %v768 = vpop.f32.mrf.mxu0
  %v769 = vpop.f32.mrf.mxu0
  %v770 = vadd.f32 %v442, %v769
  %v771 = vpop.f32.mrf.mxu0
  %772 = vmatprep.mubr.bf16.mxu0 %v326
  %773 = vmatmul.mubr.bf16.gmra.mxu0 %v325
  %v774 = vpop.f32.mrf.mxu0
  %v775 = vadd.f32 %v442, %v774
  %v776 = vpop.f32.mrf.mxu0
  %v777 = vpop.f32.mrf.mxu0
  %v778 = vadd.f32 %v442, %v777
  %v779 = vpop.f32.mrf.mxu0
  %780 = vmatprep.mubr.bf16.mxu0 %v328
  %781 = vmatmul.mubr.bf16.gmra.mxu0 %v327
  %v782 = vpop.f32.mrf.mxu0
  %v783 = vadd.f32 %v442, %v782
  %v784 = vpop.f32.mrf.mxu0
  %v785 = vpop.f32.mrf.mxu0
  %v786 = vadd.f32 %v442, %v785
  %v787 = vpop.f32.mrf.mxu0
  %788 = vmatprep.mubr.bf16.mxu0 %v330
  %789 = vmatmul.mubr.bf16.gmra.mxu0 %v329
  %v790 = vpop.f32.mrf.mxu0
  %v791 = vadd.f32 %v442, %v790
  %v792 = vpop.f32.mrf.mxu0
  %v793 = vpop.f32.mrf.mxu0
  %v794 = vadd.f32 %v442, %v793
  %v795 = vpop.f32.mrf.mxu0
  %796 = vmatprep.mubr.bf16.mxu0 %v332
  %797 = vmatmul.mubr.bf16.gmra.mxu0 %v331
  %v798 = vpop.f32.mrf.mxu0
  %v799 = vadd.f32 %v442, %v798
  %v800 = vpop.f32.mrf.mxu0
  %v801 = vpop.f32.mrf.mxu0
  %v802 = vadd.f32 %v442, %v801
  %v803 = vpop.f32.mrf.mxu0
  %804 = vmatprep.mubr.bf16.mxu0 %v334
  %805 = vmatmul.mubr.bf16.gmra.mxu0 %v333
  %v806 = vpop.f32.mrf.mxu0
  %v807 = vadd.f32 %v442, %v806
  %v808 = vpop.f32.mrf.mxu0
  %v809 = vpop.f32.mrf.mxu0
  %v810 = vadd.f32 %v442, %v809
  %v811 = vpop.f32.mrf.mxu0
  %812 = vmatprep.mubr.bf16.mxu0 %v336
  %813 = vmatmul.mubr.bf16.gmra.mxu0 %v335
  %v814 = vpop.f32.mrf.mxu0
  %v815 = vadd.f32 %v442, %v814
  %v816 = vpop.f32.mrf.mxu0
  %v817 = vpop.f32.mrf.mxu0
  %v818 = vadd.f32 %v442, %v817
  %v819 = vpop.f32.mrf.mxu0
  %820 = vmatprep.mubr.bf16.mxu0 %v338
  %821 = vmatmul.mubr.bf16.gmra.mxu0 %v337
  %v822 = vpop.f32.mrf.mxu0
  %v823 = vadd.f32 %v442, %v822
  %v824 = vpop.f32.mrf.mxu0
  %v825 = vpop.f32.mrf.mxu0
  %v826 = vadd.f32 %v442, %v825
  %v827 = vpop.f32.mrf.mxu0
  %828 = vmatprep.mubr.bf16.mxu0 %v340
  %829 = vmatmul.mubr.bf16.gmra.mxu0 %v339
  %v830 = vpop.f32.mrf.mxu0
  %v831 = vadd.f32 %v442, %v830
  %v832 = vpop.f32.mrf.mxu0
  %v833 = vpop.f32.mrf.mxu0
  %v834 = vadd.f32 %v442, %v833
  %v835 = vpop.f32.mrf.mxu0
  %836 = vmatprep.mubr.bf16.mxu0 %v342
  %837 = vmatmul.mubr.bf16.gmra.mxu0 %v341
  %v838 = vpop.f32.mrf.mxu0
  %v839 = vadd.f32 %v442, %v838
  %v840 = vpop.f32.mrf.mxu0
  %v841 = vpop.f32.mrf.mxu0
  %v842 = vadd.f32 %v442, %v841
  %v843 = vpop.f32.mrf.mxu0
  %844 = vmatprep.mubr.bf16.mxu0 %v344
  %845 = vmatmul.mubr.bf16.gmra.mxu0 %v343
  %v846 = vpop.f32.mrf.mxu0
  %v847 = vadd.f32 %v442, %v846
  %v848 = vpop.f32.mrf.mxu0
  %v849 = vpop.f32.mrf.mxu0
  %v850 = vadd.f32 %v442, %v849
  %v851 = vpop.f32.mrf.mxu0
  %852 = vmatprep.mubr.bf16.mxu0 %v346
  %853 = vmatmul.mubr.bf16.gmra.mxu0 %v345
  %v854 = vpop.f32.mrf.mxu0
  %v855 = vadd.f32 %v442, %v854
  %v856 = vpop.f32.mrf.mxu0
  %v857 = vpop.f32.mrf.mxu0
  %v858 = vadd.f32 %v442, %v857
  %v859 = vpop.f32.mrf.mxu0
  %860 = vmatprep.mubr.bf16.mxu0 %v348
  %861 = vmatmul.mubr.bf16.gmra.mxu0 %v347
  %v862 = vpop.f32.mrf.mxu0
  %v863 = vadd.f32 %v442, %v862
  %v864 = vpop.f32.mrf.mxu0
  %v865 = vpop.f32.mrf.mxu0
  %v866 = vadd.f32 %v442, %v865
  %v867 = vpop.f32.mrf.mxu0
  %868 = vmatprep.mubr.bf16.mxu0 %v350
  %869 = vmatmul.mubr.bf16.gmra.mxu0 %v349
  %v870 = vpop.f32.mrf.mxu0
  %v871 = vadd.f32 %v442, %v870
  %v872 = vpop.f32.mrf.mxu0
  %v873 = vpop.f32.mrf.mxu0
  %v874 = vadd.f32 %v442, %v873
  %v875 = vpop.f32.mrf.mxu0
  %876 = vmatprep.mubr.bf16.mxu0 %v352
  %877 = vmatmul.mubr.bf16.gmra.mxu0 %v351
  %v878 = vpop.f32.mrf.mxu0
  %v879 = vadd.f32 %v442, %v878
  %v880 = vpop.f32.mrf.mxu0
  %v881 = vpop.f32.mrf.mxu0
  %v882 = vadd.f32 %v442, %v881
  %v883 = vpop.f32.mrf.mxu0
  %884 = vmatprep.mubr.bf16.mxu0 %v354
  %885 = vmatmul.mubr.bf16.gmra.mxu0 %v353
  %v886 = vpop.f32.mrf.mxu0
  %v887 = vadd.f32 %v442, %v886
  %v888 = vpop.f32.mrf.mxu0
  %v889 = vpop.f32.mrf.mxu0
  %v890 = vadd.f32 %v442, %v889
  %v891 = vpop.f32.mrf.mxu0
  %892 = vmatprep.mubr.bf16.mxu0 %v356
  %893 = vmatmul.mubr.bf16.gmra.mxu0 %v355
  %v894 = vpop.f32.mrf.mxu0
  %v895 = vadd.f32 %v442, %v894
  %v896 = vpop.f32.mrf.mxu0
  %v897 = vpop.f32.mrf.mxu0
  %v898 = vadd.f32 %v442, %v897
  %v899 = vpop.f32.mrf.mxu0
  %900 = vmatprep.mubr.bf16.mxu0 %v358
  %901 = vmatmul.mubr.bf16.gmra.mxu0 %v357
  %v902 = vpop.f32.mrf.mxu0
  %v903 = vadd.f32 %v442, %v902
  %v904 = vpop.f32.mrf.mxu0
  %v905 = vpop.f32.mrf.mxu0
  %v906 = vadd.f32 %v442, %v905
  %v907 = vpop.f32.mrf.mxu0
  %908 = vmatprep.mubr.bf16.mxu0 %v360
  %909 = vmatmul.mubr.bf16.gmra.mxu0 %v359
  %v910 = vpop.f32.mrf.mxu0
  %v911 = vadd.f32 %v442, %v910
  %v912 = vpop.f32.mrf.mxu0
  %v913 = vpop.f32.mrf.mxu0
  %v914 = vadd.f32 %v442, %v913
  %v915 = vpop.f32.mrf.mxu0
  %916 = vmatprep.mubr.bf16.mxu0 %v362
  %917 = vmatmul.mubr.bf16.gmra.mxu0 %v361
  %v918 = vpop.f32.mrf.mxu0
  %v919 = vadd.f32 %v442, %v918
  %v920 = vpop.f32.mrf.mxu0
  %v921 = vpop.f32.mrf.mxu0
  %v922 = vadd.f32 %v442, %v921
  %v923 = vpop.f32.mrf.mxu0
  %924 = vmatprep.mubr.bf16.mxu0 %v364
  %925 = vmatmul.mubr.bf16.gmra.mxu0 %v363
  %v926 = vpop.f32.mrf.mxu0
  %v927 = vadd.f32 %v442, %v926
  %v928 = vpop.f32.mrf.mxu0
  %v929 = vpop.f32.mrf.mxu0
  %v930 = vadd.f32 %v442, %v929
  %v931 = vpop.f32.mrf.mxu0
  %932 = vmatprep.mubr.bf16.mxu0 %v366
  %933 = vmatmul.mubr.bf16.gmra.mxu0 %v365
  %v934 = vpop.f32.mrf.mxu0
  %v935 = vadd.f32 %v442, %v934
  %v936 = vpop.f32.mrf.mxu0
  %v937 = vpop.f32.mrf.mxu0
  %v938 = vadd.f32 %v442, %v937
  %v939 = vpop.f32.mrf.mxu0
  %940 = vmatprep.mubr.bf16.mxu0 %v368
  %941 = vmatmul.mubr.bf16.gmra.mxu0 %v367
  %v942 = vpop.f32.mrf.mxu0
  %v943 = vadd.f32 %v442, %v942
  %v944 = vpop.f32.mrf.mxu0
  %v945 = vpop.f32.mrf.mxu0
  %v946 = vadd.f32 %v442, %v945
  %v947 = vpop.f32.mrf.mxu0
  %948 = vmatprep.mubr.bf16.mxu0 %v370
  %949 = vmatmul.mubr.bf16.gmra.mxu0 %v369
  %v950 = vpop.f32.mrf.mxu0
  %v951 = vadd.f32 %v442, %v950
  %v952 = vpop.f32.mrf.mxu0
  %v953 = vpop.f32.mrf.mxu0
  %v954 = vadd.f32 %v442, %v953
  %v955 = vpop.f32.mrf.mxu0
  %956 = vmatprep.mubr.bf16.mxu0 %v372
  %957 = vmatmul.mubr.bf16.gmra.mxu0 %v371
  %v958 = vpop.f32.mrf.mxu0
  %v959 = vadd.f32 %v442, %v958
  %v960 = vpop.f32.mrf.mxu0
  %v961 = vpop.f32.mrf.mxu0
  %v962 = vadd.f32 %v442, %v961
  %v963 = vpop.f32.mrf.mxu0
  %964 = vmatprep.mubr.bf16.mxu0 %v374
  %965 = vmatmul.mubr.bf16.gmra.mxu0 %v373
  %v966 = vpop.f32.mrf.mxu0
  %v967 = vadd.f32 %v442, %v966
  %v968 = vpop.f32.mrf.mxu0
  %v969 = vpop.f32.mrf.mxu0
  %v970 = vadd.f32 %v442, %v969
  %v971 = vpop.f32.mrf.mxu0
  %972 = vmatprep.mubr.bf16.mxu0 %v376
  %973 = vmatmul.mubr.bf16.gmra.mxu0 %v375
  %v974 = vpop.f32.mrf.mxu0
  %v975 = vadd.f32 %v442, %v974
  %v976 = vpop.f32.mrf.mxu0
  %v977 = vpop.f32.mrf.mxu0
  %v978 = vadd.f32 %v442, %v977
  %v979 = vpop.f32.mrf.mxu0
  %980 = vmatprep.mubr.bf16.mxu0 %v378
  %981 = vmatmul.mubr.bf16.gmra.mxu0 %v377
  %v982 = vpop.f32.mrf.mxu0
  %v983 = vadd.f32 %v442, %v982
  %v984 = vpop.f32.mrf.mxu0
  %v985 = vpop.f32.mrf.mxu0
  %v986 = vadd.f32 %v442, %v985
  %v987 = vpop.f32.mrf.mxu0
  %988 = vmatprep.mubr.bf16.mxu0 %v380
  %989 = vmatmul.mubr.bf16.gmra.mxu0 %v379
  %v990 = vpop.f32.mrf.mxu0
  %v991 = vadd.f32 %v442, %v990
  %v992 = vpop.f32.mrf.mxu0
  %v993 = vpop.f32.mrf.mxu0
  %v994 = vadd.f32 %v442, %v993
  %v995 = vpop.f32.mrf.mxu0
  %996 = vmatprep.mubr.bf16.mxu0 %v382
  %997 = vmatmul.mubr.bf16.gmra.mxu0 %v381
  %v998 = vpop.f32.mrf.mxu0
  %v999 = vadd.f32 %v442, %v998
  %v1000 = vpop.f32.mrf.mxu0
  %v1001 = vpop.f32.mrf.mxu0
  %v1002 = vadd.f32 %v442, %v1001
  %v1003 = vpop.f32.mrf.mxu0
  %1004 = vmatprep.mubr.bf16.mxu0 %v384
  %1005 = vmatmul.mubr.bf16.gmra.mxu0 %v383
  %v1006 = vpop.f32.mrf.mxu0
  %v1007 = vadd.f32 %v442, %v1006
  %v1008 = vpop.f32.mrf.mxu0
  %v1009 = vpop.f32.mrf.mxu0
  %v1010 = vadd.f32 %v442, %v1009
  %v1011 = vpop.f32.mrf.mxu0
  %1012 = vmatprep.mubr.bf16.mxu0 %v386
  %1013 = vmatmul.mubr.bf16.gmra.mxu0 %v385
  %v1014 = vpop.f32.mrf.mxu0
  %v1015 = vadd.f32 %v442, %v1014
  %v1016 = vpop.f32.mrf.mxu0
  %v1017 = vpop.f32.mrf.mxu0
  %v1018 = vadd.f32 %v442, %v1017
  %v1019 = vpop.f32.mrf.mxu0
  %1020 = vmatprep.mubr.bf16.mxu0 %v388
  %1021 = vmatmul.mubr.bf16.gmra.mxu0 %v387
  %v1022 = vpop.f32.mrf.mxu0
  %v1023 = vadd.f32 %v442, %v1022
  %v1024 = vpop.f32.mrf.mxu0
  %v1025 = vpop.f32.mrf.mxu0
  %v1026 = vadd.f32 %v442, %v1025
  %v1027 = vpop.f32.mrf.mxu0
  %1028 = vmatprep.mubr.bf16.mxu0 %v390
  %1029 = vmatmul.mubr.bf16.gmra.mxu0 %v389
  %v1030 = vpop.f32.mrf.mxu0
  %v1031 = vadd.f32 %v442, %v1030
  %v1032 = vpop.f32.mrf.mxu0
  %v1033 = vpop.f32.mrf.mxu0
  %v1034 = vadd.f32 %v442, %v1033
  %v1035 = vpop.f32.mrf.mxu0
  %1036 = vmatprep.mubr.bf16.mxu0 %v392
  %1037 = vmatmul.mubr.bf16.gmra.mxu0 %v391
  %v1038 = vpop.f32.mrf.mxu0
  %v1039 = vadd.f32 %v442, %v1038
  %v1040 = vpop.f32.mrf.mxu0
  %v1041 = vpop.f32.mrf.mxu0
  %v1042 = vadd.f32 %v442, %v1041
  %v1043 = vpop.f32.mrf.mxu0
  %1044 = vmatprep.mubr.bf16.mxu0 %v394
  %1045 = vmatmul.mubr.bf16.gmra.mxu0 %v393
  %v1046 = vpop.f32.mrf.mxu0
  %v1047 = vadd.f32 %v442, %v1046
  %v1048 = vpop.f32.mrf.mxu0
  %v1049 = vpop.f32.mrf.mxu0
  %v1050 = vadd.f32 %v442, %v1049
  %v1051 = vpop.f32.mrf.mxu0
  %1052 = vmatprep.mubr.bf16.mxu0 %v396
  %1053 = vmatmul.mubr.bf16.gmra.mxu0 %v395
  %v1054 = vpop.f32.mrf.mxu0
  %v1055 = vadd.f32 %v442, %v1054
  %v1056 = vpop.f32.mrf.mxu0
  %v1057 = vpop.f32.mrf.mxu0
  %v1058 = vadd.f32 %v442, %v1057
  %v1059 = vpop.f32.mrf.mxu0
  %1060 = vmatprep.mubr.bf16.mxu0 %v398
  %1061 = vmatmul.mubr.bf16.gmra.mxu0 %v397
  %v1062 = vpop.f32.mrf.mxu0
  %v1063 = vadd.f32 %v442, %v1062
  %v1064 = vpop.f32.mrf.mxu0
  %v1065 = vpop.f32.mrf.mxu0
  %v1066 = vadd.f32 %v442, %v1065
  %v1067 = vpop.f32.mrf.mxu0
  %1068 = vmatprep.mubr.bf16.mxu0 %v400
  %1069 = vmatmul.mubr.bf16.gmra.mxu0 %v399
  %v1070 = vpop.f32.mrf.mxu0
  %v1071 = vadd.f32 %v442, %v1070
  %v1072 = vpop.f32.mrf.mxu0
  %v1073 = vpop.f32.mrf.mxu0
  %v1074 = vadd.f32 %v442, %v1073
  %v1075 = vpop.f32.mrf.mxu0
  %1076 = vmatprep.mubr.bf16.mxu0 %v402
  %1077 = vmatmul.mubr.bf16.gmra.mxu0 %v401
  %v1078 = vpop.f32.mrf.mxu0
  %v1079 = vadd.f32 %v442, %v1078
  %v1080 = vpop.f32.mrf.mxu0
  %v1081 = vpop.f32.mrf.mxu0
  %v1082 = vadd.f32 %v442, %v1081
  %v1083 = vpop.f32.mrf.mxu0
  %1084 = vmatprep.mubr.bf16.mxu0 %v404
  %1085 = vmatmul.mubr.bf16.gmra.mxu0 %v403
  %v1086 = vpop.f32.mrf.mxu0
  %v1087 = vadd.f32 %v442, %v1086
  %v1088 = vpop.f32.mrf.mxu0
  %v1089 = vpop.f32.mrf.mxu0
  %v1090 = vadd.f32 %v442, %v1089
  %v1091 = vpop.f32.mrf.mxu0
  %1092 = vdwg.mxu0
  %v1093 = vmax.f32 %v575, 0.0
  %v1094 = vmax.f32 %v578, 0.0
  %v1095 = vmax.f32 %v583, 0.0
  %v1096 = vmax.f32 %v586, 0.0
  %v1097 = vmax.f32 %v591, 0.0
  %v1098 = vmax.f32 %v594, 0.0
  %v1099 = vmax.f32 %v599, 0.0
  %v1100 = vmax.f32 %v602, 0.0
  %v1101 = vmax.f32 %v607, 0.0
  %v1102 = vmax.f32 %v610, 0.0
  %v1103 = vmax.f32 %v615, 0.0
  %v1104 = vmax.f32 %v618, 0.0
  %v1105 = vmax.f32 %v623, 0.0
  %v1106 = vmax.f32 %v626, 0.0
  %v1107 = vmax.f32 %v631, 0.0
  %v1108 = vmax.f32 %v634, 0.0
  %v1109 = vmax.f32 %v639, 0.0
  %v1110 = vmax.f32 %v642, 0.0
  %v1111 = vmax.f32 %v647, 0.0
  %v1112 = vmax.f32 %v650, 0.0
  %v1113 = vmax.f32 %v655, 0.0
  %v1114 = vmax.f32 %v658, 0.0
  %v1115 = vmax.f32 %v663, 0.0
  %v1116 = vmax.f32 %v666, 0.0
  %v1117 = vmax.f32 %v671, 0.0
  %v1118 = vmax.f32 %v674, 0.0
  %v1119 = vmax.f32 %v679, 0.0
  %v1120 = vmax.f32 %v682, 0.0
  %v1121 = vmax.f32 %v687, 0.0
  %v1122 = vmax.f32 %v690, 0.0
  %v1123 = vmax.f32 %v695, 0.0
  %v1124 = vmax.f32 %v698, 0.0
  %v1125 = vmax.f32 %v703, 0.0
  %v1126 = vmax.f32 %v706, 0.0
  %v1127 = vmax.f32 %v711, 0.0
  %v1128 = vmax.f32 %v714, 0.0
  %v1129 = vmax.f32 %v719, 0.0
  %v1130 = vmax.f32 %v722, 0.0
  %v1131 = vmax.f32 %v727, 0.0
  %v1132 = vmax.f32 %v730, 0.0
  %v1133 = vmax.f32 %v735, 0.0
  %v1134 = vmax.f32 %v738, 0.0
  %v1135 = vmax.f32 %v743, 0.0
  %v1136 = vmax.f32 %v746, 0.0
  %v1137 = vmax.f32 %v751, 0.0
  %v1138 = vmax.f32 %v754, 0.0
  %v1139 = vmax.f32 %v759, 0.0
  %v1140 = vmax.f32 %v762, 0.0
  %v1141 = vmax.f32 %v767, 0.0
  %v1142 = vmax.f32 %v770, 0.0
  %v1143 = vmax.f32 %v775, 0.0
  %v1144 = vmax.f32 %v778, 0.0
  %v1145 = vmax.f32 %v783, 0.0
  %v1146 = vmax.f32 %v786, 0.0
  %v1147 = vmax.f32 %v791, 0.0
  %v1148 = vmax.f32 %v794, 0.0
  %v1149 = vmax.f32 %v799, 0.0
  %v1150 = vmax.f32 %v802, 0.0
  %v1151 = vmax.f32 %v807, 0.0
  %v1152 = vmax.f32 %v810, 0.0
  %v1153 = vmax.f32 %v815, 0.0
  %v1154 = vmax.f32 %v818, 0.0
  %v1155 = vmax.f32 %v823, 0.0
  %v1156 = vmax.f32 %v826, 0.0
  %v1157 = vmax.f32 %v831, 0.0
  %v1158 = vmax.f32 %v834, 0.0
  %v1159 = vmax.f32 %v839, 0.0
  %v1160 = vmax.f32 %v842, 0.0
  %v1161 = vmax.f32 %v847, 0.0
  %v1162 = vmax.f32 %v850, 0.0
  %v1163 = vmax.f32 %v855, 0.0
  %v1164 = vmax.f32 %v858, 0.0
  %v1165 = vmax.f32 %v863, 0.0
  %v1166 = vmax.f32 %v866, 0.0
  %v1167 = vmax.f32 %v871, 0.0
  %v1168 = vmax.f32 %v874, 0.0
  %v1169 = vmax.f32 %v879, 0.0
  %v1170 = vmax.f32 %v882, 0.0
  %v1171 = vmax.f32 %v887, 0.0
  %v1172 = vmax.f32 %v890, 0.0
  %v1173 = vmax.f32 %v895, 0.0
  %v1174 = vmax.f32 %v898, 0.0
  %v1175 = vmax.f32 %v903, 0.0
  %v1176 = vmax.f32 %v906, 0.0
  %v1177 = vmax.f32 %v911, 0.0
  %v1178 = vmax.f32 %v914, 0.0
  %v1179 = vmax.f32 %v919, 0.0
  %v1180 = vmax.f32 %v922, 0.0
  %v1181 = vmax.f32 %v927, 0.0
  %v1182 = vmax.f32 %v930, 0.0
  %v1183 = vmax.f32 %v935, 0.0
  %v1184 = vmax.f32 %v938, 0.0
  %v1185 = vmax.f32 %v943, 0.0
  %v1186 = vmax.f32 %v946, 0.0
  %v1187 = vmax.f32 %v951, 0.0
  %v1188 = vmax.f32 %v954, 0.0
  %v1189 = vmax.f32 %v959, 0.0
  %v1190 = vmax.f32 %v962, 0.0
  %v1191 = vmax.f32 %v967, 0.0
  %v1192 = vmax.f32 %v970, 0.0
  %v1193 = vmax.f32 %v975, 0.0
  %v1194 = vmax.f32 %v978, 0.0
  %v1195 = vmax.f32 %v983, 0.0
  %v1196 = vmax.f32 %v986, 0.0
  %v1197 = vmax.f32 %v991, 0.0
  %v1198 = vmax.f32 %v994, 0.0
  %v1199 = vmax.f32 %v999, 0.0
  %v1200 = vmax.f32 %v1002, 0.0
  %v1201 = vmax.f32 %v1007, 0.0
  %v1202 = vmax.f32 %v1010, 0.0
  %v1203 = vmax.f32 %v1015, 0.0
  %v1204 = vmax.f32 %v1018, 0.0
  %v1205 = vmax.f32 %v1023, 0.0
  %v1206 = vmax.f32 %v1026, 0.0
  %v1207 = vmax.f32 %v1031, 0.0
  %v1208 = vmax.f32 %v1034, 0.0
  %v1209 = vmax.f32 %v1039, 0.0
  %v1210 = vmax.f32 %v1042, 0.0
  %v1211 = vmax.f32 %v1047, 0.0
  %v1212 = vmax.f32 %v1050, 0.0
  %v1213 = vmax.f32 %v1055, 0.0
  %v1214 = vmax.f32 %v1058, 0.0
  %v1215 = vmax.f32 %v1063, 0.0
  %v1216 = vmax.f32 %v1066, 0.0
  %v1217 = vmax.f32 %v1071, 0.0
  %v1218 = vmax.f32 %v1074, 0.0
  %v1219 = vmax.f32 %v1079, 0.0
  %v1220 = vmax.f32 %v1082, 0.0
  %v1221 = vmax.f32 %v1087, 0.0
  %v1222 = vmax.f32 %v1090, 0.0
  %vm1223 = vcmask 261120
  %1224 = vst.msk [vmem:[%s3] sm:$0xff] %vm1223, %v1093
  %1225 = vst.msk [vmem:[%s3 + $0x8] sm:$0xff] %vm1223, %v1094
  %1226 = vst.msk [vmem:[%s3 + $0x10] sm:$0xff] %vm1223, %v1095
  %1227 = vst.msk [vmem:[%s3 + $0x18] sm:$0xff] %vm1223, %v1096
  %1228 = vst.msk [vmem:[%s3 + $0x20] sm:$0xff] %vm1223, %v1097
  %1229 = vst.msk [vmem:[%s3 + $0x28] sm:$0xff] %vm1223, %v1098
  %1230 = vst.msk [vmem:[%s3 + $0x30] sm:$0xff] %vm1223, %v1099
  %1231 = vst.msk [vmem:[%s3 + $0x38] sm:$0xff] %vm1223, %v1100
  %1232 = vst.msk [vmem:[%s3 + $0x40] sm:$0xff] %vm1223, %v1101
  %1233 = vst.msk [vmem:[%s3 + $0x48] sm:$0xff] %vm1223, %v1102
  %1234 = vst.msk [vmem:[%s3 + $0x50] sm:$0xff] %vm1223, %v1103
  %1235 = vst.msk [vmem:[%s3 + $0x58] sm:$0xff] %vm1223, %v1104
  %1236 = vst.msk [vmem:[%s3 + $0x60] sm:$0xff] %vm1223, %v1105
  %1237 = vst.msk [vmem:[%s3 + $0x68] sm:$0xff] %vm1223, %v1106
  %1238 = vst.msk [vmem:[%s3 + $0x70] sm:$0xff] %vm1223, %v1107
  %1239 = vst.msk [vmem:[%s3 + $0x78] sm:$0xff] %vm1223, %v1108
  %1240 = vst.msk [vmem:[%s3 + $0x80] sm:$0xff] %vm1223, %v1109
  %1241 = vst.msk [vmem:[%s3 + $0x88] sm:$0xff] %vm1223, %v1110
  %1242 = vst.msk [vmem:[%s3 + $0x90] sm:$0xff] %vm1223, %v1111
  %1243 = vst.msk [vmem:[%s3 + $0x98] sm:$0xff] %vm1223, %v1112
  %1244 = vst.msk [vmem:[%s3 + $0xa0] sm:$0xff] %vm1223, %v1113
  %1245 = vst.msk [vmem:[%s3 + $0xa8] sm:$0xff] %vm1223, %v1114
  %1246 = vst.msk [vmem:[%s3 + $0xb0] sm:$0xff] %vm1223, %v1115
  %1247 = vst.msk [vmem:[%s3 + $0xb8] sm:$0xff] %vm1223, %v1116
  %1248 = vst.msk [vmem:[%s3 + $0xc0] sm:$0xff] %vm1223, %v1117
  %1249 = vst.msk [vmem:[%s3 + $0xc8] sm:$0xff] %vm1223, %v1118
  %1250 = vst.msk [vmem:[%s3 + $0xd0] sm:$0xff] %vm1223, %v1119
  %1251 = vst.msk [vmem:[%s3 + $0xd8] sm:$0xff] %vm1223, %v1120
  %1252 = vst.msk [vmem:[%s3 + $0xe0] sm:$0xff] %vm1223, %v1121
  %1253 = vst.msk [vmem:[%s3 + $0xe8] sm:$0xff] %vm1223, %v1122
  %1254 = vst.msk [vmem:[%s3 + $0xf0] sm:$0xff] %vm1223, %v1123
  %1255 = vst.msk [vmem:[%s3 + $0xf8] sm:$0xff] %vm1223, %v1124
  %1256 = vst.msk [vmem:[%s3 + $0x100] sm:$0xff] %vm1223, %v1125
  %1257 = vst.msk [vmem:[%s3 + $0x108] sm:$0xff] %vm1223, %v1126
  %1258 = vst.msk [vmem:[%s3 + $0x110] sm:$0xff] %vm1223, %v1127
  %1259 = vst.msk [vmem:[%s3 + $0x118] sm:$0xff] %vm1223, %v1128
  %1260 = vst.msk [vmem:[%s3 + $0x120] sm:$0xff] %vm1223, %v1129
  %1261 = vst.msk [vmem:[%s3 + $0x128] sm:$0xff] %vm1223, %v1130
  %1262 = vst.msk [vmem:[%s3 + $0x130] sm:$0xff] %vm1223, %v1131
  %1263 = vst.msk [vmem:[%s3 + $0x138] sm:$0xff] %vm1223, %v1132
  %1264 = vst.msk [vmem:[%s3 + $0x140] sm:$0xff] %vm1223, %v1133
  %1265 = vst.msk [vmem:[%s3 + $0x148] sm:$0xff] %vm1223, %v1134
  %1266 = vst.msk [vmem:[%s3 + $0x150] sm:$0xff] %vm1223, %v1135
  %1267 = vst.msk [vmem:[%s3 + $0x158] sm:$0xff] %vm1223, %v1136
  %1268 = vst.msk [vmem:[%s3 + $0x160] sm:$0xff] %vm1223, %v1137
  %1269 = vst.msk [vmem:[%s3 + $0x168] sm:$0xff] %vm1223, %v1138
  %1270 = vst.msk [vmem:[%s3 + $0x170] sm:$0xff] %vm1223, %v1139
  %1271 = vst.msk [vmem:[%s3 + $0x178] sm:$0xff] %vm1223, %v1140
  %1272 = vst.msk [vmem:[%s3 + $0x180] sm:$0xff] %vm1223, %v1141
  %1273 = vst.msk [vmem:[%s3 + $0x188] sm:$0xff] %vm1223, %v1142
  %1274 = vst.msk [vmem:[%s3 + $0x190] sm:$0xff] %vm1223, %v1143
  %1275 = vst.msk [vmem:[%s3 + $0x198] sm:$0xff] %vm1223, %v1144
  %1276 = vst.msk [vmem:[%s3 + $0x1a0] sm:$0xff] %vm1223, %v1145
  %1277 = vst.msk [vmem:[%s3 + $0x1a8] sm:$0xff] %vm1223, %v1146
  %1278 = vst.msk [vmem:[%s3 + $0x1b0] sm:$0xff] %vm1223, %v1147
  %1279 = vst.msk [vmem:[%s3 + $0x1b8] sm:$0xff] %vm1223, %v1148
  %1280 = vst.msk [vmem:[%s3 + $0x1c0] sm:$0xff] %vm1223, %v1149
  %1281 = vst.msk [vmem:[%s3 + $0x1c8] sm:$0xff] %vm1223, %v1150
  %1282 = vst.msk [vmem:[%s3 + $0x1d0] sm:$0xff] %vm1223, %v1151
  %1283 = vst.msk [vmem:[%s3 + $0x1d8] sm:$0xff] %vm1223, %v1152
  %1284 = vst.msk [vmem:[%s3 + $0x1e0] sm:$0xff] %vm1223, %v1153
  %1285 = vst.msk [vmem:[%s3 + $0x1e8] sm:$0xff] %vm1223, %v1154
  %1286 = vst.msk [vmem:[%s3 + $0x1f0] sm:$0xff] %vm1223, %v1155
  %1287 = vst.msk [vmem:[%s3 + $0x1f8] sm:$0xff] %vm1223, %v1156
  %1288 = vst.msk [vmem:[%s3 + $0x200] sm:$0xff] %vm1223, %v1157
  %1289 = vst.msk [vmem:[%s3 + $0x208] sm:$0xff] %vm1223, %v1158
  %1290 = vst.msk [vmem:[%s3 + $0x210] sm:$0xff] %vm1223, %v1159
  %1291 = vst.msk [vmem:[%s3 + $0x218] sm:$0xff] %vm1223, %v1160
  %1292 = vst.msk [vmem:[%s3 + $0x220] sm:$0xff] %vm1223, %v1161
  %1293 = vst.msk [vmem:[%s3 + $0x228] sm:$0xff] %vm1223, %v1162
  %1294 = vst.msk [vmem:[%s3 + $0x230] sm:$0xff] %vm1223, %v1163
  %1295 = vst.msk [vmem:[%s3 + $0x238] sm:$0xff] %vm1223, %v1164
  %1296 = vst.msk [vmem:[%s3 + $0x240] sm:$0xff] %vm1223, %v1165
  %1297 = vst.msk [vmem:[%s3 + $0x248] sm:$0xff] %vm1223, %v1166
  %1298 = vst.msk [vmem:[%s3 + $0x250] sm:$0xff] %vm1223, %v1167
  %1299 = vst.msk [vmem:[%s3 + $0x258] sm:$0xff] %vm1223, %v1168
  %1300 = vst.msk [vmem:[%s3 + $0x260] sm:$0xff] %vm1223, %v1169
  %1301 = vst.msk [vmem:[%s3 + $0x268] sm:$0xff] %vm1223, %v1170
  %1302 = vst.msk [vmem:[%s3 + $0x270] sm:$0xff] %vm1223, %v1171
  %1303 = vst.msk [vmem:[%s3 + $0x278] sm:$0xff] %vm1223, %v1172
  %1304 = vst.msk [vmem:[%s3 + $0x280] sm:$0xff] %vm1223, %v1173
  %1305 = vst.msk [vmem:[%s3 + $0x288] sm:$0xff] %vm1223, %v1174
  %1306 = vst.msk [vmem:[%s3 + $0x290] sm:$0xff] %vm1223, %v1175
  %1307 = vst.msk [vmem:[%s3 + $0x298] sm:$0xff] %vm1223, %v1176
  %1308 = vst.msk [vmem:[%s3 + $0x2a0] sm:$0xff] %vm1223, %v1177
  %1309 = vst.msk [vmem:[%s3 + $0x2a8] sm:$0xff] %vm1223, %v1178
  %1310 = vst.msk [vmem:[%s3 + $0x2b0] sm:$0xff] %vm1223, %v1179
  %1311 = vst.msk [vmem:[%s3 + $0x2b8] sm:$0xff] %vm1223, %v1180
  %1312 = vst.msk [vmem:[%s3 + $0x2c0] sm:$0xff] %vm1223, %v1181
  %1313 = vst.msk [vmem:[%s3 + $0x2c8] sm:$0xff] %vm1223, %v1182
  %1314 = vst.msk [vmem:[%s3 + $0x2d0] sm:$0xff] %vm1223, %v1183
  %1315 = vst.msk [vmem:[%s3 + $0x2d8] sm:$0xff] %vm1223, %v1184
  %1316 = vst.msk [vmem:[%s3 + $0x2e0] sm:$0xff] %vm1223, %v1185
  %1317 = vst.msk [vmem:[%s3 + $0x2e8] sm:$0xff] %vm1223, %v1186
  %1318 = vst.msk [vmem:[%s3 + $0x2f0] sm:$0xff] %vm1223, %v1187
  %1319 = vst.msk [vmem:[%s3 + $0x2f8] sm:$0xff] %vm1223, %v1188
  %1320 = vst.msk [vmem:[%s3 + $0x300] sm:$0xff] %vm1223, %v1189
  %1321 = vst.msk [vmem:[%s3 + $0x308] sm:$0xff] %vm1223, %v1190
  %1322 = vst.msk [vmem:[%s3 + $0x310] sm:$0xff] %vm1223, %v1191
  %1323 = vst.msk [vmem:[%s3 + $0x318] sm:$0xff] %vm1223, %v1192
  %1324 = vst.msk [vmem:[%s3 + $0x320] sm:$0xff] %vm1223, %v1193
  %1325 = vst.msk [vmem:[%s3 + $0x328] sm:$0xff] %vm1223, %v1194
  %1326 = vst.msk [vmem:[%s3 + $0x330] sm:$0xff] %vm1223, %v1195
  %1327 = vst.msk [vmem:[%s3 + $0x338] sm:$0xff] %vm1223, %v1196
  %1328 = vst.msk [vmem:[%s3 + $0x340] sm:$0xff] %vm1223, %v1197
  %1329 = vst.msk [vmem:[%s3 + $0x348] sm:$0xff] %vm1223, %v1198
  %1330 = vst.msk [vmem:[%s3 + $0x350] sm:$0xff] %vm1223, %v1199
  %1331 = vst.msk [vmem:[%s3 + $0x358] sm:$0xff] %vm1223, %v1200
  %1332 = vst.msk [vmem:[%s3 + $0x360] sm:$0xff] %vm1223, %v1201
  %1333 = vst.msk [vmem:[%s3 + $0x368] sm:$0xff] %vm1223, %v1202
  %1334 = vst.msk [vmem:[%s3 + $0x370] sm:$0xff] %vm1223, %v1203
  %1335 = vst.msk [vmem:[%s3 + $0x378] sm:$0xff] %vm1223, %v1204
  %1336 = vst.msk [vmem:[%s3 + $0x380] sm:$0xff] %vm1223, %v1205
  %1337 = vst.msk [vmem:[%s3 + $0x388] sm:$0xff] %vm1223, %v1206
  %1338 = vst.msk [vmem:[%s3 + $0x390] sm:$0xff] %vm1223, %v1207
  %1339 = vst.msk [vmem:[%s3 + $0x398] sm:$0xff] %vm1223, %v1208
  %1340 = vst.msk [vmem:[%s3 + $0x3a0] sm:$0xff] %vm1223, %v1209
  %1341 = vst.msk [vmem:[%s3 + $0x3a8] sm:$0xff] %vm1223, %v1210
  %1342 = vst.msk [vmem:[%s3 + $0x3b0] sm:$0xff] %vm1223, %v1211
  %1343 = vst.msk [vmem:[%s3 + $0x3b8] sm:$0xff] %vm1223, %v1212
  %1344 = vst.msk [vmem:[%s3 + $0x3c0] sm:$0xff] %vm1223, %v1213
  %1345 = vst.msk [vmem:[%s3 + $0x3c8] sm:$0xff] %vm1223, %v1214
  %1346 = vst.msk [vmem:[%s3 + $0x3d0] sm:$0xff] %vm1223, %v1215
  %1347 = vst.msk [vmem:[%s3 + $0x3d8] sm:$0xff] %vm1223, %v1216
  %1348 = vst.msk [vmem:[%s3 + $0x3e0] sm:$0xff] %vm1223, %v1217
  %1349 = vst.msk [vmem:[%s3 + $0x3e8] sm:$0xff] %vm1223, %v1218
  %1350 = vst.msk [vmem:[%s3 + $0x3f0] sm:$0xff] %vm1223, %v1219
  %1351 = vst.msk [vmem:[%s3 + $0x3f8] sm:$0xff] %vm1223, %v1220
  %1352 = vst.msk [vmem:[%s3 + $0x400] sm:$0xff] %vm1223, %v1221
  %1353 = vst.msk [vmem:[%s3 + $0x408] sm:$0xff] %vm1223, %v1222
  // Predicated region
  $region14: #{model_forward.4} parent=0 // pred_check
    _
  $region15: #{model_forward.4} parent=0 // pred_check_branch
    %1355 = sbr.rel (0) target = $region17
  $region16: #{model_forward.4} parent=0 // pred_region
    _
  $region17: #{model_forward.4} parent=0 // pred_fallthru
    _
  // Predicated region
  $region18: #{model_forward.4} parent=0 // pred_check
    _
  $region19: #{model_forward.4} parent=0 // pred_check_branch
    %1357 = sbr.rel (0) target = $region21
  $region20: #{model_forward.4} parent=0 // pred_region
    _
  $region21: #{model_forward.4} parent=0 // pred_fallthru
    _

// kernel: model_forward.5
$region0: #{model_forward.5}
  #allocation0 [shape = 'u32[]', space=smem, size = 0x4, offset = 0x4, fixed_abs, tag = 'smem constant byte address 0x4 - core index']
  #allocation1 [shape = 'u32[144,128]{1,0:T(1,128)}', space=vmem, size = 0x12000, scoped, tag = 'internal scratch']
  %s0 = inlined_call_operand.vmem [shape: f32[216,512], index: 0, kind: input, shape index: {}]
  %s1 = inlined_call_operand.vmem [shape: bf16[512,64], index: 1, kind: input, shape index: {}]
  %s2 = inlined_call_operand.vmem [shape: f32[1,64], index: 2, kind: input, shape index: {}]
  %s3 = inlined_call_operand.vmem [shape: f32[216,64], index: 3, kind: output, shape index: {}]
  %s4 = sld [smem:[#allocation0]]
  $region22: #{model_forward.5} parent=0
    _
  %s6 = ssub.s32 1, %s4
  %s7 = scalar_select 0, %s6, %s4
  // Predicated region
  $region2: #{model_forward.5} parent=0 // pred_check
    _
  $region3: #{model_forward.5} parent=0 // pred_check_branch
    %9 = sbr.rel (0) target = $region5
  $region4: #{model_forward.5} parent=0 // pred_region
    _
  $region5: #{model_forward.5} parent=0 // pred_fallthru
    _
  // Predicated region
  $region6: #{model_forward.5} parent=0 // pred_check
    _
  $region7: #{model_forward.5} parent=0 // pred_check_branch
    %11 = sbr.rel (0) target = $region9
  $region8: #{model_forward.5} parent=0 // pred_region
    _
  $region9: #{model_forward.5} parent=0 // pred_fallthru
    _
  // Predicated region
  $region10: #{model_forward.5} parent=0 // pred_check
    _
  $region11: #{model_forward.5} parent=0 // pred_check_branch
    %13 = sbr.rel (0) target = $region13
  $region12: #{model_forward.5} parent=0 // pred_region
    _
  $region13: #{model_forward.5} parent=0 // pred_fallthru
    _
  %v15 = vld [vmem:[%s0] sm:$0xff]
  %v16 = vld [vmem:[%s0 + $0x8] sm:$0xff]
  %v17 = vld [vmem:[%s0 + $0x10] sm:$0xff]
  %v18 = vld [vmem:[%s0 + $0x18] sm:$0xff]
  %v19 = vld [vmem:[%s0 + $0x20] sm:$0xff]
  %v20 = vld [vmem:[%s0 + $0x28] sm:$0xff]
  %v21 = vld [vmem:[%s0 + $0x30] sm:$0xff]
  %v22 = vld [vmem:[%s0 + $0x38] sm:$0xff]
  %v23 = vld [vmem:[%s0 + $0x40] sm:$0xff]
  %v24 = vld [vmem:[%s0 + $0x48] sm:$0xff]
  %v25 = vld [vmem:[%s0 + $0x50] sm:$0xff]
  %v26 = vld [vmem:[%s0 + $0x58] sm:$0xff]
  %v27 = vld [vmem:[%s0 + $0x60] sm:$0xff]
  %v28 = vld [vmem:[%s0 + $0x68] sm:$0xff]
  %v29 = vld [vmem:[%s0 + $0x70] sm:$0xff]
  %v30 = vld [vmem:[%s0 + $0x78] sm:$0xff]
  %v31 = vld [vmem:[%s0 + $0x80] sm:$0xff]
  %v32 = vld [vmem:[%s0 + $0x88] sm:$0xff]
  %v33 = vld [vmem:[%s0 + $0x90] sm:$0xff]
  %v34 = vld [vmem:[%s0 + $0x98] sm:$0xff]
  %v35 = vld [vmem:[%s0 + $0xa0] sm:$0xff]
  %v36 = vld [vmem:[%s0 + $0xa8] sm:$0xff]
  %v37 = vld [vmem:[%s0 + $0xb0] sm:$0xff]
  %v38 = vld [vmem:[%s0 + $0xb8] sm:$0xff]
  %v39 = vld [vmem:[%s0 + $0xc0] sm:$0xff]
  %v40 = vld [vmem:[%s0 + $0xc8] sm:$0xff]
  %v41 = vld [vmem:[%s0 + $0xd0] sm:$0xff]
  %v42 = vld [vmem:[%s0 + $0xd8] sm:$0xff]
  %v43 = vld [vmem:[%s0 + $0xe0] sm:$0xff]
  %v44 = vld [vmem:[%s0 + $0xe8] sm:$0xff]
  %v45 = vld [vmem:[%s0 + $0xf0] sm:$0xff]
  %v46 = vld [vmem:[%s0 + $0xf8] sm:$0xff]
  %v47 = vld [vmem:[%s0 + $0x100] sm:$0xff]
  %v48 = vld [vmem:[%s0 + $0x108] sm:$0xff]
  %v49 = vld [vmem:[%s0 + $0x110] sm:$0xff]
  %v50 = vld [vmem:[%s0 + $0x118] sm:$0xff]
  %v51 = vld [vmem:[%s0 + $0x120] sm:$0xff]
  %v52 = vld [vmem:[%s0 + $0x128] sm:$0xff]
  %v53 = vld [vmem:[%s0 + $0x130] sm:$0xff]
  %v54 = vld [vmem:[%s0 + $0x138] sm:$0xff]
  %v55 = vld [vmem:[%s0 + $0x140] sm:$0xff]
  %v56 = vld [vmem:[%s0 + $0x148] sm:$0xff]
  %v57 = vld [vmem:[%s0 + $0x150] sm:$0xff]
  %v58 = vld [vmem:[%s0 + $0x158] sm:$0xff]
  %v59 = vld [vmem:[%s0 + $0x160] sm:$0xff]
  %v60 = vld [vmem:[%s0 + $0x168] sm:$0xff]
  %v61 = vld [vmem:[%s0 + $0x170] sm:$0xff]
  %v62 = vld [vmem:[%s0 + $0x178] sm:$0xff]
  %v63 = vld [vmem:[%s0 + $0x180] sm:$0xff]
  %v64 = vld [vmem:[%s0 + $0x188] sm:$0xff]
  %v65 = vld [vmem:[%s0 + $0x190] sm:$0xff]
  %v66 = vld [vmem:[%s0 + $0x198] sm:$0xff]
  %v67 = vld [vmem:[%s0 + $0x1a0] sm:$0xff]
  %v68 = vld [vmem:[%s0 + $0x1a8] sm:$0xff]
  %v69 = vld [vmem:[%s0 + $0x1b0] sm:$0xff]
  %v70 = vld [vmem:[%s0 + $0x1b8] sm:$0xff]
  %v71 = vld [vmem:[%s0 + $0x1c0] sm:$0xff]
  %v72 = vld [vmem:[%s0 + $0x1c8] sm:$0xff]
  %v73 = vld [vmem:[%s0 + $0x1d0] sm:$0xff]
  %v74 = vld [vmem:[%s0 + $0x1d8] sm:$0xff]
  %v75 = vld [vmem:[%s0 + $0x1e0] sm:$0xff]
  %v76 = vld [vmem:[%s0 + $0x1e8] sm:$0xff]
  %v77 = vld [vmem:[%s0 + $0x1f0] sm:$0xff]
  %v78 = vld [vmem:[%s0 + $0x1f8] sm:$0xff]
  %v79 = vld [vmem:[%s0 + $0x200] sm:$0xff]
  %v80 = vld [vmem:[%s0 + $0x208] sm:$0xff]
  %v81 = vld [vmem:[%s0 + $0x210] sm:$0xff]
  %v82 = vld [vmem:[%s0 + $0x218] sm:$0xff]
  %v83 = vld [vmem:[%s0 + $0x220] sm:$0xff]
  %v84 = vld [vmem:[%s0 + $0x228] sm:$0xff]
  %v85 = vld [vmem:[%s0 + $0x230] sm:$0xff]
  %v86 = vld [vmem:[%s0 + $0x238] sm:$0xff]
  %v87 = vld [vmem:[%s0 + $0x240] sm:$0xff]
  %v88 = vld [vmem:[%s0 + $0x248] sm:$0xff]
  %v89 = vld [vmem:[%s0 + $0x250] sm:$0xff]
  %v90 = vld [vmem:[%s0 + $0x258] sm:$0xff]
  %v91 = vld [vmem:[%s0 + $0x260] sm:$0xff]
  %v92 = vld [vmem:[%s0 + $0x268] sm:$0xff]
  %v93 = vld [vmem:[%s0 + $0x270] sm:$0xff]
  %v94 = vld [vmem:[%s0 + $0x278] sm:$0xff]
  %v95 = vld [vmem:[%s0 + $0x280] sm:$0xff]
  %v96 = vld [vmem:[%s0 + $0x288] sm:$0xff]
  %v97 = vld [vmem:[%s0 + $0x290] sm:$0xff]
  %v98 = vld [vmem:[%s0 + $0x298] sm:$0xff]
  %v99 = vld [vmem:[%s0 + $0x2a0] sm:$0xff]
  %v100 = vld [vmem:[%s0 + $0x2a8] sm:$0xff]
  %v101 = vld [vmem:[%s0 + $0x2b0] sm:$0xff]
  %v102 = vld [vmem:[%s0 + $0x2b8] sm:$0xff]
  %v103 = vld [vmem:[%s0 + $0x2c0] sm:$0xff]
  %v104 = vld [vmem:[%s0 + $0x2c8] sm:$0xff]
  %v105 = vld [vmem:[%s0 + $0x2d0] sm:$0xff]
  %v106 = vld [vmem:[%s0 + $0x2d8] sm:$0xff]
  %v107 = vld [vmem:[%s0 + $0x2e0] sm:$0xff]
  %v108 = vld [vmem:[%s0 + $0x2e8] sm:$0xff]
  %v109 = vld [vmem:[%s0 + $0x2f0] sm:$0xff]
  %v110 = vld [vmem:[%s0 + $0x2f8] sm:$0xff]
  %v111 = vld [vmem:[%s0 + $0x300] sm:$0xff]
  %v112 = vld [vmem:[%s0 + $0x308] sm:$0xff]
  %v113 = vld [vmem:[%s0 + $0x310] sm:$0xff]
  %v114 = vld [vmem:[%s0 + $0x318] sm:$0xff]
  %v115 = vld [vmem:[%s0 + $0x320] sm:$0xff]
  %v116 = vld [vmem:[%s0 + $0x328] sm:$0xff]
  %v117 = vld [vmem:[%s0 + $0x330] sm:$0xff]
  %v118 = vld [vmem:[%s0 + $0x338] sm:$0xff]
  %v119 = vld [vmem:[%s0 + $0x340] sm:$0xff]
  %v120 = vld [vmem:[%s0 + $0x348] sm:$0xff]
  %v121 = vld [vmem:[%s0 + $0x350] sm:$0xff]
  %v122 = vld [vmem:[%s0 + $0x358] sm:$0xff]
  %v123 = vpack.c.bf16 %v19, %v15
  %v124 = vpack.c.bf16 %v20, %v16
  %v125 = vpack.c.bf16 %v21, %v17
  %v126 = vpack.c.bf16 %v22, %v18
  %v127 = vpack.c.bf16 %v27, %v23
  %v128 = vpack.c.bf16 %v28, %v24
  %v129 = vpack.c.bf16 %v29, %v25
  %v130 = vpack.c.bf16 %v30, %v26
  %v131 = vpack.c.bf16 %v35, %v31
  %v132 = vpack.c.bf16 %v36, %v32
  %v133 = vpack.c.bf16 %v37, %v33
  %v134 = vpack.c.bf16 %v38, %v34
  %v135 = vpack.c.bf16 %v43, %v39
  %v136 = vpack.c.bf16 %v44, %v40
  %v137 = vpack.c.bf16 %v45, %v41
  %v138 = vpack.c.bf16 %v46, %v42
  %v139 = vpack.c.bf16 %v51, %v47
  %v140 = vpack.c.bf16 %v52, %v48
  %v141 = vpack.c.bf16 %v53, %v49
  %v142 = vpack.c.bf16 %v54, %v50
  %v143 = vpack.c.bf16 %v59, %v55
  %v144 = vpack.c.bf16 %v60, %v56
  %v145 = vpack.c.bf16 %v61, %v57
  %v146 = vpack.c.bf16 %v62, %v58
  %v147 = vpack.c.bf16 %v67, %v63
  %v148 = vpack.c.bf16 %v68, %v64
  %v149 = vpack.c.bf16 %v69, %v65
  %v150 = vpack.c.bf16 %v70, %v66
  %v151 = vpack.c.bf16 %v75, %v71
  %v152 = vpack.c.bf16 %v76, %v72
  %v153 = vpack.c.bf16 %v77, %v73
  %v154 = vpack.c.bf16 %v78, %v74
  %v155 = vpack.c.bf16 %v83, %v79
  %v156 = vpack.c.bf16 %v84, %v80
  %v157 = vpack.c.bf16 %v85, %v81
  %v158 = vpack.c.bf16 %v86, %v82
  %v159 = vpack.c.bf16 %v91, %v87
  %v160 = vpack.c.bf16 %v92, %v88
  %v161 = vpack.c.bf16 %v93, %v89
  %v162 = vpack.c.bf16 %v94, %v90
  %v163 = vpack.c.bf16 %v99, %v95
  %v164 = vpack.c.bf16 %v100, %v96
  %v165 = vpack.c.bf16 %v101, %v97
  %v166 = vpack.c.bf16 %v102, %v98
  %v167 = vpack.c.bf16 %v107, %v103
  %v168 = vpack.c.bf16 %v108, %v104
  %v169 = vpack.c.bf16 %v109, %v105
  %v170 = vpack.c.bf16 %v110, %v106
  %v171 = vpack.c.bf16 %v115, %v111
  %v172 = vpack.c.bf16 %v116, %v112
  %v173 = vpack.c.bf16 %v117, %v113
  %v174 = vpack.c.bf16 %v118, %v114
  %v175 = vpack.c.bf16 %v119, %v119
  %v176 = vpack.c.bf16 %v120, %v120
  %v177 = vpack.c.bf16 %v121, %v121
  %v178 = vpack.c.bf16 %v122, %v122
  %v179 = vld [vmem:[%s1] sm:$0xf]
  %v180 = vld [vmem:[%s1 + $0x4] sm:$0xf]
  %v181 = vld [vmem:[%s1 + $0x8] sm:$0xf]
  %v182 = vld [vmem:[%s1 + $0xc] sm:$0xf]
  %v183 = vld [vmem:[%s1 + $0x10] sm:$0xf]
  %v184 = vld [vmem:[%s1 + $0x14] sm:$0xf]
  %v185 = vld [vmem:[%s1 + $0x18] sm:$0xf]
  %v186 = vld [vmem:[%s1 + $0x1c] sm:$0xf]
  %v187 = vld [vmem:[%s1 + $0x20] sm:$0xf]
  %v188 = vld [vmem:[%s1 + $0x24] sm:$0xf]
  %v189 = vld [vmem:[%s1 + $0x28] sm:$0xf]
  %v190 = vld [vmem:[%s1 + $0x2c] sm:$0xf]
  %v191 = vld [vmem:[%s1 + $0x30] sm:$0xf]
  %v192 = vld [vmem:[%s1 + $0x34] sm:$0xf]
  %v193 = vld [vmem:[%s1 + $0x38] sm:$0xf]
  %v194 = vld [vmem:[%s1 + $0x3c] sm:$0xf]
  %v195 = vld [vmem:[%s1 + $0x40] sm:$0xf]
  %v196 = vld [vmem:[%s1 + $0x44] sm:$0xf]
  %v197 = vld [vmem:[%s1 + $0x48] sm:$0xf]
  %v198 = vld [vmem:[%s1 + $0x4c] sm:$0xf]
  %v199 = vld [vmem:[%s1 + $0x50] sm:$0xf]
  %v200 = vld [vmem:[%s1 + $0x54] sm:$0xf]
  %v201 = vld [vmem:[%s1 + $0x58] sm:$0xf]
  %v202 = vld [vmem:[%s1 + $0x5c] sm:$0xf]
  %v203 = vld [vmem:[%s1 + $0x60] sm:$0xf]
  %v204 = vld [vmem:[%s1 + $0x64] sm:$0xf]
  %v205 = vld [vmem:[%s1 + $0x68] sm:$0xf]
  %v206 = vld [vmem:[%s1 + $0x6c] sm:$0xf]
  %v207 = vld [vmem:[%s1 + $0x70] sm:$0xf]
  %v208 = vld [vmem:[%s1 + $0x74] sm:$0xf]
  %v209 = vld [vmem:[%s1 + $0x78] sm:$0xf]
  %v210 = vld [vmem:[%s1 + $0x7c] sm:$0xf]
  %v211 = vld [vmem:[%s1 + $0x80] sm:$0xf]
  %v212 = vld [vmem:[%s1 + $0x84] sm:$0xf]
  %v213 = vld [vmem:[%s1 + $0x88] sm:$0xf]
  %v214 = vld [vmem:[%s1 + $0x8c] sm:$0xf]
  %v215 = vld [vmem:[%s1 + $0x90] sm:$0xf]
  %v216 = vld [vmem:[%s1 + $0x94] sm:$0xf]
  %v217 = vld [vmem:[%s1 + $0x98] sm:$0xf]
  %v218 = vld [vmem:[%s1 + $0x9c] sm:$0xf]
  %v219 = vld [vmem:[%s1 + $0xa0] sm:$0xf]
  %v220 = vld [vmem:[%s1 + $0xa4] sm:$0xf]
  %v221 = vld [vmem:[%s1 + $0xa8] sm:$0xf]
  %v222 = vld [vmem:[%s1 + $0xac] sm:$0xf]
  %v223 = vld [vmem:[%s1 + $0xb0] sm:$0xf]
  %v224 = vld [vmem:[%s1 + $0xb4] sm:$0xf]
  %v225 = vld [vmem:[%s1 + $0xb8] sm:$0xf]
  %v226 = vld [vmem:[%s1 + $0xbc] sm:$0xf]
  %v227 = vld [vmem:[%s1 + $0xc0] sm:$0xf]
  %v228 = vld [vmem:[%s1 + $0xc4] sm:$0xf]
  %v229 = vld [vmem:[%s1 + $0xc8] sm:$0xf]
  %v230 = vld [vmem:[%s1 + $0xcc] sm:$0xf]
  %v231 = vld [vmem:[%s1 + $0xd0] sm:$0xf]
  %v232 = vld [vmem:[%s1 + $0xd4] sm:$0xf]
  %v233 = vld [vmem:[%s1 + $0xd8] sm:$0xf]
  %v234 = vld [vmem:[%s1 + $0xdc] sm:$0xf]
  %v235 = vld [vmem:[%s1 + $0xe0] sm:$0xf]
  %v236 = vld [vmem:[%s1 + $0xe4] sm:$0xf]
  %v237 = vld [vmem:[%s1 + $0xe8] sm:$0xf]
  %v238 = vld [vmem:[%s1 + $0xec] sm:$0xf]
  %v239 = vld [vmem:[%s1 + $0xf0] sm:$0xf]
  %v240 = vld [vmem:[%s1 + $0xf4] sm:$0xf]
  %v241 = vld [vmem:[%s1 + $0xf8] sm:$0xf]
  %v242 = vld [vmem:[%s1 + $0xfc] sm:$0xf]
  %v243 = vld [vmem:[%s2] sm:$0x1]
  %v245 = vlaneseq
  %v246 = vshrl.u32 %v245, 7
  %v247 = vsub.s32 0, %v246
  %v248 = vrot.slane %v243, %v247
  %v314 = vunpack.c.l.b16 %v179
  %v315 = vunpack.c.l.b16 %v180
  %v316 = vunpack.c.l.b16 %v181
  %v317 = vunpack.c.l.b16 %v182
  %v318 = vunpack.c.l.b16 %v183
  %v319 = vunpack.c.l.b16 %v184
  %v320 = vunpack.c.l.b16 %v185
  %v321 = vunpack.c.l.b16 %v186
  %v322 = vunpack.c.l.b16 %v187
  %v323 = vunpack.c.l.b16 %v188
  %v324 = vunpack.c.l.b16 %v189
  %v325 = vunpack.c.l.b16 %v190
  %v326 = vunpack.c.l.b16 %v191
  %v327 = vunpack.c.l.b16 %v192
  %v328 = vunpack.c.l.b16 %v193
  %v329 = vunpack.c.l.b16 %v194
  %v330 = vunpack.c.l.b16 %v195
  %v331 = vunpack.c.l.b16 %v196
  %v332 = vunpack.c.l.b16 %v197
  %v333 = vunpack.c.l.b16 %v198
  %v334 = vunpack.c.l.b16 %v199
  %v335 = vunpack.c.l.b16 %v200
  %v336 = vunpack.c.l.b16 %v201
  %v337 = vunpack.c.l.b16 %v202
  %v338 = vunpack.c.l.b16 %v203
  %v339 = vunpack.c.l.b16 %v204
  %v340 = vunpack.c.l.b16 %v205
  %v341 = vunpack.c.l.b16 %v206
  %v342 = vunpack.c.l.b16 %v207
  %v343 = vunpack.c.l.b16 %v208
  %v344 = vunpack.c.l.b16 %v209
  %v345 = vunpack.c.l.b16 %v210
  %v346 = vunpack.c.l.b16 %v211
  %v347 = vunpack.c.l.b16 %v212
  %v348 = vunpack.c.l.b16 %v213
  %v349 = vunpack.c.l.b16 %v214
  %v350 = vunpack.c.l.b16 %v215
  %v351 = vunpack.c.l.b16 %v216
  %v352 = vunpack.c.l.b16 %v217
  %v353 = vunpack.c.l.b16 %v218
  %v354 = vunpack.c.l.b16 %v219
  %v355 = vunpack.c.l.b16 %v220
  %v356 = vunpack.c.l.b16 %v221
  %v357 = vunpack.c.l.b16 %v222
  %v358 = vunpack.c.l.b16 %v223
  %v359 = vunpack.c.l.b16 %v224
  %v360 = vunpack.c.l.b16 %v225
  %v361 = vunpack.c.l.b16 %v226
  %v362 = vunpack.c.l.b16 %v227
  %v363 = vunpack.c.l.b16 %v228
  %v364 = vunpack.c.l.b16 %v229
  %v365 = vunpack.c.l.b16 %v230
  %v366 = vunpack.c.l.b16 %v231
  %v367 = vunpack.c.l.b16 %v232
  %v368 = vunpack.c.l.b16 %v233
  %v369 = vunpack.c.l.b16 %v234
  %v370 = vunpack.c.l.b16 %v235
  %v371 = vunpack.c.l.b16 %v236
  %v372 = vunpack.c.l.b16 %v237
  %v373 = vunpack.c.l.b16 %v238
  %v374 = vunpack.c.l.b16 %v239
  %v375 = vunpack.c.l.b16 %v240
  %v376 = vunpack.c.l.b16 %v241
  %v377 = vunpack.c.l.b16 %v242
  %v378 = vpack.c.b16 %v315, %v314
  %v379 = vpack.c.b16 %v317, %v316
  %v380 = vpack.c.b16 %v319, %v318
  %v381 = vpack.c.b16 %v321, %v320
  %v382 = vpack.c.b16 %v323, %v322
  %v383 = vpack.c.b16 %v325, %v324
  %v384 = vpack.c.b16 %v327, %v326
  %v385 = vpack.c.b16 %v329, %v328
  %v386 = vpack.c.b16 %v331, %v330
  %v387 = vpack.c.b16 %v333, %v332
  %v388 = vpack.c.b16 %v335, %v334
  %v389 = vpack.c.b16 %v337, %v336
  %v390 = vpack.c.b16 %v339, %v338
  %v391 = vpack.c.b16 %v341, %v340
  %v392 = vpack.c.b16 %v343, %v342
  %v393 = vpack.c.b16 %v345, %v344
  %v394 = vpack.c.b16 %v347, %v346
  %v395 = vpack.c.b16 %v349, %v348
  %v396 = vpack.c.b16 %v351, %v350
  %v397 = vpack.c.b16 %v353, %v352
  %v398 = vpack.c.b16 %v355, %v354
  %v399 = vpack.c.b16 %v357, %v356
  %v400 = vpack.c.b16 %v359, %v358
  %v401 = vpack.c.b16 %v361, %v360
  %v402 = vpack.c.b16 %v363, %v362
  %v403 = vpack.c.b16 %v365, %v364
  %v404 = vpack.c.b16 %v367, %v366
  %v405 = vpack.c.b16 %v369, %v368
  %v406 = vpack.c.b16 %v371, %v370
  %v407 = vpack.c.b16 %v373, %v372
  %v408 = vpack.c.b16 %v375, %v374
  %v409 = vpack.c.b16 %v377, %v376
  %442 = vmatprep.subr.bf16.mxu0 0
  %443 = vmatpush1.bf16.msra.mxu0 %v385
  %444 = vmatprep.subr.bf16.mxu0 0
  %445 = vmatpush1.bf16.msra.mxu0 %v384
  %446 = vmatprep.subr.bf16.mxu0 0
  %447 = vmatpush1.bf16.msra.mxu0 %v383
  %448 = vmatprep.subr.bf16.mxu0 0
  %449 = vmatpush1.bf16.msra.mxu0 %v382
  %450 = vmatprep.subr.bf16.mxu0 0
  %451 = vmatpush1.bf16.msra.mxu0 %v381
  %452 = vmatprep.subr.bf16.mxu0 0
  %453 = vmatpush1.bf16.msra.mxu0 %v380
  %454 = vmatprep.subr.bf16.mxu0 0
  %455 = vmatpush1.bf16.msra.mxu0 %v379
  %456 = vmatprep.subr.bf16.mxu0 0
  %457 = vmatpush1.bf16.msra.mxu0 %v378
  %458 = vmatprep.subr.bf16.mxu0 0
  %459 = vmatpush2.bf16.msra.mxu0 %v393
  %460 = vmatprep.subr.bf16.mxu0 0
  %461 = vmatpush2.bf16.msra.mxu0 %v392
  %462 = vmatprep.subr.bf16.mxu0 0
  %463 = vmatpush2.bf16.msra.mxu0 %v391
  %464 = vmatprep.subr.bf16.mxu0 0
  %465 = vmatpush2.bf16.msra.mxu0 %v390
  %466 = vmatprep.subr.bf16.mxu0 0
  %467 = vmatpush2.bf16.msra.mxu0 %v389
  %468 = vmatprep.subr.bf16.mxu0 0
  %469 = vmatpush2.bf16.msra.mxu0 %v388
  %470 = vmatprep.subr.bf16.mxu0 0
  %471 = vmatpush2.bf16.msra.mxu0 %v387
  %472 = vmatprep.subr.bf16.mxu0 0
  %473 = vmatpush2.bf16.msra.mxu0 %v386
  %474 = vmatprep.mubr.bf16.mxu0 %v124
  %475 = vmatmul.mubr.bf16.gmra.mxu0 %v123
  %v476 = vpop.f32.mrf.mxu0
  %v477 = vadd.f32 %v248, %v476
  %v478 = vpop.f32.mrf.mxu0
  %v479 = vpop.f32.mrf.mxu0
  %v480 = vadd.f32 %v248, %v479
  %v481 = vpop.f32.mrf.mxu0
  %482 = vmatprep.mubr.bf16.mxu0 %v128
  %483 = vmatmul.mubr.bf16.gmra.mxu0 %v127
  %v484 = vpop.f32.mrf.mxu0
  %v485 = vadd.f32 %v248, %v484
  %v486 = vpop.f32.mrf.mxu0
  %v487 = vpop.f32.mrf.mxu0
  %v488 = vadd.f32 %v248, %v487
  %v489 = vpop.f32.mrf.mxu0
  %490 = vmatprep.mubr.bf16.mxu0 %v132
  %491 = vmatmul.mubr.bf16.gmra.mxu0 %v131
  %v492 = vpop.f32.mrf.mxu0
  %v493 = vadd.f32 %v248, %v492
  %v494 = vpop.f32.mrf.mxu0
  %v495 = vpop.f32.mrf.mxu0
  %v496 = vadd.f32 %v248, %v495
  %v497 = vpop.f32.mrf.mxu0
  %498 = vmatprep.mubr.bf16.mxu0 %v136
  %499 = vmatmul.mubr.bf16.gmra.mxu0 %v135
  %v500 = vpop.f32.mrf.mxu0
  %v501 = vadd.f32 %v248, %v500
  %v502 = vpop.f32.mrf.mxu0
  %v503 = vpop.f32.mrf.mxu0
  %v504 = vadd.f32 %v248, %v503
  %v505 = vpop.f32.mrf.mxu0
  %506 = vmatprep.mubr.bf16.mxu0 %v140
  %507 = vmatmul.mubr.bf16.gmra.mxu0 %v139
  %v508 = vpop.f32.mrf.mxu0
  %v509 = vadd.f32 %v248, %v508
  %v510 = vpop.f32.mrf.mxu0
  %v511 = vpop.f32.mrf.mxu0
  %v512 = vadd.f32 %v248, %v511
  %v513 = vpop.f32.mrf.mxu0
  %514 = vmatprep.mubr.bf16.mxu0 %v144
  %515 = vmatmul.mubr.bf16.gmra.mxu0 %v143
  %v516 = vpop.f32.mrf.mxu0
  %v517 = vadd.f32 %v248, %v516
  %v518 = vpop.f32.mrf.mxu0
  %v519 = vpop.f32.mrf.mxu0
  %v520 = vadd.f32 %v248, %v519
  %v521 = vpop.f32.mrf.mxu0
  %522 = vmatprep.mubr.bf16.mxu0 %v148
  %523 = vmatmul.mubr.bf16.gmra.mxu0 %v147
  %v524 = vpop.f32.mrf.mxu0
  %v525 = vadd.f32 %v248, %v524
  %v526 = vpop.f32.mrf.mxu0
  %v527 = vpop.f32.mrf.mxu0
  %v528 = vadd.f32 %v248, %v527
  %v529 = vpop.f32.mrf.mxu0
  %530 = vmatprep.mubr.bf16.mxu0 %v152
  %531 = vmatmul.mubr.bf16.gmra.mxu0 %v151
  %v532 = vpop.f32.mrf.mxu0
  %v533 = vadd.f32 %v248, %v532
  %v534 = vpop.f32.mrf.mxu0
  %v535 = vpop.f32.mrf.mxu0
  %v536 = vadd.f32 %v248, %v535
  %v537 = vpop.f32.mrf.mxu0
  %538 = vmatprep.mubr.bf16.mxu0 %v156
  %539 = vmatmul.mubr.bf16.gmra.mxu0 %v155
  %v540 = vpop.f32.mrf.mxu0
  %v541 = vadd.f32 %v248, %v540
  %v542 = vpop.f32.mrf.mxu0
  %v543 = vpop.f32.mrf.mxu0
  %v544 = vadd.f32 %v248, %v543
  %v545 = vpop.f32.mrf.mxu0
  %546 = vmatprep.mubr.bf16.mxu0 %v160
  %547 = vmatmul.mubr.bf16.gmra.mxu0 %v159
  %v548 = vpop.f32.mrf.mxu0
  %v549 = vadd.f32 %v248, %v548
  %v550 = vpop.f32.mrf.mxu0
  %v551 = vpop.f32.mrf.mxu0
  %v552 = vadd.f32 %v248, %v551
  %v553 = vpop.f32.mrf.mxu0
  %554 = vmatprep.mubr.bf16.mxu0 %v164
  %555 = vmatmul.mubr.bf16.gmra.mxu0 %v163
  %v556 = vpop.f32.mrf.mxu0
  %v557 = vadd.f32 %v248, %v556
  %v558 = vpop.f32.mrf.mxu0
  %v559 = vpop.f32.mrf.mxu0
  %v560 = vadd.f32 %v248, %v559
  %v561 = vpop.f32.mrf.mxu0
  %562 = vmatprep.mubr.bf16.mxu0 %v168
  %563 = vmatmul.mubr.bf16.gmra.mxu0 %v167
  %v564 = vpop.f32.mrf.mxu0
  %v565 = vadd.f32 %v248, %v564
  %v566 = vpop.f32.mrf.mxu0
  %v567 = vpop.f32.mrf.mxu0
  %v568 = vadd.f32 %v248, %v567
  %v569 = vpop.f32.mrf.mxu0
  %570 = vmatprep.mubr.bf16.mxu0 %v172
  %571 = vmatmul.mubr.bf16.gmra.mxu0 %v171
  %v572 = vpop.f32.mrf.mxu0
  %v573 = vadd.f32 %v248, %v572
  %v574 = vpop.f32.mrf.mxu0
  %v575 = vpop.f32.mrf.mxu0
  %v576 = vadd.f32 %v248, %v575
  %v577 = vpop.f32.mrf.mxu0
  %578 = vmatprep.mubr.bf16.mxu0 %v176
  %579 = vmatmul.mubr.bf16.gmra.mxu0 %v175
  %v580 = vpop.f32.mrf.mxu0
  %v581 = vadd.f32 %v248, %v580
  %v582 = vpop.f32.mrf.mxu0
  %v583 = vpop.f32.mrf.mxu0
  %v584 = vpop.f32.mrf.mxu0
  %585 = vdwg.mxu0
  %586 = vmatprep.subr.bf16.mxu0 0
  %587 = vmatpush1.bf16.msra.mxu0 %v401
  %588 = vmatprep.subr.bf16.mxu0 0
  %589 = vmatpush1.bf16.msra.mxu0 %v400
  %590 = vmatprep.subr.bf16.mxu0 0
  %591 = vmatpush1.bf16.msra.mxu0 %v399
  %592 = vmatprep.subr.bf16.mxu0 0
  %593 = vmatpush1.bf16.msra.mxu0 %v398
  %594 = vmatprep.subr.bf16.mxu0 0
  %595 = vmatpush1.bf16.msra.mxu0 %v397
  %596 = vmatprep.subr.bf16.mxu0 0
  %597 = vmatpush1.bf16.msra.mxu0 %v396
  %598 = vmatprep.subr.bf16.mxu0 0
  %599 = vmatpush1.bf16.msra.mxu0 %v395
  %600 = vmatprep.subr.bf16.mxu0 0
  %601 = vmatpush1.bf16.msra.mxu0 %v394
  %602 = vmatprep.subr.bf16.mxu0 0
  %603 = vmatpush2.bf16.msra.mxu0 %v409
  %604 = vmatprep.subr.bf16.mxu0 0
  %605 = vmatpush2.bf16.msra.mxu0 %v408
  %606 = vmatprep.subr.bf16.mxu0 0
  %607 = vmatpush2.bf16.msra.mxu0 %v407
  %608 = vmatprep.subr.bf16.mxu0 0
  %609 = vmatpush2.bf16.msra.mxu0 %v406
  %610 = vmatprep.subr.bf16.mxu0 0
  %611 = vmatpush2.bf16.msra.mxu0 %v405
  %612 = vmatprep.subr.bf16.mxu0 0
  %613 = vmatpush2.bf16.msra.mxu0 %v404
  %614 = vmatprep.subr.bf16.mxu0 0
  %615 = vmatpush2.bf16.msra.mxu0 %v403
  %616 = vmatprep.subr.bf16.mxu0 0
  %617 = vmatpush2.bf16.msra.mxu0 %v402
  %618 = vmatprep.mubr.bf16.mxu0 %v126
  %619 = vmatmul.mubr.bf16.gmra.mxu0 %v125
  %v620 = vpop.f32.mrf.mxu0
  %v621 = vadd.f32 %v477, %v620
  %v622 = vpop.f32.mrf.mxu0
  %v623 = vpop.f32.mrf.mxu0
  %v624 = vadd.f32 %v480, %v623
  %v625 = vpop.f32.mrf.mxu0
  %626 = vmatprep.mubr.bf16.mxu0 %v130
  %627 = vmatmul.mubr.bf16.gmra.mxu0 %v129
  %v628 = vpop.f32.mrf.mxu0
  %v629 = vadd.f32 %v485, %v628
  %v630 = vpop.f32.mrf.mxu0
  %v631 = vpop.f32.mrf.mxu0
  %v632 = vadd.f32 %v488, %v631
  %v633 = vpop.f32.mrf.mxu0
  %634 = vmatprep.mubr.bf16.mxu0 %v134
  %635 = vmatmul.mubr.bf16.gmra.mxu0 %v133
  %v636 = vpop.f32.mrf.mxu0
  %v637 = vadd.f32 %v493, %v636
  %v638 = vpop.f32.mrf.mxu0
  %v639 = vpop.f32.mrf.mxu0
  %v640 = vadd.f32 %v496, %v639
  %v641 = vpop.f32.mrf.mxu0
  %642 = vmatprep.mubr.bf16.mxu0 %v138
  %643 = vmatmul.mubr.bf16.gmra.mxu0 %v137
  %v644 = vpop.f32.mrf.mxu0
  %v645 = vadd.f32 %v501, %v644
  %v646 = vpop.f32.mrf.mxu0
  %v647 = vpop.f32.mrf.mxu0
  %v648 = vadd.f32 %v504, %v647
  %v649 = vpop.f32.mrf.mxu0
  %650 = vmatprep.mubr.bf16.mxu0 %v142
  %651 = vmatmul.mubr.bf16.gmra.mxu0 %v141
  %v652 = vpop.f32.mrf.mxu0
  %v653 = vadd.f32 %v509, %v652
  %v654 = vpop.f32.mrf.mxu0
  %v655 = vpop.f32.mrf.mxu0
  %v656 = vadd.f32 %v512, %v655
  %v657 = vpop.f32.mrf.mxu0
  %658 = vmatprep.mubr.bf16.mxu0 %v146
  %659 = vmatmul.mubr.bf16.gmra.mxu0 %v145
  %v660 = vpop.f32.mrf.mxu0
  %v661 = vadd.f32 %v517, %v660
  %v662 = vpop.f32.mrf.mxu0
  %v663 = vpop.f32.mrf.mxu0
  %v664 = vadd.f32 %v520, %v663
  %v665 = vpop.f32.mrf.mxu0
  %666 = vmatprep.mubr.bf16.mxu0 %v150
  %667 = vmatmul.mubr.bf16.gmra.mxu0 %v149
  %v668 = vpop.f32.mrf.mxu0
  %v669 = vadd.f32 %v525, %v668
  %v670 = vpop.f32.mrf.mxu0
  %v671 = vpop.f32.mrf.mxu0
  %v672 = vadd.f32 %v528, %v671
  %v673 = vpop.f32.mrf.mxu0
  %674 = vmatprep.mubr.bf16.mxu0 %v154
  %675 = vmatmul.mubr.bf16.gmra.mxu0 %v153
  %v676 = vpop.f32.mrf.mxu0
  %v677 = vadd.f32 %v533, %v676
  %v678 = vpop.f32.mrf.mxu0
  %v679 = vpop.f32.mrf.mxu0
  %v680 = vadd.f32 %v536, %v679
  %v681 = vpop.f32.mrf.mxu0
  %682 = vmatprep.mubr.bf16.mxu0 %v158
  %683 = vmatmul.mubr.bf16.gmra.mxu0 %v157
  %v684 = vpop.f32.mrf.mxu0
  %v685 = vadd.f32 %v541, %v684
  %v686 = vpop.f32.mrf.mxu0
  %v687 = vpop.f32.mrf.mxu0
  %v688 = vadd.f32 %v544, %v687
  %v689 = vpop.f32.mrf.mxu0
  %690 = vmatprep.mubr.bf16.mxu0 %v162
  %691 = vmatmul.mubr.bf16.gmra.mxu0 %v161
  %v692 = vpop.f32.mrf.mxu0
  %v693 = vadd.f32 %v549, %v692
  %v694 = vpop.f32.mrf.mxu0
  %v695 = vpop.f32.mrf.mxu0
  %v696 = vadd.f32 %v552, %v695
  %v697 = vpop.f32.mrf.mxu0
  %698 = vmatprep.mubr.bf16.mxu0 %v166
  %699 = vmatmul.mubr.bf16.gmra.mxu0 %v165
  %v700 = vpop.f32.mrf.mxu0
  %v701 = vadd.f32 %v557, %v700
  %v702 = vpop.f32.mrf.mxu0
  %v703 = vpop.f32.mrf.mxu0
  %v704 = vadd.f32 %v560, %v703
  %v705 = vpop.f32.mrf.mxu0
  %706 = vmatprep.mubr.bf16.mxu0 %v170
  %707 = vmatmul.mubr.bf16.gmra.mxu0 %v169
  %v708 = vpop.f32.mrf.mxu0
  %v709 = vadd.f32 %v565, %v708
  %v710 = vpop.f32.mrf.mxu0
  %v711 = vpop.f32.mrf.mxu0
  %v712 = vadd.f32 %v568, %v711
  %v713 = vpop.f32.mrf.mxu0
  %714 = vmatprep.mubr.bf16.mxu0 %v174
  %715 = vmatmul.mubr.bf16.gmra.mxu0 %v173
  %v716 = vpop.f32.mrf.mxu0
  %v717 = vadd.f32 %v573, %v716
  %v718 = vpop.f32.mrf.mxu0
  %v719 = vpop.f32.mrf.mxu0
  %v720 = vadd.f32 %v576, %v719
  %v721 = vpop.f32.mrf.mxu0
  %722 = vmatprep.mubr.bf16.mxu0 %v178
  %723 = vmatmul.mubr.bf16.gmra.mxu0 %v177
  %v724 = vpop.f32.mrf.mxu0
  %v725 = vadd.f32 %v581, %v724
  %v726 = vpop.f32.mrf.mxu0
  %v727 = vpop.f32.mrf.mxu0
  %v728 = vpop.f32.mrf.mxu0
  %729 = vdwg.mxu0
  %v730 = vmax.f32 %v621, 0.0
  %v731 = vmax.f32 %v624, 0.0
  %v732 = vmax.f32 %v629, 0.0
  %v733 = vmax.f32 %v632, 0.0
  %v734 = vmax.f32 %v637, 0.0
  %v735 = vmax.f32 %v640, 0.0
  %v736 = vmax.f32 %v645, 0.0
  %v737 = vmax.f32 %v648, 0.0
  %v738 = vmax.f32 %v653, 0.0
  %v739 = vmax.f32 %v656, 0.0
  %v740 = vmax.f32 %v661, 0.0
  %v741 = vmax.f32 %v664, 0.0
  %v742 = vmax.f32 %v669, 0.0
  %v743 = vmax.f32 %v672, 0.0
  %v744 = vmax.f32 %v677, 0.0
  %v745 = vmax.f32 %v680, 0.0
  %v746 = vmax.f32 %v685, 0.0
  %v747 = vmax.f32 %v688, 0.0
  %v748 = vmax.f32 %v693, 0.0
  %v749 = vmax.f32 %v696, 0.0
  %v750 = vmax.f32 %v701, 0.0
  %v751 = vmax.f32 %v704, 0.0
  %v752 = vmax.f32 %v709, 0.0
  %v753 = vmax.f32 %v712, 0.0
  %v754 = vmax.f32 %v717, 0.0
  %v755 = vmax.f32 %v720, 0.0
  %v756 = vmax.f32 %v725, 0.0
  %vm757 = vcmask 523264
  %758 = vst.msk [vmem:[%s3] sm:$0xff] %vm757, %v730
  %759 = vst.msk [vmem:[%s3 + $0x8] sm:$0xff] %vm757, %v731
  %760 = vst.msk [vmem:[%s3 + $0x10] sm:$0xff] %vm757, %v732
  %761 = vst.msk [vmem:[%s3 + $0x18] sm:$0xff] %vm757, %v733
  %762 = vst.msk [vmem:[%s3 + $0x20] sm:$0xff] %vm757, %v734
  %763 = vst.msk [vmem:[%s3 + $0x28] sm:$0xff] %vm757, %v735
  %764 = vst.msk [vmem:[%s3 + $0x30] sm:$0xff] %vm757, %v736
  %765 = vst.msk [vmem:[%s3 + $0x38] sm:$0xff] %vm757, %v737
  %766 = vst.msk [vmem:[%s3 + $0x40] sm:$0xff] %vm757, %v738
  %767 = vst.msk [vmem:[%s3 + $0x48] sm:$0xff] %vm757, %v739
  %768 = vst.msk [vmem:[%s3 + $0x50] sm:$0xff] %vm757, %v740
  %769 = vst.msk [vmem:[%s3 + $0x58] sm:$0xff] %vm757, %v741
  %770 = vst.msk [vmem:[%s3 + $0x60] sm:$0xff] %vm757, %v742
  %771 = vst.msk [vmem:[%s3 + $0x68] sm:$0xff] %vm757, %v743
  %772 = vst.msk [vmem:[%s3 + $0x70] sm:$0xff] %vm757, %v744
  %773 = vst.msk [vmem:[%s3 + $0x78] sm:$0xff] %vm757, %v745
  %774 = vst.msk [vmem:[%s3 + $0x80] sm:$0xff] %vm757, %v746
  %775 = vst.msk [vmem:[%s3 + $0x88] sm:$0xff] %vm757, %v747
  %776 = vst.msk [vmem:[%s3 + $0x90] sm:$0xff] %vm757, %v748
  %777 = vst.msk [vmem:[%s3 + $0x98] sm:$0xff] %vm757, %v749
  %778 = vst.msk [vmem:[%s3 + $0xa0] sm:$0xff] %vm757, %v750
  %779 = vst.msk [vmem:[%s3 + $0xa8] sm:$0xff] %vm757, %v751
  %780 = vst.msk [vmem:[%s3 + $0xb0] sm:$0xff] %vm757, %v752
  %781 = vst.msk [vmem:[%s3 + $0xb8] sm:$0xff] %vm757, %v753
  %782 = vst.msk [vmem:[%s3 + $0xc0] sm:$0xff] %vm757, %v754
  %783 = vst.msk [vmem:[%s3 + $0xc8] sm:$0xff] %vm757, %v755
  %784 = vst.msk [vmem:[%s3 + $0xd0] sm:$0xff] %vm757, %v756
  // Predicated region
  $region14: #{model_forward.5} parent=0 // pred_check
    _
  $region15: #{model_forward.5} parent=0 // pred_check_branch
    %786 = sbr.rel (0) target = $region17
  $region16: #{model_forward.5} parent=0 // pred_region
    _
  $region17: #{model_forward.5} parent=0 // pred_fallthru
    _
  // Predicated region
  $region18: #{model_forward.5} parent=0 // pred_check
    _
  $region19: #{model_forward.5} parent=0 // pred_check_branch
    %788 = sbr.rel (0) target = $region21
  $region20: #{model_forward.5} parent=0 // pred_region
    _
  $region21: #{model_forward.5} parent=0 // pred_fallthru
    _

// kernel: model_forward.6
$region0: #{model_forward.6}
  #allocation0 [shape = 'u32[]', space=smem, size = 0x4, offset = 0x4, fixed_abs, tag = 'smem constant byte address 0x4 - core index']
  #allocation1 [shape = 'u32[144,128]{1,0:T(1,128)}', space=vmem, size = 0x12000, scoped, tag = 'internal scratch']
  %s0 = inlined_call_operand.vmem [shape: f32[140,576], index: 0, kind: input, shape index: {}]
  %s1 = inlined_call_operand.vmem [shape: bf16[576,64], index: 1, kind: input, shape index: {}]
  %s2 = inlined_call_operand.vmem [shape: f32[1,64], index: 2, kind: input, shape index: {}]
  %s3 = inlined_call_operand.vmem [shape: f32[140,64], index: 3, kind: output, shape index: {}]
  %s4 = sld [smem:[#allocation0]]
  $region22: #{model_forward.6} parent=0
    _
  %s6 = ssub.s32 1, %s4
  %s7 = scalar_select 0, %s6, %s4
  // Predicated region
  $region2: #{model_forward.6} parent=0 // pred_check
    _
  $region3: #{model_forward.6} parent=0 // pred_check_branch
    %9 = sbr.rel (0) target = $region5
  $region4: #{model_forward.6} parent=0 // pred_region
    _
  $region5: #{model_forward.6} parent=0 // pred_fallthru
    _
  // Predicated region
  $region6: #{model_forward.6} parent=0 // pred_check
    _
  $region7: #{model_forward.6} parent=0 // pred_check_branch
    %11 = sbr.rel (0) target = $region9
  $region8: #{model_forward.6} parent=0 // pred_region
    _
  $region9: #{model_forward.6} parent=0 // pred_fallthru
    _
  // Predicated region
  $region10: #{model_forward.6} parent=0 // pred_check
    _
  $region11: #{model_forward.6} parent=0 // pred_check_branch
    %13 = sbr.rel (0) target = $region13
  $region12: #{model_forward.6} parent=0 // pred_region
    _
  $region13: #{model_forward.6} parent=0 // pred_fallthru
    _
  %v15 = vld [vmem:[%s0] sm:$0xff]
  %v16 = vld [vmem:[%s0 + $0x8] sm:$0xff]
  %v17 = vld [vmem:[%s0 + $0x10] sm:$0xff]
  %v18 = vld [vmem:[%s0 + $0x18] sm:$0xff]
  %v19 = vld [vmem:[%s0 + $0x20] sm:$0xff]
  %v20 = vld [vmem:[%s0 + $0x28] sm:$0xff]
  %v21 = vld [vmem:[%s0 + $0x30] sm:$0xff]
  %v22 = vld [vmem:[%s0 + $0x38] sm:$0xff]
  %v23 = vld [vmem:[%s0 + $0x40] sm:$0xff]
  %v24 = vld [vmem:[%s0 + $0x48] sm:$0xff]
  %v25 = vld [vmem:[%s0 + $0x50] sm:$0xff]
  %v26 = vld [vmem:[%s0 + $0x58] sm:$0xff]
  %v27 = vld [vmem:[%s0 + $0x60] sm:$0xff]
  %v28 = vld [vmem:[%s0 + $0x68] sm:$0xff]
  %v29 = vld [vmem:[%s0 + $0x70] sm:$0xff]
  %v30 = vld [vmem:[%s0 + $0x78] sm:$0xff]
  %v31 = vld [vmem:[%s0 + $0x80] sm:$0xff]
  %v32 = vld [vmem:[%s0 + $0x88] sm:$0xff]
  %v33 = vld [vmem:[%s0 + $0x90] sm:$0xff]
  %v34 = vld [vmem:[%s0 + $0x98] sm:$0xff]
  %v35 = vld [vmem:[%s0 + $0xa0] sm:$0xff]
  %v36 = vld [vmem:[%s0 + $0xa8] sm:$0xff]
  %v37 = vld [vmem:[%s0 + $0xb0] sm:$0xff]
  %v38 = vld [vmem:[%s0 + $0xb8] sm:$0xff]
  %v39 = vld [vmem:[%s0 + $0xc0] sm:$0xff]
  %v40 = vld [vmem:[%s0 + $0xc8] sm:$0xff]
  %v41 = vld [vmem:[%s0 + $0xd0] sm:$0xff]
  %v42 = vld [vmem:[%s0 + $0xd8] sm:$0xff]
  %v43 = vld [vmem:[%s0 + $0xe0] sm:$0xff]
  %v44 = vld [vmem:[%s0 + $0xe8] sm:$0xff]
  %v45 = vld [vmem:[%s0 + $0xf0] sm:$0xff]
  %v46 = vld [vmem:[%s0 + $0xf8] sm:$0xff]
  %v47 = vld [vmem:[%s0 + $0x100] sm:$0xff]
  %v48 = vld [vmem:[%s0 + $0x108] sm:$0xff]
  %v49 = vld [vmem:[%s0 + $0x110] sm:$0xff]
  %v50 = vld [vmem:[%s0 + $0x118] sm:$0xff]
  %v51 = vld [vmem:[%s0 + $0x120] sm:$0xff]
  %v52 = vld [vmem:[%s0 + $0x128] sm:$0xff]
  %v53 = vld [vmem:[%s0 + $0x130] sm:$0xff]
  %v54 = vld [vmem:[%s0 + $0x138] sm:$0xff]
  %v55 = vld [vmem:[%s0 + $0x140] sm:$0xff]
  %v56 = vld [vmem:[%s0 + $0x148] sm:$0xff]
  %v57 = vld [vmem:[%s0 + $0x150] sm:$0xff]
  %v58 = vld [vmem:[%s0 + $0x158] sm:$0xff]
  %v59 = vld [vmem:[%s0 + $0x160] sm:$0xff]
  %v60 = vld [vmem:[%s0 + $0x168] sm:$0xff]
  %v61 = vld [vmem:[%s0 + $0x170] sm:$0xff]
  %v62 = vld [vmem:[%s0 + $0x178] sm:$0xff]
  %v63 = vld [vmem:[%s0 + $0x180] sm:$0xff]
  %v64 = vld [vmem:[%s0 + $0x188] sm:$0xff]
  %v65 = vld [vmem:[%s0 + $0x190] sm:$0xff]
  %v66 = vld [vmem:[%s0 + $0x198] sm:$0xff]
  %v67 = vld [vmem:[%s0 + $0x1a0] sm:$0xff]
  %v68 = vld [vmem:[%s0 + $0x1a8] sm:$0xff]
  %v69 = vld [vmem:[%s0 + $0x1b0] sm:$0xff]
  %v70 = vld [vmem:[%s0 + $0x1b8] sm:$0xff]
  %v71 = vld [vmem:[%s0 + $0x1c0] sm:$0xff]
  %v72 = vld [vmem:[%s0 + $0x1c8] sm:$0xff]
  %v73 = vld [vmem:[%s0 + $0x1d0] sm:$0xff]
  %v74 = vld [vmem:[%s0 + $0x1d8] sm:$0xff]
  %v75 = vld [vmem:[%s0 + $0x1e0] sm:$0xff]
  %v76 = vld [vmem:[%s0 + $0x1e8] sm:$0xff]
  %v77 = vld [vmem:[%s0 + $0x1f0] sm:$0xff]
  %v78 = vld [vmem:[%s0 + $0x1f8] sm:$0xff]
  %v79 = vld [vmem:[%s0 + $0x200] sm:$0xff]
  %v80 = vld [vmem:[%s0 + $0x208] sm:$0xff]
  %v81 = vld [vmem:[%s0 + $0x210] sm:$0xff]
  %v82 = vld [vmem:[%s0 + $0x218] sm:$0xff]
  %v83 = vld [vmem:[%s0 + $0x220] sm:$0xff]
  %v84 = vld [vmem:[%s0 + $0x228] sm:$0xff]
  %v85 = vld [vmem:[%s0 + $0x230] sm:$0xff]
  %v86 = vld [vmem:[%s0 + $0x238] sm:$0xff]
  %v87 = vld [vmem:[%s0 + $0x240] sm:$0xff]
  %v88 = vld [vmem:[%s0 + $0x248] sm:$0xff]
  %v89 = vld [vmem:[%s0 + $0x250] sm:$0xff]
  %v90 = vld [vmem:[%s0 + $0x258] sm:$0xff]
  %v91 = vld [vmem:[%s0 + $0x260] sm:$0xff]
  %v92 = vld [vmem:[%s0 + $0x268] sm:$0xff]
  %v93 = vld [vmem:[%s0 + $0x270] sm:$0xff]
  %v94 = vld [vmem:[%s0 + $0x278] sm:$0xff]
  %v95 = vld [vmem:[%s0 + $0x280] sm:$0xff]
  %v96 = vld [vmem:[%s0 + $0x288] sm:$0xff]
  %v97 = vld [vmem:[%s0 + $0x290] sm:$0xff]
  %v98 = vld [vmem:[%s0 + $0x298] sm:$0xff]
  %v99 = vld [vmem:[%s0 + $0x2a0] sm:$0xff]
  %v100 = vld [vmem:[%s0 + $0x2a8] sm:$0xf]
  %v101 = vld [vmem:[%s0 + $0x2b0] sm:$0xf]
  %v102 = vld [vmem:[%s0 + $0x2b8] sm:$0xf]
  %v103 = vld [vmem:[%s0 + $0x2c0] sm:$0xf]
  %v104 = vld [vmem:[%s0 + $0x2c8] sm:$0xf]
  %v105 = vpack.c.bf16 %v20, %v15
  %v106 = vpack.c.bf16 %v21, %v16
  %v107 = vpack.c.bf16 %v22, %v17
  %v108 = vpack.c.bf16 %v23, %v18
  %v109 = vpack.c.bf16 %v24, %v19
  %v110 = vpack.c.bf16 %v30, %v25
  %v111 = vpack.c.bf16 %v31, %v26
  %v112 = vpack.c.bf16 %v32, %v27
  %v113 = vpack.c.bf16 %v33, %v28
  %v114 = vpack.c.bf16 %v34, %v29
  %v115 = vpack.c.bf16 %v40, %v35
  %v116 = vpack.c.bf16 %v41, %v36
  %v117 = vpack.c.bf16 %v42, %v37
  %v118 = vpack.c.bf16 %v43, %v38
  %v119 = vpack.c.bf16 %v44, %v39
  %v120 = vpack.c.bf16 %v50, %v45
  %v121 = vpack.c.bf16 %v51, %v46
  %v122 = vpack.c.bf16 %v52, %v47
  %v123 = vpack.c.bf16 %v53, %v48
  %v124 = vpack.c.bf16 %v54, %v49
  %v125 = vpack.c.bf16 %v60, %v55
  %v126 = vpack.c.bf16 %v61, %v56
  %v127 = vpack.c.bf16 %v62, %v57
  %v128 = vpack.c.bf16 %v63, %v58
  %v129 = vpack.c.bf16 %v64, %v59
  %v130 = vpack.c.bf16 %v70, %v65
  %v131 = vpack.c.bf16 %v71, %v66
  %v132 = vpack.c.bf16 %v72, %v67
  %v133 = vpack.c.bf16 %v73, %v68
  %v134 = vpack.c.bf16 %v74, %v69
  %v135 = vpack.c.bf16 %v80, %v75
  %v136 = vpack.c.bf16 %v81, %v76
  %v137 = vpack.c.bf16 %v82, %v77
  %v138 = vpack.c.bf16 %v83, %v78
  %v139 = vpack.c.bf16 %v84, %v79
  %v140 = vpack.c.bf16 %v90, %v85
  %v141 = vpack.c.bf16 %v91, %v86
  %v142 = vpack.c.bf16 %v92, %v87
  %v143 = vpack.c.bf16 %v93, %v88
  %v144 = vpack.c.bf16 %v94, %v89
  %v145 = vpack.c.bf16 %v100, %v95
  %v146 = vpack.c.bf16 %v101, %v96
  %v147 = vpack.c.bf16 %v102, %v97
  %v148 = vpack.c.bf16 %v103, %v98
  %v149 = vpack.c.bf16 %v104, %v99
  %v150 = vld [vmem:[%s1] sm:$0xf]
  %v151 = vld [vmem:[%s1 + $0x4] sm:$0xf]
  %v152 = vld [vmem:[%s1 + $0x8] sm:$0xf]
  %v153 = vld [vmem:[%s1 + $0xc] sm:$0xf]
  %v154 = vld [vmem:[%s1 + $0x10] sm:$0xf]
  %v155 = vld [vmem:[%s1 + $0x14] sm:$0xf]
  %v156 = vld [vmem:[%s1 + $0x18] sm:$0xf]
  %v157 = vld [vmem:[%s1 + $0x1c] sm:$0xf]
  %v158 = vld [vmem:[%s1 + $0x20] sm:$0xf]
  %v159 = vld [vmem:[%s1 + $0x24] sm:$0xf]
  %v160 = vld [vmem:[%s1 + $0x28] sm:$0xf]
  %v161 = vld [vmem:[%s1 + $0x2c] sm:$0xf]
  %v162 = vld [vmem:[%s1 + $0x30] sm:$0xf]
  %v163 = vld [vmem:[%s1 + $0x34] sm:$0xf]
  %v164 = vld [vmem:[%s1 + $0x38] sm:$0xf]
  %v165 = vld [vmem:[%s1 + $0x3c] sm:$0xf]
  %v166 = vld [vmem:[%s1 + $0x40] sm:$0xf]
  %v167 = vld [vmem:[%s1 + $0x44] sm:$0xf]
  %v168 = vld [vmem:[%s1 + $0x48] sm:$0xf]
  %v169 = vld [vmem:[%s1 + $0x4c] sm:$0xf]
  %v170 = vld [vmem:[%s1 + $0x50] sm:$0xf]
  %v171 = vld [vmem:[%s1 + $0x54] sm:$0xf]
  %v172 = vld [vmem:[%s1 + $0x58] sm:$0xf]
  %v173 = vld [vmem:[%s1 + $0x5c] sm:$0xf]
  %v174 = vld [vmem:[%s1 + $0x60] sm:$0xf]
  %v175 = vld [vmem:[%s1 + $0x64] sm:$0xf]
  %v176 = vld [vmem:[%s1 + $0x68] sm:$0xf]
  %v177 = vld [vmem:[%s1 + $0x6c] sm:$0xf]
  %v178 = vld [vmem:[%s1 + $0x70] sm:$0xf]
  %v179 = vld [vmem:[%s1 + $0x74] sm:$0xf]
  %v180 = vld [vmem:[%s1 + $0x78] sm:$0xf]
  %v181 = vld [vmem:[%s1 + $0x7c] sm:$0xf]
  %v182 = vld [vmem:[%s1 + $0x80] sm:$0xf]
  %v183 = vld [vmem:[%s1 + $0x84] sm:$0xf]
  %v184 = vld [vmem:[%s1 + $0x88] sm:$0xf]
  %v185 = vld [vmem:[%s1 + $0x8c] sm:$0xf]
  %v186 = vld [vmem:[%s1 + $0x90] sm:$0xf]
  %v187 = vld [vmem:[%s1 + $0x94] sm:$0xf]
  %v188 = vld [vmem:[%s1 + $0x98] sm:$0xf]
  %v189 = vld [vmem:[%s1 + $0x9c] sm:$0xf]
  %v190 = vld [vmem:[%s1 + $0xa0] sm:$0xf]
  %v191 = vld [vmem:[%s1 + $0xa4] sm:$0xf]
  %v192 = vld [vmem:[%s1 + $0xa8] sm:$0xf]
  %v193 = vld [vmem:[%s1 + $0xac] sm:$0xf]
  %v194 = vld [vmem:[%s1 + $0xb0] sm:$0xf]
  %v195 = vld [vmem:[%s1 + $0xb4] sm:$0xf]
  %v196 = vld [vmem:[%s1 + $0xb8] sm:$0xf]
  %v197 = vld [vmem:[%s1 + $0xbc] sm:$0xf]
  %v198 = vld [vmem:[%s1 + $0xc0] sm:$0xf]
  %v199 = vld [vmem:[%s1 + $0xc4] sm:$0xf]
  %v200 = vld [vmem:[%s1 + $0xc8] sm:$0xf]
  %v201 = vld [vmem:[%s1 + $0xcc] sm:$0xf]
  %v202 = vld [vmem:[%s1 + $0xd0] sm:$0xf]
  %v203 = vld [vmem:[%s1 + $0xd4] sm:$0xf]
  %v204 = vld [vmem:[%s1 + $0xd8] sm:$0xf]
  %v205 = vld [vmem:[%s1 + $0xdc] sm:$0xf]
  %v206 = vld [vmem:[%s1 + $0xe0] sm:$0xf]
  %v207 = vld [vmem:[%s1 + $0xe4] sm:$0xf]
  %v208 = vld [vmem:[%s1 + $0xe8] sm:$0xf]
  %v209 = vld [vmem:[%s1 + $0xec] sm:$0xf]
  %v210 = vld [vmem:[%s1 + $0xf0] sm:$0xf]
  %v211 = vld [vmem:[%s1 + $0xf4] sm:$0xf]
  %v212 = vld [vmem:[%s1 + $0xf8] sm:$0xf]
  %v213 = vld [vmem:[%s1 + $0xfc] sm:$0xf]
  %v214 = vld [vmem:[%s1 + $0x100] sm:$0xf]
  %v215 = vld [vmem:[%s1 + $0x104] sm:$0xf]
  %v216 = vld [vmem:[%s1 + $0x108] sm:$0xf]
  %v217 = vld [vmem:[%s1 + $0x10c] sm:$0xf]
  %v218 = vld [vmem:[%s1 + $0x110] sm:$0xf]
  %v219 = vld [vmem:[%s1 + $0x114] sm:$0xf]
  %v220 = vld [vmem:[%s1 + $0x118] sm:$0xf]
  %v221 = vld [vmem:[%s1 + $0x11c] sm:$0xf]
  %v222 = vld [vmem:[%s2] sm:$0x1]
  %v224 = vlaneseq
  %v225 = vshrl.u32 %v224, 7
  %v226 = vsub.s32 0, %v225
  %v227 = vrot.slane %v222, %v226
  %v301 = vunpack.c.l.b16 %v150
  %v302 = vunpack.c.l.b16 %v151
  %v303 = vunpack.c.l.b16 %v152
  %v304 = vunpack.c.l.b16 %v153
  %v305 = vunpack.c.l.b16 %v154
  %v306 = vunpack.c.l.b16 %v155
  %v307 = vunpack.c.l.b16 %v156
  %v308 = vunpack.c.l.b16 %v157
  %v309 = vunpack.c.l.b16 %v158
  %v310 = vunpack.c.l.b16 %v159
  %v311 = vunpack.c.l.b16 %v160
  %v312 = vunpack.c.l.b16 %v161
  %v313 = vunpack.c.l.b16 %v162
  %v314 = vunpack.c.l.b16 %v163
  %v315 = vunpack.c.l.b16 %v164
  %v316 = vunpack.c.l.b16 %v165
  %v317 = vunpack.c.l.b16 %v166
  %v318 = vunpack.c.l.b16 %v167
  %v319 = vunpack.c.l.b16 %v168
  %v320 = vunpack.c.l.b16 %v169
  %v321 = vunpack.c.l.b16 %v170
  %v322 = vunpack.c.l.b16 %v171
  %v323 = vunpack.c.l.b16 %v172
  %v324 = vunpack.c.l.b16 %v173
  %v325 = vunpack.c.l.b16 %v174
  %v326 = vunpack.c.l.b16 %v175
  %v327 = vunpack.c.l.b16 %v176
  %v328 = vunpack.c.l.b16 %v177
  %v329 = vunpack.c.l.b16 %v178
  %v330 = vunpack.c.l.b16 %v179
  %v331 = vunpack.c.l.b16 %v180
  %v332 = vunpack.c.l.b16 %v181
  %v333 = vunpack.c.l.b16 %v182
  %v334 = vunpack.c.l.b16 %v183
  %v335 = vunpack.c.l.b16 %v184
  %v336 = vunpack.c.l.b16 %v185
  %v337 = vunpack.c.l.b16 %v186
  %v338 = vunpack.c.l.b16 %v187
  %v339 = vunpack.c.l.b16 %v188
  %v340 = vunpack.c.l.b16 %v189
  %v341 = vunpack.c.l.b16 %v190
  %v342 = vunpack.c.l.b16 %v191
  %v343 = vunpack.c.l.b16 %v192
  %v344 = vunpack.c.l.b16 %v193
  %v345 = vunpack.c.l.b16 %v194
  %v346 = vunpack.c.l.b16 %v195
  %v347 = vunpack.c.l.b16 %v196
  %v348 = vunpack.c.l.b16 %v197
  %v349 = vunpack.c.l.b16 %v198
  %v350 = vunpack.c.l.b16 %v199
  %v351 = vunpack.c.l.b16 %v200
  %v352 = vunpack.c.l.b16 %v201
  %v353 = vunpack.c.l.b16 %v202
  %v354 = vunpack.c.l.b16 %v203
  %v355 = vunpack.c.l.b16 %v204
  %v356 = vunpack.c.l.b16 %v205
  %v357 = vunpack.c.l.b16 %v206
  %v358 = vunpack.c.l.b16 %v207
  %v359 = vunpack.c.l.b16 %v208
  %v360 = vunpack.c.l.b16 %v209
  %v361 = vunpack.c.l.b16 %v210
  %v362 = vunpack.c.l.b16 %v211
  %v363 = vunpack.c.l.b16 %v212
  %v364 = vunpack.c.l.b16 %v213
  %v365 = vunpack.c.l.b16 %v214
  %v366 = vunpack.c.l.b16 %v215
  %v367 = vunpack.c.l.b16 %v216
  %v368 = vunpack.c.l.b16 %v217
  %v369 = vunpack.c.l.b16 %v218
  %v370 = vunpack.c.l.b16 %v219
  %v371 = vunpack.c.l.b16 %v220
  %v372 = vunpack.c.l.b16 %v221
  %v373 = vpack.c.b16 %v302, %v301
  %v374 = vpack.c.b16 %v304, %v303
  %v375 = vpack.c.b16 %v306, %v305
  %v376 = vpack.c.b16 %v308, %v307
  %v377 = vpack.c.b16 %v310, %v309
  %v378 = vpack.c.b16 %v312, %v311
  %v379 = vpack.c.b16 %v314, %v313
  %v380 = vpack.c.b16 %v316, %v315
  %v381 = vpack.c.b16 %v318, %v317
  %v382 = vpack.c.b16 %v320, %v319
  %v383 = vpack.c.b16 %v322, %v321
  %v384 = vpack.c.b16 %v324, %v323
  %v385 = vpack.c.b16 %v326, %v325
  %v386 = vpack.c.b16 %v328, %v327
  %v387 = vpack.c.b16 %v330, %v329
  %v388 = vpack.c.b16 %v332, %v331
  %v389 = vpack.c.b16 %v334, %v333
  %v390 = vpack.c.b16 %v336, %v335
  %v391 = vpack.c.b16 %v338, %v337
  %v392 = vpack.c.b16 %v340, %v339
  %v393 = vpack.c.b16 %v342, %v341
  %v394 = vpack.c.b16 %v344, %v343
  %v395 = vpack.c.b16 %v346, %v345
  %v396 = vpack.c.b16 %v348, %v347
  %v397 = vpack.c.b16 %v350, %v349
  %v398 = vpack.c.b16 %v352, %v351
  %v399 = vpack.c.b16 %v354, %v353
  %v400 = vpack.c.b16 %v356, %v355
  %v401 = vpack.c.b16 %v358, %v357
  %v402 = vpack.c.b16 %v360, %v359
  %v403 = vpack.c.b16 %v362, %v361
  %v404 = vpack.c.b16 %v364, %v363
  %v405 = vpack.c.b16 %v366, %v365
  %v406 = vpack.c.b16 %v368, %v367
  %v407 = vpack.c.b16 %v370, %v369
  %v408 = vpack.c.b16 %v372, %v371
  %vm445 = vcmask 523264
  %v447 = vsel %vm445, %v109, 0
  %v450 = vsel %vm445, %v114, 0
  %v453 = vsel %vm445, %v119, 0
  %v456 = vsel %vm445, %v124, 0
  %v459 = vsel %vm445, %v129, 0
  %v462 = vsel %vm445, %v134, 0
  %v465 = vsel %vm445, %v139, 0
  %v468 = vsel %vm445, %v144, 0
  %v471 = vsel %vm445, %v149, 0
  %473 = vmatprep.subr.bf16.mxu0 0
  %474 = vmatpush1.bf16.msra.mxu0 %v380
  %475 = vmatprep.subr.bf16.mxu0 0
  %476 = vmatpush1.bf16.msra.mxu0 %v379
  %477 = vmatprep.subr.bf16.mxu0 0
  %478 = vmatpush1.bf16.msra.mxu0 %v378
  %479 = vmatprep.subr.bf16.mxu0 0
  %480 = vmatpush1.bf16.msra.mxu0 %v377
  %481 = vmatprep.subr.bf16.mxu0 0
  %482 = vmatpush1.bf16.msra.mxu0 %v376
  %483 = vmatprep.subr.bf16.mxu0 0
  %484 = vmatpush1.bf16.msra.mxu0 %v375
  %485 = vmatprep.subr.bf16.mxu0 0
  %486 = vmatpush1.bf16.msra.mxu0 %v374
  %487 = vmatprep.subr.bf16.mxu0 0
  %488 = vmatpush1.bf16.msra.mxu0 %v373
  %489 = vmatprep.subr.bf16.mxu0 0
  %490 = vmatpush2.bf16.msra.mxu0 %v388
  %491 = vmatprep.subr.bf16.mxu0 0
  %492 = vmatpush2.bf16.msra.mxu0 %v387
  %493 = vmatprep.subr.bf16.mxu0 0
  %494 = vmatpush2.bf16.msra.mxu0 %v386
  %495 = vmatprep.subr.bf16.mxu0 0
  %496 = vmatpush2.bf16.msra.mxu0 %v385
  %497 = vmatprep.subr.bf16.mxu0 0
  %498 = vmatpush2.bf16.msra.mxu0 %v384
  %499 = vmatprep.subr.bf16.mxu0 0
  %500 = vmatpush2.bf16.msra.mxu0 %v383
  %501 = vmatprep.subr.bf16.mxu0 0
  %502 = vmatpush2.bf16.msra.mxu0 %v382
  %503 = vmatprep.subr.bf16.mxu0 0
  %504 = vmatpush2.bf16.msra.mxu0 %v381
  %505 = vmatprep.mubr.bf16.mxu0 %v106
  %506 = vmatmul.mubr.bf16.gmra.mxu0 %v105
  %v507 = vpop.f32.mrf.mxu0
  %v508 = vadd.f32 %v227, %v507
  %v509 = vpop.f32.mrf.mxu0
  %v510 = vpop.f32.mrf.mxu0
  %v511 = vadd.f32 %v227, %v510
  %v512 = vpop.f32.mrf.mxu0
  %513 = vmatprep.mubr.bf16.mxu0 %v111
  %514 = vmatmul.mubr.bf16.gmra.mxu0 %v110
  %v515 = vpop.f32.mrf.mxu0
  %v516 = vadd.f32 %v227, %v515
  %v517 = vpop.f32.mrf.mxu0
  %v518 = vpop.f32.mrf.mxu0
  %v519 = vadd.f32 %v227, %v518
  %v520 = vpop.f32.mrf.mxu0
  %521 = vmatprep.mubr.bf16.mxu0 %v116
  %522 = vmatmul.mubr.bf16.gmra.mxu0 %v115
  %v523 = vpop.f32.mrf.mxu0
  %v524 = vadd.f32 %v227, %v523
  %v525 = vpop.f32.mrf.mxu0
  %v526 = vpop.f32.mrf.mxu0
  %v527 = vadd.f32 %v227, %v526
  %v528 = vpop.f32.mrf.mxu0
  %529 = vmatprep.mubr.bf16.mxu0 %v121
  %530 = vmatmul.mubr.bf16.gmra.mxu0 %v120
  %v531 = vpop.f32.mrf.mxu0
  %v532 = vadd.f32 %v227, %v531
  %v533 = vpop.f32.mrf.mxu0
  %v534 = vpop.f32.mrf.mxu0
  %v535 = vadd.f32 %v227, %v534
  %v536 = vpop.f32.mrf.mxu0
  %537 = vmatprep.mubr.bf16.mxu0 %v126
  %538 = vmatmul.mubr.bf16.gmra.mxu0 %v125
  %v539 = vpop.f32.mrf.mxu0
  %v540 = vadd.f32 %v227, %v539
  %v541 = vpop.f32.mrf.mxu0
  %v542 = vpop.f32.mrf.mxu0
  %v543 = vadd.f32 %v227, %v542
  %v544 = vpop.f32.mrf.mxu0
  %545 = vmatprep.mubr.bf16.mxu0 %v131
  %546 = vmatmul.mubr.bf16.gmra.mxu0 %v130
  %v547 = vpop.f32.mrf.mxu0
  %v548 = vadd.f32 %v227, %v547
  %v549 = vpop.f32.mrf.mxu0
  %v550 = vpop.f32.mrf.mxu0
  %v551 = vadd.f32 %v227, %v550
  %v552 = vpop.f32.mrf.mxu0
  %553 = vmatprep.mubr.bf16.mxu0 %v136
  %554 = vmatmul.mubr.bf16.gmra.mxu0 %v135
  %v555 = vpop.f32.mrf.mxu0
  %v556 = vadd.f32 %v227, %v555
  %v557 = vpop.f32.mrf.mxu0
  %v558 = vpop.f32.mrf.mxu0
  %v559 = vadd.f32 %v227, %v558
  %v560 = vpop.f32.mrf.mxu0
  %561 = vmatprep.mubr.bf16.mxu0 %v141
  %562 = vmatmul.mubr.bf16.gmra.mxu0 %v140
  %v563 = vpop.f32.mrf.mxu0
  %v564 = vadd.f32 %v227, %v563
  %v565 = vpop.f32.mrf.mxu0
  %v566 = vpop.f32.mrf.mxu0
  %v567 = vadd.f32 %v227, %v566
  %v568 = vpop.f32.mrf.mxu0
  %569 = vmatprep.mubr.bf16.mxu0 %v146
  %570 = vmatmul.mubr.bf16.gmra.mxu0 %v145
  %v571 = vpop.f32.mrf.mxu0
  %v572 = vadd.f32 %v227, %v571
  %v573 = vpop.f32.mrf.mxu0
  %v574 = vpop.f32.mrf.mxu0
  %v575 = vadd.f32 %v227, %v574
  %v576 = vpop.f32.mrf.mxu0
  %577 = vdwg.mxu0
  %578 = vmatprep.subr.bf16.mxu0 0
  %579 = vmatpush1.bf16.msra.mxu0 %v396
  %580 = vmatprep.subr.bf16.mxu0 0
  %581 = vmatpush1.bf16.msra.mxu0 %v395
  %582 = vmatprep.subr.bf16.mxu0 0
  %583 = vmatpush1.bf16.msra.mxu0 %v394
  %584 = vmatprep.subr.bf16.mxu0 0
  %585 = vmatpush1.bf16.msra.mxu0 %v393
  %586 = vmatprep.subr.bf16.mxu0 0
  %587 = vmatpush1.bf16.msra.mxu0 %v392
  %588 = vmatprep.subr.bf16.mxu0 0
  %589 = vmatpush1.bf16.msra.mxu0 %v391
  %590 = vmatprep.subr.bf16.mxu0 0
  %591 = vmatpush1.bf16.msra.mxu0 %v390
  %592 = vmatprep.subr.bf16.mxu0 0
  %593 = vmatpush1.bf16.msra.mxu0 %v389
  %594 = vmatprep.subr.bf16.mxu0 0
  %595 = vmatpush2.bf16.msra.mxu0 %v404
  %596 = vmatprep.subr.bf16.mxu0 0
  %597 = vmatpush2.bf16.msra.mxu0 %v403
  %598 = vmatprep.subr.bf16.mxu0 0
  %599 = vmatpush2.bf16.msra.mxu0 %v402
  %600 = vmatprep.subr.bf16.mxu0 0
  %601 = vmatpush2.bf16.msra.mxu0 %v401
  %602 = vmatprep.subr.bf16.mxu0 0
  %603 = vmatpush2.bf16.msra.mxu0 %v400
  %604 = vmatprep.subr.bf16.mxu0 0
  %605 = vmatpush2.bf16.msra.mxu0 %v399
  %606 = vmatprep.subr.bf16.mxu0 0
  %607 = vmatpush2.bf16.msra.mxu0 %v398
  %608 = vmatprep.subr.bf16.mxu0 0
  %609 = vmatpush2.bf16.msra.mxu0 %v397
  %610 = vmatprep.mubr.bf16.mxu0 %v108
  %611 = vmatmul.mubr.bf16.gmra.mxu0 %v107
  %v612 = vpop.f32.mrf.mxu0
  %v613 = vadd.f32 %v508, %v612
  %v614 = vpop.f32.mrf.mxu0
  %v615 = vpop.f32.mrf.mxu0
  %v616 = vadd.f32 %v511, %v615
  %v617 = vpop.f32.mrf.mxu0
  %618 = vmatprep.mubr.bf16.mxu0 %v113
  %619 = vmatmul.mubr.bf16.gmra.mxu0 %v112
  %v620 = vpop.f32.mrf.mxu0
  %v621 = vadd.f32 %v516, %v620
  %v622 = vpop.f32.mrf.mxu0
  %v623 = vpop.f32.mrf.mxu0
  %v624 = vadd.f32 %v519, %v623
  %v625 = vpop.f32.mrf.mxu0
  %626 = vmatprep.mubr.bf16.mxu0 %v118
  %627 = vmatmul.mubr.bf16.gmra.mxu0 %v117
  %v628 = vpop.f32.mrf.mxu0
  %v629 = vadd.f32 %v524, %v628
  %v630 = vpop.f32.mrf.mxu0
  %v631 = vpop.f32.mrf.mxu0
  %v632 = vadd.f32 %v527, %v631
  %v633 = vpop.f32.mrf.mxu0
  %634 = vmatprep.mubr.bf16.mxu0 %v123
  %635 = vmatmul.mubr.bf16.gmra.mxu0 %v122
  %v636 = vpop.f32.mrf.mxu0
  %v637 = vadd.f32 %v532, %v636
  %v638 = vpop.f32.mrf.mxu0
  %v639 = vpop.f32.mrf.mxu0
  %v640 = vadd.f32 %v535, %v639
  %v641 = vpop.f32.mrf.mxu0
  %642 = vmatprep.mubr.bf16.mxu0 %v128
  %643 = vmatmul.mubr.bf16.gmra.mxu0 %v127
  %v644 = vpop.f32.mrf.mxu0
  %v645 = vadd.f32 %v540, %v644
  %v646 = vpop.f32.mrf.mxu0
  %v647 = vpop.f32.mrf.mxu0
  %v648 = vadd.f32 %v543, %v647
  %v649 = vpop.f32.mrf.mxu0
  %650 = vmatprep.mubr.bf16.mxu0 %v133
  %651 = vmatmul.mubr.bf16.gmra.mxu0 %v132
  %v652 = vpop.f32.mrf.mxu0
  %v653 = vadd.f32 %v548, %v652
  %v654 = vpop.f32.mrf.mxu0
  %v655 = vpop.f32.mrf.mxu0
  %v656 = vadd.f32 %v551, %v655
  %v657 = vpop.f32.mrf.mxu0
  %658 = vmatprep.mubr.bf16.mxu0 %v138
  %659 = vmatmul.mubr.bf16.gmra.mxu0 %v137
  %v660 = vpop.f32.mrf.mxu0
  %v661 = vadd.f32 %v556, %v660
  %v662 = vpop.f32.mrf.mxu0
  %v663 = vpop.f32.mrf.mxu0
  %v664 = vadd.f32 %v559, %v663
  %v665 = vpop.f32.mrf.mxu0
  %666 = vmatprep.mubr.bf16.mxu0 %v143
  %667 = vmatmul.mubr.bf16.gmra.mxu0 %v142
  %v668 = vpop.f32.mrf.mxu0
  %v669 = vadd.f32 %v564, %v668
  %v670 = vpop.f32.mrf.mxu0
  %v671 = vpop.f32.mrf.mxu0
  %v672 = vadd.f32 %v567, %v671
  %v673 = vpop.f32.mrf.mxu0
  %674 = vmatprep.mubr.bf16.mxu0 %v148
  %675 = vmatmul.mubr.bf16.gmra.mxu0 %v147
  %v676 = vpop.f32.mrf.mxu0
  %v677 = vadd.f32 %v572, %v676
  %v678 = vpop.f32.mrf.mxu0
  %v679 = vpop.f32.mrf.mxu0
  %v680 = vadd.f32 %v575, %v679
  %v681 = vpop.f32.mrf.mxu0
  %682 = vdwg.mxu0
  %683 = vmatprep.subr.bf16.mxu0 0
  %684 = vmatpush1.bf16.msra.mxu0 0
  %685 = vmatprep.subr.bf16.mxu0 0
  %686 = vmatpush1.bf16.msra.mxu0 0
  %687 = vmatprep.subr.bf16.mxu0 0
  %688 = vmatpush1.bf16.msra.mxu0 0
  %689 = vmatprep.subr.bf16.mxu0 0
  %690 = vmatpush1.bf16.msra.mxu0 0
  %691 = vmatprep.subr.bf16.mxu0 0
  %692 = vmatpush1.bf16.msra.mxu0 %v408
  %693 = vmatprep.subr.bf16.mxu0 0
  %694 = vmatpush1.bf16.msra.mxu0 %v407
  %695 = vmatprep.subr.bf16.mxu0 0
  %696 = vmatpush1.bf16.msra.mxu0 %v406
  %697 = vmatprep.subr.bf16.mxu0 0
  %698 = vmatpush1.bf16.msra.mxu0 %v405
  %699 = vmatprep.subr.bf16.mxu0 0
  %700 = vmatpush2.bf16.msra.mxu0 0
  %701 = vmatprep.subr.bf16.mxu0 0
  %702 = vmatpush2.bf16.msra.mxu0 0
  %703 = vmatprep.subr.bf16.mxu0 0
  %704 = vmatpush2.bf16.msra.mxu0 0
  %705 = vmatprep.subr.bf16.mxu0 0
  %706 = vmatpush2.bf16.msra.mxu0 0
  %707 = vmatprep.subr.bf16.mxu0 0
  %708 = vmatpush2.bf16.msra.mxu0 0
  %709 = vmatprep.subr.bf16.mxu0 0
  %710 = vmatpush2.bf16.msra.mxu0 0
  %711 = vmatprep.subr.bf16.mxu0 0
  %712 = vmatpush2.bf16.msra.mxu0 0
  %713 = vmatprep.subr.bf16.mxu0 0
  %714 = vmatpush2.bf16.msra.mxu0 0
  %715 = vmatprep.mubr.bf16.mxu0 0
  %716 = vmatmul.mubr.bf16.gmra.mxu0 %v447
  %v717 = vpop.f32.mrf.mxu0
  %v718 = vadd.f32 %v613, %v717
  %v719 = vpop.f32.mrf.mxu0
  %v720 = vpop.f32.mrf.mxu0
  %v721 = vadd.f32 %v616, %v720
  %v722 = vpop.f32.mrf.mxu0
  %723 = vmatprep.mubr.bf16.mxu0 0
  %724 = vmatmul.mubr.bf16.gmra.mxu0 %v450
  %v725 = vpop.f32.mrf.mxu0
  %v726 = vadd.f32 %v621, %v725
  %v727 = vpop.f32.mrf.mxu0
  %v728 = vpop.f32.mrf.mxu0
  %v729 = vadd.f32 %v624, %v728
  %v730 = vpop.f32.mrf.mxu0
  %731 = vmatprep.mubr.bf16.mxu0 0
  %732 = vmatmul.mubr.bf16.gmra.mxu0 %v453
  %v733 = vpop.f32.mrf.mxu0
  %v734 = vadd.f32 %v629, %v733
  %v735 = vpop.f32.mrf.mxu0
  %v736 = vpop.f32.mrf.mxu0
  %v737 = vadd.f32 %v632, %v736
  %v738 = vpop.f32.mrf.mxu0
  %739 = vmatprep.mubr.bf16.mxu0 0
  %740 = vmatmul.mubr.bf16.gmra.mxu0 %v456
  %v741 = vpop.f32.mrf.mxu0
  %v742 = vadd.f32 %v637, %v741
  %v743 = vpop.f32.mrf.mxu0
  %v744 = vpop.f32.mrf.mxu0
  %v745 = vadd.f32 %v640, %v744
  %v746 = vpop.f32.mrf.mxu0
  %747 = vmatprep.mubr.bf16.mxu0 0
  %748 = vmatmul.mubr.bf16.gmra.mxu0 %v459
  %v749 = vpop.f32.mrf.mxu0
  %v750 = vadd.f32 %v645, %v749
  %v751 = vpop.f32.mrf.mxu0
  %v752 = vpop.f32.mrf.mxu0
  %v753 = vadd.f32 %v648, %v752
  %v754 = vpop.f32.mrf.mxu0
  %755 = vmatprep.mubr.bf16.mxu0 0
  %756 = vmatmul.mubr.bf16.gmra.mxu0 %v462
  %v757 = vpop.f32.mrf.mxu0
  %v758 = vadd.f32 %v653, %v757
  %v759 = vpop.f32.mrf.mxu0
  %v760 = vpop.f32.mrf.mxu0
  %v761 = vadd.f32 %v656, %v760
  %v762 = vpop.f32.mrf.mxu0
  %763 = vmatprep.mubr.bf16.mxu0 0
  %764 = vmatmul.mubr.bf16.gmra.mxu0 %v465
  %v765 = vpop.f32.mrf.mxu0
  %v766 = vadd.f32 %v661, %v765
  %v767 = vpop.f32.mrf.mxu0
  %v768 = vpop.f32.mrf.mxu0
  %v769 = vadd.f32 %v664, %v768
  %v770 = vpop.f32.mrf.mxu0
  %771 = vmatprep.mubr.bf16.mxu0 0
  %772 = vmatmul.mubr.bf16.gmra.mxu0 %v468
  %v773 = vpop.f32.mrf.mxu0
  %v774 = vadd.f32 %v669, %v773
  %v775 = vpop.f32.mrf.mxu0
  %v776 = vpop.f32.mrf.mxu0
  %v777 = vadd.f32 %v672, %v776
  %v778 = vpop.f32.mrf.mxu0
  %779 = vmatprep.mubr.bf16.mxu0 0
  %780 = vmatmul.mubr.bf16.gmra.mxu0 %v471
  %v781 = vpop.f32.mrf.mxu0
  %v782 = vadd.f32 %v677, %v781
  %v783 = vpop.f32.mrf.mxu0
  %v784 = vpop.f32.mrf.mxu0
  %v785 = vadd.f32 %v680, %v784
  %v786 = vpop.f32.mrf.mxu0
  %787 = vdwg.mxu0
  %v788 = vmax.f32 %v718, 0.0
  %v789 = vmax.f32 %v721, 0.0
  %v790 = vmax.f32 %v726, 0.0
  %v791 = vmax.f32 %v729, 0.0
  %v792 = vmax.f32 %v734, 0.0
  %v793 = vmax.f32 %v737, 0.0
  %v794 = vmax.f32 %v742, 0.0
  %v795 = vmax.f32 %v745, 0.0
  %v796 = vmax.f32 %v750, 0.0
  %v797 = vmax.f32 %v753, 0.0
  %v798 = vmax.f32 %v758, 0.0
  %v799 = vmax.f32 %v761, 0.0
  %v800 = vmax.f32 %v766, 0.0
  %v801 = vmax.f32 %v769, 0.0
  %v802 = vmax.f32 %v774, 0.0
  %v803 = vmax.f32 %v777, 0.0
  %v804 = vmax.f32 %v782, 0.0
  %v805 = vmax.f32 %v785, 0.0
  %806 = vst.msk [vmem:[%s3] sm:$0xff] %vm445, %v788
  %807 = vst.msk [vmem:[%s3 + $0x8] sm:$0xff] %vm445, %v789
  %808 = vst.msk [vmem:[%s3 + $0x10] sm:$0xff] %vm445, %v790
  %809 = vst.msk [vmem:[%s3 + $0x18] sm:$0xff] %vm445, %v791
  %810 = vst.msk [vmem:[%s3 + $0x20] sm:$0xff] %vm445, %v792
  %811 = vst.msk [vmem:[%s3 + $0x28] sm:$0xff] %vm445, %v793
  %812 = vst.msk [vmem:[%s3 + $0x30] sm:$0xff] %vm445, %v794
  %813 = vst.msk [vmem:[%s3 + $0x38] sm:$0xff] %vm445, %v795
  %814 = vst.msk [vmem:[%s3 + $0x40] sm:$0xff] %vm445, %v796
  %815 = vst.msk [vmem:[%s3 + $0x48] sm:$0xff] %vm445, %v797
  %816 = vst.msk [vmem:[%s3 + $0x50] sm:$0xff] %vm445, %v798
  %817 = vst.msk [vmem:[%s3 + $0x58] sm:$0xff] %vm445, %v799
  %818 = vst.msk [vmem:[%s3 + $0x60] sm:$0xff] %vm445, %v800
  %819 = vst.msk [vmem:[%s3 + $0x68] sm:$0xff] %vm445, %v801
  %820 = vst.msk [vmem:[%s3 + $0x70] sm:$0xff] %vm445, %v802
  %821 = vst.msk [vmem:[%s3 + $0x78] sm:$0xff] %vm445, %v803
  %822 = vst.msk [vmem:[%s3 + $0x80] sm:$0xff] %vm445, %v804
  %vm823 = vcmask 519168
  %824 = vst.msk [vmem:[%s3 + $0x88] sm:$0xf] %vm823, %v805
  // Predicated region
  $region14: #{model_forward.6} parent=0 // pred_check
    _
  $region15: #{model_forward.6} parent=0 // pred_check_branch
    %826 = sbr.rel (0) target = $region17
  $region16: #{model_forward.6} parent=0 // pred_region
    _
  $region17: #{model_forward.6} parent=0 // pred_fallthru
    _
  // Predicated region
  $region18: #{model_forward.6} parent=0 // pred_check
    _
  $region19: #{model_forward.6} parent=0 // pred_check_branch
    %828 = sbr.rel (0) target = $region21
  $region20: #{model_forward.6} parent=0 // pred_region
    _
  $region21: #{model_forward.6} parent=0 // pred_fallthru
    _

// kernel: model_forward.7
$region0: #{model_forward.7}
  #allocation0 [shape = 'u32[]', space=smem, size = 0x4, offset = 0x4, fixed_abs, tag = 'smem constant byte address 0x4 - core index']
  #allocation1 [shape = 'u32[144,128]{1,0:T(1,128)}', space=vmem, size = 0x12000, scoped, tag = 'internal scratch']
  %s0 = inlined_call_operand.vmem [shape: f32[2,4480], index: 0, kind: input, shape index: {}]
  %s1 = inlined_call_operand.vmem [shape: bf16[4480,512], index: 1, kind: input, shape index: {}]
  %s2 = inlined_call_operand.vmem [shape: f32[1,512], index: 2, kind: input, shape index: {}]
  %s3 = inlined_call_operand.vmem [shape: bf16[512,256], index: 3, kind: input, shape index: {}]
  %s4 = inlined_call_operand.vmem [shape: f32[1,256], index: 4, kind: input, shape index: {}]
  %s5 = inlined_call_operand.vmem [shape: bf16[256,6], index: 5, kind: input, shape index: {}]
  %s6 = inlined_call_operand.vmem [shape: f32[1,6], index: 6, kind: input, shape index: {}]
  %s7 = inlined_call_operand.hbm [shape: f32[2,6], index: 7, kind: output, shape index: {}]
  %s8 = sld [smem:[#allocation0]]
  $region38: #{model_forward.7} parent=0
    _
  %s10 = ssub.s32 1, %s8
  %s11 = scalar_select 0, %s10, %s8
  $region1: #{model_forward.7} parent=0
    #allocation2 [shape = 'u8[1024]{0}', space=vmem, size = 0x400, scoped, tag = 'output window, operand 0, single buffered']
    #allocation3 [shape = 's32[1]{0}', space=sflag, size = 0x4, scoped, tag = 'scoped memory for model_forward.7']
    %12 = vsyncpa [#allocation3], 0
    // Predicated region
    $region2: #{model_forward.7} parent=1 // pred_check
      _
    $region3: #{model_forward.7} parent=1 // pred_check_branch
      %14 = sbr.rel (0) target = $region5
    $region4: #{model_forward.7} parent=1 // pred_region
      _
    $region5: #{model_forward.7} parent=1 // pred_fallthru
      _
    // Predicated region
    $region6: #{model_forward.7} parent=1 // pred_check
      _
    $region7: #{model_forward.7} parent=1 // pred_check_branch
      %16 = sbr.rel (0) target = $region9
    $region8: #{model_forward.7} parent=1 // pred_region
      _
    $region9: #{model_forward.7} parent=1 // pred_fallthru
      _
    // Predicated region
    $region10: #{model_forward.7} parent=1 // pred_check
      _
    $region11: #{model_forward.7} parent=1 // pred_check_branch
      %18 = sbr.rel (0) target = $region13
    $region12: #{model_forward.7} parent=1 // pred_region
      _
    $region13: #{model_forward.7} parent=1 // pred_fallthru
      _
    // Predicated region
    $region14: #{model_forward.7} parent=1 // pred_check
      _
    $region15: #{model_forward.7} parent=1 // pred_check_branch
      %20 = sbr.rel (0) target = $region17
    $region16: #{model_forward.7} parent=1 // pred_region
      _
    $region17: #{model_forward.7} parent=1 // pred_fallthru
      _
    // Predicated region
    $region18: #{model_forward.7} parent=1 // pred_check
      _
    $region19: #{model_forward.7} parent=1 // pred_check_branch
      %22 = sbr.rel (0) target = $region21
    $region20: #{model_forward.7} parent=1 // pred_region
      _
    $region21: #{model_forward.7} parent=1 // pred_fallthru
      _
    // Predicated region
    $region22: #{model_forward.7} parent=1 // pred_check
      _
    $region23: #{model_forward.7} parent=1 // pred_check_branch
      %24 = sbr.rel (0) target = $region25
    $region24: #{model_forward.7} parent=1 // pred_region
      _
    $region25: #{model_forward.7} parent=1 // pred_fallthru
      _
    // Predicated region
    $region26: #{model_forward.7} parent=1 // pred_check
      _
    $region27: #{model_forward.7} parent=1 // pred_check_branch
      %26 = sbr.rel (0) target = $region29
    $region28: #{model_forward.7} parent=1 // pred_region
      _
    $region29: #{model_forward.7} parent=1 // pred_fallthru
      _
    %v28 = vld [vmem:[%s0] sm:$0xff]
    %v29 = vld [vmem:[%s0 + $0x8] sm:$0xff]
    %v30 = vld [vmem:[%s0 + $0x10] sm:$0xff]
    %v31 = vld [vmem:[%s0 + $0x18] sm:$0xff]
    %v32 = vld [vmem:[%s0 + $0x20] sm:$0xff]
    %v33 = vld [vmem:[%s0 + $0x28] sm:$0xff]
    %v34 = vld [vmem:[%s0 + $0x30] sm:$0xff]
    %v35 = vld [vmem:[%s0 + $0x38] sm:$0xff]
    %v36 = vld [vmem:[%s0 + $0x40] sm:$0x3f]
    %v46 = vcombine.high %v28, %v28
    %v48 = vunpack.c.l.s4 1983009808
    %v49 = vunpack.c.0.s8 %v48
    %v50 = vlaneseq
    %v51 = vshrl.u32 %v50, 7
    %v52 = vsub.s32 %v49, %v51
    %v53 = vrot.slane %v28, %v52
    %v55 = vunpack.c.l.s4 1983009808
    %v56 = vunpack.c.0.s8 %v55
    %v57 = vlaneseq
    %v58 = vshrl.u32 %v57, 7
    %v59 = vsub.s32 %v56, %v58
    %v60 = vrot.slane %v46, %v59
    %v61 = vcombine.high %v53, %v53
    %v62 = vcombine.high %v60, %v60
    %v63 = vcombine.high %v29, %v29
    %v65 = vunpack.c.l.s4 1983009808
    %v66 = vunpack.c.0.s8 %v65
    %v67 = vlaneseq
    %v68 = vshrl.u32 %v67, 7
    %v69 = vsub.s32 %v66, %v68
    %v70 = vrot.slane %v29, %v69
    %v72 = vunpack.c.l.s4 1983009808
    %v73 = vunpack.c.0.s8 %v72
    %v74 = vlaneseq
    %v75 = vshrl.u32 %v74, 7
    %v76 = vsub.s32 %v73, %v75
    %v77 = vrot.slane %v63, %v76
    %v78 = vcombine.high %v70, %v70
    %v79 = vcombine.high %v77, %v77
    %v80 = vcombine.high %v30, %v30
    %v82 = vunpack.c.l.s4 1983009808
    %v83 = vunpack.c.0.s8 %v82
    %v84 = vlaneseq
    %v85 = vshrl.u32 %v84, 7
    %v86 = vsub.s32 %v83, %v85
    %v87 = vrot.slane %v30, %v86
    %v89 = vunpack.c.l.s4 1983009808
    %v90 = vunpack.c.0.s8 %v89
    %v91 = vlaneseq
    %v92 = vshrl.u32 %v91, 7
    %v93 = vsub.s32 %v90, %v92
    %v94 = vrot.slane %v80, %v93
    %v95 = vcombine.high %v87, %v87
    %v96 = vcombine.high %v94, %v94
    %v97 = vcombine.high %v31, %v31
    %v99 = vunpack.c.l.s4 1983009808
    %v100 = vunpack.c.0.s8 %v99
    %v101 = vlaneseq
    %v102 = vshrl.u32 %v101, 7
    %v103 = vsub.s32 %v100, %v102
    %v104 = vrot.slane %v31, %v103
    %v106 = vunpack.c.l.s4 1983009808
    %v107 = vunpack.c.0.s8 %v106
    %v108 = vlaneseq
    %v109 = vshrl.u32 %v108, 7
    %v110 = vsub.s32 %v107, %v109
    %v111 = vrot.slane %v97, %v110
    %v112 = vcombine.high %v104, %v104
    %v113 = vcombine.high %v111, %v111
    %v114 = vcombine.high %v32, %v32
    %v116 = vunpack.c.l.s4 1983009808
    %v117 = vunpack.c.0.s8 %v116
    %v118 = vlaneseq
    %v119 = vshrl.u32 %v118, 7
    %v120 = vsub.s32 %v117, %v119
    %v121 = vrot.slane %v32, %v120
    %v123 = vunpack.c.l.s4 1983009808
    %v124 = vunpack.c.0.s8 %v123
    %v125 = vlaneseq
    %v126 = vshrl.u32 %v125, 7
    %v127 = vsub.s32 %v124, %v126
    %v128 = vrot.slane %v114, %v127
    %v129 = vcombine.high %v121, %v121
    %v130 = vcombine.high %v128, %v128
    %v131 = vcombine.high %v33, %v33
    %v133 = vunpack.c.l.s4 1983009808
    %v134 = vunpack.c.0.s8 %v133
    %v135 = vlaneseq
    %v136 = vshrl.u32 %v135, 7
    %v137 = vsub.s32 %v134, %v136
    %v138 = vrot.slane %v33, %v137
    %v140 = vunpack.c.l.s4 1983009808
    %v141 = vunpack.c.0.s8 %v140
    %v142 = vlaneseq
    %v143 = vshrl.u32 %v142, 7
    %v144 = vsub.s32 %v141, %v143
    %v145 = vrot.slane %v131, %v144
    %v146 = vcombine.high %v138, %v138
    %v147 = vcombine.high %v145, %v145
    %v148 = vcombine.high %v34, %v34
    %v150 = vunpack.c.l.s4 1983009808
    %v151 = vunpack.c.0.s8 %v150
    %v152 = vlaneseq
    %v153 = vshrl.u32 %v152, 7
    %v154 = vsub.s32 %v151, %v153
    %v155 = vrot.slane %v34, %v154
    %v157 = vunpack.c.l.s4 1983009808
    %v158 = vunpack.c.0.s8 %v157
    %v159 = vlaneseq
    %v160 = vshrl.u32 %v159, 7
    %v161 = vsub.s32 %v158, %v160
    %v162 = vrot.slane %v148, %v161
    %v163 = vcombine.high %v155, %v155
    %v164 = vcombine.high %v162, %v162
    %v165 = vcombine.high %v35, %v35
    %v167 = vunpack.c.l.s4 1983009808
    %v168 = vunpack.c.0.s8 %v167
    %v169 = vlaneseq
    %v170 = vshrl.u32 %v169, 7
    %v171 = vsub.s32 %v168, %v170
    %v172 = vrot.slane %v35, %v171
    %v174 = vunpack.c.l.s4 1983009808
    %v175 = vunpack.c.0.s8 %v174
    %v176 = vlaneseq
    %v177 = vshrl.u32 %v176, 7
    %v178 = vsub.s32 %v175, %v177
    %v179 = vrot.slane %v165, %v178
    %v180 = vcombine.high %v172, %v172
    %v181 = vcombine.high %v179, %v179
    %v182 = vcombine.high %v36, %v36
    %v184 = vunpack.c.l.s4 1983009808
    %v185 = vunpack.c.0.s8 %v184
    %v186 = vlaneseq
    %v187 = vshrl.u32 %v186, 7
    %v188 = vsub.s32 %v185, %v187
    %v189 = vrot.slane %v36, %v188
    %v191 = vunpack.c.l.s4 1983009808
    %v192 = vunpack.c.0.s8 %v191
    %v193 = vlaneseq
    %v194 = vshrl.u32 %v193, 7
    %v195 = vsub.s32 %v192, %v194
    %v196 = vrot.slane %v182, %v195
    %v197 = vcombine.high %v189, %v189
    %v233 = vpack.c.bf16 %v53, %v53
    %v234 = vpack.c.bf16 %v61, %v61
    %v235 = vpack.c.bf16 %v60, %v60
    %v236 = vpack.c.bf16 %v62, %v62
    %v237 = vpack.c.bf16 %v70, %v70
    %v238 = vpack.c.bf16 %v78, %v78
    %v239 = vpack.c.bf16 %v77, %v77
    %v240 = vpack.c.bf16 %v79, %v79
    %v241 = vpack.c.bf16 %v87, %v87
    %v242 = vpack.c.bf16 %v95, %v95
    %v243 = vpack.c.bf16 %v94, %v94
    %v244 = vpack.c.bf16 %v96, %v96
    %v245 = vpack.c.bf16 %v104, %v104
    %v246 = vpack.c.bf16 %v112, %v112
    %v247 = vpack.c.bf16 %v111, %v111
    %v248 = vpack.c.bf16 %v113, %v113
    %v249 = vpack.c.bf16 %v121, %v121
    %v250 = vpack.c.bf16 %v129, %v129
    %v251 = vpack.c.bf16 %v128, %v128
    %v252 = vpack.c.bf16 %v130, %v130
    %v253 = vpack.c.bf16 %v138, %v138
    %v254 = vpack.c.bf16 %v146, %v146
    %v255 = vpack.c.bf16 %v145, %v145
    %v256 = vpack.c.bf16 %v147, %v147
    %v257 = vpack.c.bf16 %v155, %v155
    %v258 = vpack.c.bf16 %v163, %v163
    %v259 = vpack.c.bf16 %v162, %v162
    %v260 = vpack.c.bf16 %v164, %v164
    %v261 = vpack.c.bf16 %v172, %v172
    %v262 = vpack.c.bf16 %v180, %v180
    %v263 = vpack.c.bf16 %v179, %v179
    %v264 = vpack.c.bf16 %v181, %v181
    %v265 = vpack.c.bf16 %v189, %v189
    %v266 = vpack.c.bf16 %v197, %v197
    %v267 = vpack.c.bf16 %v196, %v196
    %v268 = vld [vmem:[%s1] sm:$0xff]
    %v269 = vld [vmem:[%s1 + $0x8] sm:$0xff]
    %v270 = vld [vmem:[%s1 + $0x10] sm:$0xff]
    %v271 = vld [vmem:[%s1 + $0x18] sm:$0xff]
    %v272 = vld [vmem:[%s1 + $0x20] sm:$0xff]
    %v273 = vld [vmem:[%s1 + $0x28] sm:$0xff]
    %v274 = vld [vmem:[%s1 + $0x30] sm:$0xff]
    %v275 = vld [vmem:[%s1 + $0x38] sm:$0xff]
    %v276 = vld [vmem:[%s1 + $0x40] sm:$0xff]
    %v277 = vld [vmem:[%s1 + $0x48] sm:$0xff]
    %v278 = vld [vmem:[%s1 + $0x50] sm:$0xff]
    %v279 = vld [vmem:[%s1 + $0x58] sm:$0xff]
    %v280 = vld [vmem:[%s1 + $0x60] sm:$0xff]
    %v281 = vld [vmem:[%s1 + $0x68] sm:$0xff]
    %v282 = vld [vmem:[%s1 + $0x70] sm:$0xff]
    %v283 = vld [vmem:[%s1 + $0x78] sm:$0xff]
    %v284 = vld [vmem:[%s1 + $0x80] sm:$0xff]
    %v285 = vld [vmem:[%s1 + $0x88] sm:$0xff]
    %v286 = vld [vmem:[%s1 + $0x90] sm:$0xff]
    %v287 = vld [vmem:[%s1 + $0x98] sm:$0xff]
    %v288 = vld [vmem:[%s1 + $0xa0] sm:$0xff]
    %v289 = vld [vmem:[%s1 + $0xa8] sm:$0xff]
    %v290 = vld [vmem:[%s1 + $0xb0] sm:$0xff]
    %v291 = vld [vmem:[%s1 + $0xb8] sm:$0xff]
    %v292 = vld [vmem:[%s1 + $0xc0] sm:$0xff]
    %v293 = vld [vmem:[%s1 + $0xc8] sm:$0xff]
    %v294 = vld [vmem:[%s1 + $0xd0] sm:$0xff]
    %v295 = vld [vmem:[%s1 + $0xd8] sm:$0xff]
    %v296 = vld [vmem:[%s1 + $0xe0] sm:$0xff]
    %v297 = vld [vmem:[%s1 + $0xe8] sm:$0xff]
    %v298 = vld [vmem:[%s1 + $0xf0] sm:$0xff]
    %v299 = vld [vmem:[%s1 + $0xf8] sm:$0xff]
    %v300 = vld [vmem:[%s1 + $0x100] sm:$0xff]
    %v301 = vld [vmem:[%s1 + $0x108] sm:$0xff]
    %v302 = vld [vmem:[%s1 + $0x110] sm:$0xff]
    %v303 = vld [vmem:[%s1 + $0x118] sm:$0xff]
    %v304 = vld [vmem:[%s1 + $0x120] sm:$0xff]
    %v305 = vld [vmem:[%s1 + $0x128] sm:$0xff]
    %v306 = vld [vmem:[%s1 + $0x130] sm:$0xff]
    %v307 = vld [vmem:[%s1 + $0x138] sm:$0xff]
    %v308 = vld [vmem:[%s1 + $0x140] sm:$0xff]
    %v309 = vld [vmem:[%s1 + $0x148] sm:$0xff]
    %v310 = vld [vmem:[%s1 + $0x150] sm:$0xff]
    %v311 = vld [vmem:[%s1 + $0x158] sm:$0xff]
    %v312 = vld [vmem:[%s1 + $0x160] sm:$0xff]
    %v313 = vld [vmem:[%s1 + $0x168] sm:$0xff]
    %v314 = vld [vmem:[%s1 + $0x170] sm:$0xff]
    %v315 = vld [vmem:[%s1 + $0x178] sm:$0xff]
    %v316 = vld [vmem:[%s1 + $0x180] sm:$0xff]
    %v317 = vld [vmem:[%s1 + $0x188] sm:$0xff]
    %v318 = vld [vmem:[%s1 + $0x190] sm:$0xff]
    %v319 = vld [vmem:[%s1 + $0x198] sm:$0xff]
    %v320 = vld [vmem:[%s1 + $0x1a0] sm:$0xff]
    %v321 = vld [vmem:[%s1 + $0x1a8] sm:$0xff]
    %v322 = vld [vmem:[%s1 + $0x1b0] sm:$0xff]
    %v323 = vld [vmem:[%s1 + $0x1b8] sm:$0xff]
    %v324 = vld [vmem:[%s1 + $0x1c0] sm:$0xff]
    %v325 = vld [vmem:[%s1 + $0x1c8] sm:$0xff]
    %v326 = vld [vmem:[%s1 + $0x1d0] sm:$0xff]
    %v327 = vld [vmem:[%s1 + $0x1d8] sm:$0xff]
    %v328 = vld [vmem:[%s1 + $0x1e0] sm:$0xff]
    %v329 = vld [vmem:[%s1 + $0x1e8] sm:$0xff]
    %v330 = vld [vmem:[%s1 + $0x1f0] sm:$0xff]
    %v331 = vld [vmem:[%s1 + $0x1f8] sm:$0xff]
    %v332 = vld [vmem:[%s1 + $0x200] sm:$0xff]
    %v333 = vld [vmem:[%s1 + $0x208] sm:$0xff]
    %v334 = vld [vmem:[%s1 + $0x210] sm:$0xff]
    %v335 = vld [vmem:[%s1 + $0x218] sm:$0xff]
    %v336 = vld [vmem:[%s1 + $0x220] sm:$0xff]
    %v337 = vld [vmem:[%s1 + $0x228] sm:$0xff]
    %v338 = vld [vmem:[%s1 + $0x230] sm:$0xff]
    %v339 = vld [vmem:[%s1 + $0x238] sm:$0xff]
    %v340 = vld [vmem:[%s1 + $0x240] sm:$0xff]
    %v341 = vld [vmem:[%s1 + $0x248] sm:$0xff]
    %v342 = vld [vmem:[%s1 + $0x250] sm:$0xff]
    %v343 = vld [vmem:[%s1 + $0x258] sm:$0xff]
    %v344 = vld [vmem:[%s1 + $0x260] sm:$0xff]
    %v345 = vld [vmem:[%s1 + $0x268] sm:$0xff]
    %v346 = vld [vmem:[%s1 + $0x270] sm:$0xff]
    %v347 = vld [vmem:[%s1 + $0x278] sm:$0xff]
    %v348 = vld [vmem:[%s1 + $0x280] sm:$0xff]
    %v349 = vld [vmem:[%s1 + $0x288] sm:$0xff]
    %v350 = vld [vmem:[%s1 + $0x290] sm:$0xff]
    %v351 = vld [vmem:[%s1 + $0x298] sm:$0xff]
    %v352 = vld [vmem:[%s1 + $0x2a0] sm:$0xff]
    %v353 = vld [vmem:[%s1 + $0x2a8] sm:$0xff]
    %v354 = vld [vmem:[%s1 + $0x2b0] sm:$0xff]
    %v355 = vld [vmem:[%s1 + $0x2b8] sm:$0xff]
    %v356 = vld [vmem:[%s1 + $0x2c0] sm:$0xff]
    %v357 = vld [vmem:[%s1 + $0x2c8] sm:$0xff]
    %v358 = vld [vmem:[%s1 + $0x2d0] sm:$0xff]
    %v359 = vld [vmem:[%s1 + $0x2d8] sm:$0xff]
    %v360 = vld [vmem:[%s1 + $0x2e0] sm:$0xff]
    %v361 = vld [vmem:[%s1 + $0x2e8] sm:$0xff]
    %v362 = vld [vmem:[%s1 + $0x2f0] sm:$0xff]
    %v363 = vld [vmem:[%s1 + $0x2f8] sm:$0xff]
    %v364 = vld [vmem:[%s1 + $0x300] sm:$0xff]
    %v365 = vld [vmem:[%s1 + $0x308] sm:$0xff]
    %v366 = vld [vmem:[%s1 + $0x310] sm:$0xff]
    %v367 = vld [vmem:[%s1 + $0x318] sm:$0xff]
    %v368 = vld [vmem:[%s1 + $0x320] sm:$0xff]
    %v369 = vld [vmem:[%s1 + $0x328] sm:$0xff]
    %v370 = vld [vmem:[%s1 + $0x330] sm:$0xff]
    %v371 = vld [vmem:[%s1 + $0x338] sm:$0xff]
    %v372 = vld [vmem:[%s1 + $0x340] sm:$0xff]
    %v373 = vld [vmem:[%s1 + $0x348] sm:$0xff]
    %v374 = vld [vmem:[%s1 + $0x350] sm:$0xff]
    %v375 = vld [vmem:[%s1 + $0x358] sm:$0xff]
    %v376 = vld [vmem:[%s1 + $0x360] sm:$0xff]
    %v377 = vld [vmem:[%s1 + $0x368] sm:$0xff]
    %v378 = vld [vmem:[%s1 + $0x370] sm:$0xff]
    %v379 = vld [vmem:[%s1 + $0x378] sm:$0xff]
    %v380 = vld [vmem:[%s1 + $0x380] sm:$0xff]
    %v381 = vld [vmem:[%s1 + $0x388] sm:$0xff]
    %v382 = vld [vmem:[%s1 + $0x390] sm:$0xff]
    %v383 = vld [vmem:[%s1 + $0x398] sm:$0xff]
    %v384 = vld [vmem:[%s1 + $0x3a0] sm:$0xff]
    %v385 = vld [vmem:[%s1 + $0x3a8] sm:$0xff]
    %v386 = vld [vmem:[%s1 + $0x3b0] sm:$0xff]
    %v387 = vld [vmem:[%s1 + $0x3b8] sm:$0xff]
    %v388 = vld [vmem:[%s1 + $0x3c0] sm:$0xff]
    %v389 = vld [vmem:[%s1 + $0x3c8] sm:$0xff]
    %v390 = vld [vmem:[%s1 + $0x3d0] sm:$0xff]
    %v391 = vld [vmem:[%s1 + $0x3d8] sm:$0xff]
    %v392 = vld [vmem:[%s1 + $0x3e0] sm:$0xff]
    %v393 = vld [vmem:[%s1 + $0x3e8] sm:$0xff]
    %v394 = vld [vmem:[%s1 + $0x3f0] sm:$0xff]
    %v395 = vld [vmem:[%s1 + $0x3f8] sm:$0xff]
    %v396 = vld [vmem:[%s1 + $0x400] sm:$0xff]
    %v397 = vld [vmem:[%s1 + $0x408] sm:$0xff]
    %v398 = vld [vmem:[%s1 + $0x410] sm:$0xff]
    %v399 = vld [vmem:[%s1 + $0x418] sm:$0xff]
    %v400 = vld [vmem:[%s1 + $0x420] sm:$0xff]
    %v401 = vld [vmem:[%s1 + $0x428] sm:$0xff]
    %v402 = vld [vmem:[%s1 + $0x430] sm:$0xff]
    %v403 = vld [vmem:[%s1 + $0x438] sm:$0xff]
    %v404 = vld [vmem:[%s1 + $0x440] sm:$0xff]
    %v405 = vld [vmem:[%s1 + $0x448] sm:$0xff]
    %v406 = vld [vmem:[%s1 + $0x450] sm:$0xff]
    %v407 = vld [vmem:[%s1 + $0x458] sm:$0xff]
    %v408 = vld [vmem:[%s1 + $0x460] sm:$0xff]
    %v409 = vld [vmem:[%s1 + $0x468] sm:$0xff]
    %v410 = vld [vmem:[%s1 + $0x470] sm:$0xff]
    %v411 = vld [vmem:[%s1 + $0x478] sm:$0xff]
    %v412 = vld [vmem:[%s1 + $0x480] sm:$0xff]
    %v413 = vld [vmem:[%s1 + $0x488] sm:$0xff]
    %v414 = vld [vmem:[%s1 + $0x490] sm:$0xff]
    %v415 = vld [vmem:[%s1 + $0x498] sm:$0xff]
    %v416 = vld [vmem:[%s1 + $0x4a0] sm:$0xff]
    %v417 = vld [vmem:[%s1 + $0x4a8] sm:$0xff]
    %v418 = vld [vmem:[%s1 + $0x4b0] sm:$0xff]
    %v419 = vld [vmem:[%s1 + $0x4b8] sm:$0xff]
    %v420 = vld [vmem:[%s1 + $0x4c0] sm:$0xff]
    %v421 = vld [vmem:[%s1 + $0x4c8] sm:$0xff]
    %v422 = vld [vmem:[%s1 + $0x4d0] sm:$0xff]
    %v423 = vld [vmem:[%s1 + $0x4d8] sm:$0xff]
    %v424 = vld [vmem:[%s1 + $0x4e0] sm:$0xff]
    %v425 = vld [vmem:[%s1 + $0x4e8] sm:$0xff]
    %v426 = vld [vmem:[%s1 + $0x4f0] sm:$0xff]
    %v427 = vld [vmem:[%s1 + $0x4f8] sm:$0xff]
    %v428 = vld [vmem:[%s1 + $0x500] sm:$0xff]
    %v429 = vld [vmem:[%s1 + $0x508] sm:$0xff]
    %v430 = vld [vmem:[%s1 + $0x510] sm:$0xff]
    %v431 = vld [vmem:[%s1 + $0x518] sm:$0xff]
    %v432 = vld [vmem:[%s1 + $0x520] sm:$0xff]
    %v433 = vld [vmem:[%s1 + $0x528] sm:$0xff]
    %v434 = vld [vmem:[%s1 + $0x530] sm:$0xff]
    %v435 = vld [vmem:[%s1 + $0x538] sm:$0xff]
    %v436 = vld [vmem:[%s1 + $0x540] sm:$0xff]
    %v437 = vld [vmem:[%s1 + $0x548] sm:$0xff]
    %v438 = vld [vmem:[%s1 + $0x550] sm:$0xff]
    %v439 = vld [vmem:[%s1 + $0x558] sm:$0xff]
    %v440 = vld [vmem:[%s1 + $0x560] sm:$0xff]
    %v441 = vld [vmem:[%s1 + $0x568] sm:$0xff]
    %v442 = vld [vmem:[%s1 + $0x570] sm:$0xff]
    %v443 = vld [vmem:[%s1 + $0x578] sm:$0xff]
    %v444 = vld [vmem:[%s1 + $0x580] sm:$0xff]
    %v445 = vld [vmem:[%s1 + $0x588] sm:$0xff]
    %v446 = vld [vmem:[%s1 + $0x590] sm:$0xff]
    %v447 = vld [vmem:[%s1 + $0x598] sm:$0xff]
    %v448 = vld [vmem:[%s1 + $0x5a0] sm:$0xff]
    %v449 = vld [vmem:[%s1 + $0x5a8] sm:$0xff]
    %v450 = vld [vmem:[%s1 + $0x5b0] sm:$0xff]
    %v451 = vld [vmem:[%s1 + $0x5b8] sm:$0xff]
    %v452 = vld [vmem:[%s1 + $0x5c0] sm:$0xff]
    %v453 = vld [vmem:[%s1 + $0x5c8] sm:$0xff]
    %v454 = vld [vmem:[%s1 + $0x5d0] sm:$0xff]
    %v455 = vld [vmem:[%s1 + $0x5d8] sm:$0xff]
    %v456 = vld [vmem:[%s1 + $0x5e0] sm:$0xff]
    %v457 = vld [vmem:[%s1 + $0x5e8] sm:$0xff]
    %v458 = vld [vmem:[%s1 + $0x5f0] sm:$0xff]
    %v459 = vld [vmem:[%s1 + $0x5f8] sm:$0xff]
    %v460 = vld [vmem:[%s1 + $0x600] sm:$0xff]
    %v461 = vld [vmem:[%s1 + $0x608] sm:$0xff]
    %v462 = vld [vmem:[%s1 + $0x610] sm:$0xff]
    %v463 = vld [vmem:[%s1 + $0x618] sm:$0xff]
    %v464 = vld [vmem:[%s1 + $0x620] sm:$0xff]
    %v465 = vld [vmem:[%s1 + $0x628] sm:$0xff]
    %v466 = vld [vmem:[%s1 + $0x630] sm:$0xff]
    %v467 = vld [vmem:[%s1 + $0x638] sm:$0xff]
    %v468 = vld [vmem:[%s1 + $0x640] sm:$0xff]
    %v469 = vld [vmem:[%s1 + $0x648] sm:$0xff]
    %v470 = vld [vmem:[%s1 + $0x650] sm:$0xff]
    %v471 = vld [vmem:[%s1 + $0x658] sm:$0xff]
    %v472 = vld [vmem:[%s1 + $0x660] sm:$0xff]
    %v473 = vld [vmem:[%s1 + $0x668] sm:$0xff]
    %v474 = vld [vmem:[%s1 + $0x670] sm:$0xff]
    %v475 = vld [vmem:[%s1 + $0x678] sm:$0xff]
    %v476 = vld [vmem:[%s1 + $0x680] sm:$0xff]
    %v477 = vld [vmem:[%s1 + $0x688] sm:$0xff]
    %v478 = vld [vmem:[%s1 + $0x690] sm:$0xff]
    %v479 = vld [vmem:[%s1 + $0x698] sm:$0xff]
    %v480 = vld [vmem:[%s1 + $0x6a0] sm:$0xff]
    %v481 = vld [vmem:[%s1 + $0x6a8] sm:$0xff]
    %v482 = vld [vmem:[%s1 + $0x6b0] sm:$0xff]
    %v483 = vld [vmem:[%s1 + $0x6b8] sm:$0xff]
    %v484 = vld [vmem:[%s1 + $0x6c0] sm:$0xff]
    %v485 = vld [vmem:[%s1 + $0x6c8] sm:$0xff]
    %v486 = vld [vmem:[%s1 + $0x6d0] sm:$0xff]
    %v487 = vld [vmem:[%s1 + $0x6d8] sm:$0xff]
    %v488 = vld [vmem:[%s1 + $0x6e0] sm:$0xff]
    %v489 = vld [vmem:[%s1 + $0x6e8] sm:$0xff]
    %v490 = vld [vmem:[%s1 + $0x6f0] sm:$0xff]
    %v491 = vld [vmem:[%s1 + $0x6f8] sm:$0xff]
    %v492 = vld [vmem:[%s1 + $0x700] sm:$0xff]
    %v493 = vld [vmem:[%s1 + $0x708] sm:$0xff]
    %v494 = vld [vmem:[%s1 + $0x710] sm:$0xff]
    %v495 = vld [vmem:[%s1 + $0x718] sm:$0xff]
    %v496 = vld [vmem:[%s1 + $0x720] sm:$0xff]
    %v497 = vld [vmem:[%s1 + $0x728] sm:$0xff]
    %v498 = vld [vmem:[%s1 + $0x730] sm:$0xff]
    %v499 = vld [vmem:[%s1 + $0x738] sm:$0xff]
    %v500 = vld [vmem:[%s1 + $0x740] sm:$0xff]
    %v501 = vld [vmem:[%s1 + $0x748] sm:$0xff]
    %v502 = vld [vmem:[%s1 + $0x750] sm:$0xff]
    %v503 = vld [vmem:[%s1 + $0x758] sm:$0xff]
    %v504 = vld [vmem:[%s1 + $0x760] sm:$0xff]
    %v505 = vld [vmem:[%s1 + $0x768] sm:$0xff]
    %v506 = vld [vmem:[%s1 + $0x770] sm:$0xff]
    %v507 = vld [vmem:[%s1 + $0x778] sm:$0xff]
    %v508 = vld [vmem:[%s1 + $0x780] sm:$0xff]
    %v509 = vld [vmem:[%s1 + $0x788] sm:$0xff]
    %v510 = vld [vmem:[%s1 + $0x790] sm:$0xff]
    %v511 = vld [vmem:[%s1 + $0x798] sm:$0xff]
    %v512 = vld [vmem:[%s1 + $0x7a0] sm:$0xff]
    %v513 = vld [vmem:[%s1 + $0x7a8] sm:$0xff]
    %v514 = vld [vmem:[%s1 + $0x7b0] sm:$0xff]
    %v515 = vld [vmem:[%s1 + $0x7b8] sm:$0xff]
    %v516 = vld [vmem:[%s1 + $0x7c0] sm:$0xff]
    %v517 = vld [vmem:[%s1 + $0x7c8] sm:$0xff]
    %v518 = vld [vmem:[%s1 + $0x7d0] sm:$0xff]
    %v519 = vld [vmem:[%s1 + $0x7d8] sm:$0xff]
    %v520 = vld [vmem:[%s1 + $0x7e0] sm:$0xff]
    %v521 = vld [vmem:[%s1 + $0x7e8] sm:$0xff]
    %v522 = vld [vmem:[%s1 + $0x7f0] sm:$0xff]
    %v523 = vld [vmem:[%s1 + $0x7f8] sm:$0xff]
    %v524 = vld [vmem:[%s1 + $0x800] sm:$0xff]
    %v525 = vld [vmem:[%s1 + $0x808] sm:$0xff]
    %v526 = vld [vmem:[%s1 + $0x810] sm:$0xff]
    %v527 = vld [vmem:[%s1 + $0x818] sm:$0xff]
    %v528 = vld [vmem:[%s1 + $0x820] sm:$0xff]
    %v529 = vld [vmem:[%s1 + $0x828] sm:$0xff]
    %v530 = vld [vmem:[%s1 + $0x830] sm:$0xff]
    %v531 = vld [vmem:[%s1 + $0x838] sm:$0xff]
    %v532 = vld [vmem:[%s1 + $0x840] sm:$0xff]
    %v533 = vld [vmem:[%s1 + $0x848] sm:$0xff]
    %v534 = vld [vmem:[%s1 + $0x850] sm:$0xff]
    %v535 = vld [vmem:[%s1 + $0x858] sm:$0xff]
    %v536 = vld [vmem:[%s1 + $0x860] sm:$0xff]
    %v537 = vld [vmem:[%s1 + $0x868] sm:$0xff]
    %v538 = vld [vmem:[%s1 + $0x870] sm:$0xff]
    %v539 = vld [vmem:[%s1 + $0x878] sm:$0xff]
    %v540 = vld [vmem:[%s1 + $0x880] sm:$0xff]
    %v541 = vld [vmem:[%s1 + $0x888] sm:$0xff]
    %v542 = vld [vmem:[%s1 + $0x890] sm:$0xff]
    %v543 = vld [vmem:[%s1 + $0x898] sm:$0xff]
    %v544 = vld [vmem:[%s1 + $0x8a0] sm:$0xff]
    %v545 = vld [vmem:[%s1 + $0x8a8] sm:$0xff]
    %v546 = vld [vmem:[%s1 + $0x8b0] sm:$0xff]
    %v547 = vld [vmem:[%s1 + $0x8b8] sm:$0xff]
    %v548 = vld [vmem:[%s1 + $0x8c0] sm:$0xff]
    %v549 = vld [vmem:[%s1 + $0x8c8] sm:$0xff]
    %v550 = vld [vmem:[%s1 + $0x8d0] sm:$0xff]
    %v551 = vld [vmem:[%s1 + $0x8d8] sm:$0xff]
    %v552 = vld [vmem:[%s1 + $0x8e0] sm:$0xff]
    %v553 = vld [vmem:[%s1 + $0x8e8] sm:$0xff]
    %v554 = vld [vmem:[%s1 + $0x8f0] sm:$0xff]
    %v555 = vld [vmem:[%s1 + $0x8f8] sm:$0xff]
    %v556 = vld [vmem:[%s1 + $0x900] sm:$0xff]
    %v557 = vld [vmem:[%s1 + $0x908] sm:$0xff]
    %v558 = vld [vmem:[%s1 + $0x910] sm:$0xff]
    %v559 = vld [vmem:[%s1 + $0x918] sm:$0xff]
    %v560 = vld [vmem:[%s1 + $0x920] sm:$0xff]
    %v561 = vld [vmem:[%s1 + $0x928] sm:$0xff]
    %v562 = vld [vmem:[%s1 + $0x930] sm:$0xff]
    %v563 = vld [vmem:[%s1 + $0x938] sm:$0xff]
    %v564 = vld [vmem:[%s1 + $0x940] sm:$0xff]
    %v565 = vld [vmem:[%s1 + $0x948] sm:$0xff]
    %v566 = vld [vmem:[%s1 + $0x950] sm:$0xff]
    %v567 = vld [vmem:[%s1 + $0x958] sm:$0xff]
    %v568 = vld [vmem:[%s1 + $0x960] sm:$0xff]
    %v569 = vld [vmem:[%s1 + $0x968] sm:$0xff]
    %v570 = vld [vmem:[%s1 + $0x970] sm:$0xff]
    %v571 = vld [vmem:[%s1 + $0x978] sm:$0xff]
    %v572 = vld [vmem:[%s1 + $0x980] sm:$0xff]
    %v573 = vld [vmem:[%s1 + $0x988] sm:$0xff]
    %v574 = vld [vmem:[%s1 + $0x990] sm:$0xff]
    %v575 = vld [vmem:[%s1 + $0x998] sm:$0xff]
    %v576 = vld [vmem:[%s1 + $0x9a0] sm:$0xff]
    %v577 = vld [vmem:[%s1 + $0x9a8] sm:$0xff]
    %v578 = vld [vmem:[%s1 + $0x9b0] sm:$0xff]
    %v579 = vld [vmem:[%s1 + $0x9b8] sm:$0xff]
    %v580 = vld [vmem:[%s1 + $0x9c0] sm:$0xff]
    %v581 = vld [vmem:[%s1 + $0x9c8] sm:$0xff]
    %v582 = vld [vmem:[%s1 + $0x9d0] sm:$0xff]
    %v583 = vld [vmem:[%s1 + $0x9d8] sm:$0xff]
    %v584 = vld [vmem:[%s1 + $0x9e0] sm:$0xff]
    %v585 = vld [vmem:[%s1 + $0x9e8] sm:$0xff]
    %v586 = vld [vmem:[%s1 + $0x9f0] sm:$0xff]
    %v587 = vld [vmem:[%s1 + $0x9f8] sm:$0xff]
    %v588 = vld [vmem:[%s1 + $0xa00] sm:$0xff]
    %v589 = vld [vmem:[%s1 + $0xa08] sm:$0xff]
    %v590 = vld [vmem:[%s1 + $0xa10] sm:$0xff]
    %v591 = vld [vmem:[%s1 + $0xa18] sm:$0xff]
    %v592 = vld [vmem:[%s1 + $0xa20] sm:$0xff]
    %v593 = vld [vmem:[%s1 + $0xa28] sm:$0xff]
    %v594 = vld [vmem:[%s1 + $0xa30] sm:$0xff]
    %v595 = vld [vmem:[%s1 + $0xa38] sm:$0xff]
    %v596 = vld [vmem:[%s1 + $0xa40] sm:$0xff]
    %v597 = vld [vmem:[%s1 + $0xa48] sm:$0xff]
    %v598 = vld [vmem:[%s1 + $0xa50] sm:$0xff]
    %v599 = vld [vmem:[%s1 + $0xa58] sm:$0xff]
    %v600 = vld [vmem:[%s1 + $0xa60] sm:$0xff]
    %v601 = vld [vmem:[%s1 + $0xa68] sm:$0xff]
    %v602 = vld [vmem:[%s1 + $0xa70] sm:$0xff]
    %v603 = vld [vmem:[%s1 + $0xa78] sm:$0xff]
    %v604 = vld [vmem:[%s1 + $0xa80] sm:$0xff]
    %v605 = vld [vmem:[%s1 + $0xa88] sm:$0xff]
    %v606 = vld [vmem:[%s1 + $0xa90] sm:$0xff]
    %v607 = vld [vmem:[%s1 + $0xa98] sm:$0xff]
    %v608 = vld [vmem:[%s1 + $0xaa0] sm:$0xff]
    %v609 = vld [vmem:[%s1 + $0xaa8] sm:$0xff]
    %v610 = vld [vmem:[%s1 + $0xab0] sm:$0xff]
    %v611 = vld [vmem:[%s1 + $0xab8] sm:$0xff]
    %v612 = vld [vmem:[%s1 + $0xac0] sm:$0xff]
    %v613 = vld [vmem:[%s1 + $0xac8] sm:$0xff]
    %v614 = vld [vmem:[%s1 + $0xad0] sm:$0xff]
    %v615 = vld [vmem:[%s1 + $0xad8] sm:$0xff]
    %v616 = vld [vmem:[%s1 + $0xae0] sm:$0xff]
    %v617 = vld [vmem:[%s1 + $0xae8] sm:$0xff]
    %v618 = vld [vmem:[%s1 + $0xaf0] sm:$0xff]
    %v619 = vld [vmem:[%s1 + $0xaf8] sm:$0xff]
    %v620 = vld [vmem:[%s1 + $0xb00] sm:$0xff]
    %v621 = vld [vmem:[%s1 + $0xb08] sm:$0xff]
    %v622 = vld [vmem:[%s1 + $0xb10] sm:$0xff]
    %v623 = vld [vmem:[%s1 + $0xb18] sm:$0xff]
    %v624 = vld [vmem:[%s1 + $0xb20] sm:$0xff]
    %v625 = vld [vmem:[%s1 + $0xb28] sm:$0xff]
    %v626 = vld [vmem:[%s1 + $0xb30] sm:$0xff]
    %v627 = vld [vmem:[%s1 + $0xb38] sm:$0xff]
    %v628 = vld [vmem:[%s1 + $0xb40] sm:$0xff]
    %v629 = vld [vmem:[%s1 + $0xb48] sm:$0xff]
    %v630 = vld [vmem:[%s1 + $0xb50] sm:$0xff]
    %v631 = vld [vmem:[%s1 + $0xb58] sm:$0xff]
    %v632 = vld [vmem:[%s1 + $0xb60] sm:$0xff]
    %v633 = vld [vmem:[%s1 + $0xb68] sm:$0xff]
    %v634 = vld [vmem:[%s1 + $0xb70] sm:$0xff]
    %v635 = vld [vmem:[%s1 + $0xb78] sm:$0xff]
    %v636 = vld [vmem:[%s1 + $0xb80] sm:$0xff]
    %v637 = vld [vmem:[%s1 + $0xb88] sm:$0xff]
    %v638 = vld [vmem:[%s1 + $0xb90] sm:$0xff]
    %v639 = vld [vmem:[%s1 + $0xb98] sm:$0xff]
    %v640 = vld [vmem:[%s1 + $0xba0] sm:$0xff]
    %v641 = vld [vmem:[%s1 + $0xba8] sm:$0xff]
    %v642 = vld [vmem:[%s1 + $0xbb0] sm:$0xff]
    %v643 = vld [vmem:[%s1 + $0xbb8] sm:$0xff]
    %v644 = vld [vmem:[%s1 + $0xbc0] sm:$0xff]
    %v645 = vld [vmem:[%s1 + $0xbc8] sm:$0xff]
    %v646 = vld [vmem:[%s1 + $0xbd0] sm:$0xff]
    %v647 = vld [vmem:[%s1 + $0xbd8] sm:$0xff]
    %v648 = vld [vmem:[%s1 + $0xbe0] sm:$0xff]
    %v649 = vld [vmem:[%s1 + $0xbe8] sm:$0xff]
    %v650 = vld [vmem:[%s1 + $0xbf0] sm:$0xff]
    %v651 = vld [vmem:[%s1 + $0xbf8] sm:$0xff]
    %v652 = vld [vmem:[%s1 + $0xc00] sm:$0xff]
    %v653 = vld [vmem:[%s1 + $0xc08] sm:$0xff]
    %v654 = vld [vmem:[%s1 + $0xc10] sm:$0xff]
    %v655 = vld [vmem:[%s1 + $0xc18] sm:$0xff]
    %v656 = vld [vmem:[%s1 + $0xc20] sm:$0xff]
    %v657 = vld [vmem:[%s1 + $0xc28] sm:$0xff]
    %v658 = vld [vmem:[%s1 + $0xc30] sm:$0xff]
    %v659 = vld [vmem:[%s1 + $0xc38] sm:$0xff]
    %v660 = vld [vmem:[%s1 + $0xc40] sm:$0xff]
    %v661 = vld [vmem:[%s1 + $0xc48] sm:$0xff]
    %v662 = vld [vmem:[%s1 + $0xc50] sm:$0xff]
    %v663 = vld [vmem:[%s1 + $0xc58] sm:$0xff]
    %v664 = vld [vmem:[%s1 + $0xc60] sm:$0xff]
    %v665 = vld [vmem:[%s1 + $0xc68] sm:$0xff]
    %v666 = vld [vmem:[%s1 + $0xc70] sm:$0xff]
    %v667 = vld [vmem:[%s1 + $0xc78] sm:$0xff]
    %v668 = vld [vmem:[%s1 + $0xc80] sm:$0xff]
    %v669 = vld [vmem:[%s1 + $0xc88] sm:$0xff]
    %v670 = vld [vmem:[%s1 + $0xc90] sm:$0xff]
    %v671 = vld [vmem:[%s1 + $0xc98] sm:$0xff]
    %v672 = vld [vmem:[%s1 + $0xca0] sm:$0xff]
    %v673 = vld [vmem:[%s1 + $0xca8] sm:$0xff]
    %v674 = vld [vmem:[%s1 + $0xcb0] sm:$0xff]
    %v675 = vld [vmem:[%s1 + $0xcb8] sm:$0xff]
    %v676 = vld [vmem:[%s1 + $0xcc0] sm:$0xff]
    %v677 = vld [vmem:[%s1 + $0xcc8] sm:$0xff]
    %v678 = vld [vmem:[%s1 + $0xcd0] sm:$0xff]
    %v679 = vld [vmem:[%s1 + $0xcd8] sm:$0xff]
    %v680 = vld [vmem:[%s1 + $0xce0] sm:$0xff]
    %v681 = vld [vmem:[%s1 + $0xce8] sm:$0xff]
    %v682 = vld [vmem:[%s1 + $0xcf0] sm:$0xff]
    %v683 = vld [vmem:[%s1 + $0xcf8] sm:$0xff]
    %v684 = vld [vmem:[%s1 + $0xd00] sm:$0xff]
    %v685 = vld [vmem:[%s1 + $0xd08] sm:$0xff]
    %v686 = vld [vmem:[%s1 + $0xd10] sm:$0xff]
    %v687 = vld [vmem:[%s1 + $0xd18] sm:$0xff]
    %v688 = vld [vmem:[%s1 + $0xd20] sm:$0xff]
    %v689 = vld [vmem:[%s1 + $0xd28] sm:$0xff]
    %v690 = vld [vmem:[%s1 + $0xd30] sm:$0xff]
    %v691 = vld [vmem:[%s1 + $0xd38] sm:$0xff]
    %v692 = vld [vmem:[%s1 + $0xd40] sm:$0xff]
    %v693 = vld [vmem:[%s1 + $0xd48] sm:$0xff]
    %v694 = vld [vmem:[%s1 + $0xd50] sm:$0xff]
    %v695 = vld [vmem:[%s1 + $0xd58] sm:$0xff]
    %v696 = vld [vmem:[%s1 + $0xd60] sm:$0xff]
    %v697 = vld [vmem:[%s1 + $0xd68] sm:$0xff]
    %v698 = vld [vmem:[%s1 + $0xd70] sm:$0xff]
    %v699 = vld [vmem:[%s1 + $0xd78] sm:$0xff]
    %v700 = vld [vmem:[%s1 + $0xd80] sm:$0xff]
    %v701 = vld [vmem:[%s1 + $0xd88] sm:$0xff]
    %v702 = vld [vmem:[%s1 + $0xd90] sm:$0xff]
    %v703 = vld [vmem:[%s1 + $0xd98] sm:$0xff]
    %v704 = vld [vmem:[%s1 + $0xda0] sm:$0xff]
    %v705 = vld [vmem:[%s1 + $0xda8] sm:$0xff]
    %v706 = vld [vmem:[%s1 + $0xdb0] sm:$0xff]
    %v707 = vld [vmem:[%s1 + $0xdb8] sm:$0xff]
    %v708 = vld [vmem:[%s1 + $0xdc0] sm:$0xff]
    %v709 = vld [vmem:[%s1 + $0xdc8] sm:$0xff]
    %v710 = vld [vmem:[%s1 + $0xdd0] sm:$0xff]
    %v711 = vld [vmem:[%s1 + $0xdd8] sm:$0xff]
    %v712 = vld [vmem:[%s1 + $0xde0] sm:$0xff]
    %v713 = vld [vmem:[%s1 + $0xde8] sm:$0xff]
    %v714 = vld [vmem:[%s1 + $0xdf0] sm:$0xff]
    %v715 = vld [vmem:[%s1 + $0xdf8] sm:$0xff]
    %v716 = vld [vmem:[%s1 + $0xe00] sm:$0xff]
    %v717 = vld [vmem:[%s1 + $0xe08] sm:$0xff]
    %v718 = vld [vmem:[%s1 + $0xe10] sm:$0xff]
    %v719 = vld [vmem:[%s1 + $0xe18] sm:$0xff]
    %v720 = vld [vmem:[%s1 + $0xe20] sm:$0xff]
    %v721 = vld [vmem:[%s1 + $0xe28] sm:$0xff]
    %v722 = vld [vmem:[%s1 + $0xe30] sm:$0xff]
    %v723 = vld [vmem:[%s1 + $0xe38] sm:$0xff]
    %v724 = vld [vmem:[%s1 + $0xe40] sm:$0xff]
    %v725 = vld [vmem:[%s1 + $0xe48] sm:$0xff]
    %v726 = vld [vmem:[%s1 + $0xe50] sm:$0xff]
    %v727 = vld [vmem:[%s1 + $0xe58] sm:$0xff]
    %v728 = vld [vmem:[%s1 + $0xe60] sm:$0xff]
    %v729 = vld [vmem:[%s1 + $0xe68] sm:$0xff]
    %v730 = vld [vmem:[%s1 + $0xe70] sm:$0xff]
    %v731 = vld [vmem:[%s1 + $0xe78] sm:$0xff]
    %v732 = vld [vmem:[%s1 + $0xe80] sm:$0xff]
    %v733 = vld [vmem:[%s1 + $0xe88] sm:$0xff]
    %v734 = vld [vmem:[%s1 + $0xe90] sm:$0xff]
    %v735 = vld [vmem:[%s1 + $0xe98] sm:$0xff]
    %v736 = vld [vmem:[%s1 + $0xea0] sm:$0xff]
    %v737 = vld [vmem:[%s1 + $0xea8] sm:$0xff]
    %v738 = vld [vmem:[%s1 + $0xeb0] sm:$0xff]
    %v739 = vld [vmem:[%s1 + $0xeb8] sm:$0xff]
    %v740 = vld [vmem:[%s1 + $0xec0] sm:$0xff]
    %v741 = vld [vmem:[%s1 + $0xec8] sm:$0xff]
    %v742 = vld [vmem:[%s1 + $0xed0] sm:$0xff]
    %v743 = vld [vmem:[%s1 + $0xed8] sm:$0xff]
    %v744 = vld [vmem:[%s1 + $0xee0] sm:$0xff]
    %v745 = vld [vmem:[%s1 + $0xee8] sm:$0xff]
    %v746 = vld [vmem:[%s1 + $0xef0] sm:$0xff]
    %v747 = vld [vmem:[%s1 + $0xef8] sm:$0xff]
    %v748 = vld [vmem:[%s1 + $0xf00] sm:$0xff]
    %v749 = vld [vmem:[%s1 + $0xf08] sm:$0xff]
    %v750 = vld [vmem:[%s1 + $0xf10] sm:$0xff]
    %v751 = vld [vmem:[%s1 + $0xf18] sm:$0xff]
    %v752 = vld [vmem:[%s1 + $0xf20] sm:$0xff]
    %v753 = vld [vmem:[%s1 + $0xf28] sm:$0xff]
    %v754 = vld [vmem:[%s1 + $0xf30] sm:$0xff]
    %v755 = vld [vmem:[%s1 + $0xf38] sm:$0xff]
    %v756 = vld [vmem:[%s1 + $0xf40] sm:$0xff]
    %v757 = vld [vmem:[%s1 + $0xf48] sm:$0xff]
    %v758 = vld [vmem:[%s1 + $0xf50] sm:$0xff]
    %v759 = vld [vmem:[%s1 + $0xf58] sm:$0xff]
    %v760 = vld [vmem:[%s1 + $0xf60] sm:$0xff]
    %v761 = vld [vmem:[%s1 + $0xf68] sm:$0xff]
    %v762 = vld [vmem:[%s1 + $0xf70] sm:$0xff]
    %v763 = vld [vmem:[%s1 + $0xf78] sm:$0xff]
    %v764 = vld [vmem:[%s1 + $0xf80] sm:$0xff]
    %v765 = vld [vmem:[%s1 + $0xf88] sm:$0xff]
    %v766 = vld [vmem:[%s1 + $0xf90] sm:$0xff]
    %v767 = vld [vmem:[%s1 + $0xf98] sm:$0xff]
    %v768 = vld [vmem:[%s1 + $0xfa0] sm:$0xff]
    %v769 = vld [vmem:[%s1 + $0xfa8] sm:$0xff]
    %v770 = vld [vmem:[%s1 + $0xfb0] sm:$0xff]
    %v771 = vld [vmem:[%s1 + $0xfb8] sm:$0xff]
    %v772 = vld [vmem:[%s1 + $0xfc0] sm:$0xff]
    %v773 = vld [vmem:[%s1 + $0xfc8] sm:$0xff]
    %v774 = vld [vmem:[%s1 + $0xfd0] sm:$0xff]
    %v775 = vld [vmem:[%s1 + $0xfd8] sm:$0xff]
    %v776 = vld [vmem:[%s1 + $0xfe0] sm:$0xff]
    %v777 = vld [vmem:[%s1 + $0xfe8] sm:$0xff]
    %v778 = vld [vmem:[%s1 + $0xff0] sm:$0xff]
    %v779 = vld [vmem:[%s1 + $0xff8] sm:$0xff]
    %v780 = vld [vmem:[%s1 + $0x1000] sm:$0xff]
    %v781 = vld [vmem:[%s1 + $0x1008] sm:$0xff]
    %v782 = vld [vmem:[%s1 + $0x1010] sm:$0xff]
    %v783 = vld [vmem:[%s1 + $0x1018] sm:$0xff]
    %v784 = vld [vmem:[%s1 + $0x1020] sm:$0xff]
    %v785 = vld [vmem:[%s1 + $0x1028] sm:$0xff]
    %v786 = vld [vmem:[%s1 + $0x1030] sm:$0xff]
    %v787 = vld [vmem:[%s1 + $0x1038] sm:$0xff]
    %v788 = vld [vmem:[%s1 + $0x1040] sm:$0xff]
    %v789 = vld [vmem:[%s1 + $0x1048] sm:$0xff]
    %v790 = vld [vmem:[%s1 + $0x1050] sm:$0xff]
    %v791 = vld [vmem:[%s1 + $0x1058] sm:$0xff]
    %v792 = vld [vmem:[%s1 + $0x1060] sm:$0xff]
    %v793 = vld [vmem:[%s1 + $0x1068] sm:$0xff]
    %v794 = vld [vmem:[%s1 + $0x1070] sm:$0xff]
    %v795 = vld [vmem:[%s1 + $0x1078] sm:$0xff]
    %v796 = vld [vmem:[%s1 + $0x1080] sm:$0xff]
    %v797 = vld [vmem:[%s1 + $0x1088] sm:$0xff]
    %v798 = vld [vmem:[%s1 + $0x1090] sm:$0xff]
    %v799 = vld [vmem:[%s1 + $0x1098] sm:$0xff]
    %v800 = vld [vmem:[%s1 + $0x10a0] sm:$0xff]
    %v801 = vld [vmem:[%s1 + $0x10a8] sm:$0xff]
    %v802 = vld [vmem:[%s1 + $0x10b0] sm:$0xff]
    %v803 = vld [vmem:[%s1 + $0x10b8] sm:$0xff]
    %v804 = vld [vmem:[%s1 + $0x10c0] sm:$0xff]
    %v805 = vld [vmem:[%s1 + $0x10c8] sm:$0xff]
    %v806 = vld [vmem:[%s1 + $0x10d0] sm:$0xff]
    %v807 = vld [vmem:[%s1 + $0x10d8] sm:$0xff]
    %v808 = vld [vmem:[%s1 + $0x10e0] sm:$0xff]
    %v809 = vld [vmem:[%s1 + $0x10e8] sm:$0xff]
    %v810 = vld [vmem:[%s1 + $0x10f0] sm:$0xff]
    %v811 = vld [vmem:[%s1 + $0x10f8] sm:$0xff]
    %v812 = vld [vmem:[%s1 + $0x1100] sm:$0xff]
    %v813 = vld [vmem:[%s1 + $0x1108] sm:$0xff]
    %v814 = vld [vmem:[%s1 + $0x1110] sm:$0xff]
    %v815 = vld [vmem:[%s1 + $0x1118] sm:$0xff]
    %v816 = vld [vmem:[%s1 + $0x1120] sm:$0xff]
    %v817 = vld [vmem:[%s1 + $0x1128] sm:$0xff]
    %v818 = vld [vmem:[%s1 + $0x1130] sm:$0xff]
    %v819 = vld [vmem:[%s1 + $0x1138] sm:$0xff]
    %v820 = vld [vmem:[%s1 + $0x1140] sm:$0xff]
    %v821 = vld [vmem:[%s1 + $0x1148] sm:$0xff]
    %v822 = vld [vmem:[%s1 + $0x1150] sm:$0xff]
    %v823 = vld [vmem:[%s1 + $0x1158] sm:$0xff]
    %v824 = vld [vmem:[%s1 + $0x1160] sm:$0xff]
    %v825 = vld [vmem:[%s1 + $0x1168] sm:$0xff]
    %v826 = vld [vmem:[%s1 + $0x1170] sm:$0xff]
    %v827 = vld [vmem:[%s1 + $0x1178] sm:$0xff]
    %v828 = vld [vmem:[%s1 + $0x1180] sm:$0xff]
    %v829 = vld [vmem:[%s1 + $0x1188] sm:$0xff]
    %v830 = vld [vmem:[%s1 + $0x1190] sm:$0xff]
    %v831 = vld [vmem:[%s1 + $0x1198] sm:$0xff]
    %v832 = vld [vmem:[%s1 + $0x11a0] sm:$0xff]
    %v833 = vld [vmem:[%s1 + $0x11a8] sm:$0xff]
    %v834 = vld [vmem:[%s1 + $0x11b0] sm:$0xff]
    %v835 = vld [vmem:[%s1 + $0x11b8] sm:$0xff]
    %v836 = vld [vmem:[%s1 + $0x11c0] sm:$0xff]
    %v837 = vld [vmem:[%s1 + $0x11c8] sm:$0xff]
    %v838 = vld [vmem:[%s1 + $0x11d0] sm:$0xff]
    %v839 = vld [vmem:[%s1 + $0x11d8] sm:$0xff]
    %v840 = vld [vmem:[%s1 + $0x11e0] sm:$0xff]
    %v841 = vld [vmem:[%s1 + $0x11e8] sm:$0xff]
    %v842 = vld [vmem:[%s1 + $0x11f0] sm:$0xff]
    %v843 = vld [vmem:[%s1 + $0x11f8] sm:$0xff]
    %v844 = vld [vmem:[%s1 + $0x1200] sm:$0xff]
    %v845 = vld [vmem:[%s1 + $0x1208] sm:$0xff]
    %v846 = vld [vmem:[%s1 + $0x1210] sm:$0xff]
    %v847 = vld [vmem:[%s1 + $0x1218] sm:$0xff]
    %v848 = vld [vmem:[%s1 + $0x1220] sm:$0xff]
    %v849 = vld [vmem:[%s1 + $0x1228] sm:$0xff]
    %v850 = vld [vmem:[%s1 + $0x1230] sm:$0xff]
    %v851 = vld [vmem:[%s1 + $0x1238] sm:$0xff]
    %v852 = vld [vmem:[%s1 + $0x1240] sm:$0xff]
    %v853 = vld [vmem:[%s1 + $0x1248] sm:$0xff]
    %v854 = vld [vmem:[%s1 + $0x1250] sm:$0xff]
    %v855 = vld [vmem:[%s1 + $0x1258] sm:$0xff]
    %v856 = vld [vmem:[%s1 + $0x1260] sm:$0xff]
    %v857 = vld [vmem:[%s1 + $0x1268] sm:$0xff]
    %v858 = vld [vmem:[%s1 + $0x1270] sm:$0xff]
    %v859 = vld [vmem:[%s1 + $0x1278] sm:$0xff]
    %v860 = vld [vmem:[%s1 + $0x1280] sm:$0xff]
    %v861 = vld [vmem:[%s1 + $0x1288] sm:$0xff]
    %v862 = vld [vmem:[%s1 + $0x1290] sm:$0xff]
    %v863 = vld [vmem:[%s1 + $0x1298] sm:$0xff]
    %v864 = vld [vmem:[%s1 + $0x12a0] sm:$0xff]
    %v865 = vld [vmem:[%s1 + $0x12a8] sm:$0xff]
    %v866 = vld [vmem:[%s1 + $0x12b0] sm:$0xff]
    %v867 = vld [vmem:[%s1 + $0x12b8] sm:$0xff]
    %v868 = vld [vmem:[%s1 + $0x12c0] sm:$0xff]
    %v869 = vld [vmem:[%s1 + $0x12c8] sm:$0xff]
    %v870 = vld [vmem:[%s1 + $0x12d0] sm:$0xff]
    %v871 = vld [vmem:[%s1 + $0x12d8] sm:$0xff]
    %v872 = vld [vmem:[%s1 + $0x12e0] sm:$0xff]
    %v873 = vld [vmem:[%s1 + $0x12e8] sm:$0xff]
    %v874 = vld [vmem:[%s1 + $0x12f0] sm:$0xff]
    %v875 = vld [vmem:[%s1 + $0x12f8] sm:$0xff]
    %v876 = vld [vmem:[%s1 + $0x1300] sm:$0xff]
    %v877 = vld [vmem:[%s1 + $0x1308] sm:$0xff]
    %v878 = vld [vmem:[%s1 + $0x1310] sm:$0xff]
    %v879 = vld [vmem:[%s1 + $0x1318] sm:$0xff]
    %v880 = vld [vmem:[%s1 + $0x1320] sm:$0xff]
    %v881 = vld [vmem:[%s1 + $0x1328] sm:$0xff]
    %v882 = vld [vmem:[%s1 + $0x1330] sm:$0xff]
    %v883 = vld [vmem:[%s1 + $0x1338] sm:$0xff]
    %v884 = vld [vmem:[%s1 + $0x1340] sm:$0xff]
    %v885 = vld [vmem:[%s1 + $0x1348] sm:$0xff]
    %v886 = vld [vmem:[%s1 + $0x1350] sm:$0xff]
    %v887 = vld [vmem:[%s1 + $0x1358] sm:$0xff]
    %v888 = vld [vmem:[%s1 + $0x1360] sm:$0xff]
    %v889 = vld [vmem:[%s1 + $0x1368] sm:$0xff]
    %v890 = vld [vmem:[%s1 + $0x1370] sm:$0xff]
    %v891 = vld [vmem:[%s1 + $0x1378] sm:$0xff]
    %v892 = vld [vmem:[%s1 + $0x1380] sm:$0xff]
    %v893 = vld [vmem:[%s1 + $0x1388] sm:$0xff]
    %v894 = vld [vmem:[%s1 + $0x1390] sm:$0xff]
    %v895 = vld [vmem:[%s1 + $0x1398] sm:$0xff]
    %v896 = vld [vmem:[%s1 + $0x13a0] sm:$0xff]
    %v897 = vld [vmem:[%s1 + $0x13a8] sm:$0xff]
    %v898 = vld [vmem:[%s1 + $0x13b0] sm:$0xff]
    %v899 = vld [vmem:[%s1 + $0x13b8] sm:$0xff]
    %v900 = vld [vmem:[%s1 + $0x13c0] sm:$0xff]
    %v901 = vld [vmem:[%s1 + $0x13c8] sm:$0xff]
    %v902 = vld [vmem:[%s1 + $0x13d0] sm:$0xff]
    %v903 = vld [vmem:[%s1 + $0x13d8] sm:$0xff]
    %v904 = vld [vmem:[%s1 + $0x13e0] sm:$0xff]
    %v905 = vld [vmem:[%s1 + $0x13e8] sm:$0xff]
    %v906 = vld [vmem:[%s1 + $0x13f0] sm:$0xff]
    %v907 = vld [vmem:[%s1 + $0x13f8] sm:$0xff]
    %v908 = vld [vmem:[%s1 + $0x1400] sm:$0xff]
    %v909 = vld [vmem:[%s1 + $0x1408] sm:$0xff]
    %v910 = vld [vmem:[%s1 + $0x1410] sm:$0xff]
    %v911 = vld [vmem:[%s1 + $0x1418] sm:$0xff]
    %v912 = vld [vmem:[%s1 + $0x1420] sm:$0xff]
    %v913 = vld [vmem:[%s1 + $0x1428] sm:$0xff]
    %v914 = vld [vmem:[%s1 + $0x1430] sm:$0xff]
    %v915 = vld [vmem:[%s1 + $0x1438] sm:$0xff]
    %v916 = vld [vmem:[%s1 + $0x1440] sm:$0xff]
    %v917 = vld [vmem:[%s1 + $0x1448] sm:$0xff]
    %v918 = vld [vmem:[%s1 + $0x1450] sm:$0xff]
    %v919 = vld [vmem:[%s1 + $0x1458] sm:$0xff]
    %v920 = vld [vmem:[%s1 + $0x1460] sm:$0xff]
    %v921 = vld [vmem:[%s1 + $0x1468] sm:$0xff]
    %v922 = vld [vmem:[%s1 + $0x1470] sm:$0xff]
    %v923 = vld [vmem:[%s1 + $0x1478] sm:$0xff]
    %v924 = vld [vmem:[%s1 + $0x1480] sm:$0xff]
    %v925 = vld [vmem:[%s1 + $0x1488] sm:$0xff]
    %v926 = vld [vmem:[%s1 + $0x1490] sm:$0xff]
    %v927 = vld [vmem:[%s1 + $0x1498] sm:$0xff]
    %v928 = vld [vmem:[%s1 + $0x14a0] sm:$0xff]
    %v929 = vld [vmem:[%s1 + $0x14a8] sm:$0xff]
    %v930 = vld [vmem:[%s1 + $0x14b0] sm:$0xff]
    %v931 = vld [vmem:[%s1 + $0x14b8] sm:$0xff]
    %v932 = vld [vmem:[%s1 + $0x14c0] sm:$0xff]
    %v933 = vld [vmem:[%s1 + $0x14c8] sm:$0xff]
    %v934 = vld [vmem:[%s1 + $0x14d0] sm:$0xff]
    %v935 = vld [vmem:[%s1 + $0x14d8] sm:$0xff]
    %v936 = vld [vmem:[%s1 + $0x14e0] sm:$0xff]
    %v937 = vld [vmem:[%s1 + $0x14e8] sm:$0xff]
    %v938 = vld [vmem:[%s1 + $0x14f0] sm:$0xff]
    %v939 = vld [vmem:[%s1 + $0x14f8] sm:$0xff]
    %v940 = vld [vmem:[%s1 + $0x1500] sm:$0xff]
    %v941 = vld [vmem:[%s1 + $0x1508] sm:$0xff]
    %v942 = vld [vmem:[%s1 + $0x1510] sm:$0xff]
    %v943 = vld [vmem:[%s1 + $0x1518] sm:$0xff]
    %v944 = vld [vmem:[%s1 + $0x1520] sm:$0xff]
    %v945 = vld [vmem:[%s1 + $0x1528] sm:$0xff]
    %v946 = vld [vmem:[%s1 + $0x1530] sm:$0xff]
    %v947 = vld [vmem:[%s1 + $0x1538] sm:$0xff]
    %v948 = vld [vmem:[%s1 + $0x1540] sm:$0xff]
    %v949 = vld [vmem:[%s1 + $0x1548] sm:$0xff]
    %v950 = vld [vmem:[%s1 + $0x1550] sm:$0xff]
    %v951 = vld [vmem:[%s1 + $0x1558] sm:$0xff]
    %v952 = vld [vmem:[%s1 + $0x1560] sm:$0xff]
    %v953 = vld [vmem:[%s1 + $0x1568] sm:$0xff]
    %v954 = vld [vmem:[%s1 + $0x1570] sm:$0xff]
    %v955 = vld [vmem:[%s1 + $0x1578] sm:$0xff]
    %v956 = vld [vmem:[%s1 + $0x1580] sm:$0xff]
    %v957 = vld [vmem:[%s1 + $0x1588] sm:$0xff]
    %v958 = vld [vmem:[%s1 + $0x1590] sm:$0xff]
    %v959 = vld [vmem:[%s1 + $0x1598] sm:$0xff]
    %v960 = vld [vmem:[%s1 + $0x15a0] sm:$0xff]
    %v961 = vld [vmem:[%s1 + $0x15a8] sm:$0xff]
    %v962 = vld [vmem:[%s1 + $0x15b0] sm:$0xff]
    %v963 = vld [vmem:[%s1 + $0x15b8] sm:$0xff]
    %v964 = vld [vmem:[%s1 + $0x15c0] sm:$0xff]
    %v965 = vld [vmem:[%s1 + $0x15c8] sm:$0xff]
    %v966 = vld [vmem:[%s1 + $0x15d0] sm:$0xff]
    %v967 = vld [vmem:[%s1 + $0x15d8] sm:$0xff]
    %v968 = vld [vmem:[%s1 + $0x15e0] sm:$0xff]
    %v969 = vld [vmem:[%s1 + $0x15e8] sm:$0xff]
    %v970 = vld [vmem:[%s1 + $0x15f0] sm:$0xff]
    %v971 = vld [vmem:[%s1 + $0x15f8] sm:$0xff]
    %v972 = vld [vmem:[%s1 + $0x1600] sm:$0xff]
    %v973 = vld [vmem:[%s1 + $0x1608] sm:$0xff]
    %v974 = vld [vmem:[%s1 + $0x1610] sm:$0xff]
    %v975 = vld [vmem:[%s1 + $0x1618] sm:$0xff]
    %v976 = vld [vmem:[%s1 + $0x1620] sm:$0xff]
    %v977 = vld [vmem:[%s1 + $0x1628] sm:$0xff]
    %v978 = vld [vmem:[%s1 + $0x1630] sm:$0xff]
    %v979 = vld [vmem:[%s1 + $0x1638] sm:$0xff]
    %v980 = vld [vmem:[%s1 + $0x1640] sm:$0xff]
    %v981 = vld [vmem:[%s1 + $0x1648] sm:$0xff]
    %v982 = vld [vmem:[%s1 + $0x1650] sm:$0xff]
    %v983 = vld [vmem:[%s1 + $0x1658] sm:$0xff]
    %v984 = vld [vmem:[%s1 + $0x1660] sm:$0xff]
    %v985 = vld [vmem:[%s1 + $0x1668] sm:$0xff]
    %v986 = vld [vmem:[%s1 + $0x1670] sm:$0xff]
    %v987 = vld [vmem:[%s1 + $0x1678] sm:$0xff]
    %v988 = vld [vmem:[%s1 + $0x1680] sm:$0xff]
    %v989 = vld [vmem:[%s1 + $0x1688] sm:$0xff]
    %v990 = vld [vmem:[%s1 + $0x1690] sm:$0xff]
    %v991 = vld [vmem:[%s1 + $0x1698] sm:$0xff]
    %v992 = vld [vmem:[%s1 + $0x16a0] sm:$0xff]
    %v993 = vld [vmem:[%s1 + $0x16a8] sm:$0xff]
    %v994 = vld [vmem:[%s1 + $0x16b0] sm:$0xff]
    %v995 = vld [vmem:[%s1 + $0x16b8] sm:$0xff]
    %v996 = vld [vmem:[%s1 + $0x16c0] sm:$0xff]
    %v997 = vld [vmem:[%s1 + $0x16c8] sm:$0xff]
    %v998 = vld [vmem:[%s1 + $0x16d0] sm:$0xff]
    %v999 = vld [vmem:[%s1 + $0x16d8] sm:$0xff]
    %v1000 = vld [vmem:[%s1 + $0x16e0] sm:$0xff]
    %v1001 = vld [vmem:[%s1 + $0x16e8] sm:$0xff]
    %v1002 = vld [vmem:[%s1 + $0x16f0] sm:$0xff]
    %v1003 = vld [vmem:[%s1 + $0x16f8] sm:$0xff]
    %v1004 = vld [vmem:[%s1 + $0x1700] sm:$0xff]
    %v1005 = vld [vmem:[%s1 + $0x1708] sm:$0xff]
    %v1006 = vld [vmem:[%s1 + $0x1710] sm:$0xff]
    %v1007 = vld [vmem:[%s1 + $0x1718] sm:$0xff]
    %v1008 = vld [vmem:[%s1 + $0x1720] sm:$0xff]
    %v1009 = vld [vmem:[%s1 + $0x1728] sm:$0xff]
    %v1010 = vld [vmem:[%s1 + $0x1730] sm:$0xff]
    %v1011 = vld [vmem:[%s1 + $0x1738] sm:$0xff]
    %v1012 = vld [vmem:[%s1 + $0x1740] sm:$0xff]
    %v1013 = vld [vmem:[%s1 + $0x1748] sm:$0xff]
    %v1014 = vld [vmem:[%s1 + $0x1750] sm:$0xff]
    %v1015 = vld [vmem:[%s1 + $0x1758] sm:$0xff]
    %v1016 = vld [vmem:[%s1 + $0x1760] sm:$0xff]
    %v1017 = vld [vmem:[%s1 + $0x1768] sm:$0xff]
    %v1018 = vld [vmem:[%s1 + $0x1770] sm:$0xff]
    %v1019 = vld [vmem:[%s1 + $0x1778] sm:$0xff]
    %v1020 = vld [vmem:[%s1 + $0x1780] sm:$0xff]
    %v1021 = vld [vmem:[%s1 + $0x1788] sm:$0xff]
    %v1022 = vld [vmem:[%s1 + $0x1790] sm:$0xff]
    %v1023 = vld [vmem:[%s1 + $0x1798] sm:$0xff]
    %v1024 = vld [vmem:[%s1 + $0x17a0] sm:$0xff]
    %v1025 = vld [vmem:[%s1 + $0x17a8] sm:$0xff]
    %v1026 = vld [vmem:[%s1 + $0x17b0] sm:$0xff]
    %v1027 = vld [vmem:[%s1 + $0x17b8] sm:$0xff]
    %v1028 = vld [vmem:[%s1 + $0x17c0] sm:$0xff]
    %v1029 = vld [vmem:[%s1 + $0x17c8] sm:$0xff]
    %v1030 = vld [vmem:[%s1 + $0x17d0] sm:$0xff]
    %v1031 = vld [vmem:[%s1 + $0x17d8] sm:$0xff]
    %v1032 = vld [vmem:[%s1 + $0x17e0] sm:$0xff]
    %v1033 = vld [vmem:[%s1 + $0x17e8] sm:$0xff]
    %v1034 = vld [vmem:[%s1 + $0x17f0] sm:$0xff]
    %v1035 = vld [vmem:[%s1 + $0x17f8] sm:$0xff]
    %v1036 = vld [vmem:[%s1 + $0x1800] sm:$0xff]
    %v1037 = vld [vmem:[%s1 + $0x1808] sm:$0xff]
    %v1038 = vld [vmem:[%s1 + $0x1810] sm:$0xff]
    %v1039 = vld [vmem:[%s1 + $0x1818] sm:$0xff]
    %v1040 = vld [vmem:[%s1 + $0x1820] sm:$0xff]
    %v1041 = vld [vmem:[%s1 + $0x1828] sm:$0xff]
    %v1042 = vld [vmem:[%s1 + $0x1830] sm:$0xff]
    %v1043 = vld [vmem:[%s1 + $0x1838] sm:$0xff]
    %v1044 = vld [vmem:[%s1 + $0x1840] sm:$0xff]
    %v1045 = vld [vmem:[%s1 + $0x1848] sm:$0xff]
    %v1046 = vld [vmem:[%s1 + $0x1850] sm:$0xff]
    %v1047 = vld [vmem:[%s1 + $0x1858] sm:$0xff]
    %v1048 = vld [vmem:[%s1 + $0x1860] sm:$0xff]
    %v1049 = vld [vmem:[%s1 + $0x1868] sm:$0xff]
    %v1050 = vld [vmem:[%s1 + $0x1870] sm:$0xff]
    %v1051 = vld [vmem:[%s1 + $0x1878] sm:$0xff]
    %v1052 = vld [vmem:[%s1 + $0x1880] sm:$0xff]
    %v1053 = vld [vmem:[%s1 + $0x1888] sm:$0xff]
    %v1054 = vld [vmem:[%s1 + $0x1890] sm:$0xff]
    %v1055 = vld [vmem:[%s1 + $0x1898] sm:$0xff]
    %v1056 = vld [vmem:[%s1 + $0x18a0] sm:$0xff]
    %v1057 = vld [vmem:[%s1 + $0x18a8] sm:$0xff]
    %v1058 = vld [vmem:[%s1 + $0x18b0] sm:$0xff]
    %v1059 = vld [vmem:[%s1 + $0x18b8] sm:$0xff]
    %v1060 = vld [vmem:[%s1 + $0x18c0] sm:$0xff]
    %v1061 = vld [vmem:[%s1 + $0x18c8] sm:$0xff]
    %v1062 = vld [vmem:[%s1 + $0x18d0] sm:$0xff]
    %v1063 = vld [vmem:[%s1 + $0x18d8] sm:$0xff]
    %v1064 = vld [vmem:[%s1 + $0x18e0] sm:$0xff]
    %v1065 = vld [vmem:[%s1 + $0x18e8] sm:$0xff]
    %v1066 = vld [vmem:[%s1 + $0x18f0] sm:$0xff]
    %v1067 = vld [vmem:[%s1 + $0x18f8] sm:$0xff]
    %v1068 = vld [vmem:[%s1 + $0x1900] sm:$0xff]
    %v1069 = vld [vmem:[%s1 + $0x1908] sm:$0xff]
    %v1070 = vld [vmem:[%s1 + $0x1910] sm:$0xff]
    %v1071 = vld [vmem:[%s1 + $0x1918] sm:$0xff]
    %v1072 = vld [vmem:[%s1 + $0x1920] sm:$0xff]
    %v1073 = vld [vmem:[%s1 + $0x1928] sm:$0xff]
    %v1074 = vld [vmem:[%s1 + $0x1930] sm:$0xff]
    %v1075 = vld [vmem:[%s1 + $0x1938] sm:$0xff]
    %v1076 = vld [vmem:[%s1 + $0x1940] sm:$0xff]
    %v1077 = vld [vmem:[%s1 + $0x1948] sm:$0xff]
    %v1078 = vld [vmem:[%s1 + $0x1950] sm:$0xff]
    %v1079 = vld [vmem:[%s1 + $0x1958] sm:$0xff]
    %v1080 = vld [vmem:[%s1 + $0x1960] sm:$0xff]
    %v1081 = vld [vmem:[%s1 + $0x1968] sm:$0xff]
    %v1082 = vld [vmem:[%s1 + $0x1970] sm:$0xff]
    %v1083 = vld [vmem:[%s1 + $0x1978] sm:$0xff]
    %v1084 = vld [vmem:[%s1 + $0x1980] sm:$0xff]
    %v1085 = vld [vmem:[%s1 + $0x1988] sm:$0xff]
    %v1086 = vld [vmem:[%s1 + $0x1990] sm:$0xff]
    %v1087 = vld [vmem:[%s1 + $0x1998] sm:$0xff]
    %v1088 = vld [vmem:[%s1 + $0x19a0] sm:$0xff]
    %v1089 = vld [vmem:[%s1 + $0x19a8] sm:$0xff]
    %v1090 = vld [vmem:[%s1 + $0x19b0] sm:$0xff]
    %v1091 = vld [vmem:[%s1 + $0x19b8] sm:$0xff]
    %v1092 = vld [vmem:[%s1 + $0x19c0] sm:$0xff]
    %v1093 = vld [vmem:[%s1 + $0x19c8] sm:$0xff]
    %v1094 = vld [vmem:[%s1 + $0x19d0] sm:$0xff]
    %v1095 = vld [vmem:[%s1 + $0x19d8] sm:$0xff]
    %v1096 = vld [vmem:[%s1 + $0x19e0] sm:$0xff]
    %v1097 = vld [vmem:[%s1 + $0x19e8] sm:$0xff]
    %v1098 = vld [vmem:[%s1 + $0x19f0] sm:$0xff]
    %v1099 = vld [vmem:[%s1 + $0x19f8] sm:$0xff]
    %v1100 = vld [vmem:[%s1 + $0x1a00] sm:$0xff]
    %v1101 = vld [vmem:[%s1 + $0x1a08] sm:$0xff]
    %v1102 = vld [vmem:[%s1 + $0x1a10] sm:$0xff]
    %v1103 = vld [vmem:[%s1 + $0x1a18] sm:$0xff]
    %v1104 = vld [vmem:[%s1 + $0x1a20] sm:$0xff]
    %v1105 = vld [vmem:[%s1 + $0x1a28] sm:$0xff]
    %v1106 = vld [vmem:[%s1 + $0x1a30] sm:$0xff]
    %v1107 = vld [vmem:[%s1 + $0x1a38] sm:$0xff]
    %v1108 = vld [vmem:[%s1 + $0x1a40] sm:$0xff]
    %v1109 = vld [vmem:[%s1 + $0x1a48] sm:$0xff]
    %v1110 = vld [vmem:[%s1 + $0x1a50] sm:$0xff]
    %v1111 = vld [vmem:[%s1 + $0x1a58] sm:$0xff]
    %v1112 = vld [vmem:[%s1 + $0x1a60] sm:$0xff]
    %v1113 = vld [vmem:[%s1 + $0x1a68] sm:$0xff]
    %v1114 = vld [vmem:[%s1 + $0x1a70] sm:$0xff]
    %v1115 = vld [vmem:[%s1 + $0x1a78] sm:$0xff]
    %v1116 = vld [vmem:[%s1 + $0x1a80] sm:$0xff]
    %v1117 = vld [vmem:[%s1 + $0x1a88] sm:$0xff]
    %v1118 = vld [vmem:[%s1 + $0x1a90] sm:$0xff]
    %v1119 = vld [vmem:[%s1 + $0x1a98] sm:$0xff]
    %v1120 = vld [vmem:[%s1 + $0x1aa0] sm:$0xff]
    %v1121 = vld [vmem:[%s1 + $0x1aa8] sm:$0xff]
    %v1122 = vld [vmem:[%s1 + $0x1ab0] sm:$0xff]
    %v1123 = vld [vmem:[%s1 + $0x1ab8] sm:$0xff]
    %v1124 = vld [vmem:[%s1 + $0x1ac0] sm:$0xff]
    %v1125 = vld [vmem:[%s1 + $0x1ac8] sm:$0xff]
    %v1126 = vld [vmem:[%s1 + $0x1ad0] sm:$0xff]
    %v1127 = vld [vmem:[%s1 + $0x1ad8] sm:$0xff]
    %v1128 = vld [vmem:[%s1 + $0x1ae0] sm:$0xff]
    %v1129 = vld [vmem:[%s1 + $0x1ae8] sm:$0xff]
    %v1130 = vld [vmem:[%s1 + $0x1af0] sm:$0xff]
    %v1131 = vld [vmem:[%s1 + $0x1af8] sm:$0xff]
    %v1132 = vld [vmem:[%s1 + $0x1b00] sm:$0xff]
    %v1133 = vld [vmem:[%s1 + $0x1b08] sm:$0xff]
    %v1134 = vld [vmem:[%s1 + $0x1b10] sm:$0xff]
    %v1135 = vld [vmem:[%s1 + $0x1b18] sm:$0xff]
    %v1136 = vld [vmem:[%s1 + $0x1b20] sm:$0xff]
    %v1137 = vld [vmem:[%s1 + $0x1b28] sm:$0xff]
    %v1138 = vld [vmem:[%s1 + $0x1b30] sm:$0xff]
    %v1139 = vld [vmem:[%s1 + $0x1b38] sm:$0xff]
    %v1140 = vld [vmem:[%s1 + $0x1b40] sm:$0xff]
    %v1141 = vld [vmem:[%s1 + $0x1b48] sm:$0xff]
    %v1142 = vld [vmem:[%s1 + $0x1b50] sm:$0xff]
    %v1143 = vld [vmem:[%s1 + $0x1b58] sm:$0xff]
    %v1144 = vld [vmem:[%s1 + $0x1b60] sm:$0xff]
    %v1145 = vld [vmem:[%s1 + $0x1b68] sm:$0xff]
    %v1146 = vld [vmem:[%s1 + $0x1b70] sm:$0xff]
    %v1147 = vld [vmem:[%s1 + $0x1b78] sm:$0xff]
    %v1148 = vld [vmem:[%s1 + $0x1b80] sm:$0xff]
    %v1149 = vld [vmem:[%s1 + $0x1b88] sm:$0xff]
    %v1150 = vld [vmem:[%s1 + $0x1b90] sm:$0xff]
    %v1151 = vld [vmem:[%s1 + $0x1b98] sm:$0xff]
    %v1152 = vld [vmem:[%s1 + $0x1ba0] sm:$0xff]
    %v1153 = vld [vmem:[%s1 + $0x1ba8] sm:$0xff]
    %v1154 = vld [vmem:[%s1 + $0x1bb0] sm:$0xff]
    %v1155 = vld [vmem:[%s1 + $0x1bb8] sm:$0xff]
    %v1156 = vld [vmem:[%s1 + $0x1bc0] sm:$0xff]
    %v1157 = vld [vmem:[%s1 + $0x1bc8] sm:$0xff]
    %v1158 = vld [vmem:[%s1 + $0x1bd0] sm:$0xff]
    %v1159 = vld [vmem:[%s1 + $0x1bd8] sm:$0xff]
    %v1160 = vld [vmem:[%s1 + $0x1be0] sm:$0xff]
    %v1161 = vld [vmem:[%s1 + $0x1be8] sm:$0xff]
    %v1162 = vld [vmem:[%s1 + $0x1bf0] sm:$0xff]
    %v1163 = vld [vmem:[%s1 + $0x1bf8] sm:$0xff]
    %v1164 = vld [vmem:[%s1 + $0x1c00] sm:$0xff]
    %v1165 = vld [vmem:[%s1 + $0x1c08] sm:$0xff]
    %v1166 = vld [vmem:[%s1 + $0x1c10] sm:$0xff]
    %v1167 = vld [vmem:[%s1 + $0x1c18] sm:$0xff]
    %v1168 = vld [vmem:[%s1 + $0x1c20] sm:$0xff]
    %v1169 = vld [vmem:[%s1 + $0x1c28] sm:$0xff]
    %v1170 = vld [vmem:[%s1 + $0x1c30] sm:$0xff]
    %v1171 = vld [vmem:[%s1 + $0x1c38] sm:$0xff]
    %v1172 = vld [vmem:[%s1 + $0x1c40] sm:$0xff]
    %v1173 = vld [vmem:[%s1 + $0x1c48] sm:$0xff]
    %v1174 = vld [vmem:[%s1 + $0x1c50] sm:$0xff]
    %v1175 = vld [vmem:[%s1 + $0x1c58] sm:$0xff]
    %v1176 = vld [vmem:[%s1 + $0x1c60] sm:$0xff]
    %v1177 = vld [vmem:[%s1 + $0x1c68] sm:$0xff]
    %v1178 = vld [vmem:[%s1 + $0x1c70] sm:$0xff]
    %v1179 = vld [vmem:[%s1 + $0x1c78] sm:$0xff]
    %v1180 = vld [vmem:[%s1 + $0x1c80] sm:$0xff]
    %v1181 = vld [vmem:[%s1 + $0x1c88] sm:$0xff]
    %v1182 = vld [vmem:[%s1 + $0x1c90] sm:$0xff]
    %v1183 = vld [vmem:[%s1 + $0x1c98] sm:$0xff]
    %v1184 = vld [vmem:[%s1 + $0x1ca0] sm:$0xff]
    %v1185 = vld [vmem:[%s1 + $0x1ca8] sm:$0xff]
    %v1186 = vld [vmem:[%s1 + $0x1cb0] sm:$0xff]
    %v1187 = vld [vmem:[%s1 + $0x1cb8] sm:$0xff]
    %v1188 = vld [vmem:[%s1 + $0x1cc0] sm:$0xff]
    %v1189 = vld [vmem:[%s1 + $0x1cc8] sm:$0xff]
    %v1190 = vld [vmem:[%s1 + $0x1cd0] sm:$0xff]
    %v1191 = vld [vmem:[%s1 + $0x1cd8] sm:$0xff]
    %v1192 = vld [vmem:[%s1 + $0x1ce0] sm:$0xff]
    %v1193 = vld [vmem:[%s1 + $0x1ce8] sm:$0xff]
    %v1194 = vld [vmem:[%s1 + $0x1cf0] sm:$0xff]
    %v1195 = vld [vmem:[%s1 + $0x1cf8] sm:$0xff]
    %v1196 = vld [vmem:[%s1 + $0x1d00] sm:$0xff]
    %v1197 = vld [vmem:[%s1 + $0x1d08] sm:$0xff]
    %v1198 = vld [vmem:[%s1 + $0x1d10] sm:$0xff]
    %v1199 = vld [vmem:[%s1 + $0x1d18] sm:$0xff]
    %v1200 = vld [vmem:[%s1 + $0x1d20] sm:$0xff]
    %v1201 = vld [vmem:[%s1 + $0x1d28] sm:$0xff]
    %v1202 = vld [vmem:[%s1 + $0x1d30] sm:$0xff]
    %v1203 = vld [vmem:[%s1 + $0x1d38] sm:$0xff]
    %v1204 = vld [vmem:[%s1 + $0x1d40] sm:$0xff]
    %v1205 = vld [vmem:[%s1 + $0x1d48] sm:$0xff]
    %v1206 = vld [vmem:[%s1 + $0x1d50] sm:$0xff]
    %v1207 = vld [vmem:[%s1 + $0x1d58] sm:$0xff]
    %v1208 = vld [vmem:[%s1 + $0x1d60] sm:$0xff]
    %v1209 = vld [vmem:[%s1 + $0x1d68] sm:$0xff]
    %v1210 = vld [vmem:[%s1 + $0x1d70] sm:$0xff]
    %v1211 = vld [vmem:[%s1 + $0x1d78] sm:$0xff]
    %v1212 = vld [vmem:[%s1 + $0x1d80] sm:$0xff]
    %v1213 = vld [vmem:[%s1 + $0x1d88] sm:$0xff]
    %v1214 = vld [vmem:[%s1 + $0x1d90] sm:$0xff]
    %v1215 = vld [vmem:[%s1 + $0x1d98] sm:$0xff]
    %v1216 = vld [vmem:[%s1 + $0x1da0] sm:$0xff]
    %v1217 = vld [vmem:[%s1 + $0x1da8] sm:$0xff]
    %v1218 = vld [vmem:[%s1 + $0x1db0] sm:$0xff]
    %v1219 = vld [vmem:[%s1 + $0x1db8] sm:$0xff]
    %v1220 = vld [vmem:[%s1 + $0x1dc0] sm:$0xff]
    %v1221 = vld [vmem:[%s1 + $0x1dc8] sm:$0xff]
    %v1222 = vld [vmem:[%s1 + $0x1dd0] sm:$0xff]
    %v1223 = vld [vmem:[%s1 + $0x1dd8] sm:$0xff]
    %v1224 = vld [vmem:[%s1 + $0x1de0] sm:$0xff]
    %v1225 = vld [vmem:[%s1 + $0x1de8] sm:$0xff]
    %v1226 = vld [vmem:[%s1 + $0x1df0] sm:$0xff]
    %v1227 = vld [vmem:[%s1 + $0x1df8] sm:$0xff]
    %v1228 = vld [vmem:[%s1 + $0x1e00] sm:$0xff]
    %v1229 = vld [vmem:[%s1 + $0x1e08] sm:$0xff]
    %v1230 = vld [vmem:[%s1 + $0x1e10] sm:$0xff]
    %v1231 = vld [vmem:[%s1 + $0x1e18] sm:$0xff]
    %v1232 = vld [vmem:[%s1 + $0x1e20] sm:$0xff]
    %v1233 = vld [vmem:[%s1 + $0x1e28] sm:$0xff]
    %v1234 = vld [vmem:[%s1 + $0x1e30] sm:$0xff]
    %v1235 = vld [vmem:[%s1 + $0x1e38] sm:$0xff]
    %v1236 = vld [vmem:[%s1 + $0x1e40] sm:$0xff]
    %v1237 = vld [vmem:[%s1 + $0x1e48] sm:$0xff]
    %v1238 = vld [vmem:[%s1 + $0x1e50] sm:$0xff]
    %v1239 = vld [vmem:[%s1 + $0x1e58] sm:$0xff]
    %v1240 = vld [vmem:[%s1 + $0x1e60] sm:$0xff]
    %v1241 = vld [vmem:[%s1 + $0x1e68] sm:$0xff]
    %v1242 = vld [vmem:[%s1 + $0x1e70] sm:$0xff]
    %v1243 = vld [vmem:[%s1 + $0x1e78] sm:$0xff]
    %v1244 = vld [vmem:[%s1 + $0x1e80] sm:$0xff]
    %v1245 = vld [vmem:[%s1 + $0x1e88] sm:$0xff]
    %v1246 = vld [vmem:[%s1 + $0x1e90] sm:$0xff]
    %v1247 = vld [vmem:[%s1 + $0x1e98] sm:$0xff]
    %v1248 = vld [vmem:[%s1 + $0x1ea0] sm:$0xff]
    %v1249 = vld [vmem:[%s1 + $0x1ea8] sm:$0xff]
    %v1250 = vld [vmem:[%s1 + $0x1eb0] sm:$0xff]
    %v1251 = vld [vmem:[%s1 + $0x1eb8] sm:$0xff]
    %v1252 = vld [vmem:[%s1 + $0x1ec0] sm:$0xff]
    %v1253 = vld [vmem:[%s1 + $0x1ec8] sm:$0xff]
    %v1254 = vld [vmem:[%s1 + $0x1ed0] sm:$0xff]
    %v1255 = vld [vmem:[%s1 + $0x1ed8] sm:$0xff]
    %v1256 = vld [vmem:[%s1 + $0x1ee0] sm:$0xff]
    %v1257 = vld [vmem:[%s1 + $0x1ee8] sm:$0xff]
    %v1258 = vld [vmem:[%s1 + $0x1ef0] sm:$0xff]
    %v1259 = vld [vmem:[%s1 + $0x1ef8] sm:$0xff]
    %v1260 = vld [vmem:[%s1 + $0x1f00] sm:$0xff]
    %v1261 = vld [vmem:[%s1 + $0x1f08] sm:$0xff]
    %v1262 = vld [vmem:[%s1 + $0x1f10] sm:$0xff]
    %v1263 = vld [vmem:[%s1 + $0x1f18] sm:$0xff]
    %v1264 = vld [vmem:[%s1 + $0x1f20] sm:$0xff]
    %v1265 = vld [vmem:[%s1 + $0x1f28] sm:$0xff]
    %v1266 = vld [vmem:[%s1 + $0x1f30] sm:$0xff]
    %v1267 = vld [vmem:[%s1 + $0x1f38] sm:$0xff]
    %v1268 = vld [vmem:[%s1 + $0x1f40] sm:$0xff]
    %v1269 = vld [vmem:[%s1 + $0x1f48] sm:$0xff]
    %v1270 = vld [vmem:[%s1 + $0x1f50] sm:$0xff]
    %v1271 = vld [vmem:[%s1 + $0x1f58] sm:$0xff]
    %v1272 = vld [vmem:[%s1 + $0x1f60] sm:$0xff]
    %v1273 = vld [vmem:[%s1 + $0x1f68] sm:$0xff]
    %v1274 = vld [vmem:[%s1 + $0x1f70] sm:$0xff]
    %v1275 = vld [vmem:[%s1 + $0x1f78] sm:$0xff]
    %v1276 = vld [vmem:[%s1 + $0x1f80] sm:$0xff]
    %v1277 = vld [vmem:[%s1 + $0x1f88] sm:$0xff]
    %v1278 = vld [vmem:[%s1 + $0x1f90] sm:$0xff]
    %v1279 = vld [vmem:[%s1 + $0x1f98] sm:$0xff]
    %v1280 = vld [vmem:[%s1 + $0x1fa0] sm:$0xff]
    %v1281 = vld [vmem:[%s1 + $0x1fa8] sm:$0xff]
    %v1282 = vld [vmem:[%s1 + $0x1fb0] sm:$0xff]
    %v1283 = vld [vmem:[%s1 + $0x1fb8] sm:$0xff]
    %v1284 = vld [vmem:[%s1 + $0x1fc0] sm:$0xff]
    %v1285 = vld [vmem:[%s1 + $0x1fc8] sm:$0xff]
    %v1286 = vld [vmem:[%s1 + $0x1fd0] sm:$0xff]
    %v1287 = vld [vmem:[%s1 + $0x1fd8] sm:$0xff]
    %v1288 = vld [vmem:[%s1 + $0x1fe0] sm:$0xff]
    %v1289 = vld [vmem:[%s1 + $0x1fe8] sm:$0xff]
    %v1290 = vld [vmem:[%s1 + $0x1ff0] sm:$0xff]
    %v1291 = vld [vmem:[%s1 + $0x1ff8] sm:$0xff]
    %v1292 = vld [vmem:[%s1 + $0x2000] sm:$0xff]
    %v1293 = vld [vmem:[%s1 + $0x2008] sm:$0xff]
    %v1294 = vld [vmem:[%s1 + $0x2010] sm:$0xff]
    %v1295 = vld [vmem:[%s1 + $0x2018] sm:$0xff]
    %v1296 = vld [vmem:[%s1 + $0x2020] sm:$0xff]
    %v1297 = vld [vmem:[%s1 + $0x2028] sm:$0xff]
    %v1298 = vld [vmem:[%s1 + $0x2030] sm:$0xff]
    %v1299 = vld [vmem:[%s1 + $0x2038] sm:$0xff]
    %v1300 = vld [vmem:[%s1 + $0x2040] sm:$0xff]
    %v1301 = vld [vmem:[%s1 + $0x2048] sm:$0xff]
    %v1302 = vld [vmem:[%s1 + $0x2050] sm:$0xff]
    %v1303 = vld [vmem:[%s1 + $0x2058] sm:$0xff]
    %v1304 = vld [vmem:[%s1 + $0x2060] sm:$0xff]
    %v1305 = vld [vmem:[%s1 + $0x2068] sm:$0xff]
    %v1306 = vld [vmem:[%s1 + $0x2070] sm:$0xff]
    %v1307 = vld [vmem:[%s1 + $0x2078] sm:$0xff]
    %v1308 = vld [vmem:[%s1 + $0x2080] sm:$0xff]
    %v1309 = vld [vmem:[%s1 + $0x2088] sm:$0xff]
    %v1310 = vld [vmem:[%s1 + $0x2090] sm:$0xff]
    %v1311 = vld [vmem:[%s1 + $0x2098] sm:$0xff]
    %v1312 = vld [vmem:[%s1 + $0x20a0] sm:$0xff]
    %v1313 = vld [vmem:[%s1 + $0x20a8] sm:$0xff]
    %v1314 = vld [vmem:[%s1 + $0x20b0] sm:$0xff]
    %v1315 = vld [vmem:[%s1 + $0x20b8] sm:$0xff]
    %v1316 = vld [vmem:[%s1 + $0x20c0] sm:$0xff]
    %v1317 = vld [vmem:[%s1 + $0x20c8] sm:$0xff]
    %v1318 = vld [vmem:[%s1 + $0x20d0] sm:$0xff]
    %v1319 = vld [vmem:[%s1 + $0x20d8] sm:$0xff]
    %v1320 = vld [vmem:[%s1 + $0x20e0] sm:$0xff]
    %v1321 = vld [vmem:[%s1 + $0x20e8] sm:$0xff]
    %v1322 = vld [vmem:[%s1 + $0x20f0] sm:$0xff]
    %v1323 = vld [vmem:[%s1 + $0x20f8] sm:$0xff]
    %v1324 = vld [vmem:[%s1 + $0x2100] sm:$0xff]
    %v1325 = vld [vmem:[%s1 + $0x2108] sm:$0xff]
    %v1326 = vld [vmem:[%s1 + $0x2110] sm:$0xff]
    %v1327 = vld [vmem:[%s1 + $0x2118] sm:$0xff]
    %v1328 = vld [vmem:[%s1 + $0x2120] sm:$0xff]
    %v1329 = vld [vmem:[%s1 + $0x2128] sm:$0xff]
    %v1330 = vld [vmem:[%s1 + $0x2130] sm:$0xff]
    %v1331 = vld [vmem:[%s1 + $0x2138] sm:$0xff]
    %v1332 = vld [vmem:[%s1 + $0x2140] sm:$0xff]
    %v1333 = vld [vmem:[%s1 + $0x2148] sm:$0xff]
    %v1334 = vld [vmem:[%s1 + $0x2150] sm:$0xff]
    %v1335 = vld [vmem:[%s1 + $0x2158] sm:$0xff]
    %v1336 = vld [vmem:[%s1 + $0x2160] sm:$0xff]
    %v1337 = vld [vmem:[%s1 + $0x2168] sm:$0xff]
    %v1338 = vld [vmem:[%s1 + $0x2170] sm:$0xff]
    %v1339 = vld [vmem:[%s1 + $0x2178] sm:$0xff]
    %v1340 = vld [vmem:[%s1 + $0x2180] sm:$0xff]
    %v1341 = vld [vmem:[%s1 + $0x2188] sm:$0xff]
    %v1342 = vld [vmem:[%s1 + $0x2190] sm:$0xff]
    %v1343 = vld [vmem:[%s1 + $0x2198] sm:$0xff]
    %v1344 = vld [vmem:[%s1 + $0x21a0] sm:$0xff]
    %v1345 = vld [vmem:[%s1 + $0x21a8] sm:$0xff]
    %v1346 = vld [vmem:[%s1 + $0x21b0] sm:$0xff]
    %v1347 = vld [vmem:[%s1 + $0x21b8] sm:$0xff]
    %v1348 = vld [vmem:[%s1 + $0x21c0] sm:$0xff]
    %v1349 = vld [vmem:[%s1 + $0x21c8] sm:$0xff]
    %v1350 = vld [vmem:[%s1 + $0x21d0] sm:$0xff]
    %v1351 = vld [vmem:[%s1 + $0x21d8] sm:$0xff]
    %v1352 = vld [vmem:[%s1 + $0x21e0] sm:$0xff]
    %v1353 = vld [vmem:[%s1 + $0x21e8] sm:$0xff]
    %v1354 = vld [vmem:[%s1 + $0x21f0] sm:$0xff]
    %v1355 = vld [vmem:[%s1 + $0x21f8] sm:$0xff]
    %v1356 = vld [vmem:[%s1 + $0x2200] sm:$0xff]
    %v1357 = vld [vmem:[%s1 + $0x2208] sm:$0xff]
    %v1358 = vld [vmem:[%s1 + $0x2210] sm:$0xff]
    %v1359 = vld [vmem:[%s1 + $0x2218] sm:$0xff]
    %v1360 = vld [vmem:[%s1 + $0x2220] sm:$0xff]
    %v1361 = vld [vmem:[%s1 + $0x2228] sm:$0xff]
    %v1362 = vld [vmem:[%s1 + $0x2230] sm:$0xff]
    %v1363 = vld [vmem:[%s1 + $0x2238] sm:$0xff]
    %v1364 = vld [vmem:[%s1 + $0x2240] sm:$0xff]
    %v1365 = vld [vmem:[%s1 + $0x2248] sm:$0xff]
    %v1366 = vld [vmem:[%s1 + $0x2250] sm:$0xff]
    %v1367 = vld [vmem:[%s1 + $0x2258] sm:$0xff]
    %v1368 = vld [vmem:[%s1 + $0x2260] sm:$0xff]
    %v1369 = vld [vmem:[%s1 + $0x2268] sm:$0xff]
    %v1370 = vld [vmem:[%s1 + $0x2270] sm:$0xff]
    %v1371 = vld [vmem:[%s1 + $0x2278] sm:$0xff]
    %v1372 = vld [vmem:[%s1 + $0x2280] sm:$0xff]
    %v1373 = vld [vmem:[%s1 + $0x2288] sm:$0xff]
    %v1374 = vld [vmem:[%s1 + $0x2290] sm:$0xff]
    %v1375 = vld [vmem:[%s1 + $0x2298] sm:$0xff]
    %v1376 = vld [vmem:[%s1 + $0x22a0] sm:$0xff]
    %v1377 = vld [vmem:[%s1 + $0x22a8] sm:$0xff]
    %v1378 = vld [vmem:[%s1 + $0x22b0] sm:$0xff]
    %v1379 = vld [vmem:[%s1 + $0x22b8] sm:$0xff]
    %v1380 = vld [vmem:[%s1 + $0x22c0] sm:$0xff]
    %v1381 = vld [vmem:[%s1 + $0x22c8] sm:$0xff]
    %v1382 = vld [vmem:[%s1 + $0x22d0] sm:$0xff]
    %v1383 = vld [vmem:[%s1 + $0x22d8] sm:$0xff]
    %v1384 = vld [vmem:[%s1 + $0x22e0] sm:$0xff]
    %v1385 = vld [vmem:[%s1 + $0x22e8] sm:$0xff]
    %v1386 = vld [vmem:[%s1 + $0x22f0] sm:$0xff]
    %v1387 = vld [vmem:[%s1 + $0x22f8] sm:$0xff]
    %v1388 = vld [vmem:[%s2] sm:$0xf]
    %v1390 = vlaneseq
    %v1391 = vshrl.u32 %v1390, 7
    %v1392 = vsub.s32 0, %v1391
    %v1393 = vrot.slane %v1388, %v1392
    %v1394 = vlaneseq
    %v1395 = vshrl.u32 %v1394, 7
    %v1396 = vsub.s32 1, %v1395
    %v1397 = vrot.slane %v1388, %v1396
    %v1398 = vlaneseq
    %v1399 = vshrl.u32 %v1398, 7
    %v1400 = vsub.s32 2, %v1399
    %v1401 = vrot.slane %v1388, %v1400
    %v1402 = vlaneseq
    %v1403 = vshrl.u32 %v1402, 7
    %v1404 = vsub.s32 3, %v1403
    %v1405 = vrot.slane %v1388, %v1404
    %v2530 = vunpack.c.l.b16 %v268
    %v2531 = vunpack.c.h.b16 %v268
    %v2532 = vunpack.c.l.b16 %v269
    %v2533 = vunpack.c.h.b16 %v269
    %v2534 = vunpack.c.l.b16 %v270
    %v2535 = vunpack.c.h.b16 %v270
    %v2536 = vunpack.c.l.b16 %v271
    %v2537 = vunpack.c.h.b16 %v271
    %v2538 = vunpack.c.l.b16 %v272
    %v2539 = vunpack.c.h.b16 %v272
    %v2540 = vunpack.c.l.b16 %v273
    %v2541 = vunpack.c.h.b16 %v273
    %v2542 = vunpack.c.l.b16 %v274
    %v2543 = vunpack.c.h.b16 %v274
    %v2544 = vunpack.c.l.b16 %v275
    %v2545 = vunpack.c.h.b16 %v275
    %v2546 = vunpack.c.l.b16 %v276
    %v2547 = vunpack.c.h.b16 %v276
    %v2548 = vunpack.c.l.b16 %v277
    %v2549 = vunpack.c.h.b16 %v277
    %v2550 = vunpack.c.l.b16 %v278
    %v2551 = vunpack.c.h.b16 %v278
    %v2552 = vunpack.c.l.b16 %v279
    %v2553 = vunpack.c.h.b16 %v279
    %v2554 = vunpack.c.l.b16 %v280
    %v2555 = vunpack.c.h.b16 %v280
    %v2556 = vunpack.c.l.b16 %v281
    %v2557 = vunpack.c.h.b16 %v281
    %v2558 = vunpack.c.l.b16 %v282
    %v2559 = vunpack.c.h.b16 %v282
    %v2560 = vunpack.c.l.b16 %v283
    %v2561 = vunpack.c.h.b16 %v283
    %v2562 = vunpack.c.l.b16 %v284
    %v2563 = vunpack.c.h.b16 %v284
    %v2564 = vunpack.c.l.b16 %v285
    %v2565 = vunpack.c.h.b16 %v285
    %v2566 = vunpack.c.l.b16 %v286
    %v2567 = vunpack.c.h.b16 %v286
    %v2568 = vunpack.c.l.b16 %v287
    %v2569 = vunpack.c.h.b16 %v287
    %v2570 = vunpack.c.l.b16 %v288
    %v2571 = vunpack.c.h.b16 %v288
    %v2572 = vunpack.c.l.b16 %v289
    %v2573 = vunpack.c.h.b16 %v289
    %v2574 = vunpack.c.l.b16 %v290
    %v2575 = vunpack.c.h.b16 %v290
    %v2576 = vunpack.c.l.b16 %v291
    %v2577 = vunpack.c.h.b16 %v291
    %v2578 = vunpack.c.l.b16 %v292
    %v2579 = vunpack.c.h.b16 %v292
    %v2580 = vunpack.c.l.b16 %v293
    %v2581 = vunpack.c.h.b16 %v293
    %v2582 = vunpack.c.l.b16 %v294
    %v2583 = vunpack.c.h.b16 %v294
    %v2584 = vunpack.c.l.b16 %v295
    %v2585 = vunpack.c.h.b16 %v295
    %v2586 = vunpack.c.l.b16 %v296
    %v2587 = vunpack.c.h.b16 %v296
    %v2588 = vunpack.c.l.b16 %v297
    %v2589 = vunpack.c.h.b16 %v297
    %v2590 = vunpack.c.l.b16 %v298
    %v2591 = vunpack.c.h.b16 %v298
    %v2592 = vunpack.c.l.b16 %v299
    %v2593 = vunpack.c.h.b16 %v299
    %v2594 = vunpack.c.l.b16 %v300
    %v2595 = vunpack.c.h.b16 %v300
    %v2596 = vunpack.c.l.b16 %v301
    %v2597 = vunpack.c.h.b16 %v301
    %v2598 = vunpack.c.l.b16 %v302
    %v2599 = vunpack.c.h.b16 %v302
    %v2600 = vunpack.c.l.b16 %v303
    %v2601 = vunpack.c.h.b16 %v303
    %v2602 = vunpack.c.l.b16 %v304
    %v2603 = vunpack.c.h.b16 %v304
    %v2604 = vunpack.c.l.b16 %v305
    %v2605 = vunpack.c.h.b16 %v305
    %v2606 = vunpack.c.l.b16 %v306
    %v2607 = vunpack.c.h.b16 %v306
    %v2608 = vunpack.c.l.b16 %v307
    %v2609 = vunpack.c.h.b16 %v307
    %v2610 = vunpack.c.l.b16 %v308
    %v2611 = vunpack.c.h.b16 %v308
    %v2612 = vunpack.c.l.b16 %v309
    %v2613 = vunpack.c.h.b16 %v309
    %v2614 = vunpack.c.l.b16 %v310
    %v2615 = vunpack.c.h.b16 %v310
    %v2616 = vunpack.c.l.b16 %v311
    %v2617 = vunpack.c.h.b16 %v311
    %v2618 = vunpack.c.l.b16 %v312
    %v2619 = vunpack.c.h.b16 %v312
    %v2620 = vunpack.c.l.b16 %v313
    %v2621 = vunpack.c.h.b16 %v313
    %v2622 = vunpack.c.l.b16 %v314
    %v2623 = vunpack.c.h.b16 %v314
    %v2624 = vunpack.c.l.b16 %v315
    %v2625 = vunpack.c.h.b16 %v315
    %v2626 = vunpack.c.l.b16 %v316
    %v2627 = vunpack.c.h.b16 %v316
    %v2628 = vunpack.c.l.b16 %v317
    %v2629 = vunpack.c.h.b16 %v317
    %v2630 = vunpack.c.l.b16 %v318
    %v2631 = vunpack.c.h.b16 %v318
    %v2632 = vunpack.c.l.b16 %v319
    %v2633 = vunpack.c.h.b16 %v319
    %v2634 = vunpack.c.l.b16 %v320
    %v2635 = vunpack.c.h.b16 %v320
    %v2636 = vunpack.c.l.b16 %v321
    %v2637 = vunpack.c.h.b16 %v321
    %v2638 = vunpack.c.l.b16 %v322
    %v2639 = vunpack.c.h.b16 %v322
    %v2640 = vunpack.c.l.b16 %v323
    %v2641 = vunpack.c.h.b16 %v323
    %v2642 = vunpack.c.l.b16 %v324
    %v2643 = vunpack.c.h.b16 %v324
    %v2644 = vunpack.c.l.b16 %v325
    %v2645 = vunpack.c.h.b16 %v325
    %v2646 = vunpack.c.l.b16 %v326
    %v2647 = vunpack.c.h.b16 %v326
    %v2648 = vunpack.c.l.b16 %v327
    %v2649 = vunpack.c.h.b16 %v327
    %v2650 = vunpack.c.l.b16 %v328
    %v2651 = vunpack.c.h.b16 %v328
    %v2652 = vunpack.c.l.b16 %v329
    %v2653 = vunpack.c.h.b16 %v329
    %v2654 = vunpack.c.l.b16 %v330
    %v2655 = vunpack.c.h.b16 %v330
    %v2656 = vunpack.c.l.b16 %v331
    %v2657 = vunpack.c.h.b16 %v331
    %v2658 = vunpack.c.l.b16 %v332
    %v2659 = vunpack.c.h.b16 %v332
    %v2660 = vunpack.c.l.b16 %v333
    %v2661 = vunpack.c.h.b16 %v333
    %v2662 = vunpack.c.l.b16 %v334
    %v2663 = vunpack.c.h.b16 %v334
    %v2664 = vunpack.c.l.b16 %v335
    %v2665 = vunpack.c.h.b16 %v335
    %v2666 = vunpack.c.l.b16 %v336
    %v2667 = vunpack.c.h.b16 %v336
    %v2668 = vunpack.c.l.b16 %v337
    %v2669 = vunpack.c.h.b16 %v337
    %v2670 = vunpack.c.l.b16 %v338
    %v2671 = vunpack.c.h.b16 %v338
    %v2672 = vunpack.c.l.b16 %v339
    %v2673 = vunpack.c.h.b16 %v339
    %v2674 = vunpack.c.l.b16 %v340
    %v2675 = vunpack.c.h.b16 %v340
    %v2676 = vunpack.c.l.b16 %v341
    %v2677 = vunpack.c.h.b16 %v341
    %v2678 = vunpack.c.l.b16 %v342
    %v2679 = vunpack.c.h.b16 %v342
    %v2680 = vunpack.c.l.b16 %v343
    %v2681 = vunpack.c.h.b16 %v343
    %v2682 = vunpack.c.l.b16 %v344
    %v2683 = vunpack.c.h.b16 %v344
    %v2684 = vunpack.c.l.b16 %v345
    %v2685 = vunpack.c.h.b16 %v345
    %v2686 = vunpack.c.l.b16 %v346
    %v2687 = vunpack.c.h.b16 %v346
    %v2688 = vunpack.c.l.b16 %v347
    %v2689 = vunpack.c.h.b16 %v347
    %v2690 = vunpack.c.l.b16 %v348
    %v2691 = vunpack.c.h.b16 %v348
    %v2692 = vunpack.c.l.b16 %v349
    %v2693 = vunpack.c.h.b16 %v349
    %v2694 = vunpack.c.l.b16 %v350
    %v2695 = vunpack.c.h.b16 %v350
    %v2696 = vunpack.c.l.b16 %v351
    %v2697 = vunpack.c.h.b16 %v351
    %v2698 = vunpack.c.l.b16 %v352
    %v2699 = vunpack.c.h.b16 %v352
    %v2700 = vunpack.c.l.b16 %v353
    %v2701 = vunpack.c.h.b16 %v353
    %v2702 = vunpack.c.l.b16 %v354
    %v2703 = vunpack.c.h.b16 %v354
    %v2704 = vunpack.c.l.b16 %v355
    %v2705 = vunpack.c.h.b16 %v355
    %v2706 = vunpack.c.l.b16 %v356
    %v2707 = vunpack.c.h.b16 %v356
    %v2708 = vunpack.c.l.b16 %v357
    %v2709 = vunpack.c.h.b16 %v357
    %v2710 = vunpack.c.l.b16 %v358
    %v2711 = vunpack.c.h.b16 %v358
    %v2712 = vunpack.c.l.b16 %v359
    %v2713 = vunpack.c.h.b16 %v359
    %v2714 = vunpack.c.l.b16 %v360
    %v2715 = vunpack.c.h.b16 %v360
    %v2716 = vunpack.c.l.b16 %v361
    %v2717 = vunpack.c.h.b16 %v361
    %v2718 = vunpack.c.l.b16 %v362
    %v2719 = vunpack.c.h.b16 %v362
    %v2720 = vunpack.c.l.b16 %v363
    %v2721 = vunpack.c.h.b16 %v363
    %v2722 = vunpack.c.l.b16 %v364
    %v2723 = vunpack.c.h.b16 %v364
    %v2724 = vunpack.c.l.b16 %v365
    %v2725 = vunpack.c.h.b16 %v365
    %v2726 = vunpack.c.l.b16 %v366
    %v2727 = vunpack.c.h.b16 %v366
    %v2728 = vunpack.c.l.b16 %v367
    %v2729 = vunpack.c.h.b16 %v367
    %v2730 = vunpack.c.l.b16 %v368
    %v2731 = vunpack.c.h.b16 %v368
    %v2732 = vunpack.c.l.b16 %v369
    %v2733 = vunpack.c.h.b16 %v369
    %v2734 = vunpack.c.l.b16 %v370
    %v2735 = vunpack.c.h.b16 %v370
    %v2736 = vunpack.c.l.b16 %v371
    %v2737 = vunpack.c.h.b16 %v371
    %v2738 = vunpack.c.l.b16 %v372
    %v2739 = vunpack.c.h.b16 %v372
    %v2740 = vunpack.c.l.b16 %v373
    %v2741 = vunpack.c.h.b16 %v373
    %v2742 = vunpack.c.l.b16 %v374
    %v2743 = vunpack.c.h.b16 %v374
    %v2744 = vunpack.c.l.b16 %v375
    %v2745 = vunpack.c.h.b16 %v375
    %v2746 = vunpack.c.l.b16 %v376
    %v2747 = vunpack.c.h.b16 %v376
    %v2748 = vunpack.c.l.b16 %v377
    %v2749 = vunpack.c.h.b16 %v377
    %v2750 = vunpack.c.l.b16 %v378
    %v2751 = vunpack.c.h.b16 %v378
    %v2752 = vunpack.c.l.b16 %v379
    %v2753 = vunpack.c.h.b16 %v379
    %v2754 = vunpack.c.l.b16 %v380
    %v2755 = vunpack.c.h.b16 %v380
    %v2756 = vunpack.c.l.b16 %v381
    %v2757 = vunpack.c.h.b16 %v381
    %v2758 = vunpack.c.l.b16 %v382
    %v2759 = vunpack.c.h.b16 %v382
    %v2760 = vunpack.c.l.b16 %v383
    %v2761 = vunpack.c.h.b16 %v383
    %v2762 = vunpack.c.l.b16 %v384
    %v2763 = vunpack.c.h.b16 %v384
    %v2764 = vunpack.c.l.b16 %v385
    %v2765 = vunpack.c.h.b16 %v385
    %v2766 = vunpack.c.l.b16 %v386
    %v2767 = vunpack.c.h.b16 %v386
    %v2768 = vunpack.c.l.b16 %v387
    %v2769 = vunpack.c.h.b16 %v387
    %v2770 = vunpack.c.l.b16 %v388
    %v2771 = vunpack.c.h.b16 %v388
    %v2772 = vunpack.c.l.b16 %v389
    %v2773 = vunpack.c.h.b16 %v389
    %v2774 = vunpack.c.l.b16 %v390
    %v2775 = vunpack.c.h.b16 %v390
    %v2776 = vunpack.c.l.b16 %v391
    %v2777 = vunpack.c.h.b16 %v391
    %v2778 = vunpack.c.l.b16 %v392
    %v2779 = vunpack.c.h.b16 %v392
    %v2780 = vunpack.c.l.b16 %v393
    %v2781 = vunpack.c.h.b16 %v393
    %v2782 = vunpack.c.l.b16 %v394
    %v2783 = vunpack.c.h.b16 %v394
    %v2784 = vunpack.c.l.b16 %v395
    %v2785 = vunpack.c.h.b16 %v395
    %v2786 = vunpack.c.l.b16 %v396
    %v2787 = vunpack.c.h.b16 %v396
    %v2788 = vunpack.c.l.b16 %v397
    %v2789 = vunpack.c.h.b16 %v397
    %v2790 = vunpack.c.l.b16 %v398
    %v2791 = vunpack.c.h.b16 %v398
    %v2792 = vunpack.c.l.b16 %v399
    %v2793 = vunpack.c.h.b16 %v399
    %v2794 = vunpack.c.l.b16 %v400
    %v2795 = vunpack.c.h.b16 %v400
    %v2796 = vunpack.c.l.b16 %v401
    %v2797 = vunpack.c.h.b16 %v401
    %v2798 = vunpack.c.l.b16 %v402
    %v2799 = vunpack.c.h.b16 %v402
    %v2800 = vunpack.c.l.b16 %v403
    %v2801 = vunpack.c.h.b16 %v403
    %v2802 = vunpack.c.l.b16 %v404
    %v2803 = vunpack.c.h.b16 %v404
    %v2804 = vunpack.c.l.b16 %v405
    %v2805 = vunpack.c.h.b16 %v405
    %v2806 = vunpack.c.l.b16 %v406
    %v2807 = vunpack.c.h.b16 %v406
    %v2808 = vunpack.c.l.b16 %v407
    %v2809 = vunpack.c.h.b16 %v407
    %v2810 = vunpack.c.l.b16 %v408
    %v2811 = vunpack.c.h.b16 %v408
    %v2812 = vunpack.c.l.b16 %v409
    %v2813 = vunpack.c.h.b16 %v409
    %v2814 = vunpack.c.l.b16 %v410
    %v2815 = vunpack.c.h.b16 %v410
    %v2816 = vunpack.c.l.b16 %v411
    %v2817 = vunpack.c.h.b16 %v411
    %v2818 = vunpack.c.l.b16 %v412
    %v2819 = vunpack.c.h.b16 %v412
    %v2820 = vunpack.c.l.b16 %v413
    %v2821 = vunpack.c.h.b16 %v413
    %v2822 = vunpack.c.l.b16 %v414
    %v2823 = vunpack.c.h.b16 %v414
    %v2824 = vunpack.c.l.b16 %v415
    %v2825 = vunpack.c.h.b16 %v415
    %v2826 = vunpack.c.l.b16 %v416
    %v2827 = vunpack.c.h.b16 %v416
    %v2828 = vunpack.c.l.b16 %v417
    %v2829 = vunpack.c.h.b16 %v417
    %v2830 = vunpack.c.l.b16 %v418
    %v2831 = vunpack.c.h.b16 %v418
    %v2832 = vunpack.c.l.b16 %v419
    %v2833 = vunpack.c.h.b16 %v419
    %v2834 = vunpack.c.l.b16 %v420
    %v2835 = vunpack.c.h.b16 %v420
    %v2836 = vunpack.c.l.b16 %v421
    %v2837 = vunpack.c.h.b16 %v421
    %v2838 = vunpack.c.l.b16 %v422
    %v2839 = vunpack.c.h.b16 %v422
    %v2840 = vunpack.c.l.b16 %v423
    %v2841 = vunpack.c.h.b16 %v423
    %v2842 = vunpack.c.l.b16 %v424
    %v2843 = vunpack.c.h.b16 %v424
    %v2844 = vunpack.c.l.b16 %v425
    %v2845 = vunpack.c.h.b16 %v425
    %v2846 = vunpack.c.l.b16 %v426
    %v2847 = vunpack.c.h.b16 %v426
    %v2848 = vunpack.c.l.b16 %v427
    %v2849 = vunpack.c.h.b16 %v427
    %v2850 = vunpack.c.l.b16 %v428
    %v2851 = vunpack.c.h.b16 %v428
    %v2852 = vunpack.c.l.b16 %v429
    %v2853 = vunpack.c.h.b16 %v429
    %v2854 = vunpack.c.l.b16 %v430
    %v2855 = vunpack.c.h.b16 %v430
    %v2856 = vunpack.c.l.b16 %v431
    %v2857 = vunpack.c.h.b16 %v431
    %v2858 = vunpack.c.l.b16 %v432
    %v2859 = vunpack.c.h.b16 %v432
    %v2860 = vunpack.c.l.b16 %v433
    %v2861 = vunpack.c.h.b16 %v433
    %v2862 = vunpack.c.l.b16 %v434
    %v2863 = vunpack.c.h.b16 %v434
    %v2864 = vunpack.c.l.b16 %v435
    %v2865 = vunpack.c.h.b16 %v435
    %v2866 = vunpack.c.l.b16 %v436
    %v2867 = vunpack.c.h.b16 %v436
    %v2868 = vunpack.c.l.b16 %v437
    %v2869 = vunpack.c.h.b16 %v437
    %v2870 = vunpack.c.l.b16 %v438
    %v2871 = vunpack.c.h.b16 %v438
    %v2872 = vunpack.c.l.b16 %v439
    %v2873 = vunpack.c.h.b16 %v439
    %v2874 = vunpack.c.l.b16 %v440
    %v2875 = vunpack.c.h.b16 %v440
    %v2876 = vunpack.c.l.b16 %v441
    %v2877 = vunpack.c.h.b16 %v441
    %v2878 = vunpack.c.l.b16 %v442
    %v2879 = vunpack.c.h.b16 %v442
    %v2880 = vunpack.c.l.b16 %v443
    %v2881 = vunpack.c.h.b16 %v443
    %v2882 = vunpack.c.l.b16 %v444
    %v2883 = vunpack.c.h.b16 %v444
    %v2884 = vunpack.c.l.b16 %v445
    %v2885 = vunpack.c.h.b16 %v445
    %v2886 = vunpack.c.l.b16 %v446
    %v2887 = vunpack.c.h.b16 %v446
    %v2888 = vunpack.c.l.b16 %v447
    %v2889 = vunpack.c.h.b16 %v447
    %v2890 = vunpack.c.l.b16 %v448
    %v2891 = vunpack.c.h.b16 %v448
    %v2892 = vunpack.c.l.b16 %v449
    %v2893 = vunpack.c.h.b16 %v449
    %v2894 = vunpack.c.l.b16 %v450
    %v2895 = vunpack.c.h.b16 %v450
    %v2896 = vunpack.c.l.b16 %v451
    %v2897 = vunpack.c.h.b16 %v451
    %v2898 = vunpack.c.l.b16 %v452
    %v2899 = vunpack.c.h.b16 %v452
    %v2900 = vunpack.c.l.b16 %v453
    %v2901 = vunpack.c.h.b16 %v453
    %v2902 = vunpack.c.l.b16 %v454
    %v2903 = vunpack.c.h.b16 %v454
    %v2904 = vunpack.c.l.b16 %v455
    %v2905 = vunpack.c.h.b16 %v455
    %v2906 = vunpack.c.l.b16 %v456
    %v2907 = vunpack.c.h.b16 %v456
    %v2908 = vunpack.c.l.b16 %v457
    %v2909 = vunpack.c.h.b16 %v457
    %v2910 = vunpack.c.l.b16 %v458
    %v2911 = vunpack.c.h.b16 %v458
    %v2912 = vunpack.c.l.b16 %v459
    %v2913 = vunpack.c.h.b16 %v459
    %v2914 = vunpack.c.l.b16 %v460
    %v2915 = vunpack.c.h.b16 %v460
    %v2916 = vunpack.c.l.b16 %v461
    %v2917 = vunpack.c.h.b16 %v461
    %v2918 = vunpack.c.l.b16 %v462
    %v2919 = vunpack.c.h.b16 %v462
    %v2920 = vunpack.c.l.b16 %v463
    %v2921 = vunpack.c.h.b16 %v463
    %v2922 = vunpack.c.l.b16 %v464
    %v2923 = vunpack.c.h.b16 %v464
    %v2924 = vunpack.c.l.b16 %v465
    %v2925 = vunpack.c.h.b16 %v465
    %v2926 = vunpack.c.l.b16 %v466
    %v2927 = vunpack.c.h.b16 %v466
    %v2928 = vunpack.c.l.b16 %v467
    %v2929 = vunpack.c.h.b16 %v467
    %v2930 = vunpack.c.l.b16 %v468
    %v2931 = vunpack.c.h.b16 %v468
    %v2932 = vunpack.c.l.b16 %v469
    %v2933 = vunpack.c.h.b16 %v469
    %v2934 = vunpack.c.l.b16 %v470
    %v2935 = vunpack.c.h.b16 %v470
    %v2936 = vunpack.c.l.b16 %v471
    %v2937 = vunpack.c.h.b16 %v471
    %v2938 = vunpack.c.l.b16 %v472
    %v2939 = vunpack.c.h.b16 %v472
    %v2940 = vunpack.c.l.b16 %v473
    %v2941 = vunpack.c.h.b16 %v473
    %v2942 = vunpack.c.l.b16 %v474
    %v2943 = vunpack.c.h.b16 %v474
    %v2944 = vunpack.c.l.b16 %v475
    %v2945 = vunpack.c.h.b16 %v475
    %v2946 = vunpack.c.l.b16 %v476
    %v2947 = vunpack.c.h.b16 %v476
    %v2948 = vunpack.c.l.b16 %v477
    %v2949 = vunpack.c.h.b16 %v477
    %v2950 = vunpack.c.l.b16 %v478
    %v2951 = vunpack.c.h.b16 %v478
    %v2952 = vunpack.c.l.b16 %v479
    %v2953 = vunpack.c.h.b16 %v479
    %v2954 = vunpack.c.l.b16 %v480
    %v2955 = vunpack.c.h.b16 %v480
    %v2956 = vunpack.c.l.b16 %v481
    %v2957 = vunpack.c.h.b16 %v481
    %v2958 = vunpack.c.l.b16 %v482
    %v2959 = vunpack.c.h.b16 %v482
    %v2960 = vunpack.c.l.b16 %v483
    %v2961 = vunpack.c.h.b16 %v483
    %v2962 = vunpack.c.l.b16 %v484
    %v2963 = vunpack.c.h.b16 %v484
    %v2964 = vunpack.c.l.b16 %v485
    %v2965 = vunpack.c.h.b16 %v485
    %v2966 = vunpack.c.l.b16 %v486
    %v2967 = vunpack.c.h.b16 %v486
    %v2968 = vunpack.c.l.b16 %v487
    %v2969 = vunpack.c.h.b16 %v487
    %v2970 = vunpack.c.l.b16 %v488
    %v2971 = vunpack.c.h.b16 %v488
    %v2972 = vunpack.c.l.b16 %v489
    %v2973 = vunpack.c.h.b16 %v489
    %v2974 = vunpack.c.l.b16 %v490
    %v2975 = vunpack.c.h.b16 %v490
    %v2976 = vunpack.c.l.b16 %v491
    %v2977 = vunpack.c.h.b16 %v491
    %v2978 = vunpack.c.l.b16 %v492
    %v2979 = vunpack.c.h.b16 %v492
    %v2980 = vunpack.c.l.b16 %v493
    %v2981 = vunpack.c.h.b16 %v493
    %v2982 = vunpack.c.l.b16 %v494
    %v2983 = vunpack.c.h.b16 %v494
    %v2984 = vunpack.c.l.b16 %v495
    %v2985 = vunpack.c.h.b16 %v495
    %v2986 = vunpack.c.l.b16 %v496
    %v2987 = vunpack.c.h.b16 %v496
    %v2988 = vunpack.c.l.b16 %v497
    %v2989 = vunpack.c.h.b16 %v497
    %v2990 = vunpack.c.l.b16 %v498
    %v2991 = vunpack.c.h.b16 %v498
    %v2992 = vunpack.c.l.b16 %v499
    %v2993 = vunpack.c.h.b16 %v499
    %v2994 = vunpack.c.l.b16 %v500
    %v2995 = vunpack.c.h.b16 %v500
    %v2996 = vunpack.c.l.b16 %v501
    %v2997 = vunpack.c.h.b16 %v501
    %v2998 = vunpack.c.l.b16 %v502
    %v2999 = vunpack.c.h.b16 %v502
    %v3000 = vunpack.c.l.b16 %v503
    %v3001 = vunpack.c.h.b16 %v503
    %v3002 = vunpack.c.l.b16 %v504
    %v3003 = vunpack.c.h.b16 %v504
    %v3004 = vunpack.c.l.b16 %v505
    %v3005 = vunpack.c.h.b16 %v505
    %v3006 = vunpack.c.l.b16 %v506
    %v3007 = vunpack.c.h.b16 %v506
    %v3008 = vunpack.c.l.b16 %v507
    %v3009 = vunpack.c.h.b16 %v507
    %v3010 = vunpack.c.l.b16 %v508
    %v3011 = vunpack.c.h.b16 %v508
    %v3012 = vunpack.c.l.b16 %v509
    %v3013 = vunpack.c.h.b16 %v509
    %v3014 = vunpack.c.l.b16 %v510
    %v3015 = vunpack.c.h.b16 %v510
    %v3016 = vunpack.c.l.b16 %v511
    %v3017 = vunpack.c.h.b16 %v511
    %v3018 = vunpack.c.l.b16 %v512
    %v3019 = vunpack.c.h.b16 %v512
    %v3020 = vunpack.c.l.b16 %v513
    %v3021 = vunpack.c.h.b16 %v513
    %v3022 = vunpack.c.l.b16 %v514
    %v3023 = vunpack.c.h.b16 %v514
    %v3024 = vunpack.c.l.b16 %v515
    %v3025 = vunpack.c.h.b16 %v515
    %v3026 = vunpack.c.l.b16 %v516
    %v3027 = vunpack.c.h.b16 %v516
    %v3028 = vunpack.c.l.b16 %v517
    %v3029 = vunpack.c.h.b16 %v517
    %v3030 = vunpack.c.l.b16 %v518
    %v3031 = vunpack.c.h.b16 %v518
    %v3032 = vunpack.c.l.b16 %v519
    %v3033 = vunpack.c.h.b16 %v519
    %v3034 = vunpack.c.l.b16 %v520
    %v3035 = vunpack.c.h.b16 %v520
    %v3036 = vunpack.c.l.b16 %v521
    %v3037 = vunpack.c.h.b16 %v521
    %v3038 = vunpack.c.l.b16 %v522
    %v3039 = vunpack.c.h.b16 %v522
    %v3040 = vunpack.c.l.b16 %v523
    %v3041 = vunpack.c.h.b16 %v523
    %v3042 = vunpack.c.l.b16 %v524
    %v3043 = vunpack.c.h.b16 %v524
    %v3044 = vunpack.c.l.b16 %v525
    %v3045 = vunpack.c.h.b16 %v525
    %v3046 = vunpack.c.l.b16 %v526
    %v3047 = vunpack.c.h.b16 %v526
    %v3048 = vunpack.c.l.b16 %v527
    %v3049 = vunpack.c.h.b16 %v527
    %v3050 = vunpack.c.l.b16 %v528
    %v3051 = vunpack.c.h.b16 %v528
    %v3052 = vunpack.c.l.b16 %v529
    %v3053 = vunpack.c.h.b16 %v529
    %v3054 = vunpack.c.l.b16 %v530
    %v3055 = vunpack.c.h.b16 %v530
    %v3056 = vunpack.c.l.b16 %v531
    %v3057 = vunpack.c.h.b16 %v531
    %v3058 = vunpack.c.l.b16 %v532
    %v3059 = vunpack.c.h.b16 %v532
    %v3060 = vunpack.c.l.b16 %v533
    %v3061 = vunpack.c.h.b16 %v533
    %v3062 = vunpack.c.l.b16 %v534
    %v3063 = vunpack.c.h.b16 %v534
    %v3064 = vunpack.c.l.b16 %v535
    %v3065 = vunpack.c.h.b16 %v535
    %v3066 = vunpack.c.l.b16 %v536
    %v3067 = vunpack.c.h.b16 %v536
    %v3068 = vunpack.c.l.b16 %v537
    %v3069 = vunpack.c.h.b16 %v537
    %v3070 = vunpack.c.l.b16 %v538
    %v3071 = vunpack.c.h.b16 %v538
    %v3072 = vunpack.c.l.b16 %v539
    %v3073 = vunpack.c.h.b16 %v539
    %v3074 = vunpack.c.l.b16 %v540
    %v3075 = vunpack.c.h.b16 %v540
    %v3076 = vunpack.c.l.b16 %v541
    %v3077 = vunpack.c.h.b16 %v541
    %v3078 = vunpack.c.l.b16 %v542
    %v3079 = vunpack.c.h.b16 %v542
    %v3080 = vunpack.c.l.b16 %v543
    %v3081 = vunpack.c.h.b16 %v543
    %v3082 = vunpack.c.l.b16 %v544
    %v3083 = vunpack.c.h.b16 %v544
    %v3084 = vunpack.c.l.b16 %v545
    %v3085 = vunpack.c.h.b16 %v545
    %v3086 = vunpack.c.l.b16 %v546
    %v3087 = vunpack.c.h.b16 %v546
    %v3088 = vunpack.c.l.b16 %v547
    %v3089 = vunpack.c.h.b16 %v547
    %v3090 = vunpack.c.l.b16 %v548
    %v3091 = vunpack.c.h.b16 %v548
    %v3092 = vunpack.c.l.b16 %v549
    %v3093 = vunpack.c.h.b16 %v549
    %v3094 = vunpack.c.l.b16 %v550
    %v3095 = vunpack.c.h.b16 %v550
    %v3096 = vunpack.c.l.b16 %v551
    %v3097 = vunpack.c.h.b16 %v551
    %v3098 = vunpack.c.l.b16 %v552
    %v3099 = vunpack.c.h.b16 %v552
    %v3100 = vunpack.c.l.b16 %v553
    %v3101 = vunpack.c.h.b16 %v553
    %v3102 = vunpack.c.l.b16 %v554
    %v3103 = vunpack.c.h.b16 %v554
    %v3104 = vunpack.c.l.b16 %v555
    %v3105 = vunpack.c.h.b16 %v555
    %v3106 = vunpack.c.l.b16 %v556
    %v3107 = vunpack.c.h.b16 %v556
    %v3108 = vunpack.c.l.b16 %v557
    %v3109 = vunpack.c.h.b16 %v557
    %v3110 = vunpack.c.l.b16 %v558
    %v3111 = vunpack.c.h.b16 %v558
    %v3112 = vunpack.c.l.b16 %v559
    %v3113 = vunpack.c.h.b16 %v559
    %v3114 = vunpack.c.l.b16 %v560
    %v3115 = vunpack.c.h.b16 %v560
    %v3116 = vunpack.c.l.b16 %v561
    %v3117 = vunpack.c.h.b16 %v561
    %v3118 = vunpack.c.l.b16 %v562
    %v3119 = vunpack.c.h.b16 %v562
    %v3120 = vunpack.c.l.b16 %v563
    %v3121 = vunpack.c.h.b16 %v563
    %v3122 = vunpack.c.l.b16 %v564
    %v3123 = vunpack.c.h.b16 %v564
    %v3124 = vunpack.c.l.b16 %v565
    %v3125 = vunpack.c.h.b16 %v565
    %v3126 = vunpack.c.l.b16 %v566
    %v3127 = vunpack.c.h.b16 %v566
    %v3128 = vunpack.c.l.b16 %v567
    %v3129 = vunpack.c.h.b16 %v567
    %v3130 = vunpack.c.l.b16 %v568
    %v3131 = vunpack.c.h.b16 %v568
    %v3132 = vunpack.c.l.b16 %v569
    %v3133 = vunpack.c.h.b16 %v569
    %v3134 = vunpack.c.l.b16 %v570
    %v3135 = vunpack.c.h.b16 %v570
    %v3136 = vunpack.c.l.b16 %v571
    %v3137 = vunpack.c.h.b16 %v571
    %v3138 = vunpack.c.l.b16 %v572
    %v3139 = vunpack.c.h.b16 %v572
    %v3140 = vunpack.c.l.b16 %v573
    %v3141 = vunpack.c.h.b16 %v573
    %v3142 = vunpack.c.l.b16 %v574
    %v3143 = vunpack.c.h.b16 %v574
    %v3144 = vunpack.c.l.b16 %v575
    %v3145 = vunpack.c.h.b16 %v575
    %v3146 = vunpack.c.l.b16 %v576
    %v3147 = vunpack.c.h.b16 %v576
    %v3148 = vunpack.c.l.b16 %v577
    %v3149 = vunpack.c.h.b16 %v577
    %v3150 = vunpack.c.l.b16 %v578
    %v3151 = vunpack.c.h.b16 %v578
    %v3152 = vunpack.c.l.b16 %v579
    %v3153 = vunpack.c.h.b16 %v579
    %v3154 = vunpack.c.l.b16 %v580
    %v3155 = vunpack.c.h.b16 %v580
    %v3156 = vunpack.c.l.b16 %v581
    %v3157 = vunpack.c.h.b16 %v581
    %v3158 = vunpack.c.l.b16 %v582
    %v3159 = vunpack.c.h.b16 %v582
    %v3160 = vunpack.c.l.b16 %v583
    %v3161 = vunpack.c.h.b16 %v583
    %v3162 = vunpack.c.l.b16 %v584
    %v3163 = vunpack.c.h.b16 %v584
    %v3164 = vunpack.c.l.b16 %v585
    %v3165 = vunpack.c.h.b16 %v585
    %v3166 = vunpack.c.l.b16 %v586
    %v3167 = vunpack.c.h.b16 %v586
    %v3168 = vunpack.c.l.b16 %v587
    %v3169 = vunpack.c.h.b16 %v587
    %v3170 = vunpack.c.l.b16 %v588
    %v3171 = vunpack.c.h.b16 %v588
    %v3172 = vunpack.c.l.b16 %v589
    %v3173 = vunpack.c.h.b16 %v589
    %v3174 = vunpack.c.l.b16 %v590
    %v3175 = vunpack.c.h.b16 %v590
    %v3176 = vunpack.c.l.b16 %v591
    %v3177 = vunpack.c.h.b16 %v591
    %v3178 = vunpack.c.l.b16 %v592
    %v3179 = vunpack.c.h.b16 %v592
    %v3180 = vunpack.c.l.b16 %v593
    %v3181 = vunpack.c.h.b16 %v593
    %v3182 = vunpack.c.l.b16 %v594
    %v3183 = vunpack.c.h.b16 %v594
    %v3184 = vunpack.c.l.b16 %v595
    %v3185 = vunpack.c.h.b16 %v595
    %v3186 = vunpack.c.l.b16 %v596
    %v3187 = vunpack.c.h.b16 %v596
    %v3188 = vunpack.c.l.b16 %v597
    %v3189 = vunpack.c.h.b16 %v597
    %v3190 = vunpack.c.l.b16 %v598
    %v3191 = vunpack.c.h.b16 %v598
    %v3192 = vunpack.c.l.b16 %v599
    %v3193 = vunpack.c.h.b16 %v599
    %v3194 = vunpack.c.l.b16 %v600
    %v3195 = vunpack.c.h.b16 %v600
    %v3196 = vunpack.c.l.b16 %v601
    %v3197 = vunpack.c.h.b16 %v601
    %v3198 = vunpack.c.l.b16 %v602
    %v3199 = vunpack.c.h.b16 %v602
    %v3200 = vunpack.c.l.b16 %v603
    %v3201 = vunpack.c.h.b16 %v603
    %v3202 = vunpack.c.l.b16 %v604
    %v3203 = vunpack.c.h.b16 %v604
    %v3204 = vunpack.c.l.b16 %v605
    %v3205 = vunpack.c.h.b16 %v605
    %v3206 = vunpack.c.l.b16 %v606
    %v3207 = vunpack.c.h.b16 %v606
    %v3208 = vunpack.c.l.b16 %v607
    %v3209 = vunpack.c.h.b16 %v607
    %v3210 = vunpack.c.l.b16 %v608
    %v3211 = vunpack.c.h.b16 %v608
    %v3212 = vunpack.c.l.b16 %v609
    %v3213 = vunpack.c.h.b16 %v609
    %v3214 = vunpack.c.l.b16 %v610
    %v3215 = vunpack.c.h.b16 %v610
    %v3216 = vunpack.c.l.b16 %v611
    %v3217 = vunpack.c.h.b16 %v611
    %v3218 = vunpack.c.l.b16 %v612
    %v3219 = vunpack.c.h.b16 %v612
    %v3220 = vunpack.c.l.b16 %v613
    %v3221 = vunpack.c.h.b16 %v613
    %v3222 = vunpack.c.l.b16 %v614
    %v3223 = vunpack.c.h.b16 %v614
    %v3224 = vunpack.c.l.b16 %v615
    %v3225 = vunpack.c.h.b16 %v615
    %v3226 = vunpack.c.l.b16 %v616
    %v3227 = vunpack.c.h.b16 %v616
    %v3228 = vunpack.c.l.b16 %v617
    %v3229 = vunpack.c.h.b16 %v617
    %v3230 = vunpack.c.l.b16 %v618
    %v3231 = vunpack.c.h.b16 %v618
    %v3232 = vunpack.c.l.b16 %v619
    %v3233 = vunpack.c.h.b16 %v619
    %v3234 = vunpack.c.l.b16 %v620
    %v3235 = vunpack.c.h.b16 %v620
    %v3236 = vunpack.c.l.b16 %v621
    %v3237 = vunpack.c.h.b16 %v621
    %v3238 = vunpack.c.l.b16 %v622
    %v3239 = vunpack.c.h.b16 %v622
    %v3240 = vunpack.c.l.b16 %v623
    %v3241 = vunpack.c.h.b16 %v623
    %v3242 = vunpack.c.l.b16 %v624
    %v3243 = vunpack.c.h.b16 %v624
    %v3244 = vunpack.c.l.b16 %v625
    %v3245 = vunpack.c.h.b16 %v625
    %v3246 = vunpack.c.l.b16 %v626
    %v3247 = vunpack.c.h.b16 %v626
    %v3248 = vunpack.c.l.b16 %v627
    %v3249 = vunpack.c.h.b16 %v627
    %v3250 = vunpack.c.l.b16 %v628
    %v3251 = vunpack.c.h.b16 %v628
    %v3252 = vunpack.c.l.b16 %v629
    %v3253 = vunpack.c.h.b16 %v629
    %v3254 = vunpack.c.l.b16 %v630
    %v3255 = vunpack.c.h.b16 %v630
    %v3256 = vunpack.c.l.b16 %v631
    %v3257 = vunpack.c.h.b16 %v631
    %v3258 = vunpack.c.l.b16 %v632
    %v3259 = vunpack.c.h.b16 %v632
    %v3260 = vunpack.c.l.b16 %v633
    %v3261 = vunpack.c.h.b16 %v633
    %v3262 = vunpack.c.l.b16 %v634
    %v3263 = vunpack.c.h.b16 %v634
    %v3264 = vunpack.c.l.b16 %v635
    %v3265 = vunpack.c.h.b16 %v635
    %v3266 = vunpack.c.l.b16 %v636
    %v3267 = vunpack.c.h.b16 %v636
    %v3268 = vunpack.c.l.b16 %v637
    %v3269 = vunpack.c.h.b16 %v637
    %v3270 = vunpack.c.l.b16 %v638
    %v3271 = vunpack.c.h.b16 %v638
    %v3272 = vunpack.c.l.b16 %v639
    %v3273 = vunpack.c.h.b16 %v639
    %v3274 = vunpack.c.l.b16 %v640
    %v3275 = vunpack.c.h.b16 %v640
    %v3276 = vunpack.c.l.b16 %v641
    %v3277 = vunpack.c.h.b16 %v641
    %v3278 = vunpack.c.l.b16 %v642
    %v3279 = vunpack.c.h.b16 %v642
    %v3280 = vunpack.c.l.b16 %v643
    %v3281 = vunpack.c.h.b16 %v643
    %v3282 = vunpack.c.l.b16 %v644
    %v3283 = vunpack.c.h.b16 %v644
    %v3284 = vunpack.c.l.b16 %v645
    %v3285 = vunpack.c.h.b16 %v645
    %v3286 = vunpack.c.l.b16 %v646
    %v3287 = vunpack.c.h.b16 %v646
    %v3288 = vunpack.c.l.b16 %v647
    %v3289 = vunpack.c.h.b16 %v647
    %v3290 = vunpack.c.l.b16 %v648
    %v3291 = vunpack.c.h.b16 %v648
    %v3292 = vunpack.c.l.b16 %v649
    %v3293 = vunpack.c.h.b16 %v649
    %v3294 = vunpack.c.l.b16 %v650
    %v3295 = vunpack.c.h.b16 %v650
    %v3296 = vunpack.c.l.b16 %v651
    %v3297 = vunpack.c.h.b16 %v651
    %v3298 = vunpack.c.l.b16 %v652
    %v3299 = vunpack.c.h.b16 %v652
    %v3300 = vunpack.c.l.b16 %v653
    %v3301 = vunpack.c.h.b16 %v653
    %v3302 = vunpack.c.l.b16 %v654
    %v3303 = vunpack.c.h.b16 %v654
    %v3304 = vunpack.c.l.b16 %v655
    %v3305 = vunpack.c.h.b16 %v655
    %v3306 = vunpack.c.l.b16 %v656
    %v3307 = vunpack.c.h.b16 %v656
    %v3308 = vunpack.c.l.b16 %v657
    %v3309 = vunpack.c.h.b16 %v657
    %v3310 = vunpack.c.l.b16 %v658
    %v3311 = vunpack.c.h.b16 %v658
    %v3312 = vunpack.c.l.b16 %v659
    %v3313 = vunpack.c.h.b16 %v659
    %v3314 = vunpack.c.l.b16 %v660
    %v3315 = vunpack.c.h.b16 %v660
    %v3316 = vunpack.c.l.b16 %v661
    %v3317 = vunpack.c.h.b16 %v661
    %v3318 = vunpack.c.l.b16 %v662
    %v3319 = vunpack.c.h.b16 %v662
    %v3320 = vunpack.c.l.b16 %v663
    %v3321 = vunpack.c.h.b16 %v663
    %v3322 = vunpack.c.l.b16 %v664
    %v3323 = vunpack.c.h.b16 %v664
    %v3324 = vunpack.c.l.b16 %v665
    %v3325 = vunpack.c.h.b16 %v665
    %v3326 = vunpack.c.l.b16 %v666
    %v3327 = vunpack.c.h.b16 %v666
    %v3328 = vunpack.c.l.b16 %v667
    %v3329 = vunpack.c.h.b16 %v667
    %v3330 = vunpack.c.l.b16 %v668
    %v3331 = vunpack.c.h.b16 %v668
    %v3332 = vunpack.c.l.b16 %v669
    %v3333 = vunpack.c.h.b16 %v669
    %v3334 = vunpack.c.l.b16 %v670
    %v3335 = vunpack.c.h.b16 %v670
    %v3336 = vunpack.c.l.b16 %v671
    %v3337 = vunpack.c.h.b16 %v671
    %v3338 = vunpack.c.l.b16 %v672
    %v3339 = vunpack.c.h.b16 %v672
    %v3340 = vunpack.c.l.b16 %v673
    %v3341 = vunpack.c.h.b16 %v673
    %v3342 = vunpack.c.l.b16 %v674
    %v3343 = vunpack.c.h.b16 %v674
    %v3344 = vunpack.c.l.b16 %v675
    %v3345 = vunpack.c.h.b16 %v675
    %v3346 = vunpack.c.l.b16 %v676
    %v3347 = vunpack.c.h.b16 %v676
    %v3348 = vunpack.c.l.b16 %v677
    %v3349 = vunpack.c.h.b16 %v677
    %v3350 = vunpack.c.l.b16 %v678
    %v3351 = vunpack.c.h.b16 %v678
    %v3352 = vunpack.c.l.b16 %v679
    %v3353 = vunpack.c.h.b16 %v679
    %v3354 = vunpack.c.l.b16 %v680
    %v3355 = vunpack.c.h.b16 %v680
    %v3356 = vunpack.c.l.b16 %v681
    %v3357 = vunpack.c.h.b16 %v681
    %v3358 = vunpack.c.l.b16 %v682
    %v3359 = vunpack.c.h.b16 %v682
    %v3360 = vunpack.c.l.b16 %v683
    %v3361 = vunpack.c.h.b16 %v683
    %v3362 = vunpack.c.l.b16 %v684
    %v3363 = vunpack.c.h.b16 %v684
    %v3364 = vunpack.c.l.b16 %v685
    %v3365 = vunpack.c.h.b16 %v685
    %v3366 = vunpack.c.l.b16 %v686
    %v3367 = vunpack.c.h.b16 %v686
    %v3368 = vunpack.c.l.b16 %v687
    %v3369 = vunpack.c.h.b16 %v687
    %v3370 = vunpack.c.l.b16 %v688
    %v3371 = vunpack.c.h.b16 %v688
    %v3372 = vunpack.c.l.b16 %v689
    %v3373 = vunpack.c.h.b16 %v689
    %v3374 = vunpack.c.l.b16 %v690
    %v3375 = vunpack.c.h.b16 %v690
    %v3376 = vunpack.c.l.b16 %v691
    %v3377 = vunpack.c.h.b16 %v691
    %v3378 = vunpack.c.l.b16 %v692
    %v3379 = vunpack.c.h.b16 %v692
    %v3380 = vunpack.c.l.b16 %v693
    %v3381 = vunpack.c.h.b16 %v693
    %v3382 = vunpack.c.l.b16 %v694
    %v3383 = vunpack.c.h.b16 %v694
    %v3384 = vunpack.c.l.b16 %v695
    %v3385 = vunpack.c.h.b16 %v695
    %v3386 = vunpack.c.l.b16 %v696
    %v3387 = vunpack.c.h.b16 %v696
    %v3388 = vunpack.c.l.b16 %v697
    %v3389 = vunpack.c.h.b16 %v697
    %v3390 = vunpack.c.l.b16 %v698
    %v3391 = vunpack.c.h.b16 %v698
    %v3392 = vunpack.c.l.b16 %v699
    %v3393 = vunpack.c.h.b16 %v699
    %v3394 = vunpack.c.l.b16 %v700
    %v3395 = vunpack.c.h.b16 %v700
    %v3396 = vunpack.c.l.b16 %v701
    %v3397 = vunpack.c.h.b16 %v701
    %v3398 = vunpack.c.l.b16 %v702
    %v3399 = vunpack.c.h.b16 %v702
    %v3400 = vunpack.c.l.b16 %v703
    %v3401 = vunpack.c.h.b16 %v703
    %v3402 = vunpack.c.l.b16 %v704
    %v3403 = vunpack.c.h.b16 %v704
    %v3404 = vunpack.c.l.b16 %v705
    %v3405 = vunpack.c.h.b16 %v705
    %v3406 = vunpack.c.l.b16 %v706
    %v3407 = vunpack.c.h.b16 %v706
    %v3408 = vunpack.c.l.b16 %v707
    %v3409 = vunpack.c.h.b16 %v707
    %v3410 = vunpack.c.l.b16 %v708
    %v3411 = vunpack.c.h.b16 %v708
    %v3412 = vunpack.c.l.b16 %v709
    %v3413 = vunpack.c.h.b16 %v709
    %v3414 = vunpack.c.l.b16 %v710
    %v3415 = vunpack.c.h.b16 %v710
    %v3416 = vunpack.c.l.b16 %v711
    %v3417 = vunpack.c.h.b16 %v711
    %v3418 = vunpack.c.l.b16 %v712
    %v3419 = vunpack.c.h.b16 %v712
    %v3420 = vunpack.c.l.b16 %v713
    %v3421 = vunpack.c.h.b16 %v713
    %v3422 = vunpack.c.l.b16 %v714
    %v3423 = vunpack.c.h.b16 %v714
    %v3424 = vunpack.c.l.b16 %v715
    %v3425 = vunpack.c.h.b16 %v715
    %v3426 = vunpack.c.l.b16 %v716
    %v3427 = vunpack.c.h.b16 %v716
    %v3428 = vunpack.c.l.b16 %v717
    %v3429 = vunpack.c.h.b16 %v717
    %v3430 = vunpack.c.l.b16 %v718
    %v3431 = vunpack.c.h.b16 %v718
    %v3432 = vunpack.c.l.b16 %v719
    %v3433 = vunpack.c.h.b16 %v719
    %v3434 = vunpack.c.l.b16 %v720
    %v3435 = vunpack.c.h.b16 %v720
    %v3436 = vunpack.c.l.b16 %v721
    %v3437 = vunpack.c.h.b16 %v721
    %v3438 = vunpack.c.l.b16 %v722
    %v3439 = vunpack.c.h.b16 %v722
    %v3440 = vunpack.c.l.b16 %v723
    %v3441 = vunpack.c.h.b16 %v723
    %v3442 = vunpack.c.l.b16 %v724
    %v3443 = vunpack.c.h.b16 %v724
    %v3444 = vunpack.c.l.b16 %v725
    %v3445 = vunpack.c.h.b16 %v725
    %v3446 = vunpack.c.l.b16 %v726
    %v3447 = vunpack.c.h.b16 %v726
    %v3448 = vunpack.c.l.b16 %v727
    %v3449 = vunpack.c.h.b16 %v727
    %v3450 = vunpack.c.l.b16 %v728
    %v3451 = vunpack.c.h.b16 %v728
    %v3452 = vunpack.c.l.b16 %v729
    %v3453 = vunpack.c.h.b16 %v729
    %v3454 = vunpack.c.l.b16 %v730
    %v3455 = vunpack.c.h.b16 %v730
    %v3456 = vunpack.c.l.b16 %v731
    %v3457 = vunpack.c.h.b16 %v731
    %v3458 = vunpack.c.l.b16 %v732
    %v3459 = vunpack.c.h.b16 %v732
    %v3460 = vunpack.c.l.b16 %v733
    %v3461 = vunpack.c.h.b16 %v733
    %v3462 = vunpack.c.l.b16 %v734
    %v3463 = vunpack.c.h.b16 %v734
    %v3464 = vunpack.c.l.b16 %v735
    %v3465 = vunpack.c.h.b16 %v735
    %v3466 = vunpack.c.l.b16 %v736
    %v3467 = vunpack.c.h.b16 %v736
    %v3468 = vunpack.c.l.b16 %v737
    %v3469 = vunpack.c.h.b16 %v737
    %v3470 = vunpack.c.l.b16 %v738
    %v3471 = vunpack.c.h.b16 %v738
    %v3472 = vunpack.c.l.b16 %v739
    %v3473 = vunpack.c.h.b16 %v739
    %v3474 = vunpack.c.l.b16 %v740
    %v3475 = vunpack.c.h.b16 %v740
    %v3476 = vunpack.c.l.b16 %v741
    %v3477 = vunpack.c.h.b16 %v741
    %v3478 = vunpack.c.l.b16 %v742
    %v3479 = vunpack.c.h.b16 %v742
    %v3480 = vunpack.c.l.b16 %v743
    %v3481 = vunpack.c.h.b16 %v743
    %v3482 = vunpack.c.l.b16 %v744
    %v3483 = vunpack.c.h.b16 %v744
    %v3484 = vunpack.c.l.b16 %v745
    %v3485 = vunpack.c.h.b16 %v745
    %v3486 = vunpack.c.l.b16 %v746
    %v3487 = vunpack.c.h.b16 %v746
    %v3488 = vunpack.c.l.b16 %v747
    %v3489 = vunpack.c.h.b16 %v747
    %v3490 = vunpack.c.l.b16 %v748
    %v3491 = vunpack.c.h.b16 %v748
    %v3492 = vunpack.c.l.b16 %v749
    %v3493 = vunpack.c.h.b16 %v749
    %v3494 = vunpack.c.l.b16 %v750
    %v3495 = vunpack.c.h.b16 %v750
    %v3496 = vunpack.c.l.b16 %v751
    %v3497 = vunpack.c.h.b16 %v751
    %v3498 = vunpack.c.l.b16 %v752
    %v3499 = vunpack.c.h.b16 %v752
    %v3500 = vunpack.c.l.b16 %v753
    %v3501 = vunpack.c.h.b16 %v753
    %v3502 = vunpack.c.l.b16 %v754
    %v3503 = vunpack.c.h.b16 %v754
    %v3504 = vunpack.c.l.b16 %v755
    %v3505 = vunpack.c.h.b16 %v755
    %v3506 = vunpack.c.l.b16 %v756
    %v3507 = vunpack.c.h.b16 %v756
    %v3508 = vunpack.c.l.b16 %v757
    %v3509 = vunpack.c.h.b16 %v757
    %v3510 = vunpack.c.l.b16 %v758
    %v3511 = vunpack.c.h.b16 %v758
    %v3512 = vunpack.c.l.b16 %v759
    %v3513 = vunpack.c.h.b16 %v759
    %v3514 = vunpack.c.l.b16 %v760
    %v3515 = vunpack.c.h.b16 %v760
    %v3516 = vunpack.c.l.b16 %v761
    %v3517 = vunpack.c.h.b16 %v761
    %v3518 = vunpack.c.l.b16 %v762
    %v3519 = vunpack.c.h.b16 %v762
    %v3520 = vunpack.c.l.b16 %v763
    %v3521 = vunpack.c.h.b16 %v763
    %v3522 = vunpack.c.l.b16 %v764
    %v3523 = vunpack.c.h.b16 %v764
    %v3524 = vunpack.c.l.b16 %v765
    %v3525 = vunpack.c.h.b16 %v765
    %v3526 = vunpack.c.l.b16 %v766
    %v3527 = vunpack.c.h.b16 %v766
    %v3528 = vunpack.c.l.b16 %v767
    %v3529 = vunpack.c.h.b16 %v767
    %v3530 = vunpack.c.l.b16 %v768
    %v3531 = vunpack.c.h.b16 %v768
    %v3532 = vunpack.c.l.b16 %v769
    %v3533 = vunpack.c.h.b16 %v769
    %v3534 = vunpack.c.l.b16 %v770
    %v3535 = vunpack.c.h.b16 %v770
    %v3536 = vunpack.c.l.b16 %v771
    %v3537 = vunpack.c.h.b16 %v771
    %v3538 = vunpack.c.l.b16 %v772
    %v3539 = vunpack.c.h.b16 %v772
    %v3540 = vunpack.c.l.b16 %v773
    %v3541 = vunpack.c.h.b16 %v773
    %v3542 = vunpack.c.l.b16 %v774
    %v3543 = vunpack.c.h.b16 %v774
    %v3544 = vunpack.c.l.b16 %v775
    %v3545 = vunpack.c.h.b16 %v775
    %v3546 = vunpack.c.l.b16 %v776
    %v3547 = vunpack.c.h.b16 %v776
    %v3548 = vunpack.c.l.b16 %v777
    %v3549 = vunpack.c.h.b16 %v777
    %v3550 = vunpack.c.l.b16 %v778
    %v3551 = vunpack.c.h.b16 %v778
    %v3552 = vunpack.c.l.b16 %v779
    %v3553 = vunpack.c.h.b16 %v779
    %v3554 = vunpack.c.l.b16 %v780
    %v3555 = vunpack.c.h.b16 %v780
    %v3556 = vunpack.c.l.b16 %v781
    %v3557 = vunpack.c.h.b16 %v781
    %v3558 = vunpack.c.l.b16 %v782
    %v3559 = vunpack.c.h.b16 %v782
    %v3560 = vunpack.c.l.b16 %v783
    %v3561 = vunpack.c.h.b16 %v783
    %v3562 = vunpack.c.l.b16 %v784
    %v3563 = vunpack.c.h.b16 %v784
    %v3564 = vunpack.c.l.b16 %v785
    %v3565 = vunpack.c.h.b16 %v785
    %v3566 = vunpack.c.l.b16 %v786
    %v3567 = vunpack.c.h.b16 %v786
    %v3568 = vunpack.c.l.b16 %v787
    %v3569 = vunpack.c.h.b16 %v787
    %v3570 = vunpack.c.l.b16 %v788
    %v3571 = vunpack.c.h.b16 %v788
    %v3572 = vunpack.c.l.b16 %v789
    %v3573 = vunpack.c.h.b16 %v789
    %v3574 = vunpack.c.l.b16 %v790
    %v3575 = vunpack.c.h.b16 %v790
    %v3576 = vunpack.c.l.b16 %v791
    %v3577 = vunpack.c.h.b16 %v791
    %v3578 = vunpack.c.l.b16 %v792
    %v3579 = vunpack.c.h.b16 %v792
    %v3580 = vunpack.c.l.b16 %v793
    %v3581 = vunpack.c.h.b16 %v793
    %v3582 = vunpack.c.l.b16 %v794
    %v3583 = vunpack.c.h.b16 %v794
    %v3584 = vunpack.c.l.b16 %v795
    %v3585 = vunpack.c.h.b16 %v795
    %v3586 = vunpack.c.l.b16 %v796
    %v3587 = vunpack.c.h.b16 %v796
    %v3588 = vunpack.c.l.b16 %v797
    %v3589 = vunpack.c.h.b16 %v797
    %v3590 = vunpack.c.l.b16 %v798
    %v3591 = vunpack.c.h.b16 %v798
    %v3592 = vunpack.c.l.b16 %v799
    %v3593 = vunpack.c.h.b16 %v799
    %v3594 = vunpack.c.l.b16 %v800
    %v3595 = vunpack.c.h.b16 %v800
    %v3596 = vunpack.c.l.b16 %v801
    %v3597 = vunpack.c.h.b16 %v801
    %v3598 = vunpack.c.l.b16 %v802
    %v3599 = vunpack.c.h.b16 %v802
    %v3600 = vunpack.c.l.b16 %v803
    %v3601 = vunpack.c.h.b16 %v803
    %v3602 = vunpack.c.l.b16 %v804
    %v3603 = vunpack.c.h.b16 %v804
    %v3604 = vunpack.c.l.b16 %v805
    %v3605 = vunpack.c.h.b16 %v805
    %v3606 = vunpack.c.l.b16 %v806
    %v3607 = vunpack.c.h.b16 %v806
    %v3608 = vunpack.c.l.b16 %v807
    %v3609 = vunpack.c.h.b16 %v807
    %v3610 = vunpack.c.l.b16 %v808
    %v3611 = vunpack.c.h.b16 %v808
    %v3612 = vunpack.c.l.b16 %v809
    %v3613 = vunpack.c.h.b16 %v809
    %v3614 = vunpack.c.l.b16 %v810
    %v3615 = vunpack.c.h.b16 %v810
    %v3616 = vunpack.c.l.b16 %v811
    %v3617 = vunpack.c.h.b16 %v811
    %v3618 = vunpack.c.l.b16 %v812
    %v3619 = vunpack.c.h.b16 %v812
    %v3620 = vunpack.c.l.b16 %v813
    %v3621 = vunpack.c.h.b16 %v813
    %v3622 = vunpack.c.l.b16 %v814
    %v3623 = vunpack.c.h.b16 %v814
    %v3624 = vunpack.c.l.b16 %v815
    %v3625 = vunpack.c.h.b16 %v815
    %v3626 = vunpack.c.l.b16 %v816
    %v3627 = vunpack.c.h.b16 %v816
    %v3628 = vunpack.c.l.b16 %v817
    %v3629 = vunpack.c.h.b16 %v817
    %v3630 = vunpack.c.l.b16 %v818
    %v3631 = vunpack.c.h.b16 %v818
    %v3632 = vunpack.c.l.b16 %v819
    %v3633 = vunpack.c.h.b16 %v819
    %v3634 = vunpack.c.l.b16 %v820
    %v3635 = vunpack.c.h.b16 %v820
    %v3636 = vunpack.c.l.b16 %v821
    %v3637 = vunpack.c.h.b16 %v821
    %v3638 = vunpack.c.l.b16 %v822
    %v3639 = vunpack.c.h.b16 %v822
    %v3640 = vunpack.c.l.b16 %v823
    %v3641 = vunpack.c.h.b16 %v823
    %v3642 = vunpack.c.l.b16 %v824
    %v3643 = vunpack.c.h.b16 %v824
    %v3644 = vunpack.c.l.b16 %v825
    %v3645 = vunpack.c.h.b16 %v825
    %v3646 = vunpack.c.l.b16 %v826
    %v3647 = vunpack.c.h.b16 %v826
    %v3648 = vunpack.c.l.b16 %v827
    %v3649 = vunpack.c.h.b16 %v827
    %v3650 = vunpack.c.l.b16 %v828
    %v3651 = vunpack.c.h.b16 %v828
    %v3652 = vunpack.c.l.b16 %v829
    %v3653 = vunpack.c.h.b16 %v829
    %v3654 = vunpack.c.l.b16 %v830
    %v3655 = vunpack.c.h.b16 %v830
    %v3656 = vunpack.c.l.b16 %v831
    %v3657 = vunpack.c.h.b16 %v831
    %v3658 = vunpack.c.l.b16 %v832
    %v3659 = vunpack.c.h.b16 %v832
    %v3660 = vunpack.c.l.b16 %v833
    %v3661 = vunpack.c.h.b16 %v833
    %v3662 = vunpack.c.l.b16 %v834
    %v3663 = vunpack.c.h.b16 %v834
    %v3664 = vunpack.c.l.b16 %v835
    %v3665 = vunpack.c.h.b16 %v835
    %v3666 = vunpack.c.l.b16 %v836
    %v3667 = vunpack.c.h.b16 %v836
    %v3668 = vunpack.c.l.b16 %v837
    %v3669 = vunpack.c.h.b16 %v837
    %v3670 = vunpack.c.l.b16 %v838
    %v3671 = vunpack.c.h.b16 %v838
    %v3672 = vunpack.c.l.b16 %v839
    %v3673 = vunpack.c.h.b16 %v839
    %v3674 = vunpack.c.l.b16 %v840
    %v3675 = vunpack.c.h.b16 %v840
    %v3676 = vunpack.c.l.b16 %v841
    %v3677 = vunpack.c.h.b16 %v841
    %v3678 = vunpack.c.l.b16 %v842
    %v3679 = vunpack.c.h.b16 %v842
    %v3680 = vunpack.c.l.b16 %v843
    %v3681 = vunpack.c.h.b16 %v843
    %v3682 = vunpack.c.l.b16 %v844
    %v3683 = vunpack.c.h.b16 %v844
    %v3684 = vunpack.c.l.b16 %v845
    %v3685 = vunpack.c.h.b16 %v845
    %v3686 = vunpack.c.l.b16 %v846
    %v3687 = vunpack.c.h.b16 %v846
    %v3688 = vunpack.c.l.b16 %v847
    %v3689 = vunpack.c.h.b16 %v847
    %v3690 = vunpack.c.l.b16 %v848
    %v3691 = vunpack.c.h.b16 %v848
    %v3692 = vunpack.c.l.b16 %v849
    %v3693 = vunpack.c.h.b16 %v849
    %v3694 = vunpack.c.l.b16 %v850
    %v3695 = vunpack.c.h.b16 %v850
    %v3696 = vunpack.c.l.b16 %v851
    %v3697 = vunpack.c.h.b16 %v851
    %v3698 = vunpack.c.l.b16 %v852
    %v3699 = vunpack.c.h.b16 %v852
    %v3700 = vunpack.c.l.b16 %v853
    %v3701 = vunpack.c.h.b16 %v853
    %v3702 = vunpack.c.l.b16 %v854
    %v3703 = vunpack.c.h.b16 %v854
    %v3704 = vunpack.c.l.b16 %v855
    %v3705 = vunpack.c.h.b16 %v855
    %v3706 = vunpack.c.l.b16 %v856
    %v3707 = vunpack.c.h.b16 %v856
    %v3708 = vunpack.c.l.b16 %v857
    %v3709 = vunpack.c.h.b16 %v857
    %v3710 = vunpack.c.l.b16 %v858
    %v3711 = vunpack.c.h.b16 %v858
    %v3712 = vunpack.c.l.b16 %v859
    %v3713 = vunpack.c.h.b16 %v859
    %v3714 = vunpack.c.l.b16 %v860
    %v3715 = vunpack.c.h.b16 %v860
    %v3716 = vunpack.c.l.b16 %v861
    %v3717 = vunpack.c.h.b16 %v861
    %v3718 = vunpack.c.l.b16 %v862
    %v3719 = vunpack.c.h.b16 %v862
    %v3720 = vunpack.c.l.b16 %v863
    %v3721 = vunpack.c.h.b16 %v863
    %v3722 = vunpack.c.l.b16 %v864
    %v3723 = vunpack.c.h.b16 %v864
    %v3724 = vunpack.c.l.b16 %v865
    %v3725 = vunpack.c.h.b16 %v865
    %v3726 = vunpack.c.l.b16 %v866
    %v3727 = vunpack.c.h.b16 %v866
    %v3728 = vunpack.c.l.b16 %v867
    %v3729 = vunpack.c.h.b16 %v867
    %v3730 = vunpack.c.l.b16 %v868
    %v3731 = vunpack.c.h.b16 %v868
    %v3732 = vunpack.c.l.b16 %v869
    %v3733 = vunpack.c.h.b16 %v869
    %v3734 = vunpack.c.l.b16 %v870
    %v3735 = vunpack.c.h.b16 %v870
    %v3736 = vunpack.c.l.b16 %v871
    %v3737 = vunpack.c.h.b16 %v871
    %v3738 = vunpack.c.l.b16 %v872
    %v3739 = vunpack.c.h.b16 %v872
    %v3740 = vunpack.c.l.b16 %v873
    %v3741 = vunpack.c.h.b16 %v873
    %v3742 = vunpack.c.l.b16 %v874
    %v3743 = vunpack.c.h.b16 %v874
    %v3744 = vunpack.c.l.b16 %v875
    %v3745 = vunpack.c.h.b16 %v875
    %v3746 = vunpack.c.l.b16 %v876
    %v3747 = vunpack.c.h.b16 %v876
    %v3748 = vunpack.c.l.b16 %v877
    %v3749 = vunpack.c.h.b16 %v877
    %v3750 = vunpack.c.l.b16 %v878
    %v3751 = vunpack.c.h.b16 %v878
    %v3752 = vunpack.c.l.b16 %v879
    %v3753 = vunpack.c.h.b16 %v879
    %v3754 = vunpack.c.l.b16 %v880
    %v3755 = vunpack.c.h.b16 %v880
    %v3756 = vunpack.c.l.b16 %v881
    %v3757 = vunpack.c.h.b16 %v881
    %v3758 = vunpack.c.l.b16 %v882
    %v3759 = vunpack.c.h.b16 %v882
    %v3760 = vunpack.c.l.b16 %v883
    %v3761 = vunpack.c.h.b16 %v883
    %v3762 = vunpack.c.l.b16 %v884
    %v3763 = vunpack.c.h.b16 %v884
    %v3764 = vunpack.c.l.b16 %v885
    %v3765 = vunpack.c.h.b16 %v885
    %v3766 = vunpack.c.l.b16 %v886
    %v3767 = vunpack.c.h.b16 %v886
    %v3768 = vunpack.c.l.b16 %v887
    %v3769 = vunpack.c.h.b16 %v887
    %v3770 = vunpack.c.l.b16 %v888
    %v3771 = vunpack.c.h.b16 %v888
    %v3772 = vunpack.c.l.b16 %v889
    %v3773 = vunpack.c.h.b16 %v889
    %v3774 = vunpack.c.l.b16 %v890
    %v3775 = vunpack.c.h.b16 %v890
    %v3776 = vunpack.c.l.b16 %v891
    %v3777 = vunpack.c.h.b16 %v891
    %v3778 = vunpack.c.l.b16 %v892
    %v3779 = vunpack.c.h.b16 %v892
    %v3780 = vunpack.c.l.b16 %v893
    %v3781 = vunpack.c.h.b16 %v893
    %v3782 = vunpack.c.l.b16 %v894
    %v3783 = vunpack.c.h.b16 %v894
    %v3784 = vunpack.c.l.b16 %v895
    %v3785 = vunpack.c.h.b16 %v895
    %v3786 = vunpack.c.l.b16 %v896
    %v3787 = vunpack.c.h.b16 %v896
    %v3788 = vunpack.c.l.b16 %v897
    %v3789 = vunpack.c.h.b16 %v897
    %v3790 = vunpack.c.l.b16 %v898
    %v3791 = vunpack.c.h.b16 %v898
    %v3792 = vunpack.c.l.b16 %v899
    %v3793 = vunpack.c.h.b16 %v899
    %v3794 = vunpack.c.l.b16 %v900
    %v3795 = vunpack.c.h.b16 %v900
    %v3796 = vunpack.c.l.b16 %v901
    %v3797 = vunpack.c.h.b16 %v901
    %v3798 = vunpack.c.l.b16 %v902
    %v3799 = vunpack.c.h.b16 %v902
    %v3800 = vunpack.c.l.b16 %v903
    %v3801 = vunpack.c.h.b16 %v903
    %v3802 = vunpack.c.l.b16 %v904
    %v3803 = vunpack.c.h.b16 %v904
    %v3804 = vunpack.c.l.b16 %v905
    %v3805 = vunpack.c.h.b16 %v905
    %v3806 = vunpack.c.l.b16 %v906
    %v3807 = vunpack.c.h.b16 %v906
    %v3808 = vunpack.c.l.b16 %v907
    %v3809 = vunpack.c.h.b16 %v907
    %v3810 = vunpack.c.l.b16 %v908
    %v3811 = vunpack.c.h.b16 %v908
    %v3812 = vunpack.c.l.b16 %v909
    %v3813 = vunpack.c.h.b16 %v909
    %v3814 = vunpack.c.l.b16 %v910
    %v3815 = vunpack.c.h.b16 %v910
    %v3816 = vunpack.c.l.b16 %v911
    %v3817 = vunpack.c.h.b16 %v911
    %v3818 = vunpack.c.l.b16 %v912
    %v3819 = vunpack.c.h.b16 %v912
    %v3820 = vunpack.c.l.b16 %v913
    %v3821 = vunpack.c.h.b16 %v913
    %v3822 = vunpack.c.l.b16 %v914
    %v3823 = vunpack.c.h.b16 %v914
    %v3824 = vunpack.c.l.b16 %v915
    %v3825 = vunpack.c.h.b16 %v915
    %v3826 = vunpack.c.l.b16 %v916
    %v3827 = vunpack.c.h.b16 %v916
    %v3828 = vunpack.c.l.b16 %v917
    %v3829 = vunpack.c.h.b16 %v917
    %v3830 = vunpack.c.l.b16 %v918
    %v3831 = vunpack.c.h.b16 %v918
    %v3832 = vunpack.c.l.b16 %v919
    %v3833 = vunpack.c.h.b16 %v919
    %v3834 = vunpack.c.l.b16 %v920
    %v3835 = vunpack.c.h.b16 %v920
    %v3836 = vunpack.c.l.b16 %v921
    %v3837 = vunpack.c.h.b16 %v921
    %v3838 = vunpack.c.l.b16 %v922
    %v3839 = vunpack.c.h.b16 %v922
    %v3840 = vunpack.c.l.b16 %v923
    %v3841 = vunpack.c.h.b16 %v923
    %v3842 = vunpack.c.l.b16 %v924
    %v3843 = vunpack.c.h.b16 %v924
    %v3844 = vunpack.c.l.b16 %v925
    %v3845 = vunpack.c.h.b16 %v925
    %v3846 = vunpack.c.l.b16 %v926
    %v3847 = vunpack.c.h.b16 %v926
    %v3848 = vunpack.c.l.b16 %v927
    %v3849 = vunpack.c.h.b16 %v927
    %v3850 = vunpack.c.l.b16 %v928
    %v3851 = vunpack.c.h.b16 %v928
    %v3852 = vunpack.c.l.b16 %v929
    %v3853 = vunpack.c.h.b16 %v929
    %v3854 = vunpack.c.l.b16 %v930
    %v3855 = vunpack.c.h.b16 %v930
    %v3856 = vunpack.c.l.b16 %v931
    %v3857 = vunpack.c.h.b16 %v931
    %v3858 = vunpack.c.l.b16 %v932
    %v3859 = vunpack.c.h.b16 %v932
    %v3860 = vunpack.c.l.b16 %v933
    %v3861 = vunpack.c.h.b16 %v933
    %v3862 = vunpack.c.l.b16 %v934
    %v3863 = vunpack.c.h.b16 %v934
    %v3864 = vunpack.c.l.b16 %v935
    %v3865 = vunpack.c.h.b16 %v935
    %v3866 = vunpack.c.l.b16 %v936
    %v3867 = vunpack.c.h.b16 %v936
    %v3868 = vunpack.c.l.b16 %v937
    %v3869 = vunpack.c.h.b16 %v937
    %v3870 = vunpack.c.l.b16 %v938
    %v3871 = vunpack.c.h.b16 %v938
    %v3872 = vunpack.c.l.b16 %v939
    %v3873 = vunpack.c.h.b16 %v939
    %v3874 = vunpack.c.l.b16 %v940
    %v3875 = vunpack.c.h.b16 %v940
    %v3876 = vunpack.c.l.b16 %v941
    %v3877 = vunpack.c.h.b16 %v941
    %v3878 = vunpack.c.l.b16 %v942
    %v3879 = vunpack.c.h.b16 %v942
    %v3880 = vunpack.c.l.b16 %v943
    %v3881 = vunpack.c.h.b16 %v943
    %v3882 = vunpack.c.l.b16 %v944
    %v3883 = vunpack.c.h.b16 %v944
    %v3884 = vunpack.c.l.b16 %v945
    %v3885 = vunpack.c.h.b16 %v945
    %v3886 = vunpack.c.l.b16 %v946
    %v3887 = vunpack.c.h.b16 %v946
    %v3888 = vunpack.c.l.b16 %v947
    %v3889 = vunpack.c.h.b16 %v947
    %v3890 = vunpack.c.l.b16 %v948
    %v3891 = vunpack.c.h.b16 %v948
    %v3892 = vunpack.c.l.b16 %v949
    %v3893 = vunpack.c.h.b16 %v949
    %v3894 = vunpack.c.l.b16 %v950
    %v3895 = vunpack.c.h.b16 %v950
    %v3896 = vunpack.c.l.b16 %v951
    %v3897 = vunpack.c.h.b16 %v951
    %v3898 = vunpack.c.l.b16 %v952
    %v3899 = vunpack.c.h.b16 %v952
    %v3900 = vunpack.c.l.b16 %v953
    %v3901 = vunpack.c.h.b16 %v953
    %v3902 = vunpack.c.l.b16 %v954
    %v3903 = vunpack.c.h.b16 %v954
    %v3904 = vunpack.c.l.b16 %v955
    %v3905 = vunpack.c.h.b16 %v955
    %v3906 = vunpack.c.l.b16 %v956
    %v3907 = vunpack.c.h.b16 %v956
    %v3908 = vunpack.c.l.b16 %v957
    %v3909 = vunpack.c.h.b16 %v957
    %v3910 = vunpack.c.l.b16 %v958
    %v3911 = vunpack.c.h.b16 %v958
    %v3912 = vunpack.c.l.b16 %v959
    %v3913 = vunpack.c.h.b16 %v959
    %v3914 = vunpack.c.l.b16 %v960
    %v3915 = vunpack.c.h.b16 %v960
    %v3916 = vunpack.c.l.b16 %v961
    %v3917 = vunpack.c.h.b16 %v961
    %v3918 = vunpack.c.l.b16 %v962
    %v3919 = vunpack.c.h.b16 %v962
    %v3920 = vunpack.c.l.b16 %v963
    %v3921 = vunpack.c.h.b16 %v963
    %v3922 = vunpack.c.l.b16 %v964
    %v3923 = vunpack.c.h.b16 %v964
    %v3924 = vunpack.c.l.b16 %v965
    %v3925 = vunpack.c.h.b16 %v965
    %v3926 = vunpack.c.l.b16 %v966
    %v3927 = vunpack.c.h.b16 %v966
    %v3928 = vunpack.c.l.b16 %v967
    %v3929 = vunpack.c.h.b16 %v967
    %v3930 = vunpack.c.l.b16 %v968
    %v3931 = vunpack.c.h.b16 %v968
    %v3932 = vunpack.c.l.b16 %v969
    %v3933 = vunpack.c.h.b16 %v969
    %v3934 = vunpack.c.l.b16 %v970
    %v3935 = vunpack.c.h.b16 %v970
    %v3936 = vunpack.c.l.b16 %v971
    %v3937 = vunpack.c.h.b16 %v971
    %v3938 = vunpack.c.l.b16 %v972
    %v3939 = vunpack.c.h.b16 %v972
    %v3940 = vunpack.c.l.b16 %v973
    %v3941 = vunpack.c.h.b16 %v973
    %v3942 = vunpack.c.l.b16 %v974
    %v3943 = vunpack.c.h.b16 %v974
    %v3944 = vunpack.c.l.b16 %v975
    %v3945 = vunpack.c.h.b16 %v975
    %v3946 = vunpack.c.l.b16 %v976
    %v3947 = vunpack.c.h.b16 %v976
    %v3948 = vunpack.c.l.b16 %v977
    %v3949 = vunpack.c.h.b16 %v977
    %v3950 = vunpack.c.l.b16 %v978
    %v3951 = vunpack.c.h.b16 %v978
    %v3952 = vunpack.c.l.b16 %v979
    %v3953 = vunpack.c.h.b16 %v979
    %v3954 = vunpack.c.l.b16 %v980
    %v3955 = vunpack.c.h.b16 %v980
    %v3956 = vunpack.c.l.b16 %v981
    %v3957 = vunpack.c.h.b16 %v981
    %v3958 = vunpack.c.l.b16 %v982
    %v3959 = vunpack.c.h.b16 %v982
    %v3960 = vunpack.c.l.b16 %v983
    %v3961 = vunpack.c.h.b16 %v983
    %v3962 = vunpack.c.l.b16 %v984
    %v3963 = vunpack.c.h.b16 %v984
    %v3964 = vunpack.c.l.b16 %v985
    %v3965 = vunpack.c.h.b16 %v985
    %v3966 = vunpack.c.l.b16 %v986
    %v3967 = vunpack.c.h.b16 %v986
    %v3968 = vunpack.c.l.b16 %v987
    %v3969 = vunpack.c.h.b16 %v987
    %v3970 = vunpack.c.l.b16 %v988
    %v3971 = vunpack.c.h.b16 %v988
    %v3972 = vunpack.c.l.b16 %v989
    %v3973 = vunpack.c.h.b16 %v989
    %v3974 = vunpack.c.l.b16 %v990
    %v3975 = vunpack.c.h.b16 %v990
    %v3976 = vunpack.c.l.b16 %v991
    %v3977 = vunpack.c.h.b16 %v991
    %v3978 = vunpack.c.l.b16 %v992
    %v3979 = vunpack.c.h.b16 %v992
    %v3980 = vunpack.c.l.b16 %v993
    %v3981 = vunpack.c.h.b16 %v993
    %v3982 = vunpack.c.l.b16 %v994
    %v3983 = vunpack.c.h.b16 %v994
    %v3984 = vunpack.c.l.b16 %v995
    %v3985 = vunpack.c.h.b16 %v995
    %v3986 = vunpack.c.l.b16 %v996
    %v3987 = vunpack.c.h.b16 %v996
    %v3988 = vunpack.c.l.b16 %v997
    %v3989 = vunpack.c.h.b16 %v997
    %v3990 = vunpack.c.l.b16 %v998
    %v3991 = vunpack.c.h.b16 %v998
    %v3992 = vunpack.c.l.b16 %v999
    %v3993 = vunpack.c.h.b16 %v999
    %v3994 = vunpack.c.l.b16 %v1000
    %v3995 = vunpack.c.h.b16 %v1000
    %v3996 = vunpack.c.l.b16 %v1001
    %v3997 = vunpack.c.h.b16 %v1001
    %v3998 = vunpack.c.l.b16 %v1002
    %v3999 = vunpack.c.h.b16 %v1002
    %v4000 = vunpack.c.l.b16 %v1003
    %v4001 = vunpack.c.h.b16 %v1003
    %v4002 = vunpack.c.l.b16 %v1004
    %v4003 = vunpack.c.h.b16 %v1004
    %v4004 = vunpack.c.l.b16 %v1005
    %v4005 = vunpack.c.h.b16 %v1005
    %v4006 = vunpack.c.l.b16 %v1006
    %v4007 = vunpack.c.h.b16 %v1006
    %v4008 = vunpack.c.l.b16 %v1007
    %v4009 = vunpack.c.h.b16 %v1007
    %v4010 = vunpack.c.l.b16 %v1008
    %v4011 = vunpack.c.h.b16 %v1008
    %v4012 = vunpack.c.l.b16 %v1009
    %v4013 = vunpack.c.h.b16 %v1009
    %v4014 = vunpack.c.l.b16 %v1010
    %v4015 = vunpack.c.h.b16 %v1010
    %v4016 = vunpack.c.l.b16 %v1011
    %v4017 = vunpack.c.h.b16 %v1011
    %v4018 = vunpack.c.l.b16 %v1012
    %v4019 = vunpack.c.h.b16 %v1012
    %v4020 = vunpack.c.l.b16 %v1013
    %v4021 = vunpack.c.h.b16 %v1013
    %v4022 = vunpack.c.l.b16 %v1014
    %v4023 = vunpack.c.h.b16 %v1014
    %v4024 = vunpack.c.l.b16 %v1015
    %v4025 = vunpack.c.h.b16 %v1015
    %v4026 = vunpack.c.l.b16 %v1016
    %v4027 = vunpack.c.h.b16 %v1016
    %v4028 = vunpack.c.l.b16 %v1017
    %v4029 = vunpack.c.h.b16 %v1017
    %v4030 = vunpack.c.l.b16 %v1018
    %v4031 = vunpack.c.h.b16 %v1018
    %v4032 = vunpack.c.l.b16 %v1019
    %v4033 = vunpack.c.h.b16 %v1019
    %v4034 = vunpack.c.l.b16 %v1020
    %v4035 = vunpack.c.h.b16 %v1020
    %v4036 = vunpack.c.l.b16 %v1021
    %v4037 = vunpack.c.h.b16 %v1021
    %v4038 = vunpack.c.l.b16 %v1022
    %v4039 = vunpack.c.h.b16 %v1022
    %v4040 = vunpack.c.l.b16 %v1023
    %v4041 = vunpack.c.h.b16 %v1023
    %v4042 = vunpack.c.l.b16 %v1024
    %v4043 = vunpack.c.h.b16 %v1024
    %v4044 = vunpack.c.l.b16 %v1025
    %v4045 = vunpack.c.h.b16 %v1025
    %v4046 = vunpack.c.l.b16 %v1026
    %v4047 = vunpack.c.h.b16 %v1026
    %v4048 = vunpack.c.l.b16 %v1027
    %v4049 = vunpack.c.h.b16 %v1027
    %v4050 = vunpack.c.l.b16 %v1028
    %v4051 = vunpack.c.h.b16 %v1028
    %v4052 = vunpack.c.l.b16 %v1029
    %v4053 = vunpack.c.h.b16 %v1029
    %v4054 = vunpack.c.l.b16 %v1030
    %v4055 = vunpack.c.h.b16 %v1030
    %v4056 = vunpack.c.l.b16 %v1031
    %v4057 = vunpack.c.h.b16 %v1031
    %v4058 = vunpack.c.l.b16 %v1032
    %v4059 = vunpack.c.h.b16 %v1032
    %v4060 = vunpack.c.l.b16 %v1033
    %v4061 = vunpack.c.h.b16 %v1033
    %v4062 = vunpack.c.l.b16 %v1034
    %v4063 = vunpack.c.h.b16 %v1034
    %v4064 = vunpack.c.l.b16 %v1035
    %v4065 = vunpack.c.h.b16 %v1035
    %v4066 = vunpack.c.l.b16 %v1036
    %v4067 = vunpack.c.h.b16 %v1036
    %v4068 = vunpack.c.l.b16 %v1037
    %v4069 = vunpack.c.h.b16 %v1037
    %v4070 = vunpack.c.l.b16 %v1038
    %v4071 = vunpack.c.h.b16 %v1038
    %v4072 = vunpack.c.l.b16 %v1039
    %v4073 = vunpack.c.h.b16 %v1039
    %v4074 = vunpack.c.l.b16 %v1040
    %v4075 = vunpack.c.h.b16 %v1040
    %v4076 = vunpack.c.l.b16 %v1041
    %v4077 = vunpack.c.h.b16 %v1041
    %v4078 = vunpack.c.l.b16 %v1042
    %v4079 = vunpack.c.h.b16 %v1042
    %v4080 = vunpack.c.l.b16 %v1043
    %v4081 = vunpack.c.h.b16 %v1043
    %v4082 = vunpack.c.l.b16 %v1044
    %v4083 = vunpack.c.h.b16 %v1044
    %v4084 = vunpack.c.l.b16 %v1045
    %v4085 = vunpack.c.h.b16 %v1045
    %v4086 = vunpack.c.l.b16 %v1046
    %v4087 = vunpack.c.h.b16 %v1046
    %v4088 = vunpack.c.l.b16 %v1047
    %v4089 = vunpack.c.h.b16 %v1047
    %v4090 = vunpack.c.l.b16 %v1048
    %v4091 = vunpack.c.h.b16 %v1048
    %v4092 = vunpack.c.l.b16 %v1049
    %v4093 = vunpack.c.h.b16 %v1049
    %v4094 = vunpack.c.l.b16 %v1050
    %v4095 = vunpack.c.h.b16 %v1050
    %v4096 = vunpack.c.l.b16 %v1051
    %v4097 = vunpack.c.h.b16 %v1051
    %v4098 = vunpack.c.l.b16 %v1052
    %v4099 = vunpack.c.h.b16 %v1052
    %v4100 = vunpack.c.l.b16 %v1053
    %v4101 = vunpack.c.h.b16 %v1053
    %v4102 = vunpack.c.l.b16 %v1054
    %v4103 = vunpack.c.h.b16 %v1054
    %v4104 = vunpack.c.l.b16 %v1055
    %v4105 = vunpack.c.h.b16 %v1055
    %v4106 = vunpack.c.l.b16 %v1056
    %v4107 = vunpack.c.h.b16 %v1056
    %v4108 = vunpack.c.l.b16 %v1057
    %v4109 = vunpack.c.h.b16 %v1057
    %v4110 = vunpack.c.l.b16 %v1058
    %v4111 = vunpack.c.h.b16 %v1058
    %v4112 = vunpack.c.l.b16 %v1059
    %v4113 = vunpack.c.h.b16 %v1059
    %v4114 = vunpack.c.l.b16 %v1060
    %v4115 = vunpack.c.h.b16 %v1060
    %v4116 = vunpack.c.l.b16 %v1061
    %v4117 = vunpack.c.h.b16 %v1061
    %v4118 = vunpack.c.l.b16 %v1062
    %v4119 = vunpack.c.h.b16 %v1062
    %v4120 = vunpack.c.l.b16 %v1063
    %v4121 = vunpack.c.h.b16 %v1063
    %v4122 = vunpack.c.l.b16 %v1064
    %v4123 = vunpack.c.h.b16 %v1064
    %v4124 = vunpack.c.l.b16 %v1065
    %v4125 = vunpack.c.h.b16 %v1065
    %v4126 = vunpack.c.l.b16 %v1066
    %v4127 = vunpack.c.h.b16 %v1066
    %v4128 = vunpack.c.l.b16 %v1067
    %v4129 = vunpack.c.h.b16 %v1067
    %v4130 = vunpack.c.l.b16 %v1068
    %v4131 = vunpack.c.h.b16 %v1068
    %v4132 = vunpack.c.l.b16 %v1069
    %v4133 = vunpack.c.h.b16 %v1069
    %v4134 = vunpack.c.l.b16 %v1070
    %v4135 = vunpack.c.h.b16 %v1070
    %v4136 = vunpack.c.l.b16 %v1071
    %v4137 = vunpack.c.h.b16 %v1071
    %v4138 = vunpack.c.l.b16 %v1072
    %v4139 = vunpack.c.h.b16 %v1072
    %v4140 = vunpack.c.l.b16 %v1073
    %v4141 = vunpack.c.h.b16 %v1073
    %v4142 = vunpack.c.l.b16 %v1074
    %v4143 = vunpack.c.h.b16 %v1074
    %v4144 = vunpack.c.l.b16 %v1075
    %v4145 = vunpack.c.h.b16 %v1075
    %v4146 = vunpack.c.l.b16 %v1076
    %v4147 = vunpack.c.h.b16 %v1076
    %v4148 = vunpack.c.l.b16 %v1077
    %v4149 = vunpack.c.h.b16 %v1077
    %v4150 = vunpack.c.l.b16 %v1078
    %v4151 = vunpack.c.h.b16 %v1078
    %v4152 = vunpack.c.l.b16 %v1079
    %v4153 = vunpack.c.h.b16 %v1079
    %v4154 = vunpack.c.l.b16 %v1080
    %v4155 = vunpack.c.h.b16 %v1080
    %v4156 = vunpack.c.l.b16 %v1081
    %v4157 = vunpack.c.h.b16 %v1081
    %v4158 = vunpack.c.l.b16 %v1082
    %v4159 = vunpack.c.h.b16 %v1082
    %v4160 = vunpack.c.l.b16 %v1083
    %v4161 = vunpack.c.h.b16 %v1083
    %v4162 = vunpack.c.l.b16 %v1084
    %v4163 = vunpack.c.h.b16 %v1084
    %v4164 = vunpack.c.l.b16 %v1085
    %v4165 = vunpack.c.h.b16 %v1085
    %v4166 = vunpack.c.l.b16 %v1086
    %v4167 = vunpack.c.h.b16 %v1086
    %v4168 = vunpack.c.l.b16 %v1087
    %v4169 = vunpack.c.h.b16 %v1087
    %v4170 = vunpack.c.l.b16 %v1088
    %v4171 = vunpack.c.h.b16 %v1088
    %v4172 = vunpack.c.l.b16 %v1089
    %v4173 = vunpack.c.h.b16 %v1089
    %v4174 = vunpack.c.l.b16 %v1090
    %v4175 = vunpack.c.h.b16 %v1090
    %v4176 = vunpack.c.l.b16 %v1091
    %v4177 = vunpack.c.h.b16 %v1091
    %v4178 = vunpack.c.l.b16 %v1092
    %v4179 = vunpack.c.h.b16 %v1092
    %v4180 = vunpack.c.l.b16 %v1093
    %v4181 = vunpack.c.h.b16 %v1093
    %v4182 = vunpack.c.l.b16 %v1094
    %v4183 = vunpack.c.h.b16 %v1094
    %v4184 = vunpack.c.l.b16 %v1095
    %v4185 = vunpack.c.h.b16 %v1095
    %v4186 = vunpack.c.l.b16 %v1096
    %v4187 = vunpack.c.h.b16 %v1096
    %v4188 = vunpack.c.l.b16 %v1097
    %v4189 = vunpack.c.h.b16 %v1097
    %v4190 = vunpack.c.l.b16 %v1098
    %v4191 = vunpack.c.h.b16 %v1098
    %v4192 = vunpack.c.l.b16 %v1099
    %v4193 = vunpack.c.h.b16 %v1099
    %v4194 = vunpack.c.l.b16 %v1100
    %v4195 = vunpack.c.h.b16 %v1100
    %v4196 = vunpack.c.l.b16 %v1101
    %v4197 = vunpack.c.h.b16 %v1101
    %v4198 = vunpack.c.l.b16 %v1102
    %v4199 = vunpack.c.h.b16 %v1102
    %v4200 = vunpack.c.l.b16 %v1103
    %v4201 = vunpack.c.h.b16 %v1103
    %v4202 = vunpack.c.l.b16 %v1104
    %v4203 = vunpack.c.h.b16 %v1104
    %v4204 = vunpack.c.l.b16 %v1105
    %v4205 = vunpack.c.h.b16 %v1105
    %v4206 = vunpack.c.l.b16 %v1106
    %v4207 = vunpack.c.h.b16 %v1106
    %v4208 = vunpack.c.l.b16 %v1107
    %v4209 = vunpack.c.h.b16 %v1107
    %v4210 = vunpack.c.l.b16 %v1108
    %v4211 = vunpack.c.h.b16 %v1108
    %v4212 = vunpack.c.l.b16 %v1109
    %v4213 = vunpack.c.h.b16 %v1109
    %v4214 = vunpack.c.l.b16 %v1110
    %v4215 = vunpack.c.h.b16 %v1110
    %v4216 = vunpack.c.l.b16 %v1111
    %v4217 = vunpack.c.h.b16 %v1111
    %v4218 = vunpack.c.l.b16 %v1112
    %v4219 = vunpack.c.h.b16 %v1112
    %v4220 = vunpack.c.l.b16 %v1113
    %v4221 = vunpack.c.h.b16 %v1113
    %v4222 = vunpack.c.l.b16 %v1114
    %v4223 = vunpack.c.h.b16 %v1114
    %v4224 = vunpack.c.l.b16 %v1115
    %v4225 = vunpack.c.h.b16 %v1115
    %v4226 = vunpack.c.l.b16 %v1116
    %v4227 = vunpack.c.h.b16 %v1116
    %v4228 = vunpack.c.l.b16 %v1117
    %v4229 = vunpack.c.h.b16 %v1117
    %v4230 = vunpack.c.l.b16 %v1118
    %v4231 = vunpack.c.h.b16 %v1118
    %v4232 = vunpack.c.l.b16 %v1119
    %v4233 = vunpack.c.h.b16 %v1119
    %v4234 = vunpack.c.l.b16 %v1120
    %v4235 = vunpack.c.h.b16 %v1120
    %v4236 = vunpack.c.l.b16 %v1121
    %v4237 = vunpack.c.h.b16 %v1121
    %v4238 = vunpack.c.l.b16 %v1122
    %v4239 = vunpack.c.h.b16 %v1122
    %v4240 = vunpack.c.l.b16 %v1123
    %v4241 = vunpack.c.h.b16 %v1123
    %v4242 = vunpack.c.l.b16 %v1124
    %v4243 = vunpack.c.h.b16 %v1124
    %v4244 = vunpack.c.l.b16 %v1125
    %v4245 = vunpack.c.h.b16 %v1125
    %v4246 = vunpack.c.l.b16 %v1126
    %v4247 = vunpack.c.h.b16 %v1126
    %v4248 = vunpack.c.l.b16 %v1127
    %v4249 = vunpack.c.h.b16 %v1127
    %v4250 = vunpack.c.l.b16 %v1128
    %v4251 = vunpack.c.h.b16 %v1128
    %v4252 = vunpack.c.l.b16 %v1129
    %v4253 = vunpack.c.h.b16 %v1129
    %v4254 = vunpack.c.l.b16 %v1130
    %v4255 = vunpack.c.h.b16 %v1130
    %v4256 = vunpack.c.l.b16 %v1131
    %v4257 = vunpack.c.h.b16 %v1131
    %v4258 = vunpack.c.l.b16 %v1132
    %v4259 = vunpack.c.h.b16 %v1132
    %v4260 = vunpack.c.l.b16 %v1133
    %v4261 = vunpack.c.h.b16 %v1133
    %v4262 = vunpack.c.l.b16 %v1134
    %v4263 = vunpack.c.h.b16 %v1134
    %v4264 = vunpack.c.l.b16 %v1135
    %v4265 = vunpack.c.h.b16 %v1135
    %v4266 = vunpack.c.l.b16 %v1136
    %v4267 = vunpack.c.h.b16 %v1136
    %v4268 = vunpack.c.l.b16 %v1137
    %v4269 = vunpack.c.h.b16 %v1137
    %v4270 = vunpack.c.l.b16 %v1138
    %v4271 = vunpack.c.h.b16 %v1138
    %v4272 = vunpack.c.l.b16 %v1139
    %v4273 = vunpack.c.h.b16 %v1139
    %v4274 = vunpack.c.l.b16 %v1140
    %v4275 = vunpack.c.h.b16 %v1140
    %v4276 = vunpack.c.l.b16 %v1141
    %v4277 = vunpack.c.h.b16 %v1141
    %v4278 = vunpack.c.l.b16 %v1142
    %v4279 = vunpack.c.h.b16 %v1142
    %v4280 = vunpack.c.l.b16 %v1143
    %v4281 = vunpack.c.h.b16 %v1143
    %v4282 = vunpack.c.l.b16 %v1144
    %v4283 = vunpack.c.h.b16 %v1144
    %v4284 = vunpack.c.l.b16 %v1145
    %v4285 = vunpack.c.h.b16 %v1145
    %v4286 = vunpack.c.l.b16 %v1146
    %v4287 = vunpack.c.h.b16 %v1146
    %v4288 = vunpack.c.l.b16 %v1147
    %v4289 = vunpack.c.h.b16 %v1147
    %v4290 = vunpack.c.l.b16 %v1148
    %v4291 = vunpack.c.h.b16 %v1148
    %v4292 = vunpack.c.l.b16 %v1149
    %v4293 = vunpack.c.h.b16 %v1149
    %v4294 = vunpack.c.l.b16 %v1150
    %v4295 = vunpack.c.h.b16 %v1150
    %v4296 = vunpack.c.l.b16 %v1151
    %v4297 = vunpack.c.h.b16 %v1151
    %v4298 = vunpack.c.l.b16 %v1152
    %v4299 = vunpack.c.h.b16 %v1152
    %v4300 = vunpack.c.l.b16 %v1153
    %v4301 = vunpack.c.h.b16 %v1153
    %v4302 = vunpack.c.l.b16 %v1154
    %v4303 = vunpack.c.h.b16 %v1154
    %v4304 = vunpack.c.l.b16 %v1155
    %v4305 = vunpack.c.h.b16 %v1155
    %v4306 = vunpack.c.l.b16 %v1156
    %v4307 = vunpack.c.h.b16 %v1156
    %v4308 = vunpack.c.l.b16 %v1157
    %v4309 = vunpack.c.h.b16 %v1157
    %v4310 = vunpack.c.l.b16 %v1158
    %v4311 = vunpack.c.h.b16 %v1158
    %v4312 = vunpack.c.l.b16 %v1159
    %v4313 = vunpack.c.h.b16 %v1159
    %v4314 = vunpack.c.l.b16 %v1160
    %v4315 = vunpack.c.h.b16 %v1160
    %v4316 = vunpack.c.l.b16 %v1161
    %v4317 = vunpack.c.h.b16 %v1161
    %v4318 = vunpack.c.l.b16 %v1162
    %v4319 = vunpack.c.h.b16 %v1162
    %v4320 = vunpack.c.l.b16 %v1163
    %v4321 = vunpack.c.h.b16 %v1163
    %v4322 = vunpack.c.l.b16 %v1164
    %v4323 = vunpack.c.h.b16 %v1164
    %v4324 = vunpack.c.l.b16 %v1165
    %v4325 = vunpack.c.h.b16 %v1165
    %v4326 = vunpack.c.l.b16 %v1166
    %v4327 = vunpack.c.h.b16 %v1166
    %v4328 = vunpack.c.l.b16 %v1167
    %v4329 = vunpack.c.h.b16 %v1167
    %v4330 = vunpack.c.l.b16 %v1168
    %v4331 = vunpack.c.h.b16 %v1168
    %v4332 = vunpack.c.l.b16 %v1169
    %v4333 = vunpack.c.h.b16 %v1169
    %v4334 = vunpack.c.l.b16 %v1170
    %v4335 = vunpack.c.h.b16 %v1170
    %v4336 = vunpack.c.l.b16 %v1171
    %v4337 = vunpack.c.h.b16 %v1171
    %v4338 = vunpack.c.l.b16 %v1172
    %v4339 = vunpack.c.h.b16 %v1172
    %v4340 = vunpack.c.l.b16 %v1173
    %v4341 = vunpack.c.h.b16 %v1173
    %v4342 = vunpack.c.l.b16 %v1174
    %v4343 = vunpack.c.h.b16 %v1174
    %v4344 = vunpack.c.l.b16 %v1175
    %v4345 = vunpack.c.h.b16 %v1175
    %v4346 = vunpack.c.l.b16 %v1176
    %v4347 = vunpack.c.h.b16 %v1176
    %v4348 = vunpack.c.l.b16 %v1177
    %v4349 = vunpack.c.h.b16 %v1177
    %v4350 = vunpack.c.l.b16 %v1178
    %v4351 = vunpack.c.h.b16 %v1178
    %v4352 = vunpack.c.l.b16 %v1179
    %v4353 = vunpack.c.h.b16 %v1179
    %v4354 = vunpack.c.l.b16 %v1180
    %v4355 = vunpack.c.h.b16 %v1180
    %v4356 = vunpack.c.l.b16 %v1181
    %v4357 = vunpack.c.h.b16 %v1181
    %v4358 = vunpack.c.l.b16 %v1182
    %v4359 = vunpack.c.h.b16 %v1182
    %v4360 = vunpack.c.l.b16 %v1183
    %v4361 = vunpack.c.h.b16 %v1183
    %v4362 = vunpack.c.l.b16 %v1184
    %v4363 = vunpack.c.h.b16 %v1184
    %v4364 = vunpack.c.l.b16 %v1185
    %v4365 = vunpack.c.h.b16 %v1185
    %v4366 = vunpack.c.l.b16 %v1186
    %v4367 = vunpack.c.h.b16 %v1186
    %v4368 = vunpack.c.l.b16 %v1187
    %v4369 = vunpack.c.h.b16 %v1187
    %v4370 = vunpack.c.l.b16 %v1188
    %v4371 = vunpack.c.h.b16 %v1188
    %v4372 = vunpack.c.l.b16 %v1189
    %v4373 = vunpack.c.h.b16 %v1189
    %v4374 = vunpack.c.l.b16 %v1190
    %v4375 = vunpack.c.h.b16 %v1190
    %v4376 = vunpack.c.l.b16 %v1191
    %v4377 = vunpack.c.h.b16 %v1191
    %v4378 = vunpack.c.l.b16 %v1192
    %v4379 = vunpack.c.h.b16 %v1192
    %v4380 = vunpack.c.l.b16 %v1193
    %v4381 = vunpack.c.h.b16 %v1193
    %v4382 = vunpack.c.l.b16 %v1194
    %v4383 = vunpack.c.h.b16 %v1194
    %v4384 = vunpack.c.l.b16 %v1195
    %v4385 = vunpack.c.h.b16 %v1195
    %v4386 = vunpack.c.l.b16 %v1196
    %v4387 = vunpack.c.h.b16 %v1196
    %v4388 = vunpack.c.l.b16 %v1197
    %v4389 = vunpack.c.h.b16 %v1197
    %v4390 = vunpack.c.l.b16 %v1198
    %v4391 = vunpack.c.h.b16 %v1198
    %v4392 = vunpack.c.l.b16 %v1199
    %v4393 = vunpack.c.h.b16 %v1199
    %v4394 = vunpack.c.l.b16 %v1200
    %v4395 = vunpack.c.h.b16 %v1200
    %v4396 = vunpack.c.l.b16 %v1201
    %v4397 = vunpack.c.h.b16 %v1201
    %v4398 = vunpack.c.l.b16 %v1202
    %v4399 = vunpack.c.h.b16 %v1202
    %v4400 = vunpack.c.l.b16 %v1203
    %v4401 = vunpack.c.h.b16 %v1203
    %v4402 = vunpack.c.l.b16 %v1204
    %v4403 = vunpack.c.h.b16 %v1204
    %v4404 = vunpack.c.l.b16 %v1205
    %v4405 = vunpack.c.h.b16 %v1205
    %v4406 = vunpack.c.l.b16 %v1206
    %v4407 = vunpack.c.h.b16 %v1206
    %v4408 = vunpack.c.l.b16 %v1207
    %v4409 = vunpack.c.h.b16 %v1207
    %v4410 = vunpack.c.l.b16 %v1208
    %v4411 = vunpack.c.h.b16 %v1208
    %v4412 = vunpack.c.l.b16 %v1209
    %v4413 = vunpack.c.h.b16 %v1209
    %v4414 = vunpack.c.l.b16 %v1210
    %v4415 = vunpack.c.h.b16 %v1210
    %v4416 = vunpack.c.l.b16 %v1211
    %v4417 = vunpack.c.h.b16 %v1211
    %v4418 = vunpack.c.l.b16 %v1212
    %v4419 = vunpack.c.h.b16 %v1212
    %v4420 = vunpack.c.l.b16 %v1213
    %v4421 = vunpack.c.h.b16 %v1213
    %v4422 = vunpack.c.l.b16 %v1214
    %v4423 = vunpack.c.h.b16 %v1214
    %v4424 = vunpack.c.l.b16 %v1215
    %v4425 = vunpack.c.h.b16 %v1215
    %v4426 = vunpack.c.l.b16 %v1216
    %v4427 = vunpack.c.h.b16 %v1216
    %v4428 = vunpack.c.l.b16 %v1217
    %v4429 = vunpack.c.h.b16 %v1217
    %v4430 = vunpack.c.l.b16 %v1218
    %v4431 = vunpack.c.h.b16 %v1218
    %v4432 = vunpack.c.l.b16 %v1219
    %v4433 = vunpack.c.h.b16 %v1219
    %v4434 = vunpack.c.l.b16 %v1220
    %v4435 = vunpack.c.h.b16 %v1220
    %v4436 = vunpack.c.l.b16 %v1221
    %v4437 = vunpack.c.h.b16 %v1221
    %v4438 = vunpack.c.l.b16 %v1222
    %v4439 = vunpack.c.h.b16 %v1222
    %v4440 = vunpack.c.l.b16 %v1223
    %v4441 = vunpack.c.h.b16 %v1223
    %v4442 = vunpack.c.l.b16 %v1224
    %v4443 = vunpack.c.h.b16 %v1224
    %v4444 = vunpack.c.l.b16 %v1225
    %v4445 = vunpack.c.h.b16 %v1225
    %v4446 = vunpack.c.l.b16 %v1226
    %v4447 = vunpack.c.h.b16 %v1226
    %v4448 = vunpack.c.l.b16 %v1227
    %v4449 = vunpack.c.h.b16 %v1227
    %v4450 = vunpack.c.l.b16 %v1228
    %v4451 = vunpack.c.h.b16 %v1228
    %v4452 = vunpack.c.l.b16 %v1229
    %v4453 = vunpack.c.h.b16 %v1229
    %v4454 = vunpack.c.l.b16 %v1230
    %v4455 = vunpack.c.h.b16 %v1230
    %v4456 = vunpack.c.l.b16 %v1231
    %v4457 = vunpack.c.h.b16 %v1231
    %v4458 = vunpack.c.l.b16 %v1232
    %v4459 = vunpack.c.h.b16 %v1232
    %v4460 = vunpack.c.l.b16 %v1233
    %v4461 = vunpack.c.h.b16 %v1233
    %v4462 = vunpack.c.l.b16 %v1234
    %v4463 = vunpack.c.h.b16 %v1234
    %v4464 = vunpack.c.l.b16 %v1235
    %v4465 = vunpack.c.h.b16 %v1235
    %v4466 = vunpack.c.l.b16 %v1236
    %v4467 = vunpack.c.h.b16 %v1236
    %v4468 = vunpack.c.l.b16 %v1237
    %v4469 = vunpack.c.h.b16 %v1237
    %v4470 = vunpack.c.l.b16 %v1238
    %v4471 = vunpack.c.h.b16 %v1238
    %v4472 = vunpack.c.l.b16 %v1239
    %v4473 = vunpack.c.h.b16 %v1239
    %v4474 = vunpack.c.l.b16 %v1240
    %v4475 = vunpack.c.h.b16 %v1240
    %v4476 = vunpack.c.l.b16 %v1241
    %v4477 = vunpack.c.h.b16 %v1241
    %v4478 = vunpack.c.l.b16 %v1242
    %v4479 = vunpack.c.h.b16 %v1242
    %v4480 = vunpack.c.l.b16 %v1243
    %v4481 = vunpack.c.h.b16 %v1243
    %v4482 = vunpack.c.l.b16 %v1244
    %v4483 = vunpack.c.h.b16 %v1244
    %v4484 = vunpack.c.l.b16 %v1245
    %v4485 = vunpack.c.h.b16 %v1245
    %v4486 = vunpack.c.l.b16 %v1246
    %v4487 = vunpack.c.h.b16 %v1246
    %v4488 = vunpack.c.l.b16 %v1247
    %v4489 = vunpack.c.h.b16 %v1247
    %v4490 = vunpack.c.l.b16 %v1248
    %v4491 = vunpack.c.h.b16 %v1248
    %v4492 = vunpack.c.l.b16 %v1249
    %v4493 = vunpack.c.h.b16 %v1249
    %v4494 = vunpack.c.l.b16 %v1250
    %v4495 = vunpack.c.h.b16 %v1250
    %v4496 = vunpack.c.l.b16 %v1251
    %v4497 = vunpack.c.h.b16 %v1251
    %v4498 = vunpack.c.l.b16 %v1252
    %v4499 = vunpack.c.h.b16 %v1252
    %v4500 = vunpack.c.l.b16 %v1253
    %v4501 = vunpack.c.h.b16 %v1253
    %v4502 = vunpack.c.l.b16 %v1254
    %v4503 = vunpack.c.h.b16 %v1254
    %v4504 = vunpack.c.l.b16 %v1255
    %v4505 = vunpack.c.h.b16 %v1255
    %v4506 = vunpack.c.l.b16 %v1256
    %v4507 = vunpack.c.h.b16 %v1256
    %v4508 = vunpack.c.l.b16 %v1257
    %v4509 = vunpack.c.h.b16 %v1257
    %v4510 = vunpack.c.l.b16 %v1258
    %v4511 = vunpack.c.h.b16 %v1258
    %v4512 = vunpack.c.l.b16 %v1259
    %v4513 = vunpack.c.h.b16 %v1259
    %v4514 = vunpack.c.l.b16 %v1260
    %v4515 = vunpack.c.h.b16 %v1260
    %v4516 = vunpack.c.l.b16 %v1261
    %v4517 = vunpack.c.h.b16 %v1261
    %v4518 = vunpack.c.l.b16 %v1262
    %v4519 = vunpack.c.h.b16 %v1262
    %v4520 = vunpack.c.l.b16 %v1263
    %v4521 = vunpack.c.h.b16 %v1263
    %v4522 = vunpack.c.l.b16 %v1264
    %v4523 = vunpack.c.h.b16 %v1264
    %v4524 = vunpack.c.l.b16 %v1265
    %v4525 = vunpack.c.h.b16 %v1265
    %v4526 = vunpack.c.l.b16 %v1266
    %v4527 = vunpack.c.h.b16 %v1266
    %v4528 = vunpack.c.l.b16 %v1267
    %v4529 = vunpack.c.h.b16 %v1267
    %v4530 = vunpack.c.l.b16 %v1268
    %v4531 = vunpack.c.h.b16 %v1268
    %v4532 = vunpack.c.l.b16 %v1269
    %v4533 = vunpack.c.h.b16 %v1269
    %v4534 = vunpack.c.l.b16 %v1270
    %v4535 = vunpack.c.h.b16 %v1270
    %v4536 = vunpack.c.l.b16 %v1271
    %v4537 = vunpack.c.h.b16 %v1271
    %v4538 = vunpack.c.l.b16 %v1272
    %v4539 = vunpack.c.h.b16 %v1272
    %v4540 = vunpack.c.l.b16 %v1273
    %v4541 = vunpack.c.h.b16 %v1273
    %v4542 = vunpack.c.l.b16 %v1274
    %v4543 = vunpack.c.h.b16 %v1274
    %v4544 = vunpack.c.l.b16 %v1275
    %v4545 = vunpack.c.h.b16 %v1275
    %v4546 = vunpack.c.l.b16 %v1276
    %v4547 = vunpack.c.h.b16 %v1276
    %v4548 = vunpack.c.l.b16 %v1277
    %v4549 = vunpack.c.h.b16 %v1277
    %v4550 = vunpack.c.l.b16 %v1278
    %v4551 = vunpack.c.h.b16 %v1278
    %v4552 = vunpack.c.l.b16 %v1279
    %v4553 = vunpack.c.h.b16 %v1279
    %v4554 = vunpack.c.l.b16 %v1280
    %v4555 = vunpack.c.h.b16 %v1280
    %v4556 = vunpack.c.l.b16 %v1281
    %v4557 = vunpack.c.h.b16 %v1281
    %v4558 = vunpack.c.l.b16 %v1282
    %v4559 = vunpack.c.h.b16 %v1282
    %v4560 = vunpack.c.l.b16 %v1283
    %v4561 = vunpack.c.h.b16 %v1283
    %v4562 = vunpack.c.l.b16 %v1284
    %v4563 = vunpack.c.h.b16 %v1284
    %v4564 = vunpack.c.l.b16 %v1285
    %v4565 = vunpack.c.h.b16 %v1285
    %v4566 = vunpack.c.l.b16 %v1286
    %v4567 = vunpack.c.h.b16 %v1286
    %v4568 = vunpack.c.l.b16 %v1287
    %v4569 = vunpack.c.h.b16 %v1287
    %v4570 = vunpack.c.l.b16 %v1288
    %v4571 = vunpack.c.h.b16 %v1288
    %v4572 = vunpack.c.l.b16 %v1289
    %v4573 = vunpack.c.h.b16 %v1289
    %v4574 = vunpack.c.l.b16 %v1290
    %v4575 = vunpack.c.h.b16 %v1290
    %v4576 = vunpack.c.l.b16 %v1291
    %v4577 = vunpack.c.h.b16 %v1291
    %v4578 = vunpack.c.l.b16 %v1292
    %v4579 = vunpack.c.h.b16 %v1292
    %v4580 = vunpack.c.l.b16 %v1293
    %v4581 = vunpack.c.h.b16 %v1293
    %v4582 = vunpack.c.l.b16 %v1294
    %v4583 = vunpack.c.h.b16 %v1294
    %v4584 = vunpack.c.l.b16 %v1295
    %v4585 = vunpack.c.h.b16 %v1295
    %v4586 = vunpack.c.l.b16 %v1296
    %v4587 = vunpack.c.h.b16 %v1296
    %v4588 = vunpack.c.l.b16 %v1297
    %v4589 = vunpack.c.h.b16 %v1297
    %v4590 = vunpack.c.l.b16 %v1298
    %v4591 = vunpack.c.h.b16 %v1298
    %v4592 = vunpack.c.l.b16 %v1299
    %v4593 = vunpack.c.h.b16 %v1299
    %v4594 = vunpack.c.l.b16 %v1300
    %v4595 = vunpack.c.h.b16 %v1300
    %v4596 = vunpack.c.l.b16 %v1301
    %v4597 = vunpack.c.h.b16 %v1301
    %v4598 = vunpack.c.l.b16 %v1302
    %v4599 = vunpack.c.h.b16 %v1302
    %v4600 = vunpack.c.l.b16 %v1303
    %v4601 = vunpack.c.h.b16 %v1303
    %v4602 = vunpack.c.l.b16 %v1304
    %v4603 = vunpack.c.h.b16 %v1304
    %v4604 = vunpack.c.l.b16 %v1305
    %v4605 = vunpack.c.h.b16 %v1305
    %v4606 = vunpack.c.l.b16 %v1306
    %v4607 = vunpack.c.h.b16 %v1306
    %v4608 = vunpack.c.l.b16 %v1307
    %v4609 = vunpack.c.h.b16 %v1307
    %v4610 = vunpack.c.l.b16 %v1308
    %v4611 = vunpack.c.h.b16 %v1308
    %v4612 = vunpack.c.l.b16 %v1309
    %v4613 = vunpack.c.h.b16 %v1309
    %v4614 = vunpack.c.l.b16 %v1310
    %v4615 = vunpack.c.h.b16 %v1310
    %v4616 = vunpack.c.l.b16 %v1311
    %v4617 = vunpack.c.h.b16 %v1311
    %v4618 = vunpack.c.l.b16 %v1312
    %v4619 = vunpack.c.h.b16 %v1312
    %v4620 = vunpack.c.l.b16 %v1313
    %v4621 = vunpack.c.h.b16 %v1313
    %v4622 = vunpack.c.l.b16 %v1314
    %v4623 = vunpack.c.h.b16 %v1314
    %v4624 = vunpack.c.l.b16 %v1315
    %v4625 = vunpack.c.h.b16 %v1315
    %v4626 = vunpack.c.l.b16 %v1316
    %v4627 = vunpack.c.h.b16 %v1316
    %v4628 = vunpack.c.l.b16 %v1317
    %v4629 = vunpack.c.h.b16 %v1317
    %v4630 = vunpack.c.l.b16 %v1318
    %v4631 = vunpack.c.h.b16 %v1318
    %v4632 = vunpack.c.l.b16 %v1319
    %v4633 = vunpack.c.h.b16 %v1319
    %v4634 = vunpack.c.l.b16 %v1320
    %v4635 = vunpack.c.h.b16 %v1320
    %v4636 = vunpack.c.l.b16 %v1321
    %v4637 = vunpack.c.h.b16 %v1321
    %v4638 = vunpack.c.l.b16 %v1322
    %v4639 = vunpack.c.h.b16 %v1322
    %v4640 = vunpack.c.l.b16 %v1323
    %v4641 = vunpack.c.h.b16 %v1323
    %v4642 = vunpack.c.l.b16 %v1324
    %v4643 = vunpack.c.h.b16 %v1324
    %v4644 = vunpack.c.l.b16 %v1325
    %v4645 = vunpack.c.h.b16 %v1325
    %v4646 = vunpack.c.l.b16 %v1326
    %v4647 = vunpack.c.h.b16 %v1326
    %v4648 = vunpack.c.l.b16 %v1327
    %v4649 = vunpack.c.h.b16 %v1327
    %v4650 = vunpack.c.l.b16 %v1328
    %v4651 = vunpack.c.h.b16 %v1328
    %v4652 = vunpack.c.l.b16 %v1329
    %v4653 = vunpack.c.h.b16 %v1329
    %v4654 = vunpack.c.l.b16 %v1330
    %v4655 = vunpack.c.h.b16 %v1330
    %v4656 = vunpack.c.l.b16 %v1331
    %v4657 = vunpack.c.h.b16 %v1331
    %v4658 = vunpack.c.l.b16 %v1332
    %v4659 = vunpack.c.h.b16 %v1332
    %v4660 = vunpack.c.l.b16 %v1333
    %v4661 = vunpack.c.h.b16 %v1333
    %v4662 = vunpack.c.l.b16 %v1334
    %v4663 = vunpack.c.h.b16 %v1334
    %v4664 = vunpack.c.l.b16 %v1335
    %v4665 = vunpack.c.h.b16 %v1335
    %v4666 = vunpack.c.l.b16 %v1336
    %v4667 = vunpack.c.h.b16 %v1336
    %v4668 = vunpack.c.l.b16 %v1337
    %v4669 = vunpack.c.h.b16 %v1337
    %v4670 = vunpack.c.l.b16 %v1338
    %v4671 = vunpack.c.h.b16 %v1338
    %v4672 = vunpack.c.l.b16 %v1339
    %v4673 = vunpack.c.h.b16 %v1339
    %v4674 = vunpack.c.l.b16 %v1340
    %v4675 = vunpack.c.h.b16 %v1340
    %v4676 = vunpack.c.l.b16 %v1341
    %v4677 = vunpack.c.h.b16 %v1341
    %v4678 = vunpack.c.l.b16 %v1342
    %v4679 = vunpack.c.h.b16 %v1342
    %v4680 = vunpack.c.l.b16 %v1343
    %v4681 = vunpack.c.h.b16 %v1343
    %v4682 = vunpack.c.l.b16 %v1344
    %v4683 = vunpack.c.h.b16 %v1344
    %v4684 = vunpack.c.l.b16 %v1345
    %v4685 = vunpack.c.h.b16 %v1345
    %v4686 = vunpack.c.l.b16 %v1346
    %v4687 = vunpack.c.h.b16 %v1346
    %v4688 = vunpack.c.l.b16 %v1347
    %v4689 = vunpack.c.h.b16 %v1347
    %v4690 = vunpack.c.l.b16 %v1348
    %v4691 = vunpack.c.h.b16 %v1348
    %v4692 = vunpack.c.l.b16 %v1349
    %v4693 = vunpack.c.h.b16 %v1349
    %v4694 = vunpack.c.l.b16 %v1350
    %v4695 = vunpack.c.h.b16 %v1350
    %v4696 = vunpack.c.l.b16 %v1351
    %v4697 = vunpack.c.h.b16 %v1351
    %v4698 = vunpack.c.l.b16 %v1352
    %v4699 = vunpack.c.h.b16 %v1352
    %v4700 = vunpack.c.l.b16 %v1353
    %v4701 = vunpack.c.h.b16 %v1353
    %v4702 = vunpack.c.l.b16 %v1354
    %v4703 = vunpack.c.h.b16 %v1354
    %v4704 = vunpack.c.l.b16 %v1355
    %v4705 = vunpack.c.h.b16 %v1355
    %v4706 = vunpack.c.l.b16 %v1356
    %v4707 = vunpack.c.h.b16 %v1356
    %v4708 = vunpack.c.l.b16 %v1357
    %v4709 = vunpack.c.h.b16 %v1357
    %v4710 = vunpack.c.l.b16 %v1358
    %v4711 = vunpack.c.h.b16 %v1358
    %v4712 = vunpack.c.l.b16 %v1359
    %v4713 = vunpack.c.h.b16 %v1359
    %v4714 = vunpack.c.l.b16 %v1360
    %v4715 = vunpack.c.h.b16 %v1360
    %v4716 = vunpack.c.l.b16 %v1361
    %v4717 = vunpack.c.h.b16 %v1361
    %v4718 = vunpack.c.l.b16 %v1362
    %v4719 = vunpack.c.h.b16 %v1362
    %v4720 = vunpack.c.l.b16 %v1363
    %v4721 = vunpack.c.h.b16 %v1363
    %v4722 = vunpack.c.l.b16 %v1364
    %v4723 = vunpack.c.h.b16 %v1364
    %v4724 = vunpack.c.l.b16 %v1365
    %v4725 = vunpack.c.h.b16 %v1365
    %v4726 = vunpack.c.l.b16 %v1366
    %v4727 = vunpack.c.h.b16 %v1366
    %v4728 = vunpack.c.l.b16 %v1367
    %v4729 = vunpack.c.h.b16 %v1367
    %v4730 = vunpack.c.l.b16 %v1368
    %v4731 = vunpack.c.h.b16 %v1368
    %v4732 = vunpack.c.l.b16 %v1369
    %v4733 = vunpack.c.h.b16 %v1369
    %v4734 = vunpack.c.l.b16 %v1370
    %v4735 = vunpack.c.h.b16 %v1370
    %v4736 = vunpack.c.l.b16 %v1371
    %v4737 = vunpack.c.h.b16 %v1371
    %v4738 = vunpack.c.l.b16 %v1372
    %v4739 = vunpack.c.h.b16 %v1372
    %v4740 = vunpack.c.l.b16 %v1373
    %v4741 = vunpack.c.h.b16 %v1373
    %v4742 = vunpack.c.l.b16 %v1374
    %v4743 = vunpack.c.h.b16 %v1374
    %v4744 = vunpack.c.l.b16 %v1375
    %v4745 = vunpack.c.h.b16 %v1375
    %v4746 = vunpack.c.l.b16 %v1376
    %v4747 = vunpack.c.h.b16 %v1376
    %v4748 = vunpack.c.l.b16 %v1377
    %v4749 = vunpack.c.h.b16 %v1377
    %v4750 = vunpack.c.l.b16 %v1378
    %v4751 = vunpack.c.h.b16 %v1378
    %v4752 = vunpack.c.l.b16 %v1379
    %v4753 = vunpack.c.h.b16 %v1379
    %v4754 = vunpack.c.l.b16 %v1380
    %v4755 = vunpack.c.h.b16 %v1380
    %v4756 = vunpack.c.l.b16 %v1381
    %v4757 = vunpack.c.h.b16 %v1381
    %v4758 = vunpack.c.l.b16 %v1382
    %v4759 = vunpack.c.h.b16 %v1382
    %v4760 = vunpack.c.l.b16 %v1383
    %v4761 = vunpack.c.h.b16 %v1383
    %v4762 = vunpack.c.l.b16 %v1384
    %v4763 = vunpack.c.h.b16 %v1384
    %v4764 = vunpack.c.l.b16 %v1385
    %v4765 = vunpack.c.h.b16 %v1385
    %v4766 = vunpack.c.l.b16 %v1386
    %v4767 = vunpack.c.h.b16 %v1386
    %v4768 = vunpack.c.l.b16 %v1387
    %v4769 = vunpack.c.h.b16 %v1387
    %v4770 = vpack.c.b16 %v2534, %v2530
    %v4771 = vpack.c.b16 %v2535, %v2531
    %v4772 = vpack.c.b16 %v2536, %v2532
    %v4773 = vpack.c.b16 %v2537, %v2533
    %v4774 = vpack.c.b16 %v2542, %v2538
    %v4775 = vpack.c.b16 %v2543, %v2539
    %v4776 = vpack.c.b16 %v2544, %v2540
    %v4777 = vpack.c.b16 %v2545, %v2541
    %v4778 = vpack.c.b16 %v2550, %v2546
    %v4779 = vpack.c.b16 %v2551, %v2547
    %v4780 = vpack.c.b16 %v2552, %v2548
    %v4781 = vpack.c.b16 %v2553, %v2549
    %v4782 = vpack.c.b16 %v2558, %v2554
    %v4783 = vpack.c.b16 %v2559, %v2555
    %v4784 = vpack.c.b16 %v2560, %v2556
    %v4785 = vpack.c.b16 %v2561, %v2557
    %v4786 = vpack.c.b16 %v2566, %v2562
    %v4787 = vpack.c.b16 %v2567, %v2563
    %v4788 = vpack.c.b16 %v2568, %v2564
    %v4789 = vpack.c.b16 %v2569, %v2565
    %v4790 = vpack.c.b16 %v2574, %v2570
    %v4791 = vpack.c.b16 %v2575, %v2571
    %v4792 = vpack.c.b16 %v2576, %v2572
    %v4793 = vpack.c.b16 %v2577, %v2573
    %v4794 = vpack.c.b16 %v2582, %v2578
    %v4795 = vpack.c.b16 %v2583, %v2579
    %v4796 = vpack.c.b16 %v2584, %v2580
    %v4797 = vpack.c.b16 %v2585, %v2581
    %v4798 = vpack.c.b16 %v2590, %v2586
    %v4799 = vpack.c.b16 %v2591, %v2587
    %v4800 = vpack.c.b16 %v2592, %v2588
    %v4801 = vpack.c.b16 %v2593, %v2589
    %v4802 = vpack.c.b16 %v2598, %v2594
    %v4803 = vpack.c.b16 %v2599, %v2595
    %v4804 = vpack.c.b16 %v2600, %v2596
    %v4805 = vpack.c.b16 %v2601, %v2597
    %v4806 = vpack.c.b16 %v2606, %v2602
    %v4807 = vpack.c.b16 %v2607, %v2603
    %v4808 = vpack.c.b16 %v2608, %v2604
    %v4809 = vpack.c.b16 %v2609, %v2605
    %v4810 = vpack.c.b16 %v2614, %v2610
    %v4811 = vpack.c.b16 %v2615, %v2611
    %v4812 = vpack.c.b16 %v2616, %v2612
    %v4813 = vpack.c.b16 %v2617, %v2613
    %v4814 = vpack.c.b16 %v2622, %v2618
    %v4815 = vpack.c.b16 %v2623, %v2619
    %v4816 = vpack.c.b16 %v2624, %v2620
    %v4817 = vpack.c.b16 %v2625, %v2621
    %v4818 = vpack.c.b16 %v2630, %v2626
    %v4819 = vpack.c.b16 %v2631, %v2627
    %v4820 = vpack.c.b16 %v2632, %v2628
    %v4821 = vpack.c.b16 %v2633, %v2629
    %v4822 = vpack.c.b16 %v2638, %v2634
    %v4823 = vpack.c.b16 %v2639, %v2635
    %v4824 = vpack.c.b16 %v2640, %v2636
    %v4825 = vpack.c.b16 %v2641, %v2637
    %v4826 = vpack.c.b16 %v2646, %v2642
    %v4827 = vpack.c.b16 %v2647, %v2643
    %v4828 = vpack.c.b16 %v2648, %v2644
    %v4829 = vpack.c.b16 %v2649, %v2645
    %v4830 = vpack.c.b16 %v2654, %v2650
    %v4831 = vpack.c.b16 %v2655, %v2651
    %v4832 = vpack.c.b16 %v2656, %v2652
    %v4833 = vpack.c.b16 %v2657, %v2653
    %v4834 = vpack.c.b16 %v2662, %v2658
    %v4835 = vpack.c.b16 %v2663, %v2659
    %v4836 = vpack.c.b16 %v2664, %v2660
    %v4837 = vpack.c.b16 %v2665, %v2661
    %v4838 = vpack.c.b16 %v2670, %v2666
    %v4839 = vpack.c.b16 %v2671, %v2667
    %v4840 = vpack.c.b16 %v2672, %v2668
    %v4841 = vpack.c.b16 %v2673, %v2669
    %v4842 = vpack.c.b16 %v2678, %v2674
    %v4843 = vpack.c.b16 %v2679, %v2675
    %v4844 = vpack.c.b16 %v2680, %v2676
    %v4845 = vpack.c.b16 %v2681, %v2677
    %v4846 = vpack.c.b16 %v2686, %v2682
    %v4847 = vpack.c.b16 %v2687, %v2683
    %v4848 = vpack.c.b16 %v2688, %v2684
    %v4849 = vpack.c.b16 %v2689, %v2685
    %v4850 = vpack.c.b16 %v2694, %v2690
    %v4851 = vpack.c.b16 %v2695, %v2691
    %v4852 = vpack.c.b16 %v2696, %v2692
    %v4853 = vpack.c.b16 %v2697, %v2693
    %v4854 = vpack.c.b16 %v2702, %v2698
    %v4855 = vpack.c.b16 %v2703, %v2699
    %v4856 = vpack.c.b16 %v2704, %v2700
    %v4857 = vpack.c.b16 %v2705, %v2701
    %v4858 = vpack.c.b16 %v2710, %v2706
    %v4859 = vpack.c.b16 %v2711, %v2707
    %v4860 = vpack.c.b16 %v2712, %v2708
    %v4861 = vpack.c.b16 %v2713, %v2709
    %v4862 = vpack.c.b16 %v2718, %v2714
    %v4863 = vpack.c.b16 %v2719, %v2715
    %v4864 = vpack.c.b16 %v2720, %v2716
    %v4865 = vpack.c.b16 %v2721, %v2717
    %v4866 = vpack.c.b16 %v2726, %v2722
    %v4867 = vpack.c.b16 %v2727, %v2723
    %v4868 = vpack.c.b16 %v2728, %v2724
    %v4869 = vpack.c.b16 %v2729, %v2725
    %v4870 = vpack.c.b16 %v2734, %v2730
    %v4871 = vpack.c.b16 %v2735, %v2731
    %v4872 = vpack.c.b16 %v2736, %v2732
    %v4873 = vpack.c.b16 %v2737, %v2733
    %v4874 = vpack.c.b16 %v2742, %v2738
    %v4875 = vpack.c.b16 %v2743, %v2739
    %v4876 = vpack.c.b16 %v2744, %v2740
    %v4877 = vpack.c.b16 %v2745, %v2741
    %v4878 = vpack.c.b16 %v2750, %v2746
    %v4879 = vpack.c.b16 %v2751, %v2747
    %v4880 = vpack.c.b16 %v2752, %v2748
    %v4881 = vpack.c.b16 %v2753, %v2749
    %v4882 = vpack.c.b16 %v2758, %v2754
    %v4883 = vpack.c.b16 %v2759, %v2755
    %v4884 = vpack.c.b16 %v2760, %v2756
    %v4885 = vpack.c.b16 %v2761, %v2757
    %v4886 = vpack.c.b16 %v2766, %v2762
    %v4887 = vpack.c.b16 %v2767, %v2763
    %v4888 = vpack.c.b16 %v2768, %v2764
    %v4889 = vpack.c.b16 %v2769, %v2765
    %v4890 = vpack.c.b16 %v2774, %v2770
    %v4891 = vpack.c.b16 %v2775, %v2771
    %v4892 = vpack.c.b16 %v2776, %v2772
    %v4893 = vpack.c.b16 %v2777, %v2773
    %v4894 = vpack.c.b16 %v2782, %v2778
    %v4895 = vpack.c.b16 %v2783, %v2779
    %v4896 = vpack.c.b16 %v2784, %v2780
    %v4897 = vpack.c.b16 %v2785, %v2781
    %v4898 = vpack.c.b16 %v2790, %v2786
    %v4899 = vpack.c.b16 %v2791, %v2787
    %v4900 = vpack.c.b16 %v2792, %v2788
    %v4901 = vpack.c.b16 %v2793, %v2789
    %v4902 = vpack.c.b16 %v2798, %v2794
    %v4903 = vpack.c.b16 %v2799, %v2795
    %v4904 = vpack.c.b16 %v2800, %v2796
    %v4905 = vpack.c.b16 %v2801, %v2797
    %v4906 = vpack.c.b16 %v2806, %v2802
    %v4907 = vpack.c.b16 %v2807, %v2803
    %v4908 = vpack.c.b16 %v2808, %v2804
    %v4909 = vpack.c.b16 %v2809, %v2805
    %v4910 = vpack.c.b16 %v2814, %v2810
    %v4911 = vpack.c.b16 %v2815, %v2811
    %v4912 = vpack.c.b16 %v2816, %v2812
    %v4913 = vpack.c.b16 %v2817, %v2813
    %v4914 = vpack.c.b16 %v2822, %v2818
    %v4915 = vpack.c.b16 %v2823, %v2819
    %v4916 = vpack.c.b16 %v2824, %v2820
    %v4917 = vpack.c.b16 %v2825, %v2821
    %v4918 = vpack.c.b16 %v2830, %v2826
    %v4919 = vpack.c.b16 %v2831, %v2827
    %v4920 = vpack.c.b16 %v2832, %v2828
    %v4921 = vpack.c.b16 %v2833, %v2829
    %v4922 = vpack.c.b16 %v2838, %v2834
    %v4923 = vpack.c.b16 %v2839, %v2835
    %v4924 = vpack.c.b16 %v2840, %v2836
    %v4925 = vpack.c.b16 %v2841, %v2837
    %v4926 = vpack.c.b16 %v2846, %v2842
    %v4927 = vpack.c.b16 %v2847, %v2843
    %v4928 = vpack.c.b16 %v2848, %v2844
    %v4929 = vpack.c.b16 %v2849, %v2845
    %v4930 = vpack.c.b16 %v2854, %v2850
    %v4931 = vpack.c.b16 %v2855, %v2851
    %v4932 = vpack.c.b16 %v2856, %v2852
    %v4933 = vpack.c.b16 %v2857, %v2853
    %v4934 = vpack.c.b16 %v2862, %v2858
    %v4935 = vpack.c.b16 %v2863, %v2859
    %v4936 = vpack.c.b16 %v2864, %v2860
    %v4937 = vpack.c.b16 %v2865, %v2861
    %v4938 = vpack.c.b16 %v2870, %v2866
    %v4939 = vpack.c.b16 %v2871, %v2867
    %v4940 = vpack.c.b16 %v2872, %v2868
    %v4941 = vpack.c.b16 %v2873, %v2869
    %v4942 = vpack.c.b16 %v2878, %v2874
    %v4943 = vpack.c.b16 %v2879, %v2875
    %v4944 = vpack.c.b16 %v2880, %v2876
    %v4945 = vpack.c.b16 %v2881, %v2877
    %v4946 = vpack.c.b16 %v2886, %v2882
    %v4947 = vpack.c.b16 %v2887, %v2883
    %v4948 = vpack.c.b16 %v2888, %v2884
    %v4949 = vpack.c.b16 %v2889, %v2885
    %v4950 = vpack.c.b16 %v2894, %v2890
    %v4951 = vpack.c.b16 %v2895, %v2891
    %v4952 = vpack.c.b16 %v2896, %v2892
    %v4953 = vpack.c.b16 %v2897, %v2893
    %v4954 = vpack.c.b16 %v2902, %v2898
    %v4955 = vpack.c.b16 %v2903, %v2899
    %v4956 = vpack.c.b16 %v2904, %v2900
    %v4957 = vpack.c.b16 %v2905, %v2901
    %v4958 = vpack.c.b16 %v2910, %v2906
    %v4959 = vpack.c.b16 %v2911, %v2907
    %v4960 = vpack.c.b16 %v2912, %v2908
    %v4961 = vpack.c.b16 %v2913, %v2909
    %v4962 = vpack.c.b16 %v2918, %v2914
    %v4963 = vpack.c.b16 %v2919, %v2915
    %v4964 = vpack.c.b16 %v2920, %v2916
    %v4965 = vpack.c.b16 %v2921, %v2917
    %v4966 = vpack.c.b16 %v2926, %v2922
    %v4967 = vpack.c.b16 %v2927, %v2923
    %v4968 = vpack.c.b16 %v2928, %v2924
    %v4969 = vpack.c.b16 %v2929, %v2925
    %v4970 = vpack.c.b16 %v2934, %v2930
    %v4971 = vpack.c.b16 %v2935, %v2931
    %v4972 = vpack.c.b16 %v2936, %v2932
    %v4973 = vpack.c.b16 %v2937, %v2933
    %v4974 = vpack.c.b16 %v2942, %v2938
    %v4975 = vpack.c.b16 %v2943, %v2939
    %v4976 = vpack.c.b16 %v2944, %v2940
    %v4977 = vpack.c.b16 %v2945, %v2941
    %v4978 = vpack.c.b16 %v2950, %v2946
    %v4979 = vpack.c.b16 %v2951, %v2947
    %v4980 = vpack.c.b16 %v2952, %v2948
    %v4981 = vpack.c.b16 %v2953, %v2949
    %v4982 = vpack.c.b16 %v2958, %v2954
    %v4983 = vpack.c.b16 %v2959, %v2955
    %v4984 = vpack.c.b16 %v2960, %v2956
    %v4985 = vpack.c.b16 %v2961, %v2957
    %v4986 = vpack.c.b16 %v2966, %v2962
    %v4987 = vpack.c.b16 %v2967, %v2963
    %v4988 = vpack.c.b16 %v2968, %v2964
    %v4989 = vpack.c.b16 %v2969, %v2965
    %v4990 = vpack.c.b16 %v2974, %v2970
    %v4991 = vpack.c.b16 %v2975, %v2971
    %v4992 = vpack.c.b16 %v2976, %v2972
    %v4993 = vpack.c.b16 %v2977, %v2973
    %v4994 = vpack.c.b16 %v2982, %v2978
    %v4995 = vpack.c.b16 %v2983, %v2979
    %v4996 = vpack.c.b16 %v2984, %v2980
    %v4997 = vpack.c.b16 %v2985, %v2981
    %v4998 = vpack.c.b16 %v2990, %v2986
    %v4999 = vpack.c.b16 %v2991, %v2987
    %v5000 = vpack.c.b16 %v2992, %v2988
    %v5001 = vpack.c.b16 %v2993, %v2989
    %v5002 = vpack.c.b16 %v2998, %v2994
    %v5003 = vpack.c.b16 %v2999, %v2995
    %v5004 = vpack.c.b16 %v3000, %v2996
    %v5005 = vpack.c.b16 %v3001, %v2997
    %v5006 = vpack.c.b16 %v3006, %v3002
    %v5007 = vpack.c.b16 %v3007, %v3003
    %v5008 = vpack.c.b16 %v3008, %v3004
    %v5009 = vpack.c.b16 %v3009, %v3005
    %v5010 = vpack.c.b16 %v3014, %v3010
    %v5011 = vpack.c.b16 %v3015, %v3011
    %v5012 = vpack.c.b16 %v3016, %v3012
    %v5013 = vpack.c.b16 %v3017, %v3013
    %v5014 = vpack.c.b16 %v3022, %v3018
    %v5015 = vpack.c.b16 %v3023, %v3019
    %v5016 = vpack.c.b16 %v3024, %v3020
    %v5017 = vpack.c.b16 %v3025, %v3021
    %v5018 = vpack.c.b16 %v3030, %v3026
    %v5019 = vpack.c.b16 %v3031, %v3027
    %v5020 = vpack.c.b16 %v3032, %v3028
    %v5021 = vpack.c.b16 %v3033, %v3029
    %v5022 = vpack.c.b16 %v3038, %v3034
    %v5023 = vpack.c.b16 %v3039, %v3035
    %v5024 = vpack.c.b16 %v3040, %v3036
    %v5025 = vpack.c.b16 %v3041, %v3037
    %v5026 = vpack.c.b16 %v3046, %v3042
    %v5027 = vpack.c.b16 %v3047, %v3043
    %v5028 = vpack.c.b16 %v3048, %v3044
    %v5029 = vpack.c.b16 %v3049, %v3045
    %v5030 = vpack.c.b16 %v3054, %v3050
    %v5031 = vpack.c.b16 %v3055, %v3051
    %v5032 = vpack.c.b16 %v3056, %v3052
    %v5033 = vpack.c.b16 %v3057, %v3053
    %v5034 = vpack.c.b16 %v3062, %v3058
    %v5035 = vpack.c.b16 %v3063, %v3059
    %v5036 = vpack.c.b16 %v3064, %v3060
    %v5037 = vpack.c.b16 %v3065, %v3061
    %v5038 = vpack.c.b16 %v3070, %v3066
    %v5039 = vpack.c.b16 %v3071, %v3067
    %v5040 = vpack.c.b16 %v3072, %v3068
    %v5041 = vpack.c.b16 %v3073, %v3069
    %v5042 = vpack.c.b16 %v3078, %v3074
    %v5043 = vpack.c.b16 %v3079, %v3075
    %v5044 = vpack.c.b16 %v3080, %v3076
    %v5045 = vpack.c.b16 %v3081, %v3077
    %v5046 = vpack.c.b16 %v3086, %v3082
    %v5047 = vpack.c.b16 %v3087, %v3083
    %v5048 = vpack.c.b16 %v3088, %v3084
    %v5049 = vpack.c.b16 %v3089, %v3085
    %v5050 = vpack.c.b16 %v3094, %v3090
    %v5051 = vpack.c.b16 %v3095, %v3091
    %v5052 = vpack.c.b16 %v3096, %v3092
    %v5053 = vpack.c.b16 %v3097, %v3093
    %v5054 = vpack.c.b16 %v3102, %v3098
    %v5055 = vpack.c.b16 %v3103, %v3099
    %v5056 = vpack.c.b16 %v3104, %v3100
    %v5057 = vpack.c.b16 %v3105, %v3101
    %v5058 = vpack.c.b16 %v3110, %v3106
    %v5059 = vpack.c.b16 %v3111, %v3107
    %v5060 = vpack.c.b16 %v3112, %v3108
    %v5061 = vpack.c.b16 %v3113, %v3109
    %v5062 = vpack.c.b16 %v3118, %v3114
    %v5063 = vpack.c.b16 %v3119, %v3115
    %v5064 = vpack.c.b16 %v3120, %v3116
    %v5065 = vpack.c.b16 %v3121, %v3117
    %v5066 = vpack.c.b16 %v3126, %v3122
    %v5067 = vpack.c.b16 %v3127, %v3123
    %v5068 = vpack.c.b16 %v3128, %v3124
    %v5069 = vpack.c.b16 %v3129, %v3125
    %v5070 = vpack.c.b16 %v3134, %v3130
    %v5071 = vpack.c.b16 %v3135, %v3131
    %v5072 = vpack.c.b16 %v3136, %v3132
    %v5073 = vpack.c.b16 %v3137, %v3133
    %v5074 = vpack.c.b16 %v3142, %v3138
    %v5075 = vpack.c.b16 %v3143, %v3139
    %v5076 = vpack.c.b16 %v3144, %v3140
    %v5077 = vpack.c.b16 %v3145, %v3141
    %v5078 = vpack.c.b16 %v3150, %v3146
    %v5079 = vpack.c.b16 %v3151, %v3147
    %v5080 = vpack.c.b16 %v3152, %v3148
    %v5081 = vpack.c.b16 %v3153, %v3149
    %v5082 = vpack.c.b16 %v3158, %v3154
    %v5083 = vpack.c.b16 %v3159, %v3155
    %v5084 = vpack.c.b16 %v3160, %v3156
    %v5085 = vpack.c.b16 %v3161, %v3157
    %v5086 = vpack.c.b16 %v3166, %v3162
    %v5087 = vpack.c.b16 %v3167, %v3163
    %v5088 = vpack.c.b16 %v3168, %v3164
    %v5089 = vpack.c.b16 %v3169, %v3165
    %v5090 = vpack.c.b16 %v3174, %v3170
    %v5091 = vpack.c.b16 %v3175, %v3171
    %v5092 = vpack.c.b16 %v3176, %v3172
    %v5093 = vpack.c.b16 %v3177, %v3173
    %v5094 = vpack.c.b16 %v3182, %v3178
    %v5095 = vpack.c.b16 %v3183, %v3179
    %v5096 = vpack.c.b16 %v3184, %v3180
    %v5097 = vpack.c.b16 %v3185, %v3181
    %v5098 = vpack.c.b16 %v3190, %v3186
    %v5099 = vpack.c.b16 %v3191, %v3187
    %v5100 = vpack.c.b16 %v3192, %v3188
    %v5101 = vpack.c.b16 %v3193, %v3189
    %v5102 = vpack.c.b16 %v3198, %v3194
    %v5103 = vpack.c.b16 %v3199, %v3195
    %v5104 = vpack.c.b16 %v3200, %v3196
    %v5105 = vpack.c.b16 %v3201, %v3197
    %v5106 = vpack.c.b16 %v3206, %v3202
    %v5107 = vpack.c.b16 %v3207, %v3203
    %v5108 = vpack.c.b16 %v3208, %v3204
    %v5109 = vpack.c.b16 %v3209, %v3205
    %v5110 = vpack.c.b16 %v3214, %v3210
    %v5111 = vpack.c.b16 %v3215, %v3211
    %v5112 = vpack.c.b16 %v3216, %v3212
    %v5113 = vpack.c.b16 %v3217, %v3213
    %v5114 = vpack.c.b16 %v3222, %v3218
    %v5115 = vpack.c.b16 %v3223, %v3219
    %v5116 = vpack.c.b16 %v3224, %v3220
    %v5117 = vpack.c.b16 %v3225, %v3221
    %v5118 = vpack.c.b16 %v3230, %v3226
    %v5119 = vpack.c.b16 %v3231, %v3227
    %v5120 = vpack.c.b16 %v3232, %v3228
    %v5121 = vpack.c.b16 %v3233, %v3229
    %v5122 = vpack.c.b16 %v3238, %v3234
    %v5123 = vpack.c.b16 %v3239, %v3235
    %v5124 = vpack.c.b16 %v3240, %v3236
    %v5125 = vpack.c.b16 %v3241, %v3237
    %v5126 = vpack.c.b16 %v3246, %v3242
    %v5127 = vpack.c.b16 %v3247, %v3243
    %v5128 = vpack.c.b16 %v3248, %v3244
    %v5129 = vpack.c.b16 %v3249, %v3245
    %v5130 = vpack.c.b16 %v3254, %v3250
    %v5131 = vpack.c.b16 %v3255, %v3251
    %v5132 = vpack.c.b16 %v3256, %v3252
    %v5133 = vpack.c.b16 %v3257, %v3253
    %v5134 = vpack.c.b16 %v3262, %v3258
    %v5135 = vpack.c.b16 %v3263, %v3259
    %v5136 = vpack.c.b16 %v3264, %v3260
    %v5137 = vpack.c.b16 %v3265, %v3261
    %v5138 = vpack.c.b16 %v3270, %v3266
    %v5139 = vpack.c.b16 %v3271, %v3267
    %v5140 = vpack.c.b16 %v3272, %v3268
    %v5141 = vpack.c.b16 %v3273, %v3269
    %v5142 = vpack.c.b16 %v3278, %v3274
    %v5143 = vpack.c.b16 %v3279, %v3275
    %v5144 = vpack.c.b16 %v3280, %v3276
    %v5145 = vpack.c.b16 %v3281, %v3277
    %v5146 = vpack.c.b16 %v3286, %v3282
    %v5147 = vpack.c.b16 %v3287, %v3283
    %v5148 = vpack.c.b16 %v3288, %v3284
    %v5149 = vpack.c.b16 %v3289, %v3285
    %v5150 = vpack.c.b16 %v3294, %v3290
    %v5151 = vpack.c.b16 %v3295, %v3291
    %v5152 = vpack.c.b16 %v3296, %v3292
    %v5153 = vpack.c.b16 %v3297, %v3293
    %v5154 = vpack.c.b16 %v3302, %v3298
    %v5155 = vpack.c.b16 %v3303, %v3299
    %v5156 = vpack.c.b16 %v3304, %v3300
    %v5157 = vpack.c.b16 %v3305, %v3301
    %v5158 = vpack.c.b16 %v3310, %v3306
    %v5159 = vpack.c.b16 %v3311, %v3307
    %v5160 = vpack.c.b16 %v3312, %v3308
    %v5161 = vpack.c.b16 %v3313, %v3309
    %v5162 = vpack.c.b16 %v3318, %v3314
    %v5163 = vpack.c.b16 %v3319, %v3315
    %v5164 = vpack.c.b16 %v3320, %v3316
    %v5165 = vpack.c.b16 %v3321, %v3317
    %v5166 = vpack.c.b16 %v3326, %v3322
    %v5167 = vpack.c.b16 %v3327, %v3323
    %v5168 = vpack.c.b16 %v3328, %v3324
    %v5169 = vpack.c.b16 %v3329, %v3325
    %v5170 = vpack.c.b16 %v3334, %v3330
    %v5171 = vpack.c.b16 %v3335, %v3331
    %v5172 = vpack.c.b16 %v3336, %v3332
    %v5173 = vpack.c.b16 %v3337, %v3333
    %v5174 = vpack.c.b16 %v3342, %v3338
    %v5175 = vpack.c.b16 %v3343, %v3339
    %v5176 = vpack.c.b16 %v3344, %v3340
    %v5177 = vpack.c.b16 %v3345, %v3341
    %v5178 = vpack.c.b16 %v3350, %v3346
    %v5179 = vpack.c.b16 %v3351, %v3347
    %v5180 = vpack.c.b16 %v3352, %v3348
    %v5181 = vpack.c.b16 %v3353, %v3349
    %v5182 = vpack.c.b16 %v3358, %v3354
    %v5183 = vpack.c.b16 %v3359, %v3355
    %v5184 = vpack.c.b16 %v3360, %v3356
    %v5185 = vpack.c.b16 %v3361, %v3357
    %v5186 = vpack.c.b16 %v3366, %v3362
    %v5187 = vpack.c.b16 %v3367, %v3363
    %v5188 = vpack.c.b16 %v3368, %v3364
    %v5189 = vpack.c.b16 %v3369, %v3365
    %v5190 = vpack.c.b16 %v3374, %v3370
    %v5191 = vpack.c.b16 %v3375, %v3371
    %v5192 = vpack.c.b16 %v3376, %v3372
    %v5193 = vpack.c.b16 %v3377, %v3373
    %v5194 = vpack.c.b16 %v3382, %v3378
    %v5195 = vpack.c.b16 %v3383, %v3379
    %v5196 = vpack.c.b16 %v3384, %v3380
    %v5197 = vpack.c.b16 %v3385, %v3381
    %v5198 = vpack.c.b16 %v3390, %v3386
    %v5199 = vpack.c.b16 %v3391, %v3387
    %v5200 = vpack.c.b16 %v3392, %v3388
    %v5201 = vpack.c.b16 %v3393, %v3389
    %v5202 = vpack.c.b16 %v3398, %v3394
    %v5203 = vpack.c.b16 %v3399, %v3395
    %v5204 = vpack.c.b16 %v3400, %v3396
    %v5205 = vpack.c.b16 %v3401, %v3397
    %v5206 = vpack.c.b16 %v3406, %v3402
    %v5207 = vpack.c.b16 %v3407, %v3403
    %v5208 = vpack.c.b16 %v3408, %v3404
    %v5209 = vpack.c.b16 %v3409, %v3405
    %v5210 = vpack.c.b16 %v3414, %v3410
    %v5211 = vpack.c.b16 %v3415, %v3411
    %v5212 = vpack.c.b16 %v3416, %v3412
    %v5213 = vpack.c.b16 %v3417, %v3413
    %v5214 = vpack.c.b16 %v3422, %v3418
    %v5215 = vpack.c.b16 %v3423, %v3419
    %v5216 = vpack.c.b16 %v3424, %v3420
    %v5217 = vpack.c.b16 %v3425, %v3421
    %v5218 = vpack.c.b16 %v3430, %v3426
    %v5219 = vpack.c.b16 %v3431, %v3427
    %v5220 = vpack.c.b16 %v3432, %v3428
    %v5221 = vpack.c.b16 %v3433, %v3429
    %v5222 = vpack.c.b16 %v3438, %v3434
    %v5223 = vpack.c.b16 %v3439, %v3435
    %v5224 = vpack.c.b16 %v3440, %v3436
    %v5225 = vpack.c.b16 %v3441, %v3437
    %v5226 = vpack.c.b16 %v3446, %v3442
    %v5227 = vpack.c.b16 %v3447, %v3443
    %v5228 = vpack.c.b16 %v3448, %v3444
    %v5229 = vpack.c.b16 %v3449, %v3445
    %v5230 = vpack.c.b16 %v3454, %v3450
    %v5231 = vpack.c.b16 %v3455, %v3451
    %v5232 = vpack.c.b16 %v3456, %v3452
    %v5233 = vpack.c.b16 %v3457, %v3453
    %v5234 = vpack.c.b16 %v3462, %v3458
    %v5235 = vpack.c.b16 %v3463, %v3459
    %v5236 = vpack.c.b16 %v3464, %v3460
    %v5237 = vpack.c.b16 %v3465, %v3461
    %v5238 = vpack.c.b16 %v3470, %v3466
    %v5239 = vpack.c.b16 %v3471, %v3467
    %v5240 = vpack.c.b16 %v3472, %v3468
    %v5241 = vpack.c.b16 %v3473, %v3469
    %v5242 = vpack.c.b16 %v3478, %v3474
    %v5243 = vpack.c.b16 %v3479, %v3475
    %v5244 = vpack.c.b16 %v3480, %v3476
    %v5245 = vpack.c.b16 %v3481, %v3477
    %v5246 = vpack.c.b16 %v3486, %v3482
    %v5247 = vpack.c.b16 %v3487, %v3483
    %v5248 = vpack.c.b16 %v3488, %v3484
    %v5249 = vpack.c.b16 %v3489, %v3485
    %v5250 = vpack.c.b16 %v3494, %v3490
    %v5251 = vpack.c.b16 %v3495, %v3491
    %v5252 = vpack.c.b16 %v3496, %v3492
    %v5253 = vpack.c.b16 %v3497, %v3493
    %v5254 = vpack.c.b16 %v3502, %v3498
    %v5255 = vpack.c.b16 %v3503, %v3499
    %v5256 = vpack.c.b16 %v3504, %v3500
    %v5257 = vpack.c.b16 %v3505, %v3501
    %v5258 = vpack.c.b16 %v3510, %v3506
    %v5259 = vpack.c.b16 %v3511, %v3507
    %v5260 = vpack.c.b16 %v3512, %v3508
    %v5261 = vpack.c.b16 %v3513, %v3509
    %v5262 = vpack.c.b16 %v3518, %v3514
    %v5263 = vpack.c.b16 %v3519, %v3515
    %v5264 = vpack.c.b16 %v3520, %v3516
    %v5265 = vpack.c.b16 %v3521, %v3517
    %v5266 = vpack.c.b16 %v3526, %v3522
    %v5267 = vpack.c.b16 %v3527, %v3523
    %v5268 = vpack.c.b16 %v3528, %v3524
    %v5269 = vpack.c.b16 %v3529, %v3525
    %v5270 = vpack.c.b16 %v3534, %v3530
    %v5271 = vpack.c.b16 %v3535, %v3531
    %v5272 = vpack.c.b16 %v3536, %v3532
    %v5273 = vpack.c.b16 %v3537, %v3533
    %v5274 = vpack.c.b16 %v3542, %v3538
    %v5275 = vpack.c.b16 %v3543, %v3539
    %v5276 = vpack.c.b16 %v3544, %v3540
    %v5277 = vpack.c.b16 %v3545, %v3541
    %v5278 = vpack.c.b16 %v3550, %v3546
    %v5279 = vpack.c.b16 %v3551, %v3547
    %v5280 = vpack.c.b16 %v3552, %v3548
    %v5281 = vpack.c.b16 %v3553, %v3549
    %v5282 = vpack.c.b16 %v3558, %v3554
    %v5283 = vpack.c.b16 %v3559, %v3555
    %v5284 = vpack.c.b16 %v3560, %v3556
    %v5285 = vpack.c.b16 %v3561, %v3557
    %v5286 = vpack.c.b16 %v3566, %v3562
    %v5287 = vpack.c.b16 %v3567, %v3563
    %v5288 = vpack.c.b16 %v3568, %v3564
    %v5289 = vpack.c.b16 %v3569, %v3565
    %v5290 = vpack.c.b16 %v3574, %v3570
    %v5291 = vpack.c.b16 %v3575, %v3571
    %v5292 = vpack.c.b16 %v3576, %v3572
    %v5293 = vpack.c.b16 %v3577, %v3573
    %v5294 = vpack.c.b16 %v3582, %v3578
    %v5295 = vpack.c.b16 %v3583, %v3579
    %v5296 = vpack.c.b16 %v3584, %v3580
    %v5297 = vpack.c.b16 %v3585, %v3581
    %v5298 = vpack.c.b16 %v3590, %v3586
    %v5299 = vpack.c.b16 %v3591, %v3587
    %v5300 = vpack.c.b16 %v3592, %v3588
    %v5301 = vpack.c.b16 %v3593, %v3589
    %v5302 = vpack.c.b16 %v3598, %v3594
    %v5303 = vpack.c.b16 %v3599, %v3595
    %v5304 = vpack.c.b16 %v3600, %v3596
    %v5305 = vpack.c.b16 %v3601, %v3597
    %v5306 = vpack.c.b16 %v3606, %v3602
    %v5307 = vpack.c.b16 %v3607, %v3603
    %v5308 = vpack.c.b16 %v3608, %v3604
    %v5309 = vpack.c.b16 %v3609, %v3605
    %v5310 = vpack.c.b16 %v3614, %v3610
    %v5311 = vpack.c.b16 %v3615, %v3611
    %v5312 = vpack.c.b16 %v3616, %v3612
    %v5313 = vpack.c.b16 %v3617, %v3613
    %v5314 = vpack.c.b16 %v3622, %v3618
    %v5315 = vpack.c.b16 %v3623, %v3619
    %v5316 = vpack.c.b16 %v3624, %v3620
    %v5317 = vpack.c.b16 %v3625, %v3621
    %v5318 = vpack.c.b16 %v3630, %v3626
    %v5319 = vpack.c.b16 %v3631, %v3627
    %v5320 = vpack.c.b16 %v3632, %v3628
    %v5321 = vpack.c.b16 %v3633, %v3629
    %v5322 = vpack.c.b16 %v3638, %v3634
    %v5323 = vpack.c.b16 %v3639, %v3635
    %v5324 = vpack.c.b16 %v3640, %v3636
    %v5325 = vpack.c.b16 %v3641, %v3637
    %v5326 = vpack.c.b16 %v3646, %v3642
    %v5327 = vpack.c.b16 %v3647, %v3643
    %v5328 = vpack.c.b16 %v3648, %v3644
    %v5329 = vpack.c.b16 %v3649, %v3645
    %v5330 = vpack.c.b16 %v3654, %v3650
    %v5331 = vpack.c.b16 %v3655, %v3651
    %v5332 = vpack.c.b16 %v3656, %v3652
    %v5333 = vpack.c.b16 %v3657, %v3653
    %v5334 = vpack.c.b16 %v3662, %v3658
    %v5335 = vpack.c.b16 %v3663, %v3659
    %v5336 = vpack.c.b16 %v3664, %v3660
    %v5337 = vpack.c.b16 %v3665, %v3661
    %v5338 = vpack.c.b16 %v3670, %v3666
    %v5339 = vpack.c.b16 %v3671, %v3667
    %v5340 = vpack.c.b16 %v3672, %v3668
    %v5341 = vpack.c.b16 %v3673, %v3669
    %v5342 = vpack.c.b16 %v3678, %v3674
    %v5343 = vpack.c.b16 %v3679, %v3675
    %v5344 = vpack.c.b16 %v3680, %v3676
    %v5345 = vpack.c.b16 %v3681, %v3677
    %v5346 = vpack.c.b16 %v3686, %v3682
    %v5347 = vpack.c.b16 %v3687, %v3683
    %v5348 = vpack.c.b16 %v3688, %v3684
    %v5349 = vpack.c.b16 %v3689, %v3685
    %v5350 = vpack.c.b16 %v3694, %v3690
    %v5351 = vpack.c.b16 %v3695, %v3691
    %v5352 = vpack.c.b16 %v3696, %v3692
    %v5353 = vpack.c.b16 %v3697, %v3693
    %v5354 = vpack.c.b16 %v3702, %v3698
    %v5355 = vpack.c.b16 %v3703, %v3699
    %v5356 = vpack.c.b16 %v3704, %v3700
    %v5357 = vpack.c.b16 %v3705, %v3701
    %v5358 = vpack.c.b16 %v3710, %v3706
    %v5359 = vpack.c.b16 %v3711, %v3707
    %v5360 = vpack.c.b16 %v3712, %v3708
    %v5361 = vpack.c.b16 %v3713, %v3709
    %v5362 = vpack.c.b16 %v3718, %v3714
    %v5363 = vpack.c.b16 %v3719, %v3715
    %v5364 = vpack.c.b16 %v3720, %v3716
    %v5365 = vpack.c.b16 %v3721, %v3717
    %v5366 = vpack.c.b16 %v3726, %v3722
    %v5367 = vpack.c.b16 %v3727, %v3723
    %v5368 = vpack.c.b16 %v3728, %v3724
    %v5369 = vpack.c.b16 %v3729, %v3725
    %v5370 = vpack.c.b16 %v3734, %v3730
    %v5371 = vpack.c.b16 %v3735, %v3731
    %v5372 = vpack.c.b16 %v3736, %v3732
    %v5373 = vpack.c.b16 %v3737, %v3733
    %v5374 = vpack.c.b16 %v3742, %v3738
    %v5375 = vpack.c.b16 %v3743, %v3739
    %v5376 = vpack.c.b16 %v3744, %v3740
    %v5377 = vpack.c.b16 %v3745, %v3741
    %v5378 = vpack.c.b16 %v3750, %v3746
    %v5379 = vpack.c.b16 %v3751, %v3747
    %v5380 = vpack.c.b16 %v3752, %v3748
    %v5381 = vpack.c.b16 %v3753, %v3749
    %v5382 = vpack.c.b16 %v3758, %v3754
    %v5383 = vpack.c.b16 %v3759, %v3755
    %v5384 = vpack.c.b16 %v3760, %v3756
    %v5385 = vpack.c.b16 %v3761, %v3757
    %v5386 = vpack.c.b16 %v3766, %v3762
    %v5387 = vpack.c.b16 %v3767, %v3763
    %v5388 = vpack.c.b16 %v3768, %v3764
    %v5389 = vpack.c.b16 %v3769, %v3765
    %v5390 = vpack.c.b16 %v3774, %v3770
    %v5391 = vpack.c.b16 %v3775, %v3771
    %v5392 = vpack.c.b16 %v3776, %v3772
    %v5393 = vpack.c.b16 %v3777, %v3773
    %v5394 = vpack.c.b16 %v3782, %v3778
    %v5395 = vpack.c.b16 %v3783, %v3779
    %v5396 = vpack.c.b16 %v3784, %v3780
    %v5397 = vpack.c.b16 %v3785, %v3781
    %v5398 = vpack.c.b16 %v3790, %v3786
    %v5399 = vpack.c.b16 %v3791, %v3787
    %v5400 = vpack.c.b16 %v3792, %v3788
    %v5401 = vpack.c.b16 %v3793, %v3789
    %v5402 = vpack.c.b16 %v3798, %v3794
    %v5403 = vpack.c.b16 %v3799, %v3795
    %v5404 = vpack.c.b16 %v3800, %v3796
    %v5405 = vpack.c.b16 %v3801, %v3797
    %v5406 = vpack.c.b16 %v3806, %v3802
    %v5407 = vpack.c.b16 %v3807, %v3803
    %v5408 = vpack.c.b16 %v3808, %v3804
    %v5409 = vpack.c.b16 %v3809, %v3805
    %v5410 = vpack.c.b16 %v3814, %v3810
    %v5411 = vpack.c.b16 %v3815, %v3811
    %v5412 = vpack.c.b16 %v3816, %v3812
    %v5413 = vpack.c.b16 %v3817, %v3813
    %v5414 = vpack.c.b16 %v3822, %v3818
    %v5415 = vpack.c.b16 %v3823, %v3819
    %v5416 = vpack.c.b16 %v3824, %v3820
    %v5417 = vpack.c.b16 %v3825, %v3821
    %v5418 = vpack.c.b16 %v3830, %v3826
    %v5419 = vpack.c.b16 %v3831, %v3827
    %v5420 = vpack.c.b16 %v3832, %v3828
    %v5421 = vpack.c.b16 %v3833, %v3829
    %v5422 = vpack.c.b16 %v3838, %v3834
    %v5423 = vpack.c.b16 %v3839, %v3835
    %v5424 = vpack.c.b16 %v3840, %v3836
    %v5425 = vpack.c.b16 %v3841, %v3837
    %v5426 = vpack.c.b16 %v3846, %v3842
    %v5427 = vpack.c.b16 %v3847, %v3843
    %v5428 = vpack.c.b16 %v3848, %v3844
    %v5429 = vpack.c.b16 %v3849, %v3845
    %v5430 = vpack.c.b16 %v3854, %v3850
    %v5431 = vpack.c.b16 %v3855, %v3851
    %v5432 = vpack.c.b16 %v3856, %v3852
    %v5433 = vpack.c.b16 %v3857, %v3853
    %v5434 = vpack.c.b16 %v3862, %v3858
    %v5435 = vpack.c.b16 %v3863, %v3859
    %v5436 = vpack.c.b16 %v3864, %v3860
    %v5437 = vpack.c.b16 %v3865, %v3861
    %v5438 = vpack.c.b16 %v3870, %v3866
    %v5439 = vpack.c.b16 %v3871, %v3867
    %v5440 = vpack.c.b16 %v3872, %v3868
    %v5441 = vpack.c.b16 %v3873, %v3869
    %v5442 = vpack.c.b16 %v3878, %v3874
    %v5443 = vpack.c.b16 %v3879, %v3875
    %v5444 = vpack.c.b16 %v3880, %v3876
    %v5445 = vpack.c.b16 %v3881, %v3877
    %v5446 = vpack.c.b16 %v3886, %v3882
    %v5447 = vpack.c.b16 %v3887, %v3883
    %v5448 = vpack.c.b16 %v3888, %v3884
    %v5449 = vpack.c.b16 %v3889, %v3885
    %v5450 = vpack.c.b16 %v3894, %v3890
    %v5451 = vpack.c.b16 %v3895, %v3891
    %v5452 = vpack.c.b16 %v3896, %v3892
    %v5453 = vpack.c.b16 %v3897, %v3893
    %v5454 = vpack.c.b16 %v3902, %v3898
    %v5455 = vpack.c.b16 %v3903, %v3899
    %v5456 = vpack.c.b16 %v3904, %v3900
    %v5457 = vpack.c.b16 %v3905, %v3901
    %v5458 = vpack.c.b16 %v3910, %v3906
    %v5459 = vpack.c.b16 %v3911, %v3907
    %v5460 = vpack.c.b16 %v3912, %v3908
    %v5461 = vpack.c.b16 %v3913, %v3909
    %v5462 = vpack.c.b16 %v3918, %v3914
    %v5463 = vpack.c.b16 %v3919, %v3915
    %v5464 = vpack.c.b16 %v3920, %v3916
    %v5465 = vpack.c.b16 %v3921, %v3917
    %v5466 = vpack.c.b16 %v3926, %v3922
    %v5467 = vpack.c.b16 %v3927, %v3923
    %v5468 = vpack.c.b16 %v3928, %v3924
    %v5469 = vpack.c.b16 %v3929, %v3925
    %v5470 = vpack.c.b16 %v3934, %v3930
    %v5471 = vpack.c.b16 %v3935, %v3931
    %v5472 = vpack.c.b16 %v3936, %v3932
    %v5473 = vpack.c.b16 %v3937, %v3933
    %v5474 = vpack.c.b16 %v3942, %v3938
    %v5475 = vpack.c.b16 %v3943, %v3939
    %v5476 = vpack.c.b16 %v3944, %v3940
    %v5477 = vpack.c.b16 %v3945, %v3941
    %v5478 = vpack.c.b16 %v3950, %v3946
    %v5479 = vpack.c.b16 %v3951, %v3947
    %v5480 = vpack.c.b16 %v3952, %v3948
    %v5481 = vpack.c.b16 %v3953, %v3949
    %v5482 = vpack.c.b16 %v3958, %v3954
    %v5483 = vpack.c.b16 %v3959, %v3955
    %v5484 = vpack.c.b16 %v3960, %v3956
    %v5485 = vpack.c.b16 %v3961, %v3957
    %v5486 = vpack.c.b16 %v3966, %v3962
    %v5487 = vpack.c.b16 %v3967, %v3963
    %v5488 = vpack.c.b16 %v3968, %v3964
    %v5489 = vpack.c.b16 %v3969, %v3965
    %v5490 = vpack.c.b16 %v3974, %v3970
    %v5491 = vpack.c.b16 %v3975, %v3971
    %v5492 = vpack.c.b16 %v3976, %v3972
    %v5493 = vpack.c.b16 %v3977, %v3973
    %v5494 = vpack.c.b16 %v3982, %v3978
    %v5495 = vpack.c.b16 %v3983, %v3979
    %v5496 = vpack.c.b16 %v3984, %v3980
    %v5497 = vpack.c.b16 %v3985, %v3981
    %v5498 = vpack.c.b16 %v3990, %v3986
    %v5499 = vpack.c.b16 %v3991, %v3987
    %v5500 = vpack.c.b16 %v3992, %v3988
    %v5501 = vpack.c.b16 %v3993, %v3989
    %v5502 = vpack.c.b16 %v3998, %v3994
    %v5503 = vpack.c.b16 %v3999, %v3995
    %v5504 = vpack.c.b16 %v4000, %v3996
    %v5505 = vpack.c.b16 %v4001, %v3997
    %v5506 = vpack.c.b16 %v4006, %v4002
    %v5507 = vpack.c.b16 %v4007, %v4003
    %v5508 = vpack.c.b16 %v4008, %v4004
    %v5509 = vpack.c.b16 %v4009, %v4005
    %v5510 = vpack.c.b16 %v4014, %v4010
    %v5511 = vpack.c.b16 %v4015, %v4011
    %v5512 = vpack.c.b16 %v4016, %v4012
    %v5513 = vpack.c.b16 %v4017, %v4013
    %v5514 = vpack.c.b16 %v4022, %v4018
    %v5515 = vpack.c.b16 %v4023, %v4019
    %v5516 = vpack.c.b16 %v4024, %v4020
    %v5517 = vpack.c.b16 %v4025, %v4021
    %v5518 = vpack.c.b16 %v4030, %v4026
    %v5519 = vpack.c.b16 %v4031, %v4027
    %v5520 = vpack.c.b16 %v4032, %v4028
    %v5521 = vpack.c.b16 %v4033, %v4029
    %v5522 = vpack.c.b16 %v4038, %v4034
    %v5523 = vpack.c.b16 %v4039, %v4035
    %v5524 = vpack.c.b16 %v4040, %v4036
    %v5525 = vpack.c.b16 %v4041, %v4037
    %v5526 = vpack.c.b16 %v4046, %v4042
    %v5527 = vpack.c.b16 %v4047, %v4043
    %v5528 = vpack.c.b16 %v4048, %v4044
    %v5529 = vpack.c.b16 %v4049, %v4045
    %v5530 = vpack.c.b16 %v4054, %v4050
    %v5531 = vpack.c.b16 %v4055, %v4051
    %v5532 = vpack.c.b16 %v4056, %v4052
    %v5533 = vpack.c.b16 %v4057, %v4053
    %v5534 = vpack.c.b16 %v4062, %v4058
    %v5535 = vpack.c.b16 %v4063, %v4059
    %v5536 = vpack.c.b16 %v4064, %v4060
    %v5537 = vpack.c.b16 %v4065, %v4061
    %v5538 = vpack.c.b16 %v4070, %v4066
    %v5539 = vpack.c.b16 %v4071, %v4067
    %v5540 = vpack.c.b16 %v4072, %v4068
    %v5541 = vpack.c.b16 %v4073, %v4069
    %v5542 = vpack.c.b16 %v4078, %v4074
    %v5543 = vpack.c.b16 %v4079, %v4075
    %v5544 = vpack.c.b16 %v4080, %v4076
    %v5545 = vpack.c.b16 %v4081, %v4077
    %v5546 = vpack.c.b16 %v4086, %v4082
    %v5547 = vpack.c.b16 %v4087, %v4083
    %v5548 = vpack.c.b16 %v4088, %v4084
    %v5549 = vpack.c.b16 %v4089, %v4085
    %v5550 = vpack.c.b16 %v4094, %v4090
    %v5551 = vpack.c.b16 %v4095, %v4091
    %v5552 = vpack.c.b16 %v4096, %v4092
    %v5553 = vpack.c.b16 %v4097, %v4093
    %v5554 = vpack.c.b16 %v4102, %v4098
    %v5555 = vpack.c.b16 %v4103, %v4099
    %v5556 = vpack.c.b16 %v4104, %v4100
    %v5557 = vpack.c.b16 %v4105, %v4101
    %v5558 = vpack.c.b16 %v4110, %v4106
    %v5559 = vpack.c.b16 %v4111, %v4107
    %v5560 = vpack.c.b16 %v4112, %v4108
    %v5561 = vpack.c.b16 %v4113, %v4109
    %v5562 = vpack.c.b16 %v4118, %v4114
    %v5563 = vpack.c.b16 %v4119, %v4115
    %v5564 = vpack.c.b16 %v4120, %v4116
    %v5565 = vpack.c.b16 %v4121, %v4117
    %v5566 = vpack.c.b16 %v4126, %v4122
    %v5567 = vpack.c.b16 %v4127, %v4123
    %v5568 = vpack.c.b16 %v4128, %v4124
    %v5569 = vpack.c.b16 %v4129, %v4125
    %v5570 = vpack.c.b16 %v4134, %v4130
    %v5571 = vpack.c.b16 %v4135, %v4131
    %v5572 = vpack.c.b16 %v4136, %v4132
    %v5573 = vpack.c.b16 %v4137, %v4133
    %v5574 = vpack.c.b16 %v4142, %v4138
    %v5575 = vpack.c.b16 %v4143, %v4139
    %v5576 = vpack.c.b16 %v4144, %v4140
    %v5577 = vpack.c.b16 %v4145, %v4141
    %v5578 = vpack.c.b16 %v4150, %v4146
    %v5579 = vpack.c.b16 %v4151, %v4147
    %v5580 = vpack.c.b16 %v4152, %v4148
    %v5581 = vpack.c.b16 %v4153, %v4149
    %v5582 = vpack.c.b16 %v4158, %v4154
    %v5583 = vpack.c.b16 %v4159, %v4155
    %v5584 = vpack.c.b16 %v4160, %v4156
    %v5585 = vpack.c.b16 %v4161, %v4157
    %v5586 = vpack.c.b16 %v4166, %v4162
    %v5587 = vpack.c.b16 %v4167, %v4163
    %v5588 = vpack.c.b16 %v4168, %v4164
    %v5589 = vpack.c.b16 %v4169, %v4165
    %v5590 = vpack.c.b16 %v4174, %v4170
    %v5591 = vpack.c.b16 %v4175, %v4171
    %v5592 = vpack.c.b16 %v4176, %v4172
    %v5593 = vpack.c.b16 %v4177, %v4173
    %v5594 = vpack.c.b16 %v4182, %v4178
    %v5595 = vpack.c.b16 %v4183, %v4179
    %v5596 = vpack.c.b16 %v4184, %v4180
    %v5597 = vpack.c.b16 %v4185, %v4181
    %v5598 = vpack.c.b16 %v4190, %v4186
    %v5599 = vpack.c.b16 %v4191, %v4187
    %v5600 = vpack.c.b16 %v4192, %v4188
    %v5601 = vpack.c.b16 %v4193, %v4189
    %v5602 = vpack.c.b16 %v4198, %v4194
    %v5603 = vpack.c.b16 %v4199, %v4195
    %v5604 = vpack.c.b16 %v4200, %v4196
    %v5605 = vpack.c.b16 %v4201, %v4197
    %v5606 = vpack.c.b16 %v4206, %v4202
    %v5607 = vpack.c.b16 %v4207, %v4203
    %v5608 = vpack.c.b16 %v4208, %v4204
    %v5609 = vpack.c.b16 %v4209, %v4205
    %v5610 = vpack.c.b16 %v4214, %v4210
    %v5611 = vpack.c.b16 %v4215, %v4211
    %v5612 = vpack.c.b16 %v4216, %v4212
    %v5613 = vpack.c.b16 %v4217, %v4213
    %v5614 = vpack.c.b16 %v4222, %v4218
    %v5615 = vpack.c.b16 %v4223, %v4219
    %v5616 = vpack.c.b16 %v4224, %v4220
    %v5617 = vpack.c.b16 %v4225, %v4221
    %v5618 = vpack.c.b16 %v4230, %v4226
    %v5619 = vpack.c.b16 %v4231, %v4227
    %v5620 = vpack.c.b16 %v4232, %v4228
    %v5621 = vpack.c.b16 %v4233, %v4229
    %v5622 = vpack.c.b16 %v4238, %v4234
    %v5623 = vpack.c.b16 %v4239, %v4235
    %v5624 = vpack.c.b16 %v4240, %v4236
    %v5625 = vpack.c.b16 %v4241, %v4237
    %v5626 = vpack.c.b16 %v4246, %v4242
    %v5627 = vpack.c.b16 %v4247, %v4243
    %v5628 = vpack.c.b16 %v4248, %v4244
    %v5629 = vpack.c.b16 %v4249, %v4245
    %v5630 = vpack.c.b16 %v4254, %v4250
    %v5631 = vpack.c.b16 %v4255, %v4251
    %v5632 = vpack.c.b16 %v4256, %v4252
    %v5633 = vpack.c.b16 %v4257, %v4253
    %v5634 = vpack.c.b16 %v4262, %v4258
    %v5635 = vpack.c.b16 %v4263, %v4259
    %v5636 = vpack.c.b16 %v4264, %v4260
    %v5637 = vpack.c.b16 %v4265, %v4261
    %v5638 = vpack.c.b16 %v4270, %v4266
    %v5639 = vpack.c.b16 %v4271, %v4267
    %v5640 = vpack.c.b16 %v4272, %v4268
    %v5641 = vpack.c.b16 %v4273, %v4269
    %v5642 = vpack.c.b16 %v4278, %v4274
    %v5643 = vpack.c.b16 %v4279, %v4275
    %v5644 = vpack.c.b16 %v4280, %v4276
    %v5645 = vpack.c.b16 %v4281, %v4277
    %v5646 = vpack.c.b16 %v4286, %v4282
    %v5647 = vpack.c.b16 %v4287, %v4283
    %v5648 = vpack.c.b16 %v4288, %v4284
    %v5649 = vpack.c.b16 %v4289, %v4285
    %v5650 = vpack.c.b16 %v4294, %v4290
    %v5651 = vpack.c.b16 %v4295, %v4291
    %v5652 = vpack.c.b16 %v4296, %v4292
    %v5653 = vpack.c.b16 %v4297, %v4293
    %v5654 = vpack.c.b16 %v4302, %v4298
    %v5655 = vpack.c.b16 %v4303, %v4299
    %v5656 = vpack.c.b16 %v4304, %v4300
    %v5657 = vpack.c.b16 %v4305, %v4301
    %v5658 = vpack.c.b16 %v4310, %v4306
    %v5659 = vpack.c.b16 %v4311, %v4307
    %v5660 = vpack.c.b16 %v4312, %v4308
    %v5661 = vpack.c.b16 %v4313, %v4309
    %v5662 = vpack.c.b16 %v4318, %v4314
    %v5663 = vpack.c.b16 %v4319, %v4315
    %v5664 = vpack.c.b16 %v4320, %v4316
    %v5665 = vpack.c.b16 %v4321, %v4317
    %v5666 = vpack.c.b16 %v4326, %v4322
    %v5667 = vpack.c.b16 %v4327, %v4323
    %v5668 = vpack.c.b16 %v4328, %v4324
    %v5669 = vpack.c.b16 %v4329, %v4325
    %v5670 = vpack.c.b16 %v4334, %v4330
    %v5671 = vpack.c.b16 %v4335, %v4331
    %v5672 = vpack.c.b16 %v4336, %v4332
    %v5673 = vpack.c.b16 %v4337, %v4333
    %v5674 = vpack.c.b16 %v4342, %v4338
    %v5675 = vpack.c.b16 %v4343, %v4339
    %v5676 = vpack.c.b16 %v4344, %v4340
    %v5677 = vpack.c.b16 %v4345, %v4341
    %v5678 = vpack.c.b16 %v4350, %v4346
    %v5679 = vpack.c.b16 %v4351, %v4347
    %v5680 = vpack.c.b16 %v4352, %v4348
    %v5681 = vpack.c.b16 %v4353, %v4349
    %v5682 = vpack.c.b16 %v4358, %v4354
    %v5683 = vpack.c.b16 %v4359, %v4355
    %v5684 = vpack.c.b16 %v4360, %v4356
    %v5685 = vpack.c.b16 %v4361, %v4357
    %v5686 = vpack.c.b16 %v4366, %v4362
    %v5687 = vpack.c.b16 %v4367, %v4363
    %v5688 = vpack.c.b16 %v4368, %v4364
    %v5689 = vpack.c.b16 %v4369, %v4365
    %v5690 = vpack.c.b16 %v4374, %v4370
    %v5691 = vpack.c.b16 %v4375, %v4371
    %v5692 = vpack.c.b16 %v4376, %v4372
    %v5693 = vpack.c.b16 %v4377, %v4373
    %v5694 = vpack.c.b16 %v4382, %v4378
    %v5695 = vpack.c.b16 %v4383, %v4379
    %v5696 = vpack.c.b16 %v4384, %v4380
    %v5697 = vpack.c.b16 %v4385, %v4381
    %v5698 = vpack.c.b16 %v4390, %v4386
    %v5699 = vpack.c.b16 %v4391, %v4387
    %v5700 = vpack.c.b16 %v4392, %v4388
    %v5701 = vpack.c.b16 %v4393, %v4389
    %v5702 = vpack.c.b16 %v4398, %v4394
    %v5703 = vpack.c.b16 %v4399, %v4395
    %v5704 = vpack.c.b16 %v4400, %v4396
    %v5705 = vpack.c.b16 %v4401, %v4397
    %v5706 = vpack.c.b16 %v4406, %v4402
    %v5707 = vpack.c.b16 %v4407, %v4403
    %v5708 = vpack.c.b16 %v4408, %v4404
    %v5709 = vpack.c.b16 %v4409, %v4405
    %v5710 = vpack.c.b16 %v4414, %v4410
    %v5711 = vpack.c.b16 %v4415, %v4411
    %v5712 = vpack.c.b16 %v4416, %v4412
    %v5713 = vpack.c.b16 %v4417, %v4413
    %v5714 = vpack.c.b16 %v4422, %v4418
    %v5715 = vpack.c.b16 %v4423, %v4419
    %v5716 = vpack.c.b16 %v4424, %v4420
    %v5717 = vpack.c.b16 %v4425, %v4421
    %v5718 = vpack.c.b16 %v4430, %v4426
    %v5719 = vpack.c.b16 %v4431, %v4427
    %v5720 = vpack.c.b16 %v4432, %v4428
    %v5721 = vpack.c.b16 %v4433, %v4429
    %v5722 = vpack.c.b16 %v4438, %v4434
    %v5723 = vpack.c.b16 %v4439, %v4435
    %v5724 = vpack.c.b16 %v4440, %v4436
    %v5725 = vpack.c.b16 %v4441, %v4437
    %v5726 = vpack.c.b16 %v4446, %v4442
    %v5727 = vpack.c.b16 %v4447, %v4443
    %v5728 = vpack.c.b16 %v4448, %v4444
    %v5729 = vpack.c.b16 %v4449, %v4445
    %v5730 = vpack.c.b16 %v4454, %v4450
    %v5731 = vpack.c.b16 %v4455, %v4451
    %v5732 = vpack.c.b16 %v4456, %v4452
    %v5733 = vpack.c.b16 %v4457, %v4453
    %v5734 = vpack.c.b16 %v4462, %v4458
    %v5735 = vpack.c.b16 %v4463, %v4459
    %v5736 = vpack.c.b16 %v4464, %v4460
    %v5737 = vpack.c.b16 %v4465, %v4461
    %v5738 = vpack.c.b16 %v4470, %v4466
    %v5739 = vpack.c.b16 %v4471, %v4467
    %v5740 = vpack.c.b16 %v4472, %v4468
    %v5741 = vpack.c.b16 %v4473, %v4469
    %v5742 = vpack.c.b16 %v4478, %v4474
    %v5743 = vpack.c.b16 %v4479, %v4475
    %v5744 = vpack.c.b16 %v4480, %v4476
    %v5745 = vpack.c.b16 %v4481, %v4477
    %v5746 = vpack.c.b16 %v4486, %v4482
    %v5747 = vpack.c.b16 %v4487, %v4483
    %v5748 = vpack.c.b16 %v4488, %v4484
    %v5749 = vpack.c.b16 %v4489, %v4485
    %v5750 = vpack.c.b16 %v4494, %v4490
    %v5751 = vpack.c.b16 %v4495, %v4491
    %v5752 = vpack.c.b16 %v4496, %v4492
    %v5753 = vpack.c.b16 %v4497, %v4493
    %v5754 = vpack.c.b16 %v4502, %v4498
    %v5755 = vpack.c.b16 %v4503, %v4499
    %v5756 = vpack.c.b16 %v4504, %v4500
    %v5757 = vpack.c.b16 %v4505, %v4501
    %v5758 = vpack.c.b16 %v4510, %v4506
    %v5759 = vpack.c.b16 %v4511, %v4507
    %v5760 = vpack.c.b16 %v4512, %v4508
    %v5761 = vpack.c.b16 %v4513, %v4509
    %v5762 = vpack.c.b16 %v4518, %v4514
    %v5763 = vpack.c.b16 %v4519, %v4515
    %v5764 = vpack.c.b16 %v4520, %v4516
    %v5765 = vpack.c.b16 %v4521, %v4517
    %v5766 = vpack.c.b16 %v4526, %v4522
    %v5767 = vpack.c.b16 %v4527, %v4523
    %v5768 = vpack.c.b16 %v4528, %v4524
    %v5769 = vpack.c.b16 %v4529, %v4525
    %v5770 = vpack.c.b16 %v4534, %v4530
    %v5771 = vpack.c.b16 %v4535, %v4531
    %v5772 = vpack.c.b16 %v4536, %v4532
    %v5773 = vpack.c.b16 %v4537, %v4533
    %v5774 = vpack.c.b16 %v4542, %v4538
    %v5775 = vpack.c.b16 %v4543, %v4539
    %v5776 = vpack.c.b16 %v4544, %v4540
    %v5777 = vpack.c.b16 %v4545, %v4541
    %v5778 = vpack.c.b16 %v4550, %v4546
    %v5779 = vpack.c.b16 %v4551, %v4547
    %v5780 = vpack.c.b16 %v4552, %v4548
    %v5781 = vpack.c.b16 %v4553, %v4549
    %v5782 = vpack.c.b16 %v4558, %v4554
    %v5783 = vpack.c.b16 %v4559, %v4555
    %v5784 = vpack.c.b16 %v4560, %v4556
    %v5785 = vpack.c.b16 %v4561, %v4557
    %v5786 = vpack.c.b16 %v4566, %v4562
    %v5787 = vpack.c.b16 %v4567, %v4563
    %v5788 = vpack.c.b16 %v4568, %v4564
    %v5789 = vpack.c.b16 %v4569, %v4565
    %v5790 = vpack.c.b16 %v4574, %v4570
    %v5791 = vpack.c.b16 %v4575, %v4571
    %v5792 = vpack.c.b16 %v4576, %v4572
    %v5793 = vpack.c.b16 %v4577, %v4573
    %v5794 = vpack.c.b16 %v4582, %v4578
    %v5795 = vpack.c.b16 %v4583, %v4579
    %v5796 = vpack.c.b16 %v4584, %v4580
    %v5797 = vpack.c.b16 %v4585, %v4581
    %v5798 = vpack.c.b16 %v4590, %v4586
    %v5799 = vpack.c.b16 %v4591, %v4587
    %v5800 = vpack.c.b16 %v4592, %v4588
    %v5801 = vpack.c.b16 %v4593, %v4589
    %v5802 = vpack.c.b16 %v4598, %v4594
    %v5803 = vpack.c.b16 %v4599, %v4595
    %v5804 = vpack.c.b16 %v4600, %v4596
    %v5805 = vpack.c.b16 %v4601, %v4597
    %v5806 = vpack.c.b16 %v4606, %v4602
    %v5807 = vpack.c.b16 %v4607, %v4603
    %v5808 = vpack.c.b16 %v4608, %v4604
    %v5809 = vpack.c.b16 %v4609, %v4605
    %v5810 = vpack.c.b16 %v4614, %v4610
    %v5811 = vpack.c.b16 %v4615, %v4611
    %v5812 = vpack.c.b16 %v4616, %v4612
    %v5813 = vpack.c.b16 %v4617, %v4613
    %v5814 = vpack.c.b16 %v4622, %v4618
    %v5815 = vpack.c.b16 %v4623, %v4619
    %v5816 = vpack.c.b16 %v4624, %v4620
    %v5817 = vpack.c.b16 %v4625, %v4621
    %v5818 = vpack.c.b16 %v4630, %v4626
    %v5819 = vpack.c.b16 %v4631, %v4627
    %v5820 = vpack.c.b16 %v4632, %v4628
    %v5821 = vpack.c.b16 %v4633, %v4629
    %v5822 = vpack.c.b16 %v4638, %v4634
    %v5823 = vpack.c.b16 %v4639, %v4635
    %v5824 = vpack.c.b16 %v4640, %v4636
    %v5825 = vpack.c.b16 %v4641, %v4637
    %v5826 = vpack.c.b16 %v4646, %v4642
    %v5827 = vpack.c.b16 %v4647, %v4643
    %v5828 = vpack.c.b16 %v4648, %v4644
    %v5829 = vpack.c.b16 %v4649, %v4645
    %v5830 = vpack.c.b16 %v4654, %v4650
    %v5831 = vpack.c.b16 %v4655, %v4651
    %v5832 = vpack.c.b16 %v4656, %v4652
    %v5833 = vpack.c.b16 %v4657, %v4653
    %v5834 = vpack.c.b16 %v4662, %v4658
    %v5835 = vpack.c.b16 %v4663, %v4659
    %v5836 = vpack.c.b16 %v4664, %v4660
    %v5837 = vpack.c.b16 %v4665, %v4661
    %v5838 = vpack.c.b16 %v4670, %v4666
    %v5839 = vpack.c.b16 %v4671, %v4667
    %v5840 = vpack.c.b16 %v4672, %v4668
    %v5841 = vpack.c.b16 %v4673, %v4669
    %v5842 = vpack.c.b16 %v4678, %v4674
    %v5843 = vpack.c.b16 %v4679, %v4675
    %v5844 = vpack.c.b16 %v4680, %v4676
    %v5845 = vpack.c.b16 %v4681, %v4677
    %v5846 = vpack.c.b16 %v4686, %v4682
    %v5847 = vpack.c.b16 %v4687, %v4683
    %v5848 = vpack.c.b16 %v4688, %v4684
    %v5849 = vpack.c.b16 %v4689, %v4685
    %v5850 = vpack.c.b16 %v4694, %v4690
    %v5851 = vpack.c.b16 %v4695, %v4691
    %v5852 = vpack.c.b16 %v4696, %v4692
    %v5853 = vpack.c.b16 %v4697, %v4693
    %v5854 = vpack.c.b16 %v4702, %v4698
    %v5855 = vpack.c.b16 %v4703, %v4699
    %v5856 = vpack.c.b16 %v4704, %v4700
    %v5857 = vpack.c.b16 %v4705, %v4701
    %v5858 = vpack.c.b16 %v4710, %v4706
    %v5859 = vpack.c.b16 %v4711, %v4707
    %v5860 = vpack.c.b16 %v4712, %v4708
    %v5861 = vpack.c.b16 %v4713, %v4709
    %v5862 = vpack.c.b16 %v4718, %v4714
    %v5863 = vpack.c.b16 %v4719, %v4715
    %v5864 = vpack.c.b16 %v4720, %v4716
    %v5865 = vpack.c.b16 %v4721, %v4717
    %v5866 = vpack.c.b16 %v4726, %v4722
    %v5867 = vpack.c.b16 %v4727, %v4723
    %v5868 = vpack.c.b16 %v4728, %v4724
    %v5869 = vpack.c.b16 %v4729, %v4725
    %v5870 = vpack.c.b16 %v4734, %v4730
    %v5871 = vpack.c.b16 %v4735, %v4731
    %v5872 = vpack.c.b16 %v4736, %v4732
    %v5873 = vpack.c.b16 %v4737, %v4733
    %v5874 = vpack.c.b16 %v4742, %v4738
    %v5875 = vpack.c.b16 %v4743, %v4739
    %v5876 = vpack.c.b16 %v4744, %v4740
    %v5877 = vpack.c.b16 %v4745, %v4741
    %v5878 = vpack.c.b16 %v4750, %v4746
    %v5879 = vpack.c.b16 %v4751, %v4747
    %v5880 = vpack.c.b16 %v4752, %v4748
    %v5881 = vpack.c.b16 %v4753, %v4749
    %v5882 = vpack.c.b16 %v4758, %v4754
    %v5883 = vpack.c.b16 %v4759, %v4755
    %v5884 = vpack.c.b16 %v4760, %v4756
    %v5885 = vpack.c.b16 %v4761, %v4757
    %v5886 = vpack.c.b16 %v4766, %v4762
    %v5887 = vpack.c.b16 %v4767, %v4763
    %v5888 = vpack.c.b16 %v4768, %v4764
    %v5889 = vpack.c.b16 %v4769, %v4765
    %7010 = vmatprep.subr.bf16.mxu0 %v4799
    %7011 = vmatpush1.bf16.msra.mxu0 %v4798
    %7012 = vmatprep.subr.bf16.mxu0 %v4795
    %7013 = vmatpush1.bf16.msra.mxu0 %v4794
    %7014 = vmatprep.subr.bf16.mxu0 %v4791
    %7015 = vmatpush1.bf16.msra.mxu0 %v4790
    %7016 = vmatprep.subr.bf16.mxu0 %v4787
    %7017 = vmatpush1.bf16.msra.mxu0 %v4786
    %7018 = vmatprep.subr.bf16.mxu0 %v4783
    %7019 = vmatpush1.bf16.msra.mxu0 %v4782
    %7020 = vmatprep.subr.bf16.mxu0 %v4779
    %7021 = vmatpush1.bf16.msra.mxu0 %v4778
    %7022 = vmatprep.subr.bf16.mxu0 %v4775
    %7023 = vmatpush1.bf16.msra.mxu0 %v4774
    %7024 = vmatprep.subr.bf16.mxu0 %v4771
    %7025 = vmatpush1.bf16.msra.mxu0 %v4770
    %7026 = vmatprep.subr.bf16.mxu0 %v4831
    %7027 = vmatpush2.bf16.msra.mxu0 %v4830
    %7028 = vmatprep.subr.bf16.mxu0 %v4827
    %7029 = vmatpush2.bf16.msra.mxu0 %v4826
    %7030 = vmatprep.subr.bf16.mxu0 %v4823
    %7031 = vmatpush2.bf16.msra.mxu0 %v4822
    %7032 = vmatprep.subr.bf16.mxu0 %v4819
    %7033 = vmatpush2.bf16.msra.mxu0 %v4818
    %7034 = vmatprep.subr.bf16.mxu0 %v4815
    %7035 = vmatpush2.bf16.msra.mxu0 %v4814
    %7036 = vmatprep.subr.bf16.mxu0 %v4811
    %7037 = vmatpush2.bf16.msra.mxu0 %v4810
    %7038 = vmatprep.subr.bf16.mxu0 %v4807
    %7039 = vmatpush2.bf16.msra.mxu0 %v4806
    %7040 = vmatprep.subr.bf16.mxu0 %v4803
    %7041 = vmatpush2.bf16.msra.mxu0 %v4802
    %7042 = vmatprep.mubr.bf16.mxu0 %v234
    %7043 = vmatmul.mubr.bf16.gmra.mxu0 %v233
    %v7044 = vpop.f32.mrf.mxu0
    %v7045 = vadd.f32 %v1393, %v7044
    %v7046 = vpop.f32.mrf.mxu0
    %v7047 = vadd.f32 %v1397, %v7046
    %v7048 = vpop.f32.mrf.mxu0
    %v7049 = vpop.f32.mrf.mxu0
    %7050 = vdwg.mxu0
    %7051 = vmatprep.subr.bf16.mxu0 %v4863
    %7052 = vmatpush1.bf16.msra.mxu0 %v4862
    %7053 = vmatprep.subr.bf16.mxu0 %v4859
    %7054 = vmatpush1.bf16.msra.mxu0 %v4858
    %7055 = vmatprep.subr.bf16.mxu0 %v4855
    %7056 = vmatpush1.bf16.msra.mxu0 %v4854
    %7057 = vmatprep.subr.bf16.mxu0 %v4851
    %7058 = vmatpush1.bf16.msra.mxu0 %v4850
    %7059 = vmatprep.subr.bf16.mxu0 %v4847
    %7060 = vmatpush1.bf16.msra.mxu0 %v4846
    %7061 = vmatprep.subr.bf16.mxu0 %v4843
    %7062 = vmatpush1.bf16.msra.mxu0 %v4842
    %7063 = vmatprep.subr.bf16.mxu0 %v4839
    %7064 = vmatpush1.bf16.msra.mxu0 %v4838
    %7065 = vmatprep.subr.bf16.mxu0 %v4835
    %7066 = vmatpush1.bf16.msra.mxu0 %v4834
    %7067 = vmatprep.subr.bf16.mxu0 %v4895
    %7068 = vmatpush2.bf16.msra.mxu0 %v4894
    %7069 = vmatprep.subr.bf16.mxu0 %v4891
    %7070 = vmatpush2.bf16.msra.mxu0 %v4890
    %7071 = vmatprep.subr.bf16.mxu0 %v4887
    %7072 = vmatpush2.bf16.msra.mxu0 %v4886
    %7073 = vmatprep.subr.bf16.mxu0 %v4883
    %7074 = vmatpush2.bf16.msra.mxu0 %v4882
    %7075 = vmatprep.subr.bf16.mxu0 %v4879
    %7076 = vmatpush2.bf16.msra.mxu0 %v4878
    %7077 = vmatprep.subr.bf16.mxu0 %v4875
    %7078 = vmatpush2.bf16.msra.mxu0 %v4874
    %7079 = vmatprep.subr.bf16.mxu0 %v4871
    %7080 = vmatpush2.bf16.msra.mxu0 %v4870
    %7081 = vmatprep.subr.bf16.mxu0 %v4867
    %7082 = vmatpush2.bf16.msra.mxu0 %v4866
    %7083 = vmatprep.mubr.bf16.mxu0 %v236
    %7084 = vmatmul.mubr.bf16.gmra.mxu0 %v235
    %v7085 = vpop.f32.mrf.mxu0
    %v7086 = vadd.f32 %v7045, %v7085
    %v7087 = vpop.f32.mrf.mxu0
    %v7088 = vadd.f32 %v7047, %v7087
    %v7089 = vpop.f32.mrf.mxu0
    %v7090 = vpop.f32.mrf.mxu0
    %7091 = vdwg.mxu0
    %7092 = vmatprep.subr.bf16.mxu0 %v4927
    %7093 = vmatpush1.bf16.msra.mxu0 %v4926
    %7094 = vmatprep.subr.bf16.mxu0 %v4923
    %7095 = vmatpush1.bf16.msra.mxu0 %v4922
    %7096 = vmatprep.subr.bf16.mxu0 %v4919
    %7097 = vmatpush1.bf16.msra.mxu0 %v4918
    %7098 = vmatprep.subr.bf16.mxu0 %v4915
    %7099 = vmatpush1.bf16.msra.mxu0 %v4914
    %7100 = vmatprep.subr.bf16.mxu0 %v4911
    %7101 = vmatpush1.bf16.msra.mxu0 %v4910
    %7102 = vmatprep.subr.bf16.mxu0 %v4907
    %7103 = vmatpush1.bf16.msra.mxu0 %v4906
    %7104 = vmatprep.subr.bf16.mxu0 %v4903
    %7105 = vmatpush1.bf16.msra.mxu0 %v4902
    %7106 = vmatprep.subr.bf16.mxu0 %v4899
    %7107 = vmatpush1.bf16.msra.mxu0 %v4898
    %7108 = vmatprep.subr.bf16.mxu0 %v4959
    %7109 = vmatpush2.bf16.msra.mxu0 %v4958
    %7110 = vmatprep.subr.bf16.mxu0 %v4955
    %7111 = vmatpush2.bf16.msra.mxu0 %v4954
    %7112 = vmatprep.subr.bf16.mxu0 %v4951
    %7113 = vmatpush2.bf16.msra.mxu0 %v4950
    %7114 = vmatprep.subr.bf16.mxu0 %v4947
    %7115 = vmatpush2.bf16.msra.mxu0 %v4946
    %7116 = vmatprep.subr.bf16.mxu0 %v4943
    %7117 = vmatpush2.bf16.msra.mxu0 %v4942
    %7118 = vmatprep.subr.bf16.mxu0 %v4939
    %7119 = vmatpush2.bf16.msra.mxu0 %v4938
    %7120 = vmatprep.subr.bf16.mxu0 %v4935
    %7121 = vmatpush2.bf16.msra.mxu0 %v4934
    %7122 = vmatprep.subr.bf16.mxu0 %v4931
    %7123 = vmatpush2.bf16.msra.mxu0 %v4930
    %7124 = vmatprep.mubr.bf16.mxu0 %v238
    %7125 = vmatmul.mubr.bf16.gmra.mxu0 %v237
    %v7126 = vpop.f32.mrf.mxu0
    %v7127 = vadd.f32 %v7086, %v7126
    %v7128 = vpop.f32.mrf.mxu0
    %v7129 = vadd.f32 %v7088, %v7128
    %v7130 = vpop.f32.mrf.mxu0
    %v7131 = vpop.f32.mrf.mxu0
    %7132 = vdwg.mxu0
    %7133 = vmatprep.subr.bf16.mxu0 %v4991
    %7134 = vmatpush1.bf16.msra.mxu0 %v4990
    %7135 = vmatprep.subr.bf16.mxu0 %v4987
    %7136 = vmatpush1.bf16.msra.mxu0 %v4986
    %7137 = vmatprep.subr.bf16.mxu0 %v4983
    %7138 = vmatpush1.bf16.msra.mxu0 %v4982
    %7139 = vmatprep.subr.bf16.mxu0 %v4979
    %7140 = vmatpush1.bf16.msra.mxu0 %v4978
    %7141 = vmatprep.subr.bf16.mxu0 %v4975
    %7142 = vmatpush1.bf16.msra.mxu0 %v4974
    %7143 = vmatprep.subr.bf16.mxu0 %v4971
    %7144 = vmatpush1.bf16.msra.mxu0 %v4970
    %7145 = vmatprep.subr.bf16.mxu0 %v4967
    %7146 = vmatpush1.bf16.msra.mxu0 %v4966
    %7147 = vmatprep.subr.bf16.mxu0 %v4963
    %7148 = vmatpush1.bf16.msra.mxu0 %v4962
    %7149 = vmatprep.subr.bf16.mxu0 %v5023
    %7150 = vmatpush2.bf16.msra.mxu0 %v5022
    %7151 = vmatprep.subr.bf16.mxu0 %v5019
    %7152 = vmatpush2.bf16.msra.mxu0 %v5018
    %7153 = vmatprep.subr.bf16.mxu0 %v5015
    %7154 = vmatpush2.bf16.msra.mxu0 %v5014
    %7155 = vmatprep.subr.bf16.mxu0 %v5011
    %7156 = vmatpush2.bf16.msra.mxu0 %v5010
    %7157 = vmatprep.subr.bf16.mxu0 %v5007
    %7158 = vmatpush2.bf16.msra.mxu0 %v5006
    %7159 = vmatprep.subr.bf16.mxu0 %v5003
    %7160 = vmatpush2.bf16.msra.mxu0 %v5002
    %7161 = vmatprep.subr.bf16.mxu0 %v4999
    %7162 = vmatpush2.bf16.msra.mxu0 %v4998
    %7163 = vmatprep.subr.bf16.mxu0 %v4995
    %7164 = vmatpush2.bf16.msra.mxu0 %v4994
    %7165 = vmatprep.mubr.bf16.mxu0 %v240
    %7166 = vmatmul.mubr.bf16.gmra.mxu0 %v239
    %v7167 = vpop.f32.mrf.mxu0
    %v7168 = vadd.f32 %v7127, %v7167
    %v7169 = vpop.f32.mrf.mxu0
    %v7170 = vadd.f32 %v7129, %v7169
    %v7171 = vpop.f32.mrf.mxu0
    %v7172 = vpop.f32.mrf.mxu0
    %7173 = vdwg.mxu0
    %7174 = vmatprep.subr.bf16.mxu0 %v5055
    %7175 = vmatpush1.bf16.msra.mxu0 %v5054
    %7176 = vmatprep.subr.bf16.mxu0 %v5051
    %7177 = vmatpush1.bf16.msra.mxu0 %v5050
    %7178 = vmatprep.subr.bf16.mxu0 %v5047
    %7179 = vmatpush1.bf16.msra.mxu0 %v5046
    %7180 = vmatprep.subr.bf16.mxu0 %v5043
    %7181 = vmatpush1.bf16.msra.mxu0 %v5042
    %7182 = vmatprep.subr.bf16.mxu0 %v5039
    %7183 = vmatpush1.bf16.msra.mxu0 %v5038
    %7184 = vmatprep.subr.bf16.mxu0 %v5035
    %7185 = vmatpush1.bf16.msra.mxu0 %v5034
    %7186 = vmatprep.subr.bf16.mxu0 %v5031
    %7187 = vmatpush1.bf16.msra.mxu0 %v5030
    %7188 = vmatprep.subr.bf16.mxu0 %v5027
    %7189 = vmatpush1.bf16.msra.mxu0 %v5026
    %7190 = vmatprep.subr.bf16.mxu0 %v5087
    %7191 = vmatpush2.bf16.msra.mxu0 %v5086
    %7192 = vmatprep.subr.bf16.mxu0 %v5083
    %7193 = vmatpush2.bf16.msra.mxu0 %v5082
    %7194 = vmatprep.subr.bf16.mxu0 %v5079
    %7195 = vmatpush2.bf16.msra.mxu0 %v5078
    %7196 = vmatprep.subr.bf16.mxu0 %v5075
    %7197 = vmatpush2.bf16.msra.mxu0 %v5074
    %7198 = vmatprep.subr.bf16.mxu0 %v5071
    %7199 = vmatpush2.bf16.msra.mxu0 %v5070
    %7200 = vmatprep.subr.bf16.mxu0 %v5067
    %7201 = vmatpush2.bf16.msra.mxu0 %v5066
    %7202 = vmatprep.subr.bf16.mxu0 %v5063
    %7203 = vmatpush2.bf16.msra.mxu0 %v5062
    %7204 = vmatprep.subr.bf16.mxu0 %v5059
    %7205 = vmatpush2.bf16.msra.mxu0 %v5058
    %7206 = vmatprep.mubr.bf16.mxu0 %v242
    %7207 = vmatmul.mubr.bf16.gmra.mxu0 %v241
    %v7208 = vpop.f32.mrf.mxu0
    %v7209 = vadd.f32 %v7168, %v7208
    %v7210 = vpop.f32.mrf.mxu0
    %v7211 = vadd.f32 %v7170, %v7210
    %v7212 = vpop.f32.mrf.mxu0
    %v7213 = vpop.f32.mrf.mxu0
    %7214 = vdwg.mxu0
    %7215 = vmatprep.subr.bf16.mxu0 %v5119
    %7216 = vmatpush1.bf16.msra.mxu0 %v5118
    %7217 = vmatprep.subr.bf16.mxu0 %v5115
    %7218 = vmatpush1.bf16.msra.mxu0 %v5114
    %7219 = vmatprep.subr.bf16.mxu0 %v5111
    %7220 = vmatpush1.bf16.msra.mxu0 %v5110
    %7221 = vmatprep.subr.bf16.mxu0 %v5107
    %7222 = vmatpush1.bf16.msra.mxu0 %v5106
    %7223 = vmatprep.subr.bf16.mxu0 %v5103
    %7224 = vmatpush1.bf16.msra.mxu0 %v5102
    %7225 = vmatprep.subr.bf16.mxu0 %v5099
    %7226 = vmatpush1.bf16.msra.mxu0 %v5098
    %7227 = vmatprep.subr.bf16.mxu0 %v5095
    %7228 = vmatpush1.bf16.msra.mxu0 %v5094
    %7229 = vmatprep.subr.bf16.mxu0 %v5091
    %7230 = vmatpush1.bf16.msra.mxu0 %v5090
    %7231 = vmatprep.subr.bf16.mxu0 %v5151
    %7232 = vmatpush2.bf16.msra.mxu0 %v5150
    %7233 = vmatprep.subr.bf16.mxu0 %v5147
    %7234 = vmatpush2.bf16.msra.mxu0 %v5146
    %7235 = vmatprep.subr.bf16.mxu0 %v5143
    %7236 = vmatpush2.bf16.msra.mxu0 %v5142
    %7237 = vmatprep.subr.bf16.mxu0 %v5139
    %7238 = vmatpush2.bf16.msra.mxu0 %v5138
    %7239 = vmatprep.subr.bf16.mxu0 %v5135
    %7240 = vmatpush2.bf16.msra.mxu0 %v5134
    %7241 = vmatprep.subr.bf16.mxu0 %v5131
    %7242 = vmatpush2.bf16.msra.mxu0 %v5130
    %7243 = vmatprep.subr.bf16.mxu0 %v5127
    %7244 = vmatpush2.bf16.msra.mxu0 %v5126
    %7245 = vmatprep.subr.bf16.mxu0 %v5123
    %7246 = vmatpush2.bf16.msra.mxu0 %v5122
    %7247 = vmatprep.mubr.bf16.mxu0 %v244
    %7248 = vmatmul.mubr.bf16.gmra.mxu0 %v243
    %v7249 = vpop.f32.mrf.mxu0
    %v7250 = vadd.f32 %v7209, %v7249
    %v7251 = vpop.f32.mrf.mxu0
    %v7252 = vadd.f32 %v7211, %v7251
    %v7253 = vpop.f32.mrf.mxu0
    %v7254 = vpop.f32.mrf.mxu0
    %7255 = vdwg.mxu0
    %7256 = vmatprep.subr.bf16.mxu0 %v5183
    %7257 = vmatpush1.bf16.msra.mxu0 %v5182
    %7258 = vmatprep.subr.bf16.mxu0 %v5179
    %7259 = vmatpush1.bf16.msra.mxu0 %v5178
    %7260 = vmatprep.subr.bf16.mxu0 %v5175
    %7261 = vmatpush1.bf16.msra.mxu0 %v5174
    %7262 = vmatprep.subr.bf16.mxu0 %v5171
    %7263 = vmatpush1.bf16.msra.mxu0 %v5170
    %7264 = vmatprep.subr.bf16.mxu0 %v5167
    %7265 = vmatpush1.bf16.msra.mxu0 %v5166
    %7266 = vmatprep.subr.bf16.mxu0 %v5163
    %7267 = vmatpush1.bf16.msra.mxu0 %v5162
    %7268 = vmatprep.subr.bf16.mxu0 %v5159
    %7269 = vmatpush1.bf16.msra.mxu0 %v5158
    %7270 = vmatprep.subr.bf16.mxu0 %v5155
    %7271 = vmatpush1.bf16.msra.mxu0 %v5154
    %7272 = vmatprep.subr.bf16.mxu0 %v5215
    %7273 = vmatpush2.bf16.msra.mxu0 %v5214
    %7274 = vmatprep.subr.bf16.mxu0 %v5211
    %7275 = vmatpush2.bf16.msra.mxu0 %v5210
    %7276 = vmatprep.subr.bf16.mxu0 %v5207
    %7277 = vmatpush2.bf16.msra.mxu0 %v5206
    %7278 = vmatprep.subr.bf16.mxu0 %v5203
    %7279 = vmatpush2.bf16.msra.mxu0 %v5202
    %7280 = vmatprep.subr.bf16.mxu0 %v5199
    %7281 = vmatpush2.bf16.msra.mxu0 %v5198
    %7282 = vmatprep.subr.bf16.mxu0 %v5195
    %7283 = vmatpush2.bf16.msra.mxu0 %v5194
    %7284 = vmatprep.subr.bf16.mxu0 %v5191
    %7285 = vmatpush2.bf16.msra.mxu0 %v5190
    %7286 = vmatprep.subr.bf16.mxu0 %v5187
    %7287 = vmatpush2.bf16.msra.mxu0 %v5186
    %7288 = vmatprep.mubr.bf16.mxu0 %v246
    %7289 = vmatmul.mubr.bf16.gmra.mxu0 %v245
    %v7290 = vpop.f32.mrf.mxu0
    %v7291 = vadd.f32 %v7250, %v7290
    %v7292 = vpop.f32.mrf.mxu0
    %v7293 = vadd.f32 %v7252, %v7292
    %v7294 = vpop.f32.mrf.mxu0
    %v7295 = vpop.f32.mrf.mxu0
    %7296 = vdwg.mxu0
    %7297 = vmatprep.subr.bf16.mxu0 %v5247
    %7298 = vmatpush1.bf16.msra.mxu0 %v5246
    %7299 = vmatprep.subr.bf16.mxu0 %v5243
    %7300 = vmatpush1.bf16.msra.mxu0 %v5242
    %7301 = vmatprep.subr.bf16.mxu0 %v5239
    %7302 = vmatpush1.bf16.msra.mxu0 %v5238
    %7303 = vmatprep.subr.bf16.mxu0 %v5235
    %7304 = vmatpush1.bf16.msra.mxu0 %v5234
    %7305 = vmatprep.subr.bf16.mxu0 %v5231
    %7306 = vmatpush1.bf16.msra.mxu0 %v5230
    %7307 = vmatprep.subr.bf16.mxu0 %v5227
    %7308 = vmatpush1.bf16.msra.mxu0 %v5226
    %7309 = vmatprep.subr.bf16.mxu0 %v5223
    %7310 = vmatpush1.bf16.msra.mxu0 %v5222
    %7311 = vmatprep.subr.bf16.mxu0 %v5219
    %7312 = vmatpush1.bf16.msra.mxu0 %v5218
    %7313 = vmatprep.subr.bf16.mxu0 %v5279
    %7314 = vmatpush2.bf16.msra.mxu0 %v5278
    %7315 = vmatprep.subr.bf16.mxu0 %v5275
    %7316 = vmatpush2.bf16.msra.mxu0 %v5274
    %7317 = vmatprep.subr.bf16.mxu0 %v5271
    %7318 = vmatpush2.bf16.msra.mxu0 %v5270
    %7319 = vmatprep.subr.bf16.mxu0 %v5267
    %7320 = vmatpush2.bf16.msra.mxu0 %v5266
    %7321 = vmatprep.subr.bf16.mxu0 %v5263
    %7322 = vmatpush2.bf16.msra.mxu0 %v5262
    %7323 = vmatprep.subr.bf16.mxu0 %v5259
    %7324 = vmatpush2.bf16.msra.mxu0 %v5258
    %7325 = vmatprep.subr.bf16.mxu0 %v5255
    %7326 = vmatpush2.bf16.msra.mxu0 %v5254
    %7327 = vmatprep.subr.bf16.mxu0 %v5251
    %7328 = vmatpush2.bf16.msra.mxu0 %v5250
    %7329 = vmatprep.mubr.bf16.mxu0 %v248
    %7330 = vmatmul.mubr.bf16.gmra.mxu0 %v247
    %v7331 = vpop.f32.mrf.mxu0
    %v7332 = vadd.f32 %v7291, %v7331
    %v7333 = vpop.f32.mrf.mxu0
    %v7334 = vadd.f32 %v7293, %v7333
    %v7335 = vpop.f32.mrf.mxu0
    %v7336 = vpop.f32.mrf.mxu0
    %7337 = vdwg.mxu0
    %7338 = vmatprep.subr.bf16.mxu0 %v5311
    %7339 = vmatpush1.bf16.msra.mxu0 %v5310
    %7340 = vmatprep.subr.bf16.mxu0 %v5307
    %7341 = vmatpush1.bf16.msra.mxu0 %v5306
    %7342 = vmatprep.subr.bf16.mxu0 %v5303
    %7343 = vmatpush1.bf16.msra.mxu0 %v5302
    %7344 = vmatprep.subr.bf16.mxu0 %v5299
    %7345 = vmatpush1.bf16.msra.mxu0 %v5298
    %7346 = vmatprep.subr.bf16.mxu0 %v5295
    %7347 = vmatpush1.bf16.msra.mxu0 %v5294
    %7348 = vmatprep.subr.bf16.mxu0 %v5291
    %7349 = vmatpush1.bf16.msra.mxu0 %v5290
    %7350 = vmatprep.subr.bf16.mxu0 %v5287
    %7351 = vmatpush1.bf16.msra.mxu0 %v5286
    %7352 = vmatprep.subr.bf16.mxu0 %v5283
    %7353 = vmatpush1.bf16.msra.mxu0 %v5282
    %7354 = vmatprep.subr.bf16.mxu0 %v5343
    %7355 = vmatpush2.bf16.msra.mxu0 %v5342
    %7356 = vmatprep.subr.bf16.mxu0 %v5339
    %7357 = vmatpush2.bf16.msra.mxu0 %v5338
    %7358 = vmatprep.subr.bf16.mxu0 %v5335
    %7359 = vmatpush2.bf16.msra.mxu0 %v5334
    %7360 = vmatprep.subr.bf16.mxu0 %v5331
    %7361 = vmatpush2.bf16.msra.mxu0 %v5330
    %7362 = vmatprep.subr.bf16.mxu0 %v5327
    %7363 = vmatpush2.bf16.msra.mxu0 %v5326
    %7364 = vmatprep.subr.bf16.mxu0 %v5323
    %7365 = vmatpush2.bf16.msra.mxu0 %v5322
    %7366 = vmatprep.subr.bf16.mxu0 %v5319
    %7367 = vmatpush2.bf16.msra.mxu0 %v5318
    %7368 = vmatprep.subr.bf16.mxu0 %v5315
    %7369 = vmatpush2.bf16.msra.mxu0 %v5314
    %7370 = vmatprep.mubr.bf16.mxu0 %v250
    %7371 = vmatmul.mubr.bf16.gmra.mxu0 %v249
    %v7372 = vpop.f32.mrf.mxu0
    %v7373 = vadd.f32 %v7332, %v7372
    %v7374 = vpop.f32.mrf.mxu0
    %v7375 = vadd.f32 %v7334, %v7374
    %v7376 = vpop.f32.mrf.mxu0
    %v7377 = vpop.f32.mrf.mxu0
    %7378 = vdwg.mxu0
    %7379 = vmatprep.subr.bf16.mxu0 %v5375
    %7380 = vmatpush1.bf16.msra.mxu0 %v5374
    %7381 = vmatprep.subr.bf16.mxu0 %v5371
    %7382 = vmatpush1.bf16.msra.mxu0 %v5370
    %7383 = vmatprep.subr.bf16.mxu0 %v5367
    %7384 = vmatpush1.bf16.msra.mxu0 %v5366
    %7385 = vmatprep.subr.bf16.mxu0 %v5363
    %7386 = vmatpush1.bf16.msra.mxu0 %v5362
    %7387 = vmatprep.subr.bf16.mxu0 %v5359
    %7388 = vmatpush1.bf16.msra.mxu0 %v5358
    %7389 = vmatprep.subr.bf16.mxu0 %v5355
    %7390 = vmatpush1.bf16.msra.mxu0 %v5354
    %7391 = vmatprep.subr.bf16.mxu0 %v5351
    %7392 = vmatpush1.bf16.msra.mxu0 %v5350
    %7393 = vmatprep.subr.bf16.mxu0 %v5347
    %7394 = vmatpush1.bf16.msra.mxu0 %v5346
    %7395 = vmatprep.subr.bf16.mxu0 %v5407
    %7396 = vmatpush2.bf16.msra.mxu0 %v5406
    %7397 = vmatprep.subr.bf16.mxu0 %v5403
    %7398 = vmatpush2.bf16.msra.mxu0 %v5402
    %7399 = vmatprep.subr.bf16.mxu0 %v5399
    %7400 = vmatpush2.bf16.msra.mxu0 %v5398
    %7401 = vmatprep.subr.bf16.mxu0 %v5395
    %7402 = vmatpush2.bf16.msra.mxu0 %v5394
    %7403 = vmatprep.subr.bf16.mxu0 %v5391
    %7404 = vmatpush2.bf16.msra.mxu0 %v5390
    %7405 = vmatprep.subr.bf16.mxu0 %v5387
    %7406 = vmatpush2.bf16.msra.mxu0 %v5386
    %7407 = vmatprep.subr.bf16.mxu0 %v5383
    %7408 = vmatpush2.bf16.msra.mxu0 %v5382
    %7409 = vmatprep.subr.bf16.mxu0 %v5379
    %7410 = vmatpush2.bf16.msra.mxu0 %v5378
    %7411 = vmatprep.mubr.bf16.mxu0 %v252
    %7412 = vmatmul.mubr.bf16.gmra.mxu0 %v251
    %v7413 = vpop.f32.mrf.mxu0
    %v7414 = vadd.f32 %v7373, %v7413
    %v7415 = vpop.f32.mrf.mxu0
    %v7416 = vadd.f32 %v7375, %v7415
    %v7417 = vpop.f32.mrf.mxu0
    %v7418 = vpop.f32.mrf.mxu0
    %7419 = vdwg.mxu0
    %7420 = vmatprep.subr.bf16.mxu0 %v5439
    %7421 = vmatpush1.bf16.msra.mxu0 %v5438
    %7422 = vmatprep.subr.bf16.mxu0 %v5435
    %7423 = vmatpush1.bf16.msra.mxu0 %v5434
    %7424 = vmatprep.subr.bf16.mxu0 %v5431
    %7425 = vmatpush1.bf16.msra.mxu0 %v5430
    %7426 = vmatprep.subr.bf16.mxu0 %v5427
    %7427 = vmatpush1.bf16.msra.mxu0 %v5426
    %7428 = vmatprep.subr.bf16.mxu0 %v5423
    %7429 = vmatpush1.bf16.msra.mxu0 %v5422
    %7430 = vmatprep.subr.bf16.mxu0 %v5419
    %7431 = vmatpush1.bf16.msra.mxu0 %v5418
    %7432 = vmatprep.subr.bf16.mxu0 %v5415
    %7433 = vmatpush1.bf16.msra.mxu0 %v5414
    %7434 = vmatprep.subr.bf16.mxu0 %v5411
    %7435 = vmatpush1.bf16.msra.mxu0 %v5410
    %7436 = vmatprep.subr.bf16.mxu0 %v5471
    %7437 = vmatpush2.bf16.msra.mxu0 %v5470
    %7438 = vmatprep.subr.bf16.mxu0 %v5467
    %7439 = vmatpush2.bf16.msra.mxu0 %v5466
    %7440 = vmatprep.subr.bf16.mxu0 %v5463
    %7441 = vmatpush2.bf16.msra.mxu0 %v5462
    %7442 = vmatprep.subr.bf16.mxu0 %v5459
    %7443 = vmatpush2.bf16.msra.mxu0 %v5458
    %7444 = vmatprep.subr.bf16.mxu0 %v5455
    %7445 = vmatpush2.bf16.msra.mxu0 %v5454
    %7446 = vmatprep.subr.bf16.mxu0 %v5451
    %7447 = vmatpush2.bf16.msra.mxu0 %v5450
    %7448 = vmatprep.subr.bf16.mxu0 %v5447
    %7449 = vmatpush2.bf16.msra.mxu0 %v5446
    %7450 = vmatprep.subr.bf16.mxu0 %v5443
    %7451 = vmatpush2.bf16.msra.mxu0 %v5442
    %7452 = vmatprep.mubr.bf16.mxu0 %v254
    %7453 = vmatmul.mubr.bf16.gmra.mxu0 %v253
    %v7454 = vpop.f32.mrf.mxu0
    %v7455 = vadd.f32 %v7414, %v7454
    %v7456 = vpop.f32.mrf.mxu0
    %v7457 = vadd.f32 %v7416, %v7456
    %v7458 = vpop.f32.mrf.mxu0
    %v7459 = vpop.f32.mrf.mxu0
    %7460 = vdwg.mxu0
    %7461 = vmatprep.subr.bf16.mxu0 %v5503
    %7462 = vmatpush1.bf16.msra.mxu0 %v5502
    %7463 = vmatprep.subr.bf16.mxu0 %v5499
    %7464 = vmatpush1.bf16.msra.mxu0 %v5498
    %7465 = vmatprep.subr.bf16.mxu0 %v5495
    %7466 = vmatpush1.bf16.msra.mxu0 %v5494
    %7467 = vmatprep.subr.bf16.mxu0 %v5491
    %7468 = vmatpush1.bf16.msra.mxu0 %v5490
    %7469 = vmatprep.subr.bf16.mxu0 %v5487
    %7470 = vmatpush1.bf16.msra.mxu0 %v5486
    %7471 = vmatprep.subr.bf16.mxu0 %v5483
    %7472 = vmatpush1.bf16.msra.mxu0 %v5482
    %7473 = vmatprep.subr.bf16.mxu0 %v5479
    %7474 = vmatpush1.bf16.msra.mxu0 %v5478
    %7475 = vmatprep.subr.bf16.mxu0 %v5475
    %7476 = vmatpush1.bf16.msra.mxu0 %v5474
    %7477 = vmatprep.subr.bf16.mxu0 %v5535
    %7478 = vmatpush2.bf16.msra.mxu0 %v5534
    %7479 = vmatprep.subr.bf16.mxu0 %v5531
    %7480 = vmatpush2.bf16.msra.mxu0 %v5530
    %7481 = vmatprep.subr.bf16.mxu0 %v5527
    %7482 = vmatpush2.bf16.msra.mxu0 %v5526
    %7483 = vmatprep.subr.bf16.mxu0 %v5523
    %7484 = vmatpush2.bf16.msra.mxu0 %v5522
    %7485 = vmatprep.subr.bf16.mxu0 %v5519
    %7486 = vmatpush2.bf16.msra.mxu0 %v5518
    %7487 = vmatprep.subr.bf16.mxu0 %v5515
    %7488 = vmatpush2.bf16.msra.mxu0 %v5514
    %7489 = vmatprep.subr.bf16.mxu0 %v5511
    %7490 = vmatpush2.bf16.msra.mxu0 %v5510
    %7491 = vmatprep.subr.bf16.mxu0 %v5507
    %7492 = vmatpush2.bf16.msra.mxu0 %v5506
    %7493 = vmatprep.mubr.bf16.mxu0 %v256
    %7494 = vmatmul.mubr.bf16.gmra.mxu0 %v255
    %v7495 = vpop.f32.mrf.mxu0
    %v7496 = vadd.f32 %v7455, %v7495
    %v7497 = vpop.f32.mrf.mxu0
    %v7498 = vadd.f32 %v7457, %v7497
    %v7499 = vpop.f32.mrf.mxu0
    %v7500 = vpop.f32.mrf.mxu0
    %7501 = vdwg.mxu0
    %7502 = vmatprep.subr.bf16.mxu0 %v5567
    %7503 = vmatpush1.bf16.msra.mxu0 %v5566
    %7504 = vmatprep.subr.bf16.mxu0 %v5563
    %7505 = vmatpush1.bf16.msra.mxu0 %v5562
    %7506 = vmatprep.subr.bf16.mxu0 %v5559
    %7507 = vmatpush1.bf16.msra.mxu0 %v5558
    %7508 = vmatprep.subr.bf16.mxu0 %v5555
    %7509 = vmatpush1.bf16.msra.mxu0 %v5554
    %7510 = vmatprep.subr.bf16.mxu0 %v5551
    %7511 = vmatpush1.bf16.msra.mxu0 %v5550
    %7512 = vmatprep.subr.bf16.mxu0 %v5547
    %7513 = vmatpush1.bf16.msra.mxu0 %v5546
    %7514 = vmatprep.subr.bf16.mxu0 %v5543
    %7515 = vmatpush1.bf16.msra.mxu0 %v5542
    %7516 = vmatprep.subr.bf16.mxu0 %v5539
    %7517 = vmatpush1.bf16.msra.mxu0 %v5538
    %7518 = vmatprep.subr.bf16.mxu0 %v5599
    %7519 = vmatpush2.bf16.msra.mxu0 %v5598
    %7520 = vmatprep.subr.bf16.mxu0 %v5595
    %7521 = vmatpush2.bf16.msra.mxu0 %v5594
    %7522 = vmatprep.subr.bf16.mxu0 %v5591
    %7523 = vmatpush2.bf16.msra.mxu0 %v5590
    %7524 = vmatprep.subr.bf16.mxu0 %v5587
    %7525 = vmatpush2.bf16.msra.mxu0 %v5586
    %7526 = vmatprep.subr.bf16.mxu0 %v5583
    %7527 = vmatpush2.bf16.msra.mxu0 %v5582
    %7528 = vmatprep.subr.bf16.mxu0 %v5579
    %7529 = vmatpush2.bf16.msra.mxu0 %v5578
    %7530 = vmatprep.subr.bf16.mxu0 %v5575
    %7531 = vmatpush2.bf16.msra.mxu0 %v5574
    %7532 = vmatprep.subr.bf16.mxu0 %v5571
    %7533 = vmatpush2.bf16.msra.mxu0 %v5570
    %7534 = vmatprep.mubr.bf16.mxu0 %v258
    %7535 = vmatmul.mubr.bf16.gmra.mxu0 %v257
    %v7536 = vpop.f32.mrf.mxu0
    %v7537 = vadd.f32 %v7496, %v7536
    %v7538 = vpop.f32.mrf.mxu0
    %v7539 = vadd.f32 %v7498, %v7538
    %v7540 = vpop.f32.mrf.mxu0
    %v7541 = vpop.f32.mrf.mxu0
    %7542 = vdwg.mxu0
    %7543 = vmatprep.subr.bf16.mxu0 %v5631
    %7544 = vmatpush1.bf16.msra.mxu0 %v5630
    %7545 = vmatprep.subr.bf16.mxu0 %v5627
    %7546 = vmatpush1.bf16.msra.mxu0 %v5626
    %7547 = vmatprep.subr.bf16.mxu0 %v5623
    %7548 = vmatpush1.bf16.msra.mxu0 %v5622
    %7549 = vmatprep.subr.bf16.mxu0 %v5619
    %7550 = vmatpush1.bf16.msra.mxu0 %v5618
    %7551 = vmatprep.subr.bf16.mxu0 %v5615
    %7552 = vmatpush1.bf16.msra.mxu0 %v5614
    %7553 = vmatprep.subr.bf16.mxu0 %v5611
    %7554 = vmatpush1.bf16.msra.mxu0 %v5610
    %7555 = vmatprep.subr.bf16.mxu0 %v5607
    %7556 = vmatpush1.bf16.msra.mxu0 %v5606
    %7557 = vmatprep.subr.bf16.mxu0 %v5603
    %7558 = vmatpush1.bf16.msra.mxu0 %v5602
    %7559 = vmatprep.subr.bf16.mxu0 %v5663
    %7560 = vmatpush2.bf16.msra.mxu0 %v5662
    %7561 = vmatprep.subr.bf16.mxu0 %v5659
    %7562 = vmatpush2.bf16.msra.mxu0 %v5658
    %7563 = vmatprep.subr.bf16.mxu0 %v5655
    %7564 = vmatpush2.bf16.msra.mxu0 %v5654
    %7565 = vmatprep.subr.bf16.mxu0 %v5651
    %7566 = vmatpush2.bf16.msra.mxu0 %v5650
    %7567 = vmatprep.subr.bf16.mxu0 %v5647
    %7568 = vmatpush2.bf16.msra.mxu0 %v5646
    %7569 = vmatprep.subr.bf16.mxu0 %v5643
    %7570 = vmatpush2.bf16.msra.mxu0 %v5642
    %7571 = vmatprep.subr.bf16.mxu0 %v5639
    %7572 = vmatpush2.bf16.msra.mxu0 %v5638
    %7573 = vmatprep.subr.bf16.mxu0 %v5635
    %7574 = vmatpush2.bf16.msra.mxu0 %v5634
    %7575 = vmatprep.mubr.bf16.mxu0 %v260
    %7576 = vmatmul.mubr.bf16.gmra.mxu0 %v259
    %v7577 = vpop.f32.mrf.mxu0
    %v7578 = vadd.f32 %v7537, %v7577
    %v7579 = vpop.f32.mrf.mxu0
    %v7580 = vadd.f32 %v7539, %v7579
    %v7581 = vpop.f32.mrf.mxu0
    %v7582 = vpop.f32.mrf.mxu0
    %7583 = vdwg.mxu0
    %7584 = vmatprep.subr.bf16.mxu0 %v5695
    %7585 = vmatpush1.bf16.msra.mxu0 %v5694
    %7586 = vmatprep.subr.bf16.mxu0 %v5691
    %7587 = vmatpush1.bf16.msra.mxu0 %v5690
    %7588 = vmatprep.subr.bf16.mxu0 %v5687
    %7589 = vmatpush1.bf16.msra.mxu0 %v5686
    %7590 = vmatprep.subr.bf16.mxu0 %v5683
    %7591 = vmatpush1.bf16.msra.mxu0 %v5682
    %7592 = vmatprep.subr.bf16.mxu0 %v5679
    %7593 = vmatpush1.bf16.msra.mxu0 %v5678
    %7594 = vmatprep.subr.bf16.mxu0 %v5675
    %7595 = vmatpush1.bf16.msra.mxu0 %v5674
    %7596 = vmatprep.subr.bf16.mxu0 %v5671
    %7597 = vmatpush1.bf16.msra.mxu0 %v5670
    %7598 = vmatprep.subr.bf16.mxu0 %v5667
    %7599 = vmatpush1.bf16.msra.mxu0 %v5666
    %7600 = vmatprep.subr.bf16.mxu0 %v5727
    %7601 = vmatpush2.bf16.msra.mxu0 %v5726
    %7602 = vmatprep.subr.bf16.mxu0 %v5723
    %7603 = vmatpush2.bf16.msra.mxu0 %v5722
    %7604 = vmatprep.subr.bf16.mxu0 %v5719
    %7605 = vmatpush2.bf16.msra.mxu0 %v5718
    %7606 = vmatprep.subr.bf16.mxu0 %v5715
    %7607 = vmatpush2.bf16.msra.mxu0 %v5714
    %7608 = vmatprep.subr.bf16.mxu0 %v5711
    %7609 = vmatpush2.bf16.msra.mxu0 %v5710
    %7610 = vmatprep.subr.bf16.mxu0 %v5707
    %7611 = vmatpush2.bf16.msra.mxu0 %v5706
    %7612 = vmatprep.subr.bf16.mxu0 %v5703
    %7613 = vmatpush2.bf16.msra.mxu0 %v5702
    %7614 = vmatprep.subr.bf16.mxu0 %v5699
    %7615 = vmatpush2.bf16.msra.mxu0 %v5698
    %7616 = vmatprep.mubr.bf16.mxu0 %v262
    %7617 = vmatmul.mubr.bf16.gmra.mxu0 %v261
    %v7618 = vpop.f32.mrf.mxu0
    %v7619 = vadd.f32 %v7578, %v7618
    %v7620 = vpop.f32.mrf.mxu0
    %v7621 = vadd.f32 %v7580, %v7620
    %v7622 = vpop.f32.mrf.mxu0
    %v7623 = vpop.f32.mrf.mxu0
    %7624 = vdwg.mxu0
    %7625 = vmatprep.subr.bf16.mxu0 %v5759
    %7626 = vmatpush1.bf16.msra.mxu0 %v5758
    %7627 = vmatprep.subr.bf16.mxu0 %v5755
    %7628 = vmatpush1.bf16.msra.mxu0 %v5754
    %7629 = vmatprep.subr.bf16.mxu0 %v5751
    %7630 = vmatpush1.bf16.msra.mxu0 %v5750
    %7631 = vmatprep.subr.bf16.mxu0 %v5747
    %7632 = vmatpush1.bf16.msra.mxu0 %v5746
    %7633 = vmatprep.subr.bf16.mxu0 %v5743
    %7634 = vmatpush1.bf16.msra.mxu0 %v5742
    %7635 = vmatprep.subr.bf16.mxu0 %v5739
    %7636 = vmatpush1.bf16.msra.mxu0 %v5738
    %7637 = vmatprep.subr.bf16.mxu0 %v5735
    %7638 = vmatpush1.bf16.msra.mxu0 %v5734
    %7639 = vmatprep.subr.bf16.mxu0 %v5731
    %7640 = vmatpush1.bf16.msra.mxu0 %v5730
    %7641 = vmatprep.subr.bf16.mxu0 %v5791
    %7642 = vmatpush2.bf16.msra.mxu0 %v5790
    %7643 = vmatprep.subr.bf16.mxu0 %v5787
    %7644 = vmatpush2.bf16.msra.mxu0 %v5786
    %7645 = vmatprep.subr.bf16.mxu0 %v5783
    %7646 = vmatpush2.bf16.msra.mxu0 %v5782
    %7647 = vmatprep.subr.bf16.mxu0 %v5779
    %7648 = vmatpush2.bf16.msra.mxu0 %v5778
    %7649 = vmatprep.subr.bf16.mxu0 %v5775
    %7650 = vmatpush2.bf16.msra.mxu0 %v5774
    %7651 = vmatprep.subr.bf16.mxu0 %v5771
    %7652 = vmatpush2.bf16.msra.mxu0 %v5770
    %7653 = vmatprep.subr.bf16.mxu0 %v5767
    %7654 = vmatpush2.bf16.msra.mxu0 %v5766
    %7655 = vmatprep.subr.bf16.mxu0 %v5763
    %7656 = vmatpush2.bf16.msra.mxu0 %v5762
    %7657 = vmatprep.mubr.bf16.mxu0 %v264
    %7658 = vmatmul.mubr.bf16.gmra.mxu0 %v263
    %v7659 = vpop.f32.mrf.mxu0
    %v7660 = vadd.f32 %v7619, %v7659
    %v7661 = vpop.f32.mrf.mxu0
    %v7662 = vadd.f32 %v7621, %v7661
    %v7663 = vpop.f32.mrf.mxu0
    %v7664 = vpop.f32.mrf.mxu0
    %7665 = vdwg.mxu0
    %7666 = vmatprep.subr.bf16.mxu0 %v5823
    %7667 = vmatpush1.bf16.msra.mxu0 %v5822
    %7668 = vmatprep.subr.bf16.mxu0 %v5819
    %7669 = vmatpush1.bf16.msra.mxu0 %v5818
    %7670 = vmatprep.subr.bf16.mxu0 %v5815
    %7671 = vmatpush1.bf16.msra.mxu0 %v5814
    %7672 = vmatprep.subr.bf16.mxu0 %v5811
    %7673 = vmatpush1.bf16.msra.mxu0 %v5810
    %7674 = vmatprep.subr.bf16.mxu0 %v5807
    %7675 = vmatpush1.bf16.msra.mxu0 %v5806
    %7676 = vmatprep.subr.bf16.mxu0 %v5803
    %7677 = vmatpush1.bf16.msra.mxu0 %v5802
    %7678 = vmatprep.subr.bf16.mxu0 %v5799
    %7679 = vmatpush1.bf16.msra.mxu0 %v5798
    %7680 = vmatprep.subr.bf16.mxu0 %v5795
    %7681 = vmatpush1.bf16.msra.mxu0 %v5794
    %7682 = vmatprep.subr.bf16.mxu0 %v5855
    %7683 = vmatpush2.bf16.msra.mxu0 %v5854
    %7684 = vmatprep.subr.bf16.mxu0 %v5851
    %7685 = vmatpush2.bf16.msra.mxu0 %v5850
    %7686 = vmatprep.subr.bf16.mxu0 %v5847
    %7687 = vmatpush2.bf16.msra.mxu0 %v5846
    %7688 = vmatprep.subr.bf16.mxu0 %v5843
    %7689 = vmatpush2.bf16.msra.mxu0 %v5842
    %7690 = vmatprep.subr.bf16.mxu0 %v5839
    %7691 = vmatpush2.bf16.msra.mxu0 %v5838
    %7692 = vmatprep.subr.bf16.mxu0 %v5835
    %7693 = vmatpush2.bf16.msra.mxu0 %v5834
    %7694 = vmatprep.subr.bf16.mxu0 %v5831
    %7695 = vmatpush2.bf16.msra.mxu0 %v5830
    %7696 = vmatprep.subr.bf16.mxu0 %v5827
    %7697 = vmatpush2.bf16.msra.mxu0 %v5826
    %7698 = vmatprep.mubr.bf16.mxu0 %v266
    %7699 = vmatmul.mubr.bf16.gmra.mxu0 %v265
    %v7700 = vpop.f32.mrf.mxu0
    %v7701 = vadd.f32 %v7660, %v7700
    %v7702 = vpop.f32.mrf.mxu0
    %v7703 = vadd.f32 %v7662, %v7702
    %v7704 = vpop.f32.mrf.mxu0
    %v7705 = vpop.f32.mrf.mxu0
    %7706 = vdwg.mxu0
    %7707 = vmatprep.subr.bf16.mxu0 %v5887
    %7708 = vmatpush1.bf16.msra.mxu0 %v5886
    %7709 = vmatprep.subr.bf16.mxu0 %v5883
    %7710 = vmatpush1.bf16.msra.mxu0 %v5882
    %7711 = vmatprep.subr.bf16.mxu0 %v5879
    %7712 = vmatpush1.bf16.msra.mxu0 %v5878
    %7713 = vmatprep.subr.bf16.mxu0 %v5875
    %7714 = vmatpush1.bf16.msra.mxu0 %v5874
    %7715 = vmatprep.subr.bf16.mxu0 %v5871
    %7716 = vmatpush1.bf16.msra.mxu0 %v5870
    %7717 = vmatprep.subr.bf16.mxu0 %v5867
    %7718 = vmatpush1.bf16.msra.mxu0 %v5866
    %7719 = vmatprep.subr.bf16.mxu0 %v5863
    %7720 = vmatpush1.bf16.msra.mxu0 %v5862
    %7721 = vmatprep.subr.bf16.mxu0 %v5859
    %7722 = vmatpush1.bf16.msra.mxu0 %v5858
    %7723 = vmatprep.subr.bf16.mxu0 0
    %7724 = vmatpush2.bf16.msra.mxu0 0
    %7725 = vmatprep.subr.bf16.mxu0 0
    %7726 = vmatpush2.bf16.msra.mxu0 0
    %7727 = vmatprep.subr.bf16.mxu0 0
    %7728 = vmatpush2.bf16.msra.mxu0 0
    %7729 = vmatprep.subr.bf16.mxu0 0
    %7730 = vmatpush2.bf16.msra.mxu0 0
    %7731 = vmatprep.subr.bf16.mxu0 0
    %7732 = vmatpush2.bf16.msra.mxu0 0
    %7733 = vmatprep.subr.bf16.mxu0 0
    %7734 = vmatpush2.bf16.msra.mxu0 0
    %7735 = vmatprep.subr.bf16.mxu0 0
    %7736 = vmatpush2.bf16.msra.mxu0 0
    %7737 = vmatprep.subr.bf16.mxu0 0
    %7738 = vmatpush2.bf16.msra.mxu0 0
    %7739 = vmatprep.mubr.bf16.mxu0 0
    %7740 = vmatmul.mubr.bf16.gmra.mxu0 %v267
    %v7741 = vpop.f32.mrf.mxu0
    %v7742 = vadd.f32 %v7701, %v7741
    %v7743 = vpop.f32.mrf.mxu0
    %v7744 = vadd.f32 %v7703, %v7743
    %v7745 = vpop.f32.mrf.mxu0
    %v7746 = vpop.f32.mrf.mxu0
    %7747 = vdwg.mxu0
    %7748 = vmatprep.subr.bf16.mxu0 %v4801
    %7749 = vmatpush1.bf16.msra.mxu0 %v4800
    %7750 = vmatprep.subr.bf16.mxu0 %v4797
    %7751 = vmatpush1.bf16.msra.mxu0 %v4796
    %7752 = vmatprep.subr.bf16.mxu0 %v4793
    %7753 = vmatpush1.bf16.msra.mxu0 %v4792
    %7754 = vmatprep.subr.bf16.mxu0 %v4789
    %7755 = vmatpush1.bf16.msra.mxu0 %v4788
    %7756 = vmatprep.subr.bf16.mxu0 %v4785
    %7757 = vmatpush1.bf16.msra.mxu0 %v4784
    %7758 = vmatprep.subr.bf16.mxu0 %v4781
    %7759 = vmatpush1.bf16.msra.mxu0 %v4780
    %7760 = vmatprep.subr.bf16.mxu0 %v4777
    %7761 = vmatpush1.bf16.msra.mxu0 %v4776
    %7762 = vmatprep.subr.bf16.mxu0 %v4773
    %7763 = vmatpush1.bf16.msra.mxu0 %v4772
    %7764 = vmatprep.subr.bf16.mxu0 %v4833
    %7765 = vmatpush2.bf16.msra.mxu0 %v4832
    %7766 = vmatprep.subr.bf16.mxu0 %v4829
    %7767 = vmatpush2.bf16.msra.mxu0 %v4828
    %7768 = vmatprep.subr.bf16.mxu0 %v4825
    %7769 = vmatpush2.bf16.msra.mxu0 %v4824
    %7770 = vmatprep.subr.bf16.mxu0 %v4821
    %7771 = vmatpush2.bf16.msra.mxu0 %v4820
    %7772 = vmatprep.subr.bf16.mxu0 %v4817
    %7773 = vmatpush2.bf16.msra.mxu0 %v4816
    %7774 = vmatprep.subr.bf16.mxu0 %v4813
    %7775 = vmatpush2.bf16.msra.mxu0 %v4812
    %7776 = vmatprep.subr.bf16.mxu0 %v4809
    %7777 = vmatpush2.bf16.msra.mxu0 %v4808
    %7778 = vmatprep.subr.bf16.mxu0 %v4805
    %7779 = vmatpush2.bf16.msra.mxu0 %v4804
    %7780 = vmatprep.mubr.bf16.mxu0 %v234
    %7781 = vmatmul.mubr.bf16.gmra.mxu0 %v233
    %v7782 = vpop.f32.mrf.mxu0
    %v7783 = vadd.f32 %v1401, %v7782
    %v7784 = vpop.f32.mrf.mxu0
    %v7785 = vadd.f32 %v1405, %v7784
    %v7786 = vpop.f32.mrf.mxu0
    %v7787 = vpop.f32.mrf.mxu0
    %7788 = vdwg.mxu0
    %7789 = vmatprep.subr.bf16.mxu0 %v4865
    %7790 = vmatpush1.bf16.msra.mxu0 %v4864
    %7791 = vmatprep.subr.bf16.mxu0 %v4861
    %7792 = vmatpush1.bf16.msra.mxu0 %v4860
    %7793 = vmatprep.subr.bf16.mxu0 %v4857
    %7794 = vmatpush1.bf16.msra.mxu0 %v4856
    %7795 = vmatprep.subr.bf16.mxu0 %v4853
    %7796 = vmatpush1.bf16.msra.mxu0 %v4852
    %7797 = vmatprep.subr.bf16.mxu0 %v4849
    %7798 = vmatpush1.bf16.msra.mxu0 %v4848
    %7799 = vmatprep.subr.bf16.mxu0 %v4845
    %7800 = vmatpush1.bf16.msra.mxu0 %v4844
    %7801 = vmatprep.subr.bf16.mxu0 %v4841
    %7802 = vmatpush1.bf16.msra.mxu0 %v4840
    %7803 = vmatprep.subr.bf16.mxu0 %v4837
    %7804 = vmatpush1.bf16.msra.mxu0 %v4836
    %7805 = vmatprep.subr.bf16.mxu0 %v4897
    %7806 = vmatpush2.bf16.msra.mxu0 %v4896
    %7807 = vmatprep.subr.bf16.mxu0 %v4893
    %7808 = vmatpush2.bf16.msra.mxu0 %v4892
    %7809 = vmatprep.subr.bf16.mxu0 %v4889
    %7810 = vmatpush2.bf16.msra.mxu0 %v4888
    %7811 = vmatprep.subr.bf16.mxu0 %v4885
    %7812 = vmatpush2.bf16.msra.mxu0 %v4884
    %7813 = vmatprep.subr.bf16.mxu0 %v4881
    %7814 = vmatpush2.bf16.msra.mxu0 %v4880
    %7815 = vmatprep.subr.bf16.mxu0 %v4877
    %7816 = vmatpush2.bf16.msra.mxu0 %v4876
    %7817 = vmatprep.subr.bf16.mxu0 %v4873
    %7818 = vmatpush2.bf16.msra.mxu0 %v4872
    %7819 = vmatprep.subr.bf16.mxu0 %v4869
    %7820 = vmatpush2.bf16.msra.mxu0 %v4868
    %7821 = vmatprep.mubr.bf16.mxu0 %v236
    %7822 = vmatmul.mubr.bf16.gmra.mxu0 %v235
    %v7823 = vpop.f32.mrf.mxu0
    %v7824 = vadd.f32 %v7783, %v7823
    %v7825 = vpop.f32.mrf.mxu0
    %v7826 = vadd.f32 %v7785, %v7825
    %v7827 = vpop.f32.mrf.mxu0
    %v7828 = vpop.f32.mrf.mxu0
    %7829 = vdwg.mxu0
    %7830 = vmatprep.subr.bf16.mxu0 %v4929
    %7831 = vmatpush1.bf16.msra.mxu0 %v4928
    %7832 = vmatprep.subr.bf16.mxu0 %v4925
    %7833 = vmatpush1.bf16.msra.mxu0 %v4924
    %7834 = vmatprep.subr.bf16.mxu0 %v4921
    %7835 = vmatpush1.bf16.msra.mxu0 %v4920
    %7836 = vmatprep.subr.bf16.mxu0 %v4917
    %7837 = vmatpush1.bf16.msra.mxu0 %v4916
    %7838 = vmatprep.subr.bf16.mxu0 %v4913
    %7839 = vmatpush1.bf16.msra.mxu0 %v4912
    %7840 = vmatprep.subr.bf16.mxu0 %v4909
    %7841 = vmatpush1.bf16.msra.mxu0 %v4908
    %7842 = vmatprep.subr.bf16.mxu0 %v4905
    %7843 = vmatpush1.bf16.msra.mxu0 %v4904
    %7844 = vmatprep.subr.bf16.mxu0 %v4901
    %7845 = vmatpush1.bf16.msra.mxu0 %v4900
    %7846 = vmatprep.subr.bf16.mxu0 %v4961
    %7847 = vmatpush2.bf16.msra.mxu0 %v4960
    %7848 = vmatprep.subr.bf16.mxu0 %v4957
    %7849 = vmatpush2.bf16.msra.mxu0 %v4956
    %7850 = vmatprep.subr.bf16.mxu0 %v4953
    %7851 = vmatpush2.bf16.msra.mxu0 %v4952
    %7852 = vmatprep.subr.bf16.mxu0 %v4949
    %7853 = vmatpush2.bf16.msra.mxu0 %v4948
    %7854 = vmatprep.subr.bf16.mxu0 %v4945
    %7855 = vmatpush2.bf16.msra.mxu0 %v4944
    %7856 = vmatprep.subr.bf16.mxu0 %v4941
    %7857 = vmatpush2.bf16.msra.mxu0 %v4940
    %7858 = vmatprep.subr.bf16.mxu0 %v4937
    %7859 = vmatpush2.bf16.msra.mxu0 %v4936
    %7860 = vmatprep.subr.bf16.mxu0 %v4933
    %7861 = vmatpush2.bf16.msra.mxu0 %v4932
    %7862 = vmatprep.mubr.bf16.mxu0 %v238
    %7863 = vmatmul.mubr.bf16.gmra.mxu0 %v237
    %v7864 = vpop.f32.mrf.mxu0
    %v7865 = vadd.f32 %v7824, %v7864
    %v7866 = vpop.f32.mrf.mxu0
    %v7867 = vadd.f32 %v7826, %v7866
    %v7868 = vpop.f32.mrf.mxu0
    %v7869 = vpop.f32.mrf.mxu0
    %7870 = vdwg.mxu0
    %7871 = vmatprep.subr.bf16.mxu0 %v4993
    %7872 = vmatpush1.bf16.msra.mxu0 %v4992
    %7873 = vmatprep.subr.bf16.mxu0 %v4989
    %7874 = vmatpush1.bf16.msra.mxu0 %v4988
    %7875 = vmatprep.subr.bf16.mxu0 %v4985
    %7876 = vmatpush1.bf16.msra.mxu0 %v4984
    %7877 = vmatprep.subr.bf16.mxu0 %v4981
    %7878 = vmatpush1.bf16.msra.mxu0 %v4980
    %7879 = vmatprep.subr.bf16.mxu0 %v4977
    %7880 = vmatpush1.bf16.msra.mxu0 %v4976
    %7881 = vmatprep.subr.bf16.mxu0 %v4973
    %7882 = vmatpush1.bf16.msra.mxu0 %v4972
    %7883 = vmatprep.subr.bf16.mxu0 %v4969
    %7884 = vmatpush1.bf16.msra.mxu0 %v4968
    %7885 = vmatprep.subr.bf16.mxu0 %v4965
    %7886 = vmatpush1.bf16.msra.mxu0 %v4964
    %7887 = vmatprep.subr.bf16.mxu0 %v5025
    %7888 = vmatpush2.bf16.msra.mxu0 %v5024
    %7889 = vmatprep.subr.bf16.mxu0 %v5021
    %7890 = vmatpush2.bf16.msra.mxu0 %v5020
    %7891 = vmatprep.subr.bf16.mxu0 %v5017
    %7892 = vmatpush2.bf16.msra.mxu0 %v5016
    %7893 = vmatprep.subr.bf16.mxu0 %v5013
    %7894 = vmatpush2.bf16.msra.mxu0 %v5012
    %7895 = vmatprep.subr.bf16.mxu0 %v5009
    %7896 = vmatpush2.bf16.msra.mxu0 %v5008
    %7897 = vmatprep.subr.bf16.mxu0 %v5005
    %7898 = vmatpush2.bf16.msra.mxu0 %v5004
    %7899 = vmatprep.subr.bf16.mxu0 %v5001
    %7900 = vmatpush2.bf16.msra.mxu0 %v5000
    %7901 = vmatprep.subr.bf16.mxu0 %v4997
    %7902 = vmatpush2.bf16.msra.mxu0 %v4996
    %7903 = vmatprep.mubr.bf16.mxu0 %v240
    %7904 = vmatmul.mubr.bf16.gmra.mxu0 %v239
    %v7905 = vpop.f32.mrf.mxu0
    %v7906 = vadd.f32 %v7865, %v7905
    %v7907 = vpop.f32.mrf.mxu0
    %v7908 = vadd.f32 %v7867, %v7907
    %v7909 = vpop.f32.mrf.mxu0
    %v7910 = vpop.f32.mrf.mxu0
    %7911 = vdwg.mxu0
    %7912 = vmatprep.subr.bf16.mxu0 %v5057
    %7913 = vmatpush1.bf16.msra.mxu0 %v5056
    %7914 = vmatprep.subr.bf16.mxu0 %v5053
    %7915 = vmatpush1.bf16.msra.mxu0 %v5052
    %7916 = vmatprep.subr.bf16.mxu0 %v5049
    %7917 = vmatpush1.bf16.msra.mxu0 %v5048
    %7918 = vmatprep.subr.bf16.mxu0 %v5045
    %7919 = vmatpush1.bf16.msra.mxu0 %v5044
    %7920 = vmatprep.subr.bf16.mxu0 %v5041
    %7921 = vmatpush1.bf16.msra.mxu0 %v5040
    %7922 = vmatprep.subr.bf16.mxu0 %v5037
    %7923 = vmatpush1.bf16.msra.mxu0 %v5036
    %7924 = vmatprep.subr.bf16.mxu0 %v5033
    %7925 = vmatpush1.bf16.msra.mxu0 %v5032
    %7926 = vmatprep.subr.bf16.mxu0 %v5029
    %7927 = vmatpush1.bf16.msra.mxu0 %v5028
    %7928 = vmatprep.subr.bf16.mxu0 %v5089
    %7929 = vmatpush2.bf16.msra.mxu0 %v5088
    %7930 = vmatprep.subr.bf16.mxu0 %v5085
    %7931 = vmatpush2.bf16.msra.mxu0 %v5084
    %7932 = vmatprep.subr.bf16.mxu0 %v5081
    %7933 = vmatpush2.bf16.msra.mxu0 %v5080
    %7934 = vmatprep.subr.bf16.mxu0 %v5077
    %7935 = vmatpush2.bf16.msra.mxu0 %v5076
    %7936 = vmatprep.subr.bf16.mxu0 %v5073
    %7937 = vmatpush2.bf16.msra.mxu0 %v5072
    %7938 = vmatprep.subr.bf16.mxu0 %v5069
    %7939 = vmatpush2.bf16.msra.mxu0 %v5068
    %7940 = vmatprep.subr.bf16.mxu0 %v5065
    %7941 = vmatpush2.bf16.msra.mxu0 %v5064
    %7942 = vmatprep.subr.bf16.mxu0 %v5061
    %7943 = vmatpush2.bf16.msra.mxu0 %v5060
    %7944 = vmatprep.mubr.bf16.mxu0 %v242
    %7945 = vmatmul.mubr.bf16.gmra.mxu0 %v241
    %v7946 = vpop.f32.mrf.mxu0
    %v7947 = vadd.f32 %v7906, %v7946
    %v7948 = vpop.f32.mrf.mxu0
    %v7949 = vadd.f32 %v7908, %v7948
    %v7950 = vpop.f32.mrf.mxu0
    %v7951 = vpop.f32.mrf.mxu0
    %7952 = vdwg.mxu0
    %7953 = vmatprep.subr.bf16.mxu0 %v5121
    %7954 = vmatpush1.bf16.msra.mxu0 %v5120
    %7955 = vmatprep.subr.bf16.mxu0 %v5117
    %7956 = vmatpush1.bf16.msra.mxu0 %v5116
    %7957 = vmatprep.subr.bf16.mxu0 %v5113
    %7958 = vmatpush1.bf16.msra.mxu0 %v5112
    %7959 = vmatprep.subr.bf16.mxu0 %v5109
    %7960 = vmatpush1.bf16.msra.mxu0 %v5108
    %7961 = vmatprep.subr.bf16.mxu0 %v5105
    %7962 = vmatpush1.bf16.msra.mxu0 %v5104
    %7963 = vmatprep.subr.bf16.mxu0 %v5101
    %7964 = vmatpush1.bf16.msra.mxu0 %v5100
    %7965 = vmatprep.subr.bf16.mxu0 %v5097
    %7966 = vmatpush1.bf16.msra.mxu0 %v5096
    %7967 = vmatprep.subr.bf16.mxu0 %v5093
    %7968 = vmatpush1.bf16.msra.mxu0 %v5092
    %7969 = vmatprep.subr.bf16.mxu0 %v5153
    %7970 = vmatpush2.bf16.msra.mxu0 %v5152
    %7971 = vmatprep.subr.bf16.mxu0 %v5149
    %7972 = vmatpush2.bf16.msra.mxu0 %v5148
    %7973 = vmatprep.subr.bf16.mxu0 %v5145
    %7974 = vmatpush2.bf16.msra.mxu0 %v5144
    %7975 = vmatprep.subr.bf16.mxu0 %v5141
    %7976 = vmatpush2.bf16.msra.mxu0 %v5140
    %7977 = vmatprep.subr.bf16.mxu0 %v5137
    %7978 = vmatpush2.bf16.msra.mxu0 %v5136
    %7979 = vmatprep.subr.bf16.mxu0 %v5133
    %7980 = vmatpush2.bf16.msra.mxu0 %v5132
    %7981 = vmatprep.subr.bf16.mxu0 %v5129
    %7982 = vmatpush2.bf16.msra.mxu0 %v5128
    %7983 = vmatprep.subr.bf16.mxu0 %v5125
    %7984 = vmatpush2.bf16.msra.mxu0 %v5124
    %7985 = vmatprep.mubr.bf16.mxu0 %v244
    %7986 = vmatmul.mubr.bf16.gmra.mxu0 %v243
    %v7987 = vpop.f32.mrf.mxu0
    %v7988 = vadd.f32 %v7947, %v7987
    %v7989 = vpop.f32.mrf.mxu0
    %v7990 = vadd.f32 %v7949, %v7989
    %v7991 = vpop.f32.mrf.mxu0
    %v7992 = vpop.f32.mrf.mxu0
    %7993 = vdwg.mxu0
    %7994 = vmatprep.subr.bf16.mxu0 %v5185
    %7995 = vmatpush1.bf16.msra.mxu0 %v5184
    %7996 = vmatprep.subr.bf16.mxu0 %v5181
    %7997 = vmatpush1.bf16.msra.mxu0 %v5180
    %7998 = vmatprep.subr.bf16.mxu0 %v5177
    %7999 = vmatpush1.bf16.msra.mxu0 %v5176
    %8000 = vmatprep.subr.bf16.mxu0 %v5173
    %8001 = vmatpush1.bf16.msra.mxu0 %v5172
    %8002 = vmatprep.subr.bf16.mxu0 %v5169
    %8003 = vmatpush1.bf16.msra.mxu0 %v5168
    %8004 = vmatprep.subr.bf16.mxu0 %v5165
    %8005 = vmatpush1.bf16.msra.mxu0 %v5164
    %8006 = vmatprep.subr.bf16.mxu0 %v5161
    %8007 = vmatpush1.bf16.msra.mxu0 %v5160
    %8008 = vmatprep.subr.bf16.mxu0 %v5157
    %8009 = vmatpush1.bf16.msra.mxu0 %v5156
    %8010 = vmatprep.subr.bf16.mxu0 %v5217
    %8011 = vmatpush2.bf16.msra.mxu0 %v5216
    %8012 = vmatprep.subr.bf16.mxu0 %v5213
    %8013 = vmatpush2.bf16.msra.mxu0 %v5212
    %8014 = vmatprep.subr.bf16.mxu0 %v5209
    %8015 = vmatpush2.bf16.msra.mxu0 %v5208
    %8016 = vmatprep.subr.bf16.mxu0 %v5205
    %8017 = vmatpush2.bf16.msra.mxu0 %v5204
    %8018 = vmatprep.subr.bf16.mxu0 %v5201
    %8019 = vmatpush2.bf16.msra.mxu0 %v5200
    %8020 = vmatprep.subr.bf16.mxu0 %v5197
    %8021 = vmatpush2.bf16.msra.mxu0 %v5196
    %8022 = vmatprep.subr.bf16.mxu0 %v5193
    %8023 = vmatpush2.bf16.msra.mxu0 %v5192
    %8024 = vmatprep.subr.bf16.mxu0 %v5189
    %8025 = vmatpush2.bf16.msra.mxu0 %v5188
    %8026 = vmatprep.mubr.bf16.mxu0 %v246
    %8027 = vmatmul.mubr.bf16.gmra.mxu0 %v245
    %v8028 = vpop.f32.mrf.mxu0
    %v8029 = vadd.f32 %v7988, %v8028
    %v8030 = vpop.f32.mrf.mxu0
    %v8031 = vadd.f32 %v7990, %v8030
    %v8032 = vpop.f32.mrf.mxu0
    %v8033 = vpop.f32.mrf.mxu0
    %8034 = vdwg.mxu0
    %8035 = vmatprep.subr.bf16.mxu0 %v5249
    %8036 = vmatpush1.bf16.msra.mxu0 %v5248
    %8037 = vmatprep.subr.bf16.mxu0 %v5245
    %8038 = vmatpush1.bf16.msra.mxu0 %v5244
    %8039 = vmatprep.subr.bf16.mxu0 %v5241
    %8040 = vmatpush1.bf16.msra.mxu0 %v5240
    %8041 = vmatprep.subr.bf16.mxu0 %v5237
    %8042 = vmatpush1.bf16.msra.mxu0 %v5236
    %8043 = vmatprep.subr.bf16.mxu0 %v5233
    %8044 = vmatpush1.bf16.msra.mxu0 %v5232
    %8045 = vmatprep.subr.bf16.mxu0 %v5229
    %8046 = vmatpush1.bf16.msra.mxu0 %v5228
    %8047 = vmatprep.subr.bf16.mxu0 %v5225
    %8048 = vmatpush1.bf16.msra.mxu0 %v5224
    %8049 = vmatprep.subr.bf16.mxu0 %v5221
    %8050 = vmatpush1.bf16.msra.mxu0 %v5220
    %8051 = vmatprep.subr.bf16.mxu0 %v5281
    %8052 = vmatpush2.bf16.msra.mxu0 %v5280
    %8053 = vmatprep.subr.bf16.mxu0 %v5277
    %8054 = vmatpush2.bf16.msra.mxu0 %v5276
    %8055 = vmatprep.subr.bf16.mxu0 %v5273
    %8056 = vmatpush2.bf16.msra.mxu0 %v5272
    %8057 = vmatprep.subr.bf16.mxu0 %v5269
    %8058 = vmatpush2.bf16.msra.mxu0 %v5268
    %8059 = vmatprep.subr.bf16.mxu0 %v5265
    %8060 = vmatpush2.bf16.msra.mxu0 %v5264
    %8061 = vmatprep.subr.bf16.mxu0 %v5261
    %8062 = vmatpush2.bf16.msra.mxu0 %v5260
    %8063 = vmatprep.subr.bf16.mxu0 %v5257
    %8064 = vmatpush2.bf16.msra.mxu0 %v5256
    %8065 = vmatprep.subr.bf16.mxu0 %v5253
    %8066 = vmatpush2.bf16.msra.mxu0 %v5252
    %8067 = vmatprep.mubr.bf16.mxu0 %v248
    %8068 = vmatmul.mubr.bf16.gmra.mxu0 %v247
    %v8069 = vpop.f32.mrf.mxu0
    %v8070 = vadd.f32 %v8029, %v8069
    %v8071 = vpop.f32.mrf.mxu0
    %v8072 = vadd.f32 %v8031, %v8071
    %v8073 = vpop.f32.mrf.mxu0
    %v8074 = vpop.f32.mrf.mxu0
    %8075 = vdwg.mxu0
    %8076 = vmatprep.subr.bf16.mxu0 %v5313
    %8077 = vmatpush1.bf16.msra.mxu0 %v5312
    %8078 = vmatprep.subr.bf16.mxu0 %v5309
    %8079 = vmatpush1.bf16.msra.mxu0 %v5308
    %8080 = vmatprep.subr.bf16.mxu0 %v5305
    %8081 = vmatpush1.bf16.msra.mxu0 %v5304
    %8082 = vmatprep.subr.bf16.mxu0 %v5301
    %8083 = vmatpush1.bf16.msra.mxu0 %v5300
    %8084 = vmatprep.subr.bf16.mxu0 %v5297
    %8085 = vmatpush1.bf16.msra.mxu0 %v5296
    %8086 = vmatprep.subr.bf16.mxu0 %v5293
    %8087 = vmatpush1.bf16.msra.mxu0 %v5292
    %8088 = vmatprep.subr.bf16.mxu0 %v5289
    %8089 = vmatpush1.bf16.msra.mxu0 %v5288
    %8090 = vmatprep.subr.bf16.mxu0 %v5285
    %8091 = vmatpush1.bf16.msra.mxu0 %v5284
    %8092 = vmatprep.subr.bf16.mxu0 %v5345
    %8093 = vmatpush2.bf16.msra.mxu0 %v5344
    %8094 = vmatprep.subr.bf16.mxu0 %v5341
    %8095 = vmatpush2.bf16.msra.mxu0 %v5340
    %8096 = vmatprep.subr.bf16.mxu0 %v5337
    %8097 = vmatpush2.bf16.msra.mxu0 %v5336
    %8098 = vmatprep.subr.bf16.mxu0 %v5333
    %8099 = vmatpush2.bf16.msra.mxu0 %v5332
    %8100 = vmatprep.subr.bf16.mxu0 %v5329
    %8101 = vmatpush2.bf16.msra.mxu0 %v5328
    %8102 = vmatprep.subr.bf16.mxu0 %v5325
    %8103 = vmatpush2.bf16.msra.mxu0 %v5324
    %8104 = vmatprep.subr.bf16.mxu0 %v5321
    %8105 = vmatpush2.bf16.msra.mxu0 %v5320
    %8106 = vmatprep.subr.bf16.mxu0 %v5317
    %8107 = vmatpush2.bf16.msra.mxu0 %v5316
    %8108 = vmatprep.mubr.bf16.mxu0 %v250
    %8109 = vmatmul.mubr.bf16.gmra.mxu0 %v249
    %v8110 = vpop.f32.mrf.mxu0
    %v8111 = vadd.f32 %v8070, %v8110
    %v8112 = vpop.f32.mrf.mxu0
    %v8113 = vadd.f32 %v8072, %v8112
    %v8114 = vpop.f32.mrf.mxu0
    %v8115 = vpop.f32.mrf.mxu0
    %8116 = vdwg.mxu0
    %8117 = vmatprep.subr.bf16.mxu0 %v5377
    %8118 = vmatpush1.bf16.msra.mxu0 %v5376
    %8119 = vmatprep.subr.bf16.mxu0 %v5373
    %8120 = vmatpush1.bf16.msra.mxu0 %v5372
    %8121 = vmatprep.subr.bf16.mxu0 %v5369
    %8122 = vmatpush1.bf16.msra.mxu0 %v5368
    %8123 = vmatprep.subr.bf16.mxu0 %v5365
    %8124 = vmatpush1.bf16.msra.mxu0 %v5364
    %8125 = vmatprep.subr.bf16.mxu0 %v5361
    %8126 = vmatpush1.bf16.msra.mxu0 %v5360
    %8127 = vmatprep.subr.bf16.mxu0 %v5357
    %8128 = vmatpush1.bf16.msra.mxu0 %v5356
    %8129 = vmatprep.subr.bf16.mxu0 %v5353
    %8130 = vmatpush1.bf16.msra.mxu0 %v5352
    %8131 = vmatprep.subr.bf16.mxu0 %v5349
    %8132 = vmatpush1.bf16.msra.mxu0 %v5348
    %8133 = vmatprep.subr.bf16.mxu0 %v5409
    %8134 = vmatpush2.bf16.msra.mxu0 %v5408
    %8135 = vmatprep.subr.bf16.mxu0 %v5405
    %8136 = vmatpush2.bf16.msra.mxu0 %v5404
    %8137 = vmatprep.subr.bf16.mxu0 %v5401
    %8138 = vmatpush2.bf16.msra.mxu0 %v5400
    %8139 = vmatprep.subr.bf16.mxu0 %v5397
    %8140 = vmatpush2.bf16.msra.mxu0 %v5396
    %8141 = vmatprep.subr.bf16.mxu0 %v5393
    %8142 = vmatpush2.bf16.msra.mxu0 %v5392
    %8143 = vmatprep.subr.bf16.mxu0 %v5389
    %8144 = vmatpush2.bf16.msra.mxu0 %v5388
    %8145 = vmatprep.subr.bf16.mxu0 %v5385
    %8146 = vmatpush2.bf16.msra.mxu0 %v5384
    %8147 = vmatprep.subr.bf16.mxu0 %v5381
    %8148 = vmatpush2.bf16.msra.mxu0 %v5380
    %8149 = vmatprep.mubr.bf16.mxu0 %v252
    %8150 = vmatmul.mubr.bf16.gmra.mxu0 %v251
    %v8151 = vpop.f32.mrf.mxu0
    %v8152 = vadd.f32 %v8111, %v8151
    %v8153 = vpop.f32.mrf.mxu0
    %v8154 = vadd.f32 %v8113, %v8153
    %v8155 = vpop.f32.mrf.mxu0
    %v8156 = vpop.f32.mrf.mxu0
    %8157 = vdwg.mxu0
    %8158 = vmatprep.subr.bf16.mxu0 %v5441
    %8159 = vmatpush1.bf16.msra.mxu0 %v5440
    %8160 = vmatprep.subr.bf16.mxu0 %v5437
    %8161 = vmatpush1.bf16.msra.mxu0 %v5436
    %8162 = vmatprep.subr.bf16.mxu0 %v5433
    %8163 = vmatpush1.bf16.msra.mxu0 %v5432
    %8164 = vmatprep.subr.bf16.mxu0 %v5429
    %8165 = vmatpush1.bf16.msra.mxu0 %v5428
    %8166 = vmatprep.subr.bf16.mxu0 %v5425
    %8167 = vmatpush1.bf16.msra.mxu0 %v5424
    %8168 = vmatprep.subr.bf16.mxu0 %v5421
    %8169 = vmatpush1.bf16.msra.mxu0 %v5420
    %8170 = vmatprep.subr.bf16.mxu0 %v5417
    %8171 = vmatpush1.bf16.msra.mxu0 %v5416
    %8172 = vmatprep.subr.bf16.mxu0 %v5413
    %8173 = vmatpush1.bf16.msra.mxu0 %v5412
    %8174 = vmatprep.subr.bf16.mxu0 %v5473
    %8175 = vmatpush2.bf16.msra.mxu0 %v5472
    %8176 = vmatprep.subr.bf16.mxu0 %v5469
    %8177 = vmatpush2.bf16.msra.mxu0 %v5468
    %8178 = vmatprep.subr.bf16.mxu0 %v5465
    %8179 = vmatpush2.bf16.msra.mxu0 %v5464
    %8180 = vmatprep.subr.bf16.mxu0 %v5461
    %8181 = vmatpush2.bf16.msra.mxu0 %v5460
    %8182 = vmatprep.subr.bf16.mxu0 %v5457
    %8183 = vmatpush2.bf16.msra.mxu0 %v5456
    %8184 = vmatprep.subr.bf16.mxu0 %v5453
    %8185 = vmatpush2.bf16.msra.mxu0 %v5452
    %8186 = vmatprep.subr.bf16.mxu0 %v5449
    %8187 = vmatpush2.bf16.msra.mxu0 %v5448
    %8188 = vmatprep.subr.bf16.mxu0 %v5445
    %8189 = vmatpush2.bf16.msra.mxu0 %v5444
    %8190 = vmatprep.mubr.bf16.mxu0 %v254
    %8191 = vmatmul.mubr.bf16.gmra.mxu0 %v253
    %v8192 = vpop.f32.mrf.mxu0
    %v8193 = vadd.f32 %v8152, %v8192
    %v8194 = vpop.f32.mrf.mxu0
    %v8195 = vadd.f32 %v8154, %v8194
    %v8196 = vpop.f32.mrf.mxu0
    %v8197 = vpop.f32.mrf.mxu0
    %8198 = vdwg.mxu0
    %8199 = vmatprep.subr.bf16.mxu0 %v5505
    %8200 = vmatpush1.bf16.msra.mxu0 %v5504
    %8201 = vmatprep.subr.bf16.mxu0 %v5501
    %8202 = vmatpush1.bf16.msra.mxu0 %v5500
    %8203 = vmatprep.subr.bf16.mxu0 %v5497
    %8204 = vmatpush1.bf16.msra.mxu0 %v5496
    %8205 = vmatprep.subr.bf16.mxu0 %v5493
    %8206 = vmatpush1.bf16.msra.mxu0 %v5492
    %8207 = vmatprep.subr.bf16.mxu0 %v5489
    %8208 = vmatpush1.bf16.msra.mxu0 %v5488
    %8209 = vmatprep.subr.bf16.mxu0 %v5485
    %8210 = vmatpush1.bf16.msra.mxu0 %v5484
    %8211 = vmatprep.subr.bf16.mxu0 %v5481
    %8212 = vmatpush1.bf16.msra.mxu0 %v5480
    %8213 = vmatprep.subr.bf16.mxu0 %v5477
    %8214 = vmatpush1.bf16.msra.mxu0 %v5476
    %8215 = vmatprep.subr.bf16.mxu0 %v5537
    %8216 = vmatpush2.bf16.msra.mxu0 %v5536
    %8217 = vmatprep.subr.bf16.mxu0 %v5533
    %8218 = vmatpush2.bf16.msra.mxu0 %v5532
    %8219 = vmatprep.subr.bf16.mxu0 %v5529
    %8220 = vmatpush2.bf16.msra.mxu0 %v5528
    %8221 = vmatprep.subr.bf16.mxu0 %v5525
    %8222 = vmatpush2.bf16.msra.mxu0 %v5524
    %8223 = vmatprep.subr.bf16.mxu0 %v5521
    %8224 = vmatpush2.bf16.msra.mxu0 %v5520
    %8225 = vmatprep.subr.bf16.mxu0 %v5517
    %8226 = vmatpush2.bf16.msra.mxu0 %v5516
    %8227 = vmatprep.subr.bf16.mxu0 %v5513
    %8228 = vmatpush2.bf16.msra.mxu0 %v5512
    %8229 = vmatprep.subr.bf16.mxu0 %v5509
    %8230 = vmatpush2.bf16.msra.mxu0 %v5508
    %8231 = vmatprep.mubr.bf16.mxu0 %v256
    %8232 = vmatmul.mubr.bf16.gmra.mxu0 %v255
    %v8233 = vpop.f32.mrf.mxu0
    %v8234 = vadd.f32 %v8193, %v8233
    %v8235 = vpop.f32.mrf.mxu0
    %v8236 = vadd.f32 %v8195, %v8235
    %v8237 = vpop.f32.mrf.mxu0
    %v8238 = vpop.f32.mrf.mxu0
    %8239 = vdwg.mxu0
    %8240 = vmatprep.subr.bf16.mxu0 %v5569
    %8241 = vmatpush1.bf16.msra.mxu0 %v5568
    %8242 = vmatprep.subr.bf16.mxu0 %v5565
    %8243 = vmatpush1.bf16.msra.mxu0 %v5564
    %8244 = vmatprep.subr.bf16.mxu0 %v5561
    %8245 = vmatpush1.bf16.msra.mxu0 %v5560
    %8246 = vmatprep.subr.bf16.mxu0 %v5557
    %8247 = vmatpush1.bf16.msra.mxu0 %v5556
    %8248 = vmatprep.subr.bf16.mxu0 %v5553
    %8249 = vmatpush1.bf16.msra.mxu0 %v5552
    %8250 = vmatprep.subr.bf16.mxu0 %v5549
    %8251 = vmatpush1.bf16.msra.mxu0 %v5548
    %8252 = vmatprep.subr.bf16.mxu0 %v5545
    %8253 = vmatpush1.bf16.msra.mxu0 %v5544
    %8254 = vmatprep.subr.bf16.mxu0 %v5541
    %8255 = vmatpush1.bf16.msra.mxu0 %v5540
    %8256 = vmatprep.subr.bf16.mxu0 %v5601
    %8257 = vmatpush2.bf16.msra.mxu0 %v5600
    %8258 = vmatprep.subr.bf16.mxu0 %v5597
    %8259 = vmatpush2.bf16.msra.mxu0 %v5596
    %8260 = vmatprep.subr.bf16.mxu0 %v5593
    %8261 = vmatpush2.bf16.msra.mxu0 %v5592
    %8262 = vmatprep.subr.bf16.mxu0 %v5589
    %8263 = vmatpush2.bf16.msra.mxu0 %v5588
    %8264 = vmatprep.subr.bf16.mxu0 %v5585
    %8265 = vmatpush2.bf16.msra.mxu0 %v5584
    %8266 = vmatprep.subr.bf16.mxu0 %v5581
    %8267 = vmatpush2.bf16.msra.mxu0 %v5580
    %8268 = vmatprep.subr.bf16.mxu0 %v5577
    %8269 = vmatpush2.bf16.msra.mxu0 %v5576
    %8270 = vmatprep.subr.bf16.mxu0 %v5573
    %8271 = vmatpush2.bf16.msra.mxu0 %v5572
    %8272 = vmatprep.mubr.bf16.mxu0 %v258
    %8273 = vmatmul.mubr.bf16.gmra.mxu0 %v257
    %v8274 = vpop.f32.mrf.mxu0
    %v8275 = vadd.f32 %v8234, %v8274
    %v8276 = vpop.f32.mrf.mxu0
    %v8277 = vadd.f32 %v8236, %v8276
    %v8278 = vpop.f32.mrf.mxu0
    %v8279 = vpop.f32.mrf.mxu0
    %8280 = vdwg.mxu0
    %8281 = vmatprep.subr.bf16.mxu0 %v5633
    %8282 = vmatpush1.bf16.msra.mxu0 %v5632
    %8283 = vmatprep.subr.bf16.mxu0 %v5629
    %8284 = vmatpush1.bf16.msra.mxu0 %v5628
    %8285 = vmatprep.subr.bf16.mxu0 %v5625
    %8286 = vmatpush1.bf16.msra.mxu0 %v5624
    %8287 = vmatprep.subr.bf16.mxu0 %v5621
    %8288 = vmatpush1.bf16.msra.mxu0 %v5620
    %8289 = vmatprep.subr.bf16.mxu0 %v5617
    %8290 = vmatpush1.bf16.msra.mxu0 %v5616
    %8291 = vmatprep.subr.bf16.mxu0 %v5613
    %8292 = vmatpush1.bf16.msra.mxu0 %v5612
    %8293 = vmatprep.subr.bf16.mxu0 %v5609
    %8294 = vmatpush1.bf16.msra.mxu0 %v5608
    %8295 = vmatprep.subr.bf16.mxu0 %v5605
    %8296 = vmatpush1.bf16.msra.mxu0 %v5604
    %8297 = vmatprep.subr.bf16.mxu0 %v5665
    %8298 = vmatpush2.bf16.msra.mxu0 %v5664
    %8299 = vmatprep.subr.bf16.mxu0 %v5661
    %8300 = vmatpush2.bf16.msra.mxu0 %v5660
    %8301 = vmatprep.subr.bf16.mxu0 %v5657
    %8302 = vmatpush2.bf16.msra.mxu0 %v5656
    %8303 = vmatprep.subr.bf16.mxu0 %v5653
    %8304 = vmatpush2.bf16.msra.mxu0 %v5652
    %8305 = vmatprep.subr.bf16.mxu0 %v5649
    %8306 = vmatpush2.bf16.msra.mxu0 %v5648
    %8307 = vmatprep.subr.bf16.mxu0 %v5645
    %8308 = vmatpush2.bf16.msra.mxu0 %v5644
    %8309 = vmatprep.subr.bf16.mxu0 %v5641
    %8310 = vmatpush2.bf16.msra.mxu0 %v5640
    %8311 = vmatprep.subr.bf16.mxu0 %v5637
    %8312 = vmatpush2.bf16.msra.mxu0 %v5636
    %8313 = vmatprep.mubr.bf16.mxu0 %v260
    %8314 = vmatmul.mubr.bf16.gmra.mxu0 %v259
    %v8315 = vpop.f32.mrf.mxu0
    %v8316 = vadd.f32 %v8275, %v8315
    %v8317 = vpop.f32.mrf.mxu0
    %v8318 = vadd.f32 %v8277, %v8317
    %v8319 = vpop.f32.mrf.mxu0
    %v8320 = vpop.f32.mrf.mxu0
    %8321 = vdwg.mxu0
    %8322 = vmatprep.subr.bf16.mxu0 %v5697
    %8323 = vmatpush1.bf16.msra.mxu0 %v5696
    %8324 = vmatprep.subr.bf16.mxu0 %v5693
    %8325 = vmatpush1.bf16.msra.mxu0 %v5692
    %8326 = vmatprep.subr.bf16.mxu0 %v5689
    %8327 = vmatpush1.bf16.msra.mxu0 %v5688
    %8328 = vmatprep.subr.bf16.mxu0 %v5685
    %8329 = vmatpush1.bf16.msra.mxu0 %v5684
    %8330 = vmatprep.subr.bf16.mxu0 %v5681
    %8331 = vmatpush1.bf16.msra.mxu0 %v5680
    %8332 = vmatprep.subr.bf16.mxu0 %v5677
    %8333 = vmatpush1.bf16.msra.mxu0 %v5676
    %8334 = vmatprep.subr.bf16.mxu0 %v5673
    %8335 = vmatpush1.bf16.msra.mxu0 %v5672
    %8336 = vmatprep.subr.bf16.mxu0 %v5669
    %8337 = vmatpush1.bf16.msra.mxu0 %v5668
    %8338 = vmatprep.subr.bf16.mxu0 %v5729
    %8339 = vmatpush2.bf16.msra.mxu0 %v5728
    %8340 = vmatprep.subr.bf16.mxu0 %v5725
    %8341 = vmatpush2.bf16.msra.mxu0 %v5724
    %8342 = vmatprep.subr.bf16.mxu0 %v5721
    %8343 = vmatpush2.bf16.msra.mxu0 %v5720
    %8344 = vmatprep.subr.bf16.mxu0 %v5717
    %8345 = vmatpush2.bf16.msra.mxu0 %v5716
    %8346 = vmatprep.subr.bf16.mxu0 %v5713
    %8347 = vmatpush2.bf16.msra.mxu0 %v5712
    %8348 = vmatprep.subr.bf16.mxu0 %v5709
    %8349 = vmatpush2.bf16.msra.mxu0 %v5708
    %8350 = vmatprep.subr.bf16.mxu0 %v5705
    %8351 = vmatpush2.bf16.msra.mxu0 %v5704
    %8352 = vmatprep.subr.bf16.mxu0 %v5701
    %8353 = vmatpush2.bf16.msra.mxu0 %v5700
    %8354 = vmatprep.mubr.bf16.mxu0 %v262
    %8355 = vmatmul.mubr.bf16.gmra.mxu0 %v261
    %v8356 = vpop.f32.mrf.mxu0
    %v8357 = vadd.f32 %v8316, %v8356
    %v8358 = vpop.f32.mrf.mxu0
    %v8359 = vadd.f32 %v8318, %v8358
    %v8360 = vpop.f32.mrf.mxu0
    %v8361 = vpop.f32.mrf.mxu0
    %8362 = vdwg.mxu0
    %8363 = vmatprep.subr.bf16.mxu0 %v5761
    %8364 = vmatpush1.bf16.msra.mxu0 %v5760
    %8365 = vmatprep.subr.bf16.mxu0 %v5757
    %8366 = vmatpush1.bf16.msra.mxu0 %v5756
    %8367 = vmatprep.subr.bf16.mxu0 %v5753
    %8368 = vmatpush1.bf16.msra.mxu0 %v5752
    %8369 = vmatprep.subr.bf16.mxu0 %v5749
    %8370 = vmatpush1.bf16.msra.mxu0 %v5748
    %8371 = vmatprep.subr.bf16.mxu0 %v5745
    %8372 = vmatpush1.bf16.msra.mxu0 %v5744
    %8373 = vmatprep.subr.bf16.mxu0 %v5741
    %8374 = vmatpush1.bf16.msra.mxu0 %v5740
    %8375 = vmatprep.subr.bf16.mxu0 %v5737
    %8376 = vmatpush1.bf16.msra.mxu0 %v5736
    %8377 = vmatprep.subr.bf16.mxu0 %v5733
    %8378 = vmatpush1.bf16.msra.mxu0 %v5732
    %8379 = vmatprep.subr.bf16.mxu0 %v5793
    %8380 = vmatpush2.bf16.msra.mxu0 %v5792
    %8381 = vmatprep.subr.bf16.mxu0 %v5789
    %8382 = vmatpush2.bf16.msra.mxu0 %v5788
    %8383 = vmatprep.subr.bf16.mxu0 %v5785
    %8384 = vmatpush2.bf16.msra.mxu0 %v5784
    %8385 = vmatprep.subr.bf16.mxu0 %v5781
    %8386 = vmatpush2.bf16.msra.mxu0 %v5780
    %8387 = vmatprep.subr.bf16.mxu0 %v5777
    %8388 = vmatpush2.bf16.msra.mxu0 %v5776
    %8389 = vmatprep.subr.bf16.mxu0 %v5773
    %8390 = vmatpush2.bf16.msra.mxu0 %v5772
    %8391 = vmatprep.subr.bf16.mxu0 %v5769
    %8392 = vmatpush2.bf16.msra.mxu0 %v5768
    %8393 = vmatprep.subr.bf16.mxu0 %v5765
    %8394 = vmatpush2.bf16.msra.mxu0 %v5764
    %8395 = vmatprep.mubr.bf16.mxu0 %v264
    %8396 = vmatmul.mubr.bf16.gmra.mxu0 %v263
    %v8397 = vpop.f32.mrf.mxu0
    %v8398 = vadd.f32 %v8357, %v8397
    %v8399 = vpop.f32.mrf.mxu0
    %v8400 = vadd.f32 %v8359, %v8399
    %v8401 = vpop.f32.mrf.mxu0
    %v8402 = vpop.f32.mrf.mxu0
    %8403 = vdwg.mxu0
    %8404 = vmatprep.subr.bf16.mxu0 %v5825
    %8405 = vmatpush1.bf16.msra.mxu0 %v5824
    %8406 = vmatprep.subr.bf16.mxu0 %v5821
    %8407 = vmatpush1.bf16.msra.mxu0 %v5820
    %8408 = vmatprep.subr.bf16.mxu0 %v5817
    %8409 = vmatpush1.bf16.msra.mxu0 %v5816
    %8410 = vmatprep.subr.bf16.mxu0 %v5813
    %8411 = vmatpush1.bf16.msra.mxu0 %v5812
    %8412 = vmatprep.subr.bf16.mxu0 %v5809
    %8413 = vmatpush1.bf16.msra.mxu0 %v5808
    %8414 = vmatprep.subr.bf16.mxu0 %v5805
    %8415 = vmatpush1.bf16.msra.mxu0 %v5804
    %8416 = vmatprep.subr.bf16.mxu0 %v5801
    %8417 = vmatpush1.bf16.msra.mxu0 %v5800
    %8418 = vmatprep.subr.bf16.mxu0 %v5797
    %8419 = vmatpush1.bf16.msra.mxu0 %v5796
    %8420 = vmatprep.subr.bf16.mxu0 %v5857
    %8421 = vmatpush2.bf16.msra.mxu0 %v5856
    %8422 = vmatprep.subr.bf16.mxu0 %v5853
    %8423 = vmatpush2.bf16.msra.mxu0 %v5852
    %8424 = vmatprep.subr.bf16.mxu0 %v5849
    %8425 = vmatpush2.bf16.msra.mxu0 %v5848
    %8426 = vmatprep.subr.bf16.mxu0 %v5845
    %8427 = vmatpush2.bf16.msra.mxu0 %v5844
    %8428 = vmatprep.subr.bf16.mxu0 %v5841
    %8429 = vmatpush2.bf16.msra.mxu0 %v5840
    %8430 = vmatprep.subr.bf16.mxu0 %v5837
    %8431 = vmatpush2.bf16.msra.mxu0 %v5836
    %8432 = vmatprep.subr.bf16.mxu0 %v5833
    %8433 = vmatpush2.bf16.msra.mxu0 %v5832
    %8434 = vmatprep.subr.bf16.mxu0 %v5829
    %8435 = vmatpush2.bf16.msra.mxu0 %v5828
    %8436 = vmatprep.mubr.bf16.mxu0 %v266
    %8437 = vmatmul.mubr.bf16.gmra.mxu0 %v265
    %v8438 = vpop.f32.mrf.mxu0
    %v8439 = vadd.f32 %v8398, %v8438
    %v8440 = vpop.f32.mrf.mxu0
    %v8441 = vadd.f32 %v8400, %v8440
    %v8442 = vpop.f32.mrf.mxu0
    %v8443 = vpop.f32.mrf.mxu0
    %8444 = vdwg.mxu0
    %8445 = vmatprep.subr.bf16.mxu0 %v5889
    %8446 = vmatpush1.bf16.msra.mxu0 %v5888
    %8447 = vmatprep.subr.bf16.mxu0 %v5885
    %8448 = vmatpush1.bf16.msra.mxu0 %v5884
    %8449 = vmatprep.subr.bf16.mxu0 %v5881
    %8450 = vmatpush1.bf16.msra.mxu0 %v5880
    %8451 = vmatprep.subr.bf16.mxu0 %v5877
    %8452 = vmatpush1.bf16.msra.mxu0 %v5876
    %8453 = vmatprep.subr.bf16.mxu0 %v5873
    %8454 = vmatpush1.bf16.msra.mxu0 %v5872
    %8455 = vmatprep.subr.bf16.mxu0 %v5869
    %8456 = vmatpush1.bf16.msra.mxu0 %v5868
    %8457 = vmatprep.subr.bf16.mxu0 %v5865
    %8458 = vmatpush1.bf16.msra.mxu0 %v5864
    %8459 = vmatprep.subr.bf16.mxu0 %v5861
    %8460 = vmatpush1.bf16.msra.mxu0 %v5860
    %8461 = vmatprep.subr.bf16.mxu0 0
    %8462 = vmatpush2.bf16.msra.mxu0 0
    %8463 = vmatprep.subr.bf16.mxu0 0
    %8464 = vmatpush2.bf16.msra.mxu0 0
    %8465 = vmatprep.subr.bf16.mxu0 0
    %8466 = vmatpush2.bf16.msra.mxu0 0
    %8467 = vmatprep.subr.bf16.mxu0 0
    %8468 = vmatpush2.bf16.msra.mxu0 0
    %8469 = vmatprep.subr.bf16.mxu0 0
    %8470 = vmatpush2.bf16.msra.mxu0 0
    %8471 = vmatprep.subr.bf16.mxu0 0
    %8472 = vmatpush2.bf16.msra.mxu0 0
    %8473 = vmatprep.subr.bf16.mxu0 0
    %8474 = vmatpush2.bf16.msra.mxu0 0
    %8475 = vmatprep.subr.bf16.mxu0 0
    %8476 = vmatpush2.bf16.msra.mxu0 0
    %8477 = vmatprep.mubr.bf16.mxu0 0
    %8478 = vmatmul.mubr.bf16.gmra.mxu0 %v267
    %v8479 = vpop.f32.mrf.mxu0
    %v8480 = vadd.f32 %v8439, %v8479
    %v8481 = vpop.f32.mrf.mxu0
    %v8482 = vadd.f32 %v8441, %v8481
    %v8483 = vpop.f32.mrf.mxu0
    %v8484 = vpop.f32.mrf.mxu0
    %8485 = vdwg.mxu0
    %v8486 = vmax.f32 %v7742, 0.0
    %v8487 = vmax.f32 %v7744, 0.0
    %v8488 = vmax.f32 %v8480, 0.0
    %v8489 = vmax.f32 %v8482, 0.0
    %v8490 = vpack.c.bf16 %v8486, %v8486
    %v8491 = vpack.c.bf16 %v8487, %v8487
    %v8492 = vpack.c.bf16 %v8488, %v8488
    %v8493 = vpack.c.bf16 %v8489, %v8489
    %v8494 = vld [vmem:[%s3] sm:$0xff]
    %v8495 = vld [vmem:[%s3 + $0x8] sm:$0xff]
    %v8496 = vld [vmem:[%s3 + $0x10] sm:$0xff]
    %v8497 = vld [vmem:[%s3 + $0x18] sm:$0xff]
    %v8498 = vld [vmem:[%s3 + $0x20] sm:$0xff]
    %v8499 = vld [vmem:[%s3 + $0x28] sm:$0xff]
    %v8500 = vld [vmem:[%s3 + $0x30] sm:$0xff]
    %v8501 = vld [vmem:[%s3 + $0x38] sm:$0xff]
    %v8502 = vld [vmem:[%s3 + $0x40] sm:$0xff]
    %v8503 = vld [vmem:[%s3 + $0x48] sm:$0xff]
    %v8504 = vld [vmem:[%s3 + $0x50] sm:$0xff]
    %v8505 = vld [vmem:[%s3 + $0x58] sm:$0xff]
    %v8506 = vld [vmem:[%s3 + $0x60] sm:$0xff]
    %v8507 = vld [vmem:[%s3 + $0x68] sm:$0xff]
    %v8508 = vld [vmem:[%s3 + $0x70] sm:$0xff]
    %v8509 = vld [vmem:[%s3 + $0x78] sm:$0xff]
    %v8510 = vld [vmem:[%s3 + $0x80] sm:$0xff]
    %v8511 = vld [vmem:[%s3 + $0x88] sm:$0xff]
    %v8512 = vld [vmem:[%s3 + $0x90] sm:$0xff]
    %v8513 = vld [vmem:[%s3 + $0x98] sm:$0xff]
    %v8514 = vld [vmem:[%s3 + $0xa0] sm:$0xff]
    %v8515 = vld [vmem:[%s3 + $0xa8] sm:$0xff]
    %v8516 = vld [vmem:[%s3 + $0xb0] sm:$0xff]
    %v8517 = vld [vmem:[%s3 + $0xb8] sm:$0xff]
    %v8518 = vld [vmem:[%s3 + $0xc0] sm:$0xff]
    %v8519 = vld [vmem:[%s3 + $0xc8] sm:$0xff]
    %v8520 = vld [vmem:[%s3 + $0xd0] sm:$0xff]
    %v8521 = vld [vmem:[%s3 + $0xd8] sm:$0xff]
    %v8522 = vld [vmem:[%s3 + $0xe0] sm:$0xff]
    %v8523 = vld [vmem:[%s3 + $0xe8] sm:$0xff]
    %v8524 = vld [vmem:[%s3 + $0xf0] sm:$0xff]
    %v8525 = vld [vmem:[%s3 + $0xf8] sm:$0xff]
    %v8526 = vld [vmem:[%s3 + $0x100] sm:$0xff]
    %v8527 = vld [vmem:[%s3 + $0x108] sm:$0xff]
    %v8528 = vld [vmem:[%s3 + $0x110] sm:$0xff]
    %v8529 = vld [vmem:[%s3 + $0x118] sm:$0xff]
    %v8530 = vld [vmem:[%s3 + $0x120] sm:$0xff]
    %v8531 = vld [vmem:[%s3 + $0x128] sm:$0xff]
    %v8532 = vld [vmem:[%s3 + $0x130] sm:$0xff]
    %v8533 = vld [vmem:[%s3 + $0x138] sm:$0xff]
    %v8534 = vld [vmem:[%s3 + $0x140] sm:$0xff]
    %v8535 = vld [vmem:[%s3 + $0x148] sm:$0xff]
    %v8536 = vld [vmem:[%s3 + $0x150] sm:$0xff]
    %v8537 = vld [vmem:[%s3 + $0x158] sm:$0xff]
    %v8538 = vld [vmem:[%s3 + $0x160] sm:$0xff]
    %v8539 = vld [vmem:[%s3 + $0x168] sm:$0xff]
    %v8540 = vld [vmem:[%s3 + $0x170] sm:$0xff]
    %v8541 = vld [vmem:[%s3 + $0x178] sm:$0xff]
    %v8542 = vld [vmem:[%s3 + $0x180] sm:$0xff]
    %v8543 = vld [vmem:[%s3 + $0x188] sm:$0xff]
    %v8544 = vld [vmem:[%s3 + $0x190] sm:$0xff]
    %v8545 = vld [vmem:[%s3 + $0x198] sm:$0xff]
    %v8546 = vld [vmem:[%s3 + $0x1a0] sm:$0xff]
    %v8547 = vld [vmem:[%s3 + $0x1a8] sm:$0xff]
    %v8548 = vld [vmem:[%s3 + $0x1b0] sm:$0xff]
    %v8549 = vld [vmem:[%s3 + $0x1b8] sm:$0xff]
    %v8550 = vld [vmem:[%s3 + $0x1c0] sm:$0xff]
    %v8551 = vld [vmem:[%s3 + $0x1c8] sm:$0xff]
    %v8552 = vld [vmem:[%s3 + $0x1d0] sm:$0xff]
    %v8553 = vld [vmem:[%s3 + $0x1d8] sm:$0xff]
    %v8554 = vld [vmem:[%s3 + $0x1e0] sm:$0xff]
    %v8555 = vld [vmem:[%s3 + $0x1e8] sm:$0xff]
    %v8556 = vld [vmem:[%s3 + $0x1f0] sm:$0xff]
    %v8557 = vld [vmem:[%s3 + $0x1f8] sm:$0xff]
    %v8558 = vld [vmem:[%s4] sm:$0x3]
    %v8560 = vlaneseq
    %v8561 = vshrl.u32 %v8560, 7
    %v8562 = vsub.s32 0, %v8561
    %v8563 = vrot.slane %v8558, %v8562
    %v8564 = vlaneseq
    %v8565 = vshrl.u32 %v8564, 7
    %v8566 = vsub.s32 1, %v8565
    %v8567 = vrot.slane %v8558, %v8566
    %v8634 = vunpack.c.l.b16 %v8494
    %v8635 = vunpack.c.h.b16 %v8494
    %v8636 = vunpack.c.l.b16 %v8495
    %v8637 = vunpack.c.h.b16 %v8495
    %v8638 = vunpack.c.l.b16 %v8496
    %v8639 = vunpack.c.h.b16 %v8496
    %v8640 = vunpack.c.l.b16 %v8497
    %v8641 = vunpack.c.h.b16 %v8497
    %v8642 = vunpack.c.l.b16 %v8498
    %v8643 = vunpack.c.h.b16 %v8498
    %v8644 = vunpack.c.l.b16 %v8499
    %v8645 = vunpack.c.h.b16 %v8499
    %v8646 = vunpack.c.l.b16 %v8500
    %v8647 = vunpack.c.h.b16 %v8500
    %v8648 = vunpack.c.l.b16 %v8501
    %v8649 = vunpack.c.h.b16 %v8501
    %v8650 = vunpack.c.l.b16 %v8502
    %v8651 = vunpack.c.h.b16 %v8502
    %v8652 = vunpack.c.l.b16 %v8503
    %v8653 = vunpack.c.h.b16 %v8503
    %v8654 = vunpack.c.l.b16 %v8504
    %v8655 = vunpack.c.h.b16 %v8504
    %v8656 = vunpack.c.l.b16 %v8505
    %v8657 = vunpack.c.h.b16 %v8505
    %v8658 = vunpack.c.l.b16 %v8506
    %v8659 = vunpack.c.h.b16 %v8506
    %v8660 = vunpack.c.l.b16 %v8507
    %v8661 = vunpack.c.h.b16 %v8507
    %v8662 = vunpack.c.l.b16 %v8508
    %v8663 = vunpack.c.h.b16 %v8508
    %v8664 = vunpack.c.l.b16 %v8509
    %v8665 = vunpack.c.h.b16 %v8509
    %v8666 = vunpack.c.l.b16 %v8510
    %v8667 = vunpack.c.h.b16 %v8510
    %v8668 = vunpack.c.l.b16 %v8511
    %v8669 = vunpack.c.h.b16 %v8511
    %v8670 = vunpack.c.l.b16 %v8512
    %v8671 = vunpack.c.h.b16 %v8512
    %v8672 = vunpack.c.l.b16 %v8513
    %v8673 = vunpack.c.h.b16 %v8513
    %v8674 = vunpack.c.l.b16 %v8514
    %v8675 = vunpack.c.h.b16 %v8514
    %v8676 = vunpack.c.l.b16 %v8515
    %v8677 = vunpack.c.h.b16 %v8515
    %v8678 = vunpack.c.l.b16 %v8516
    %v8679 = vunpack.c.h.b16 %v8516
    %v8680 = vunpack.c.l.b16 %v8517
    %v8681 = vunpack.c.h.b16 %v8517
    %v8682 = vunpack.c.l.b16 %v8518
    %v8683 = vunpack.c.h.b16 %v8518
    %v8684 = vunpack.c.l.b16 %v8519
    %v8685 = vunpack.c.h.b16 %v8519
    %v8686 = vunpack.c.l.b16 %v8520
    %v8687 = vunpack.c.h.b16 %v8520
    %v8688 = vunpack.c.l.b16 %v8521
    %v8689 = vunpack.c.h.b16 %v8521
    %v8690 = vunpack.c.l.b16 %v8522
    %v8691 = vunpack.c.h.b16 %v8522
    %v8692 = vunpack.c.l.b16 %v8523
    %v8693 = vunpack.c.h.b16 %v8523
    %v8694 = vunpack.c.l.b16 %v8524
    %v8695 = vunpack.c.h.b16 %v8524
    %v8696 = vunpack.c.l.b16 %v8525
    %v8697 = vunpack.c.h.b16 %v8525
    %v8698 = vunpack.c.l.b16 %v8526
    %v8699 = vunpack.c.h.b16 %v8526
    %v8700 = vunpack.c.l.b16 %v8527
    %v8701 = vunpack.c.h.b16 %v8527
    %v8702 = vunpack.c.l.b16 %v8528
    %v8703 = vunpack.c.h.b16 %v8528
    %v8704 = vunpack.c.l.b16 %v8529
    %v8705 = vunpack.c.h.b16 %v8529
    %v8706 = vunpack.c.l.b16 %v8530
    %v8707 = vunpack.c.h.b16 %v8530
    %v8708 = vunpack.c.l.b16 %v8531
    %v8709 = vunpack.c.h.b16 %v8531
    %v8710 = vunpack.c.l.b16 %v8532
    %v8711 = vunpack.c.h.b16 %v8532
    %v8712 = vunpack.c.l.b16 %v8533
    %v8713 = vunpack.c.h.b16 %v8533
    %v8714 = vunpack.c.l.b16 %v8534
    %v8715 = vunpack.c.h.b16 %v8534
    %v8716 = vunpack.c.l.b16 %v8535
    %v8717 = vunpack.c.h.b16 %v8535
    %v8718 = vunpack.c.l.b16 %v8536
    %v8719 = vunpack.c.h.b16 %v8536
    %v8720 = vunpack.c.l.b16 %v8537
    %v8721 = vunpack.c.h.b16 %v8537
    %v8722 = vunpack.c.l.b16 %v8538
    %v8723 = vunpack.c.h.b16 %v8538
    %v8724 = vunpack.c.l.b16 %v8539
    %v8725 = vunpack.c.h.b16 %v8539
    %v8726 = vunpack.c.l.b16 %v8540
    %v8727 = vunpack.c.h.b16 %v8540
    %v8728 = vunpack.c.l.b16 %v8541
    %v8729 = vunpack.c.h.b16 %v8541
    %v8730 = vunpack.c.l.b16 %v8542
    %v8731 = vunpack.c.h.b16 %v8542
    %v8732 = vunpack.c.l.b16 %v8543
    %v8733 = vunpack.c.h.b16 %v8543
    %v8734 = vunpack.c.l.b16 %v8544
    %v8735 = vunpack.c.h.b16 %v8544
    %v8736 = vunpack.c.l.b16 %v8545
    %v8737 = vunpack.c.h.b16 %v8545
    %v8738 = vunpack.c.l.b16 %v8546
    %v8739 = vunpack.c.h.b16 %v8546
    %v8740 = vunpack.c.l.b16 %v8547
    %v8741 = vunpack.c.h.b16 %v8547
    %v8742 = vunpack.c.l.b16 %v8548
    %v8743 = vunpack.c.h.b16 %v8548
    %v8744 = vunpack.c.l.b16 %v8549
    %v8745 = vunpack.c.h.b16 %v8549
    %v8746 = vunpack.c.l.b16 %v8550
    %v8747 = vunpack.c.h.b16 %v8550
    %v8748 = vunpack.c.l.b16 %v8551
    %v8749 = vunpack.c.h.b16 %v8551
    %v8750 = vunpack.c.l.b16 %v8552
    %v8751 = vunpack.c.h.b16 %v8552
    %v8752 = vunpack.c.l.b16 %v8553
    %v8753 = vunpack.c.h.b16 %v8553
    %v8754 = vunpack.c.l.b16 %v8554
    %v8755 = vunpack.c.h.b16 %v8554
    %v8756 = vunpack.c.l.b16 %v8555
    %v8757 = vunpack.c.h.b16 %v8555
    %v8758 = vunpack.c.l.b16 %v8556
    %v8759 = vunpack.c.h.b16 %v8556
    %v8760 = vunpack.c.l.b16 %v8557
    %v8761 = vunpack.c.h.b16 %v8557
    %v8762 = vpack.c.b16 %v8636, %v8634
    %v8763 = vpack.c.b16 %v8637, %v8635
    %v8764 = vpack.c.b16 %v8640, %v8638
    %v8765 = vpack.c.b16 %v8641, %v8639
    %v8766 = vpack.c.b16 %v8644, %v8642
    %v8767 = vpack.c.b16 %v8645, %v8643
    %v8768 = vpack.c.b16 %v8648, %v8646
    %v8769 = vpack.c.b16 %v8649, %v8647
    %v8770 = vpack.c.b16 %v8652, %v8650
    %v8771 = vpack.c.b16 %v8653, %v8651
    %v8772 = vpack.c.b16 %v8656, %v8654
    %v8773 = vpack.c.b16 %v8657, %v8655
    %v8774 = vpack.c.b16 %v8660, %v8658
    %v8775 = vpack.c.b16 %v8661, %v8659
    %v8776 = vpack.c.b16 %v8664, %v8662
    %v8777 = vpack.c.b16 %v8665, %v8663
    %v8778 = vpack.c.b16 %v8668, %v8666
    %v8779 = vpack.c.b16 %v8669, %v8667
    %v8780 = vpack.c.b16 %v8672, %v8670
    %v8781 = vpack.c.b16 %v8673, %v8671
    %v8782 = vpack.c.b16 %v8676, %v8674
    %v8783 = vpack.c.b16 %v8677, %v8675
    %v8784 = vpack.c.b16 %v8680, %v8678
    %v8785 = vpack.c.b16 %v8681, %v8679
    %v8786 = vpack.c.b16 %v8684, %v8682
    %v8787 = vpack.c.b16 %v8685, %v8683
    %v8788 = vpack.c.b16 %v8688, %v8686
    %v8789 = vpack.c.b16 %v8689, %v8687
    %v8790 = vpack.c.b16 %v8692, %v8690
    %v8791 = vpack.c.b16 %v8693, %v8691
    %v8792 = vpack.c.b16 %v8696, %v8694
    %v8793 = vpack.c.b16 %v8697, %v8695
    %v8794 = vpack.c.b16 %v8700, %v8698
    %v8795 = vpack.c.b16 %v8701, %v8699
    %v8796 = vpack.c.b16 %v8704, %v8702
    %v8797 = vpack.c.b16 %v8705, %v8703
    %v8798 = vpack.c.b16 %v8708, %v8706
    %v8799 = vpack.c.b16 %v8709, %v8707
    %v8800 = vpack.c.b16 %v8712, %v8710
    %v8801 = vpack.c.b16 %v8713, %v8711
    %v8802 = vpack.c.b16 %v8716, %v8714
    %v8803 = vpack.c.b16 %v8717, %v8715
    %v8804 = vpack.c.b16 %v8720, %v8718
    %v8805 = vpack.c.b16 %v8721, %v8719
    %v8806 = vpack.c.b16 %v8724, %v8722
    %v8807 = vpack.c.b16 %v8725, %v8723
    %v8808 = vpack.c.b16 %v8728, %v8726
    %v8809 = vpack.c.b16 %v8729, %v8727
    %v8810 = vpack.c.b16 %v8732, %v8730
    %v8811 = vpack.c.b16 %v8733, %v8731
    %v8812 = vpack.c.b16 %v8736, %v8734
    %v8813 = vpack.c.b16 %v8737, %v8735
    %v8814 = vpack.c.b16 %v8740, %v8738
    %v8815 = vpack.c.b16 %v8741, %v8739
    %v8816 = vpack.c.b16 %v8744, %v8742
    %v8817 = vpack.c.b16 %v8745, %v8743
    %v8818 = vpack.c.b16 %v8748, %v8746
    %v8819 = vpack.c.b16 %v8749, %v8747
    %v8820 = vpack.c.b16 %v8752, %v8750
    %v8821 = vpack.c.b16 %v8753, %v8751
    %v8822 = vpack.c.b16 %v8756, %v8754
    %v8823 = vpack.c.b16 %v8757, %v8755
    %v8824 = vpack.c.b16 %v8760, %v8758
    %v8825 = vpack.c.b16 %v8761, %v8759
    %8890 = vmatprep.subr.bf16.mxu0 %v8777
    %8891 = vmatpush1.bf16.msra.mxu0 %v8776
    %8892 = vmatprep.subr.bf16.mxu0 %v8775
    %8893 = vmatpush1.bf16.msra.mxu0 %v8774
    %8894 = vmatprep.subr.bf16.mxu0 %v8773
    %8895 = vmatpush1.bf16.msra.mxu0 %v8772
    %8896 = vmatprep.subr.bf16.mxu0 %v8771
    %8897 = vmatpush1.bf16.msra.mxu0 %v8770
    %8898 = vmatprep.subr.bf16.mxu0 %v8769
    %8899 = vmatpush1.bf16.msra.mxu0 %v8768
    %8900 = vmatprep.subr.bf16.mxu0 %v8767
    %8901 = vmatpush1.bf16.msra.mxu0 %v8766
    %8902 = vmatprep.subr.bf16.mxu0 %v8765
    %8903 = vmatpush1.bf16.msra.mxu0 %v8764
    %8904 = vmatprep.subr.bf16.mxu0 %v8763
    %8905 = vmatpush1.bf16.msra.mxu0 %v8762
    %8906 = vmatprep.subr.bf16.mxu0 %v8793
    %8907 = vmatpush2.bf16.msra.mxu0 %v8792
    %8908 = vmatprep.subr.bf16.mxu0 %v8791
    %8909 = vmatpush2.bf16.msra.mxu0 %v8790
    %8910 = vmatprep.subr.bf16.mxu0 %v8789
    %8911 = vmatpush2.bf16.msra.mxu0 %v8788
    %8912 = vmatprep.subr.bf16.mxu0 %v8787
    %8913 = vmatpush2.bf16.msra.mxu0 %v8786
    %8914 = vmatprep.subr.bf16.mxu0 %v8785
    %8915 = vmatpush2.bf16.msra.mxu0 %v8784
    %8916 = vmatprep.subr.bf16.mxu0 %v8783
    %8917 = vmatpush2.bf16.msra.mxu0 %v8782
    %8918 = vmatprep.subr.bf16.mxu0 %v8781
    %8919 = vmatpush2.bf16.msra.mxu0 %v8780
    %8920 = vmatprep.subr.bf16.mxu0 %v8779
    %8921 = vmatpush2.bf16.msra.mxu0 %v8778
    %8922 = vmatprep.mubr.bf16.mxu0 %v8491
    %8923 = vmatmul.mubr.bf16.gmra.mxu0 %v8490
    %v8924 = vpop.f32.mrf.mxu0
    %v8925 = vadd.f32 %v8563, %v8924
    %v8926 = vpop.f32.mrf.mxu0
    %v8927 = vadd.f32 %v8567, %v8926
    %v8928 = vpop.f32.mrf.mxu0
    %v8929 = vpop.f32.mrf.mxu0
    %8930 = vdwg.mxu0
    %8931 = vmatprep.subr.bf16.mxu0 %v8809
    %8932 = vmatpush1.bf16.msra.mxu0 %v8808
    %8933 = vmatprep.subr.bf16.mxu0 %v8807
    %8934 = vmatpush1.bf16.msra.mxu0 %v8806
    %8935 = vmatprep.subr.bf16.mxu0 %v8805
    %8936 = vmatpush1.bf16.msra.mxu0 %v8804
    %8937 = vmatprep.subr.bf16.mxu0 %v8803
    %8938 = vmatpush1.bf16.msra.mxu0 %v8802
    %8939 = vmatprep.subr.bf16.mxu0 %v8801
    %8940 = vmatpush1.bf16.msra.mxu0 %v8800
    %8941 = vmatprep.subr.bf16.mxu0 %v8799
    %8942 = vmatpush1.bf16.msra.mxu0 %v8798
    %8943 = vmatprep.subr.bf16.mxu0 %v8797
    %8944 = vmatpush1.bf16.msra.mxu0 %v8796
    %8945 = vmatprep.subr.bf16.mxu0 %v8795
    %8946 = vmatpush1.bf16.msra.mxu0 %v8794
    %8947 = vmatprep.subr.bf16.mxu0 %v8825
    %8948 = vmatpush2.bf16.msra.mxu0 %v8824
    %8949 = vmatprep.subr.bf16.mxu0 %v8823
    %8950 = vmatpush2.bf16.msra.mxu0 %v8822
    %8951 = vmatprep.subr.bf16.mxu0 %v8821
    %8952 = vmatpush2.bf16.msra.mxu0 %v8820
    %8953 = vmatprep.subr.bf16.mxu0 %v8819
    %8954 = vmatpush2.bf16.msra.mxu0 %v8818
    %8955 = vmatprep.subr.bf16.mxu0 %v8817
    %8956 = vmatpush2.bf16.msra.mxu0 %v8816
    %8957 = vmatprep.subr.bf16.mxu0 %v8815
    %8958 = vmatpush2.bf16.msra.mxu0 %v8814
    %8959 = vmatprep.subr.bf16.mxu0 %v8813
    %8960 = vmatpush2.bf16.msra.mxu0 %v8812
    %8961 = vmatprep.subr.bf16.mxu0 %v8811
    %8962 = vmatpush2.bf16.msra.mxu0 %v8810
    %8963 = vmatprep.mubr.bf16.mxu0 %v8493
    %8964 = vmatmul.mubr.bf16.gmra.mxu0 %v8492
    %v8965 = vpop.f32.mrf.mxu0
    %v8966 = vadd.f32 %v8925, %v8965
    %v8967 = vpop.f32.mrf.mxu0
    %v8968 = vadd.f32 %v8927, %v8967
    %v8969 = vpop.f32.mrf.mxu0
    %v8970 = vpop.f32.mrf.mxu0
    %8971 = vdwg.mxu0
    %v8972 = vmax.f32 %v8966, 0.0
    %v8973 = vmax.f32 %v8968, 0.0
    %v8974 = vpack.c.bf16 %v8972, %v8972
    %v8975 = vpack.c.bf16 %v8973, %v8973
    %v8976 = vld [vmem:[%s5] sm:$0xf]
    %v8977 = vld [vmem:[%s5 + $0x4] sm:$0xf]
    %v8978 = vld [vmem:[%s5 + $0x8] sm:$0xf]
    %v8979 = vld [vmem:[%s5 + $0xc] sm:$0xf]
    %v8980 = vld [vmem:[%s5 + $0x10] sm:$0xf]
    %v8981 = vld [vmem:[%s5 + $0x14] sm:$0xf]
    %v8982 = vld [vmem:[%s5 + $0x18] sm:$0xf]
    %v8983 = vld [vmem:[%s5 + $0x1c] sm:$0xf]
    %v8984 = vld [vmem:[%s5 + $0x20] sm:$0xf]
    %v8985 = vld [vmem:[%s5 + $0x24] sm:$0xf]
    %v8986 = vld [vmem:[%s5 + $0x28] sm:$0xf]
    %v8987 = vld [vmem:[%s5 + $0x2c] sm:$0xf]
    %v8988 = vld [vmem:[%s5 + $0x30] sm:$0xf]
    %v8989 = vld [vmem:[%s5 + $0x34] sm:$0xf]
    %v8990 = vld [vmem:[%s5 + $0x38] sm:$0xf]
    %v8991 = vld [vmem:[%s5 + $0x3c] sm:$0xf]
    %v8992 = vld [vmem:[%s5 + $0x40] sm:$0xf]
    %v8993 = vld [vmem:[%s5 + $0x44] sm:$0xf]
    %v8994 = vld [vmem:[%s5 + $0x48] sm:$0xf]
    %v8995 = vld [vmem:[%s5 + $0x4c] sm:$0xf]
    %v8996 = vld [vmem:[%s5 + $0x50] sm:$0xf]
    %v8997 = vld [vmem:[%s5 + $0x54] sm:$0xf]
    %v8998 = vld [vmem:[%s5 + $0x58] sm:$0xf]
    %v8999 = vld [vmem:[%s5 + $0x5c] sm:$0xf]
    %v9000 = vld [vmem:[%s5 + $0x60] sm:$0xf]
    %v9001 = vld [vmem:[%s5 + $0x64] sm:$0xf]
    %v9002 = vld [vmem:[%s5 + $0x68] sm:$0xf]
    %v9003 = vld [vmem:[%s5 + $0x6c] sm:$0xf]
    %v9004 = vld [vmem:[%s5 + $0x70] sm:$0xf]
    %v9005 = vld [vmem:[%s5 + $0x74] sm:$0xf]
    %v9006 = vld [vmem:[%s5 + $0x78] sm:$0xf]
    %v9007 = vld [vmem:[%s5 + $0x7c] sm:$0xf]
    %v9008 = vld [vmem:[%s6] sm:$0x1]
    %v9010 = vlaneseq
    %v9011 = vshrl.u32 %v9010, 7
    %v9012 = vsub.s32 0, %v9011
    %v9013 = vrot.slane %v9008, %v9012
    %v9047 = vunpack.c.l.b16 %v8976
    %v9048 = vunpack.c.l.b16 %v8977
    %v9049 = vunpack.c.l.b16 %v8978
    %v9050 = vunpack.c.l.b16 %v8979
    %v9051 = vunpack.c.l.b16 %v8980
    %v9052 = vunpack.c.l.b16 %v8981
    %v9053 = vunpack.c.l.b16 %v8982
    %v9054 = vunpack.c.l.b16 %v8983
    %v9055 = vunpack.c.l.b16 %v8984
    %v9056 = vunpack.c.l.b16 %v8985
    %v9057 = vunpack.c.l.b16 %v8986
    %v9058 = vunpack.c.l.b16 %v8987
    %v9059 = vunpack.c.l.b16 %v8988
    %v9060 = vunpack.c.l.b16 %v8989
    %v9061 = vunpack.c.l.b16 %v8990
    %v9062 = vunpack.c.l.b16 %v8991
    %v9063 = vunpack.c.l.b16 %v8992
    %v9064 = vunpack.c.l.b16 %v8993
    %v9065 = vunpack.c.l.b16 %v8994
    %v9066 = vunpack.c.l.b16 %v8995
    %v9067 = vunpack.c.l.b16 %v8996
    %v9068 = vunpack.c.l.b16 %v8997
    %v9069 = vunpack.c.l.b16 %v8998
    %v9070 = vunpack.c.l.b16 %v8999
    %v9071 = vunpack.c.l.b16 %v9000
    %v9072 = vunpack.c.l.b16 %v9001
    %v9073 = vunpack.c.l.b16 %v9002
    %v9074 = vunpack.c.l.b16 %v9003
    %v9075 = vunpack.c.l.b16 %v9004
    %v9076 = vunpack.c.l.b16 %v9005
    %v9077 = vunpack.c.l.b16 %v9006
    %v9078 = vunpack.c.l.b16 %v9007
    %v9079 = vpack.c.b16 %v9048, %v9047
    %v9080 = vpack.c.b16 %v9050, %v9049
    %v9081 = vpack.c.b16 %v9052, %v9051
    %v9082 = vpack.c.b16 %v9054, %v9053
    %v9083 = vpack.c.b16 %v9056, %v9055
    %v9084 = vpack.c.b16 %v9058, %v9057
    %v9085 = vpack.c.b16 %v9060, %v9059
    %v9086 = vpack.c.b16 %v9062, %v9061
    %v9087 = vpack.c.b16 %v9064, %v9063
    %v9088 = vpack.c.b16 %v9066, %v9065
    %v9089 = vpack.c.b16 %v9068, %v9067
    %v9090 = vpack.c.b16 %v9070, %v9069
    %v9091 = vpack.c.b16 %v9072, %v9071
    %v9092 = vpack.c.b16 %v9074, %v9073
    %v9093 = vpack.c.b16 %v9076, %v9075
    %v9094 = vpack.c.b16 %v9078, %v9077
    %9111 = vmatprep.subr.bf16.mxu0 0
    %9112 = vmatpush1.bf16.msra.mxu0 %v9086
    %9113 = vmatprep.subr.bf16.mxu0 0
    %9114 = vmatpush1.bf16.msra.mxu0 %v9085
    %9115 = vmatprep.subr.bf16.mxu0 0
    %9116 = vmatpush1.bf16.msra.mxu0 %v9084
    %9117 = vmatprep.subr.bf16.mxu0 0
    %9118 = vmatpush1.bf16.msra.mxu0 %v9083
    %9119 = vmatprep.subr.bf16.mxu0 0
    %9120 = vmatpush1.bf16.msra.mxu0 %v9082
    %9121 = vmatprep.subr.bf16.mxu0 0
    %9122 = vmatpush1.bf16.msra.mxu0 %v9081
    %9123 = vmatprep.subr.bf16.mxu0 0
    %9124 = vmatpush1.bf16.msra.mxu0 %v9080
    %9125 = vmatprep.subr.bf16.mxu0 0
    %9126 = vmatpush1.bf16.msra.mxu0 %v9079
    %9127 = vmatprep.subr.bf16.mxu0 0
    %9128 = vmatpush2.bf16.msra.mxu0 %v9094
    %9129 = vmatprep.subr.bf16.mxu0 0
    %9130 = vmatpush2.bf16.msra.mxu0 %v9093
    %9131 = vmatprep.subr.bf16.mxu0 0
    %9132 = vmatpush2.bf16.msra.mxu0 %v9092
    %9133 = vmatprep.subr.bf16.mxu0 0
    %9134 = vmatpush2.bf16.msra.mxu0 %v9091
    %9135 = vmatprep.subr.bf16.mxu0 0
    %9136 = vmatpush2.bf16.msra.mxu0 %v9090
    %9137 = vmatprep.subr.bf16.mxu0 0
    %9138 = vmatpush2.bf16.msra.mxu0 %v9089
    %9139 = vmatprep.subr.bf16.mxu0 0
    %9140 = vmatpush2.bf16.msra.mxu0 %v9088
    %9141 = vmatprep.subr.bf16.mxu0 0
    %9142 = vmatpush2.bf16.msra.mxu0 %v9087
    %9143 = vmatprep.mubr.bf16.mxu0 %v8975
    %9144 = vmatmul.mubr.bf16.gmra.mxu0 %v8974
    %v9145 = vpop.f32.mrf.mxu0
    %v9146 = vadd.f32 %v9013, %v9145
    %v9147 = vpop.f32.mrf.mxu0
    %v9148 = vpop.f32.mrf.mxu0
    %v9149 = vpop.f32.mrf.mxu0
    %9150 = vdwg.mxu0
    %vm9151 = vcmask 41984
    %9152 = vst.msk [vmem:[#allocation2] sm:$0x3] %vm9151, %v9146
    // Predicated region
    $region30: #{model_forward.7} parent=1 // pred_check
      _
    $region31: #{model_forward.7} parent=1 // pred_check_branch
      %9154 = sbr.rel (0) target = $region33
    $region32: #{model_forward.7} parent=1 // pred_region
      %s9156 = ssub.s32 32, 32
      %9157 = vsyncadd [#allocation3], %s9156
      %s9159 = sshll.u32 [#allocation2], 4
      %s9160 = int_to_ptr.vmem [resolvable:$true] %s9159
      %9162 = dma.vmem_to_hbm [thread:$0]  %s9160, 32, %s7, [#allocation3]
    $region33: #{model_forward.7} parent=1 // pred_fallthru
      _
    // Predicated region
    $region34: #{model_forward.7} parent=1 // pred_check
      _
    $region35: #{model_forward.7} parent=1 // pred_check_branch
      %9164 = sbr.rel (0) target = $region37
    $region36: #{model_forward.7} parent=1 // pred_region
      %9165 = dma.done [#allocation3], 32
    $region37: #{model_forward.7} parent=1 // pred_fallthru
      _
    %9166 = vsyncpa [#allocation3], 1

</llo_original>
